<compile_context>
chip_gen: v5e
topology: v5e:2x2
jax: 0.10.0
libtpu: 0.0.40
codegen_flags: <defaults>
</compile_context>

<pallas_src>
import jax
import jax.numpy as jnp
from jax.experimental import pallas as pl
from jax.experimental.pallas import tpu as pltpu

# ----------------------------- model config ---------------------------------
INPUT_DIM = 1
HIDDEN_DIM = 32
KERNEL_SIZE = 3
NUM_LAYERS = 2


# ----------------------------- fused kernel ---------------------------------
def fused_convlstm_kernel(x_ref, wx0_ref, wh0_ref, b0_ref,
                          wx1_ref, wh1_ref, b1_ref,
                          wout_ref, bout_ref,
                          out_ref,
                          xp_ref, hp0_ref, hp1_ref, c0_ref, c1_ref):
    """Grid = (B, T). One grid step = one (batch element, timestep).

    x_ref   : (1, 1, H, W, 1)      current frame
    wx0_ref : (9, 1, 4C)           layer-0 conv taps over x
    wh0_ref : (9, C, 4C)           layer-0 conv taps over h0
    wx1_ref : (9, C, 4C)           layer-1 conv taps over h0_t (input from below)
    wh1_ref : (9, C, 4C)           layer-1 conv taps over h1
    b0/b1   : (1, 4C)              conv biases
    wout    : (1, C), bout: (1,1)  1x1 output conv
    out_ref : (1, H*W, 1)          final prediction (written at t == T-1)
    scratch : xp (H+2,W+2,1), hp0/hp1 (H+2,W+2,C) zero-padded states,
              c0/c1 (H*W, C) cell states — all carried across timesteps.
    """
    t = pl.program_id(1)
    n_t = pl.num_programs(1)

    Hp, Wp, _ = xp_ref.shape
    H, W = Hp - 2, Wp - 2
    HW = H * W
    CH = c0_ref.shape[-1]
    CH4 = 4 * CH

    # ---- reset carried state at the first timestep of each batch element ----
    @pl.when(t == 0)
    def _():
        xp_ref[...] = jnp.zeros_like(xp_ref)
        hp0_ref[...] = jnp.zeros_like(hp0_ref)
        hp1_ref[...] = jnp.zeros_like(hp1_ref)
        c0_ref[...] = jnp.zeros_like(c0_ref)
        c1_ref[...] = jnp.zeros_like(c1_ref)

    # current frame into the padded scratch (the 1-pixel border stays zero)
    xp_ref[1:H + 1, 1:W + 1, :] = x_ref[0, 0]

    # Single-tanh gate trick: sigmoid(z) = 0.5*tanh(0.5*z) + 0.5 on the first
    # 3*CH lanes (i, f, o); plain tanh on the last CH lanes (g).
    lane = jax.lax.broadcasted_iota(jnp.int32, (1, CH4), 1)
    is_sig = lane < 3 * CH
    pre = jnp.where(is_sig, 0.5, 1.0)
    post_m = jnp.where(is_sig, 0.5, 1.0)
    post_a = jnp.where(is_sig, 0.5, 0.0)

    def lstm_update(acc, c_prev):
        gates = jnp.tanh(acc * pre) * post_m + post_a        # [ i | f | o | g ]
        i = gates[:, 0 * CH:1 * CH]
        f = gates[:, 1 * CH:2 * CH]
        o = gates[:, 2 * CH:3 * CH]
        g = gates[:, 3 * CH:4 * CH]
        c_next = f * c_prev + i * g
        h_next = o * jnp.tanh(c_next)
        return h_next, c_next

    # -------- layer 0: 3x3 conv over [x | h0_prev] + gates + state update ----
    acc0 = jnp.zeros((HW, CH4), jnp.float32)
    for kh in range(3):
        for kw in range(3):
            tap = kh * 3 + kw
            xpat = xp_ref[kh:kh + H, kw:kw + W, :].reshape(HW, 1)
            acc0 = acc0 + xpat * wx0_ref[tap]                        # VPU (Cin=1)
            hpat = hp0_ref[kh:kh + H, kw:kw + W, :].reshape(HW, CH)
            acc0 = acc0 + jnp.dot(hpat, wh0_ref[tap],
                                  preferred_element_type=jnp.float32)
    acc0 = acc0 + b0_ref[...]
    h0, c0_new = lstm_update(acc0, c0_ref[...])
    c0_ref[...] = c0_new
    hp0_ref[1:H + 1, 1:W + 1, :] = h0.reshape(H, W, CH)              # h0_t

    # -------- layer 1: 3x3 conv over [h0_t | h1_prev] -------------------------
    acc1 = jnp.zeros((HW, CH4), jnp.float32)
    for kh in range(3):
        for kw in range(3):
            tap = kh * 3 + kw
            p0 = hp0_ref[kh:kh + H, kw:kw + W, :].reshape(HW, CH)    # h0_t
            acc1 = acc1 + jnp.dot(p0, wx1_ref[tap],
                                  preferred_element_type=jnp.float32)
            p1 = hp1_ref[kh:kh + H, kw:kw + W, :].reshape(HW, CH)    # h1_prev
            acc1 = acc1 + jnp.dot(p1, wh1_ref[tap],
                                  preferred_element_type=jnp.float32)
    acc1 = acc1 + b1_ref[...]
    h1, c1_new = lstm_update(acc1, c1_ref[...])
    c1_ref[...] = c1_new
    hp1_ref[1:H + 1, 1:W + 1, :] = h1.reshape(H, W, CH)

    # -------- fused 1x1 conv head + ReLU, only on the last timestep ----------
    @pl.when(t == n_t - 1)
    def _():
        y = jnp.sum(h1 * wout_ref[...], axis=-1, keepdims=True) + bout_ref[...]
        out_ref[...] = jnp.maximum(y, 0.0).reshape(1, HW, 1)


# ------------------------------ wrapper --------------------------------------
@jax.jit
def vehicle_grid_predictor(x, params):
    """x: (B, T, H, W) -> (B, H, W)  (matches the PyTorch forward)."""
    B, T, H, W = x.shape
    CH = HIDDEN_DIM
    CH4 = 4 * CH
    HW = H * W
    x5 = x[..., None]                                # (B, T, H, W, 1) NHWC

    const3 = lambda b, t: (0, 0, 0)
    const2 = lambda b, t: (0, 0)

    out = pl.pallas_call(
        fused_convlstm_kernel,
        out_shape=jax.ShapeDtypeStruct((B, HW, 1), jnp.float32),
        grid_spec=pltpu.PrefetchScalarGridSpec(
            num_scalar_prefetch=0,
            grid=(B, T),
            in_specs=[
                pl.BlockSpec((1, 1, H, W, 1), lambda b, t: (b, t, 0, 0, 0)),  # x
                pl.BlockSpec((9, INPUT_DIM, CH4), const3),                    # wx0
                pl.BlockSpec((9, CH, CH4), const3),                           # wh0
                pl.BlockSpec((1, CH4), const2),                               # b0
                pl.BlockSpec((9, CH, CH4), const3),                           # wx1
                pl.BlockSpec((9, CH, CH4), const3),                           # wh1
                pl.BlockSpec((1, CH4), const2),                               # b1
                pl.BlockSpec((1, CH), const2),                                # w_out
                pl.BlockSpec((1, 1), const2),                                 # b_out
            ],
            out_specs=pl.BlockSpec((1, HW, 1), lambda b, t: (b, 0, 0)),
            scratch_shapes=[
                pltpu.VMEM((H + 2, W + 2, INPUT_DIM), jnp.float32),  # padded x
                pltpu.VMEM((H + 2, W + 2, CH), jnp.float32),         # padded h0
                pltpu.VMEM((H + 2, W + 2, CH), jnp.float32),         # padded h1
                pltpu.VMEM((HW, CH), jnp.float32),                   # c0
                pltpu.VMEM((HW, CH), jnp.float32),                   # c1
            ]),
        compiler_params=pltpu.CompilerParams(
            dimension_semantics=("parallel", "arbitrary")),
    )(x5,
      params["wx0"], params["wh0"], params["b0"],
      params["wx1"], params["wh1"], params["b1"],
      params["w_out"], params["b_out"])
    return out.reshape(B, H, W)


# --------------------------- pure-JAX reference -------------------------------
def _cell_ref(x_t, h, c, wx, wh, b):
    B, H, W, _ = x_t.shape
    ch4 = wh.shape[-1]
    ch = ch4 // 4
    comb = jnp.concatenate([x_t, h], axis=-1)
    w = jnp.concatenate([wx, wh], axis=1)            # (9, Cin+Ch, 4*Ch)
    xp = jnp.pad(comb, ((0, 0), (1, 1), (1, 1), (0, 0)))
    acc = jnp.zeros((B, H, W, ch4), jnp.float32)
    for kh in range(3):
        for kw in range(3):
            acc = acc + jnp.einsum('bhwc,cd->bhwd',
                                   xp[:, kh:kh + H, kw:kw + W, :], w[kh * 3 + kw])
    acc = acc + b
    i = jax.nn.sigmoid(acc[..., 0 * ch:1 * ch])
    f = jax.nn.sigmoid(acc[..., 1 * ch:2 * ch])
    o = jax.nn.sigmoid(acc[..., 2 * ch:3 * ch])
    g = jnp.tanh(acc[..., 3 * ch:4 * ch])
    c_next = f * c + i * g
    return o * jnp.tanh(c_next), c_next


@jax.jit
def _predictor_ref(x, params):
    B, T, H, W = x.shape
    cur = x[..., None]
    layers = [(params["wx0"], params["wh0"], params["b0"]),
              (params["wx1"], params["wh1"], params["b1"])]
    for wx, wh, b in layers:
        h = jnp.zeros((B, H, W, HIDDEN_DIM), jnp.float32)
        c = jnp.zeros((B, H, W, HIDDEN_DIM), jnp.float32)
        outs = []
        for t in range(T):
            h, c = _cell_ref(cur[:, t], h, c, wx, wh, b)
            outs.append(h)
        cur = jnp.stack(outs, axis=1)
    last = cur[:, -1]
    y = jnp.einsum('bhwc,c->bhw', last, params["w_out"][0]) + params["b_out"][0, 0]
    return jnp.maximum(y, 0.0)


# ------------------------------- params --------------------------------------
def init_params(key):
    ch4 = 4 * HIDDEN_DIM
    ks = jax.random.split(key, 8)
    # gate order along output channels: i, f, o, g (matches torch.split order)
    return {
        "wx0": 0.1 * jax.random.normal(ks[0], (9, INPUT_DIM, ch4), jnp.float32),
        "wh0": 0.1 * jax.random.normal(ks[1], (9, HIDDEN_DIM, ch4), jnp.float32),
        "b0": 0.1 * jax.random.normal(ks[2], (1, ch4), jnp.float32),
        "wx1": 0.1 * jax.random.normal(ks[3], (9, HIDDEN_DIM, ch4), jnp.float32),
        "wh1": 0.1 * jax.random.normal(ks[4], (9, HIDDEN_DIM, ch4), jnp.float32),
        "b1": 0.1 * jax.random.normal(ks[5], (1, ch4), jnp.float32),
        "w_out": 0.1 * jax.random.normal(ks[6], (1, HIDDEN_DIM), jnp.float32),
        "b_out": 0.1 * jax.random.normal(ks[7], (1, 1), jnp.float32),
    }


# --------------------------------- main ---------------------------------------
if __name__ == "__main__":
    key = jax.random.PRNGKey(0)
    key, kx, kp = jax.random.split(key, 3)

    B, T, H, W = 2, 4, 16, 16
    x = jax.random.uniform(kx, (B, T, H, W), jnp.float32)
    params = init_params(kp)

    out = jax.block_until_ready(vehicle_grid_predictor(x, params))
    assert out.shape == (B, H, W), out.shape

    ref = jax.block_until_ready(_predictor_ref(x, params))
    if not jnp.allclose(out, ref, atol=2e-3, rtol=2e-3):
        err = float(jnp.max(jnp.abs(out - ref)))
        raise AssertionError(f"Pallas output diverges from reference (max err {err})")

    print("KERNEL_OK")
</pallas_src>

<mosaic_0001>
module attributes {stable_mosaic.version = 11 : i64} {
  func.func @fused_convlstm_kernel(%arg0: i32, %arg1: i32, %arg2: memref<1x1x16x16x1xf32, #tpu.memory_space<vmem>>, %arg3: memref<9x1x128xf32, #tpu.memory_space<vmem>>, %arg4: memref<9x32x128xf32, #tpu.memory_space<vmem>>, %arg5: memref<1x128xf32, #tpu.memory_space<vmem>>, %arg6: memref<9x32x128xf32, #tpu.memory_space<vmem>>, %arg7: memref<9x32x128xf32, #tpu.memory_space<vmem>>, %arg8: memref<1x128xf32, #tpu.memory_space<vmem>>, %arg9: memref<1x32xf32, #tpu.memory_space<vmem>>, %arg10: memref<1x1xf32, #tpu.memory_space<vmem>>, %arg11: memref<1x256x1xf32, #tpu.memory_space<vmem>>, %arg12: memref<18x18x1xf32, #tpu.memory_space<vmem>>, %arg13: memref<18x18x32xf32, #tpu.memory_space<vmem>>, %arg14: memref<18x18x32xf32, #tpu.memory_space<vmem>>, %arg15: memref<256x32xf32, #tpu.memory_space<vmem>>, %arg16: memref<256x32xf32, #tpu.memory_space<vmem>>) attributes {dimension_semantics = [#tpu.dimension_semantics<parallel>, #tpu.dimension_semantics<arbitrary>], iteration_bounds = array<i64: 2, 4>, scalar_prefetch = 0 : i64, scratch_operands = 5 : i64, tpu.core_type = #tpu.core_type<tc>, window_params = [{transform_indices = @transform_0, window_bounds = array<i64: 1, 1, 16, 16, 1>}, {pipeline_mode = #tpu.pipeline_mode<synchronous>, transform_indices = @transform_1, window_bounds = array<i64: 9, 1, 128>}, {pipeline_mode = #tpu.pipeline_mode<synchronous>, transform_indices = @transform_2, window_bounds = array<i64: 9, 32, 128>}, {pipeline_mode = #tpu.pipeline_mode<synchronous>, transform_indices = @transform_3, window_bounds = array<i64: 1, 128>}, {pipeline_mode = #tpu.pipeline_mode<synchronous>, transform_indices = @transform_4, window_bounds = array<i64: 9, 32, 128>}, {pipeline_mode = #tpu.pipeline_mode<synchronous>, transform_indices = @transform_5, window_bounds = array<i64: 9, 32, 128>}, {pipeline_mode = #tpu.pipeline_mode<synchronous>, transform_indices = @transform_6, window_bounds = array<i64: 1, 128>}, {pipeline_mode = #tpu.pipeline_mode<synchronous>, transform_indices = @transform_7, window_bounds = array<i64: 1, 32>}, {pipeline_mode = #tpu.pipeline_mode<synchronous>, transform_indices = @transform_8, window_bounds = array<i64: 1, 1>}, {transform_indices = @transform_9, window_bounds = array<i64: 1, 256, 1>}]} {
    %c0_i32 = arith.constant 0 : i32
    %0 = arith.cmpi eq, %arg1, %c0_i32 : i32
    %1 = arith.extui %0 : i1 to i32
    %c0_i32_0 = arith.constant 0 : i32
    %2 = arith.cmpi ne, %1, %c0_i32_0 : i32
    scf.if %2 {
      %cst_269 = arith.constant 0.000000e+00 : f32
      %303 = vector.broadcast %cst_269 : f32 to vector<18x18x1xf32>
      %c0_270 = arith.constant 0 : index
      %c0_271 = arith.constant 0 : index
      %c0_272 = arith.constant 0 : index
      %304 = vector.load %arg12[%c0_270, %c0_271, %c0_272] : memref<18x18x1xf32, #tpu.memory_space<vmem>>, vector<18x18x1xf32>
      tpu.vector_store %arg12[%c0_270, %c0_271, %c0_272], %303 {strides = array<i32>} : memref<18x18x1xf32, #tpu.memory_space<vmem>>, vector<18x18x1xf32>,
      %cst_273 = arith.constant 0.000000e+00 : f32
      %305 = vector.broadcast %cst_273 : f32 to vector<18x18x32xf32>
      %c0_274 = arith.constant 0 : index
      %c0_275 = arith.constant 0 : index
      %c0_276 = arith.constant 0 : index
      %306 = vector.load %arg13[%c0_274, %c0_275, %c0_276] : memref<18x18x32xf32, #tpu.memory_space<vmem>>, vector<18x18x32xf32>
      tpu.vector_store %arg13[%c0_274, %c0_275, %c0_276], %305 {strides = array<i32>} : memref<18x18x32xf32, #tpu.memory_space<vmem>>, vector<18x18x32xf32>,
      %cst_277 = arith.constant 0.000000e+00 : f32
      %307 = vector.broadcast %cst_277 : f32 to vector<18x18x32xf32>
      %c0_278 = arith.constant 0 : index
      %c0_279 = arith.constant 0 : index
      %c0_280 = arith.constant 0 : index
      %308 = vector.load %arg14[%c0_278, %c0_279, %c0_280] : memref<18x18x32xf32, #tpu.memory_space<vmem>>, vector<18x18x32xf32>
      tpu.vector_store %arg14[%c0_278, %c0_279, %c0_280], %307 {strides = array<i32>} : memref<18x18x32xf32, #tpu.memory_space<vmem>>, vector<18x18x32xf32>,
      %cst_281 = arith.constant 0.000000e+00 : f32
      %309 = vector.broadcast %cst_281 : f32 to vector<256x32xf32>
      %c0_282 = arith.constant 0 : index
      %c0_283 = arith.constant 0 : index
      %310 = vector.load %arg15[%c0_282, %c0_283] : memref<256x32xf32, #tpu.memory_space<vmem>>, vector<256x32xf32>
      tpu.vector_store %arg15[%c0_282, %c0_283], %309 {strides = array<i32>} : memref<256x32xf32, #tpu.memory_space<vmem>>, vector<256x32xf32>,
      %cst_284 = arith.constant 0.000000e+00 : f32
      %311 = vector.broadcast %cst_284 : f32 to vector<256x32xf32>
      %c0_285 = arith.constant 0 : index
      %c0_286 = arith.constant 0 : index
      %312 = vector.load %arg16[%c0_285, %c0_286] : memref<256x32xf32, #tpu.memory_space<vmem>>, vector<256x32xf32>
      tpu.vector_store %arg16[%c0_285, %c0_286], %311 {strides = array<i32>} : memref<256x32xf32, #tpu.memory_space<vmem>>, vector<256x32xf32>,
    } else {
    }
    %c0 = arith.constant 0 : index
    %c0_1 = arith.constant 0 : index
    %c0_2 = arith.constant 0 : index
    %c0_3 = arith.constant 0 : index
    %c0_4 = arith.constant 0 : index
    %3 = vector.load %arg2[%c0, %c0_1, %c0_2, %c0_3, %c0_4] : memref<1x1x16x16x1xf32, #tpu.memory_space<vmem>>, vector<1x1x16x16x1xf32>
    %4 = vector.shape_cast %3 : vector<1x1x16x16x1xf32> to vector<16x16x1xf32>
    %c1 = arith.constant 1 : index
    %c1_5 = arith.constant 1 : index
    %c0_6 = arith.constant 0 : index
    %5 = vector.load %arg12[%c1, %c1_5, %c0_6] : memref<18x18x1xf32, #tpu.memory_space<vmem>>, vector<16x16x1xf32>
    tpu.vector_store %arg12[%c1, %c1_5, %c0_6], %4 {strides = array<i32>} : memref<18x18x1xf32, #tpu.memory_space<vmem>>, vector<16x16x1xf32>,
    %6 = tpu.iota {dimensions = array<i32: 1>} : vector<1x128xi32>
    %c96_i32 = arith.constant 96 : i32
    %7 = vector.broadcast %c96_i32 : i32 to vector<1x128xi32>
    %8 = arith.cmpi slt, %6, %7 : vector<1x128xi32>
    %cst = arith.constant 5.000000e-01 : f32
    %cst_7 = arith.constant 1.000000e+00 : f32
    %9 = vector.broadcast %cst : f32 to vector<1x128xf32>
    %10 = vector.broadcast %cst_7 : f32 to vector<1x128xf32>
    %11 = arith.select %8, %9, %10 : vector<1x128xi1>, vector<1x128xf32>
    %cst_8 = arith.constant 5.000000e-01 : f32
    %cst_9 = arith.constant 1.000000e+00 : f32
    %12 = vector.broadcast %cst_8 : f32 to vector<1x128xf32>
    %13 = vector.broadcast %cst_9 : f32 to vector<1x128xf32>
    %14 = arith.select %8, %12, %13 : vector<1x128xi1>, vector<1x128xf32>
    %cst_10 = arith.constant 5.000000e-01 : f32
    %cst_11 = arith.constant 0.000000e+00 : f32
    %15 = vector.broadcast %cst_10 : f32 to vector<1x128xf32>
    %16 = vector.broadcast %cst_11 : f32 to vector<1x128xf32>
    %17 = arith.select %8, %15, %16 : vector<1x128xi1>, vector<1x128xf32>
    %cst_12 = arith.constant 0.000000e+00 : f32
    %18 = vector.broadcast %cst_12 : f32 to vector<256x128xf32>
    %c0_13 = arith.constant 0 : index
    %c0_14 = arith.constant 0 : index
    %c0_15 = arith.constant 0 : index
    %19 = vector.load %arg12[%c0_13, %c0_14, %c0_15] : memref<18x18x1xf32, #tpu.memory_space<vmem>>, vector<16x16x1xf32>
    %20 = vector.shape_cast %19 : vector<16x16x1xf32> to vector<256x1xf32>
    %c0_16 = arith.constant 0 : index
    %c0_17 = arith.constant 0 : index
    %c0_18 = arith.constant 0 : index
    %21 = vector.load %arg3[%c0_16, %c0_17, %c0_18] : memref<9x1x128xf32, #tpu.memory_space<vmem>>, vector<1x1x128xf32>
    %22 = vector.shape_cast %21 : vector<1x1x128xf32> to vector<1x128xf32>
    %23 = vector.broadcast %20 : vector<256x1xf32> to vector<256x128xf32>
    %24 = vector.broadcast %22 : vector<1x128xf32> to vector<256x128xf32>
    %25 = arith.mulf %23, %24 : vector<256x128xf32>
    %26 = arith.addf %18, %25 : vector<256x128xf32>
    %c0_19 = arith.constant 0 : index
    %c0_20 = arith.constant 0 : index
    %c0_21 = arith.constant 0 : index
    %27 = vector.load %arg13[%c0_19, %c0_20, %c0_21] : memref<18x18x32xf32, #tpu.memory_space<vmem>>, vector<16x16x32xf32>
    %28 = vector.shape_cast %27 : vector<16x16x32xf32> to vector<256x32xf32>
    %c0_22 = arith.constant 0 : index
    %c0_23 = arith.constant 0 : index
    %c0_24 = arith.constant 0 : index
    %29 = vector.load %arg4[%c0_22, %c0_23, %c0_24] : memref<9x32x128xf32, #tpu.memory_space<vmem>>, vector<1x32x128xf32>
    %30 = vector.shape_cast %29 : vector<1x32x128xf32> to vector<32x128xf32>
    %cst_25 = arith.constant dense<0.000000e+00> : vector<256x128xf32>
    %31 = tpu.matmul %28, %30, %cst_25 {dimension_numbers = #tpu.dot_dimension_numbers<[1], [0], [0], [1], [0, 0, 1, 1], [], []>} : vector<256x32xf32>, vector<32x128xf32>, vector<256x128xf32> -> vector<256x128xf32>
    %32 = arith.addf %26, %31 : vector<256x128xf32>
    %c0_26 = arith.constant 0 : index
    %c1_27 = arith.constant 1 : index
    %c0_28 = arith.constant 0 : index
    %33 = vector.load %arg12[%c0_26, %c1_27, %c0_28] : memref<18x18x1xf32, #tpu.memory_space<vmem>>, vector<16x16x1xf32>
    %34 = vector.shape_cast %33 : vector<16x16x1xf32> to vector<256x1xf32>
    %c1_29 = arith.constant 1 : index
    %c0_30 = arith.constant 0 : index
    %c0_31 = arith.constant 0 : index
    %35 = vector.load %arg3[%c1_29, %c0_30, %c0_31] : memref<9x1x128xf32, #tpu.memory_space<vmem>>, vector<1x1x128xf32>
    %36 = vector.shape_cast %35 : vector<1x1x128xf32> to vector<1x128xf32>
    %37 = vector.broadcast %34 : vector<256x1xf32> to vector<256x128xf32>
    %38 = vector.broadcast %36 : vector<1x128xf32> to vector<256x128xf32>
    %39 = arith.mulf %37, %38 : vector<256x128xf32>
    %40 = arith.addf %32, %39 : vector<256x128xf32>
    %c0_32 = arith.constant 0 : index
    %c1_33 = arith.constant 1 : index
    %c0_34 = arith.constant 0 : index
    %41 = vector.load %arg13[%c0_32, %c1_33, %c0_34] : memref<18x18x32xf32, #tpu.memory_space<vmem>>, vector<16x16x32xf32>
    %42 = vector.shape_cast %41 : vector<16x16x32xf32> to vector<256x32xf32>
    %c1_35 = arith.constant 1 : index
    %c0_36 = arith.constant 0 : index
    %c0_37 = arith.constant 0 : index
    %43 = vector.load %arg4[%c1_35, %c0_36, %c0_37] : memref<9x32x128xf32, #tpu.memory_space<vmem>>, vector<1x32x128xf32>
    %44 = vector.shape_cast %43 : vector<1x32x128xf32> to vector<32x128xf32>
    %cst_38 = arith.constant dense<0.000000e+00> : vector<256x128xf32>
    %45 = tpu.matmul %42, %44, %cst_38 {dimension_numbers = #tpu.dot_dimension_numbers<[1], [0], [0], [1], [0, 0, 1, 1], [], []>} : vector<256x32xf32>, vector<32x128xf32>, vector<256x128xf32> -> vector<256x128xf32>
    %46 = arith.addf %40, %45 : vector<256x128xf32>
    %c0_39 = arith.constant 0 : index
    %c2 = arith.constant 2 : index
    %c0_40 = arith.constant 0 : index
    %47 = vector.load %arg12[%c0_39, %c2, %c0_40] : memref<18x18x1xf32, #tpu.memory_space<vmem>>, vector<16x16x1xf32>
    %48 = vector.shape_cast %47 : vector<16x16x1xf32> to vector<256x1xf32>
    %c2_41 = arith.constant 2 : index
    %c0_42 = arith.constant 0 : index
    %c0_43 = arith.constant 0 : index
    %49 = vector.load %arg3[%c2_41, %c0_42, %c0_43] : memref<9x1x128xf32, #tpu.memory_space<vmem>>, vector<1x1x128xf32>
    %50 = vector.shape_cast %49 : vector<1x1x128xf32> to vector<1x128xf32>
    %51 = vector.broadcast %48 : vector<256x1xf32> to vector<256x128xf32>
    %52 = vector.broadcast %50 : vector<1x128xf32> to vector<256x128xf32>
    %53 = arith.mulf %51, %52 : vector<256x128xf32>
    %54 = arith.addf %46, %53 : vector<256x128xf32>
    %c0_44 = arith.constant 0 : index
    %c2_45 = arith.constant 2 : index
    %c0_46 = arith.constant 0 : index
    %55 = vector.load %arg13[%c0_44, %c2_45, %c0_46] : memref<18x18x32xf32, #tpu.memory_space<vmem>>, vector<16x16x32xf32>
    %56 = vector.shape_cast %55 : vector<16x16x32xf32> to vector<256x32xf32>
    %c2_47 = arith.constant 2 : index
    %c0_48 = arith.constant 0 : index
    %c0_49 = arith.constant 0 : index
    %57 = vector.load %arg4[%c2_47, %c0_48, %c0_49] : memref<9x32x128xf32, #tpu.memory_space<vmem>>, vector<1x32x128xf32>
    %58 = vector.shape_cast %57 : vector<1x32x128xf32> to vector<32x128xf32>
    %cst_50 = arith.constant dense<0.000000e+00> : vector<256x128xf32>
    %59 = tpu.matmul %56, %58, %cst_50 {dimension_numbers = #tpu.dot_dimension_numbers<[1], [0], [0], [1], [0, 0, 1, 1], [], []>} : vector<256x32xf32>, vector<32x128xf32>, vector<256x128xf32> -> vector<256x128xf32>
    %60 = arith.addf %54, %59 : vector<256x128xf32>
    %c1_51 = arith.constant 1 : index
    %c0_52 = arith.constant 0 : index
    %c0_53 = arith.constant 0 : index
    %61 = vector.load %arg12[%c1_51, %c0_52, %c0_53] : memref<18x18x1xf32, #tpu.memory_space<vmem>>, vector<16x16x1xf32>
    %62 = vector.shape_cast %61 : vector<16x16x1xf32> to vector<256x1xf32>
    %c3 = arith.constant 3 : index
    %c0_54 = arith.constant 0 : index
    %c0_55 = arith.constant 0 : index
    %63 = vector.load %arg3[%c3, %c0_54, %c0_55] : memref<9x1x128xf32, #tpu.memory_space<vmem>>, vector<1x1x128xf32>
    %64 = vector.shape_cast %63 : vector<1x1x128xf32> to vector<1x128xf32>
    %65 = vector.broadcast %62 : vector<256x1xf32> to vector<256x128xf32>
    %66 = vector.broadcast %64 : vector<1x128xf32> to vector<256x128xf32>
    %67 = arith.mulf %65, %66 : vector<256x128xf32>
    %68 = arith.addf %60, %67 : vector<256x128xf32>
    %c1_56 = arith.constant 1 : index
    %c0_57 = arith.constant 0 : index
    %c0_58 = arith.constant 0 : index
    %69 = vector.load %arg13[%c1_56, %c0_57, %c0_58] : memref<18x18x32xf32, #tpu.memory_space<vmem>>, vector<16x16x32xf32>
    %70 = vector.shape_cast %69 : vector<16x16x32xf32> to vector<256x32xf32>
    %c3_59 = arith.constant 3 : index
    %c0_60 = arith.constant 0 : index
    %c0_61 = arith.constant 0 : index
    %71 = vector.load %arg4[%c3_59, %c0_60, %c0_61] : memref<9x32x128xf32, #tpu.memory_space<vmem>>, vector<1x32x128xf32>
    %72 = vector.shape_cast %71 : vector<1x32x128xf32> to vector<32x128xf32>
    %cst_62 = arith.constant dense<0.000000e+00> : vector<256x128xf32>
    %73 = tpu.matmul %70, %72, %cst_62 {dimension_numbers = #tpu.dot_dimension_numbers<[1], [0], [0], [1], [0, 0, 1, 1], [], []>} : vector<256x32xf32>, vector<32x128xf32>, vector<256x128xf32> -> vector<256x128xf32>
    %74 = arith.addf %68, %73 : vector<256x128xf32>
    %c1_63 = arith.constant 1 : index
    %c1_64 = arith.constant 1 : index
    %c0_65 = arith.constant 0 : index
    %75 = vector.load %arg12[%c1_63, %c1_64, %c0_65] : memref<18x18x1xf32, #tpu.memory_space<vmem>>, vector<16x16x1xf32>
    %76 = vector.shape_cast %75 : vector<16x16x1xf32> to vector<256x1xf32>
    %c4 = arith.constant 4 : index
    %c0_66 = arith.constant 0 : index
    %c0_67 = arith.constant 0 : index
    %77 = vector.load %arg3[%c4, %c0_66, %c0_67] : memref<9x1x128xf32, #tpu.memory_space<vmem>>, vector<1x1x128xf32>
    %78 = vector.shape_cast %77 : vector<1x1x128xf32> to vector<1x128xf32>
    %79 = vector.broadcast %76 : vector<256x1xf32> to vector<256x128xf32>
    %80 = vector.broadcast %78 : vector<1x128xf32> to vector<256x128xf32>
    %81 = arith.mulf %79, %80 : vector<256x128xf32>
    %82 = arith.addf %74, %81 : vector<256x128xf32>
    %c1_68 = arith.constant 1 : index
    %c1_69 = arith.constant 1 : index
    %c0_70 = arith.constant 0 : index
    %83 = vector.load %arg13[%c1_68, %c1_69, %c0_70] : memref<18x18x32xf32, #tpu.memory_space<vmem>>, vector<16x16x32xf32>
    %84 = vector.shape_cast %83 : vector<16x16x32xf32> to vector<256x32xf32>
    %c4_71 = arith.constant 4 : index
    %c0_72 = arith.constant 0 : index
    %c0_73 = arith.constant 0 : index
    %85 = vector.load %arg4[%c4_71, %c0_72, %c0_73] : memref<9x32x128xf32, #tpu.memory_space<vmem>>, vector<1x32x128xf32>
    %86 = vector.shape_cast %85 : vector<1x32x128xf32> to vector<32x128xf32>
    %cst_74 = arith.constant dense<0.000000e+00> : vector<256x128xf32>
    %87 = tpu.matmul %84, %86, %cst_74 {dimension_numbers = #tpu.dot_dimension_numbers<[1], [0], [0], [1], [0, 0, 1, 1], [], []>} : vector<256x32xf32>, vector<32x128xf32>, vector<256x128xf32> -> vector<256x128xf32>
    %88 = arith.addf %82, %87 : vector<256x128xf32>
    %c1_75 = arith.constant 1 : index
    %c2_76 = arith.constant 2 : index
    %c0_77 = arith.constant 0 : index
    %89 = vector.load %arg12[%c1_75, %c2_76, %c0_77] : memref<18x18x1xf32, #tpu.memory_space<vmem>>, vector<16x16x1xf32>
    %90 = vector.shape_cast %89 : vector<16x16x1xf32> to vector<256x1xf32>
    %c5 = arith.constant 5 : index
    %c0_78 = arith.constant 0 : index
    %c0_79 = arith.constant 0 : index
    %91 = vector.load %arg3[%c5, %c0_78, %c0_79] : memref<9x1x128xf32, #tpu.memory_space<vmem>>, vector<1x1x128xf32>
    %92 = vector.shape_cast %91 : vector<1x1x128xf32> to vector<1x128xf32>
    %93 = vector.broadcast %90 : vector<256x1xf32> to vector<256x128xf32>
    %94 = vector.broadcast %92 : vector<1x128xf32> to vector<256x128xf32>
    %95 = arith.mulf %93, %94 : vector<256x128xf32>
    %96 = arith.addf %88, %95 : vector<256x128xf32>
    %c1_80 = arith.constant 1 : index
    %c2_81 = arith.constant 2 : index
    %c0_82 = arith.constant 0 : index
    %97 = vector.load %arg13[%c1_80, %c2_81, %c0_82] : memref<18x18x32xf32, #tpu.memory_space<vmem>>, vector<16x16x32xf32>
    %98 = vector.shape_cast %97 : vector<16x16x32xf32> to vector<256x32xf32>
    %c5_83 = arith.constant 5 : index
    %c0_84 = arith.constant 0 : index
    %c0_85 = arith.constant 0 : index
    %99 = vector.load %arg4[%c5_83, %c0_84, %c0_85] : memref<9x32x128xf32, #tpu.memory_space<vmem>>, vector<1x32x128xf32>
    %100 = vector.shape_cast %99 : vector<1x32x128xf32> to vector<32x128xf32>
    %cst_86 = arith.constant dense<0.000000e+00> : vector<256x128xf32>
    %101 = tpu.matmul %98, %100, %cst_86 {dimension_numbers = #tpu.dot_dimension_numbers<[1], [0], [0], [1], [0, 0, 1, 1], [], []>} : vector<256x32xf32>, vector<32x128xf32>, vector<256x128xf32> -> vector<256x128xf32>
    %102 = arith.addf %96, %101 : vector<256x128xf32>
    %c2_87 = arith.constant 2 : index
    %c0_88 = arith.constant 0 : index
    %c0_89 = arith.constant 0 : index
    %103 = vector.load %arg12[%c2_87, %c0_88, %c0_89] : memref<18x18x1xf32, #tpu.memory_space<vmem>>, vector<16x16x1xf32>
    %104 = vector.shape_cast %103 : vector<16x16x1xf32> to vector<256x1xf32>
    %c6 = arith.constant 6 : index
    %c0_90 = arith.constant 0 : index
    %c0_91 = arith.constant 0 : index
    %105 = vector.load %arg3[%c6, %c0_90, %c0_91] : memref<9x1x128xf32, #tpu.memory_space<vmem>>, vector<1x1x128xf32>
    %106 = vector.shape_cast %105 : vector<1x1x128xf32> to vector<1x128xf32>
    %107 = vector.broadcast %104 : vector<256x1xf32> to vector<256x128xf32>
    %108 = vector.broadcast %106 : vector<1x128xf32> to vector<256x128xf32>
    %109 = arith.mulf %107, %108 : vector<256x128xf32>
    %110 = arith.addf %102, %109 : vector<256x128xf32>
    %c2_92 = arith.constant 2 : index
    %c0_93 = arith.constant 0 : index
    %c0_94 = arith.constant 0 : index
    %111 = vector.load %arg13[%c2_92, %c0_93, %c0_94] : memref<18x18x32xf32, #tpu.memory_space<vmem>>, vector<16x16x32xf32>
    %112 = vector.shape_cast %111 : vector<16x16x32xf32> to vector<256x32xf32>
    %c6_95 = arith.constant 6 : index
    %c0_96 = arith.constant 0 : index
    %c0_97 = arith.constant 0 : index
    %113 = vector.load %arg4[%c6_95, %c0_96, %c0_97] : memref<9x32x128xf32, #tpu.memory_space<vmem>>, vector<1x32x128xf32>
    %114 = vector.shape_cast %113 : vector<1x32x128xf32> to vector<32x128xf32>
    %cst_98 = arith.constant dense<0.000000e+00> : vector<256x128xf32>
    %115 = tpu.matmul %112, %114, %cst_98 {dimension_numbers = #tpu.dot_dimension_numbers<[1], [0], [0], [1], [0, 0, 1, 1], [], []>} : vector<256x32xf32>, vector<32x128xf32>, vector<256x128xf32> -> vector<256x128xf32>
    %116 = arith.addf %110, %115 : vector<256x128xf32>
    %c2_99 = arith.constant 2 : index
    %c1_100 = arith.constant 1 : index
    %c0_101 = arith.constant 0 : index
    %117 = vector.load %arg12[%c2_99, %c1_100, %c0_101] : memref<18x18x1xf32, #tpu.memory_space<vmem>>, vector<16x16x1xf32>
    %118 = vector.shape_cast %117 : vector<16x16x1xf32> to vector<256x1xf32>
    %c7 = arith.constant 7 : index
    %c0_102 = arith.constant 0 : index
    %c0_103 = arith.constant 0 : index
    %119 = vector.load %arg3[%c7, %c0_102, %c0_103] : memref<9x1x128xf32, #tpu.memory_space<vmem>>, vector<1x1x128xf32>
    %120 = vector.shape_cast %119 : vector<1x1x128xf32> to vector<1x128xf32>
    %121 = vector.broadcast %118 : vector<256x1xf32> to vector<256x128xf32>
    %122 = vector.broadcast %120 : vector<1x128xf32> to vector<256x128xf32>
    %123 = arith.mulf %121, %122 : vector<256x128xf32>
    %124 = arith.addf %116, %123 : vector<256x128xf32>
    %c2_104 = arith.constant 2 : index
    %c1_105 = arith.constant 1 : index
    %c0_106 = arith.constant 0 : index
    %125 = vector.load %arg13[%c2_104, %c1_105, %c0_106] : memref<18x18x32xf32, #tpu.memory_space<vmem>>, vector<16x16x32xf32>
    %126 = vector.shape_cast %125 : vector<16x16x32xf32> to vector<256x32xf32>
    %c7_107 = arith.constant 7 : index
    %c0_108 = arith.constant 0 : index
    %c0_109 = arith.constant 0 : index
    %127 = vector.load %arg4[%c7_107, %c0_108, %c0_109] : memref<9x32x128xf32, #tpu.memory_space<vmem>>, vector<1x32x128xf32>
    %128 = vector.shape_cast %127 : vector<1x32x128xf32> to vector<32x128xf32>
    %cst_110 = arith.constant dense<0.000000e+00> : vector<256x128xf32>
    %129 = tpu.matmul %126, %128, %cst_110 {dimension_numbers = #tpu.dot_dimension_numbers<[1], [0], [0], [1], [0, 0, 1, 1], [], []>} : vector<256x32xf32>, vector<32x128xf32>, vector<256x128xf32> -> vector<256x128xf32>
    %130 = arith.addf %124, %129 : vector<256x128xf32>
    %c2_111 = arith.constant 2 : index
    %c2_112 = arith.constant 2 : index
    %c0_113 = arith.constant 0 : index
    %131 = vector.load %arg12[%c2_111, %c2_112, %c0_113] : memref<18x18x1xf32, #tpu.memory_space<vmem>>, vector<16x16x1xf32>
    %132 = vector.shape_cast %131 : vector<16x16x1xf32> to vector<256x1xf32>
    %c8 = arith.constant 8 : index
    %c0_114 = arith.constant 0 : index
    %c0_115 = arith.constant 0 : index
    %133 = vector.load %arg3[%c8, %c0_114, %c0_115] : memref<9x1x128xf32, #tpu.memory_space<vmem>>, vector<1x1x128xf32>
    %134 = vector.shape_cast %133 : vector<1x1x128xf32> to vector<1x128xf32>
    %135 = vector.broadcast %132 : vector<256x1xf32> to vector<256x128xf32>
    %136 = vector.broadcast %134 : vector<1x128xf32> to vector<256x128xf32>
    %137 = arith.mulf %135, %136 : vector<256x128xf32>
    %138 = arith.addf %130, %137 : vector<256x128xf32>
    %c2_116 = arith.constant 2 : index
    %c2_117 = arith.constant 2 : index
    %c0_118 = arith.constant 0 : index
    %139 = vector.load %arg13[%c2_116, %c2_117, %c0_118] : memref<18x18x32xf32, #tpu.memory_space<vmem>>, vector<16x16x32xf32>
    %140 = vector.shape_cast %139 : vector<16x16x32xf32> to vector<256x32xf32>
    %c8_119 = arith.constant 8 : index
    %c0_120 = arith.constant 0 : index
    %c0_121 = arith.constant 0 : index
    %141 = vector.load %arg4[%c8_119, %c0_120, %c0_121] : memref<9x32x128xf32, #tpu.memory_space<vmem>>, vector<1x32x128xf32>
    %142 = vector.shape_cast %141 : vector<1x32x128xf32> to vector<32x128xf32>
    %cst_122 = arith.constant dense<0.000000e+00> : vector<256x128xf32>
    %143 = tpu.matmul %140, %142, %cst_122 {dimension_numbers = #tpu.dot_dimension_numbers<[1], [0], [0], [1], [0, 0, 1, 1], [], []>} : vector<256x32xf32>, vector<32x128xf32>, vector<256x128xf32> -> vector<256x128xf32>
    %144 = arith.addf %138, %143 : vector<256x128xf32>
    %c0_123 = arith.constant 0 : index
    %c0_124 = arith.constant 0 : index
    %145 = vector.load %arg5[%c0_123, %c0_124] : memref<1x128xf32, #tpu.memory_space<vmem>>, vector<1x128xf32>
    %146 = vector.broadcast %145 : vector<1x128xf32> to vector<256x128xf32>
    %147 = arith.addf %144, %146 : vector<256x128xf32>
    %c0_125 = arith.constant 0 : index
    %c0_126 = arith.constant 0 : index
    %148 = vector.load %arg15[%c0_125, %c0_126] : memref<256x32xf32, #tpu.memory_space<vmem>>, vector<256x32xf32>
    %149 = vector.broadcast %11 : vector<1x128xf32> to vector<256x128xf32>
    %150 = arith.mulf %147, %149 : vector<256x128xf32>
    %151 = math.tanh %150 : vector<256x128xf32>
    %152 = vector.broadcast %14 : vector<1x128xf32> to vector<256x128xf32>
    %153 = arith.mulf %151, %152 : vector<256x128xf32>
    %154 = vector.broadcast %17 : vector<1x128xf32> to vector<256x128xf32>
    %155 = arith.addf %153, %154 : vector<256x128xf32>
    %156 = vector.extract_strided_slice %155 {offsets = [0, 0], sizes = [256, 32], strides = [1, 1]} : vector<256x128xf32> to vector<256x32xf32>
    %157 = vector.extract_strided_slice %155 {offsets = [0, 32], sizes = [256, 32], strides = [1, 1]} : vector<256x128xf32> to vector<256x32xf32>
    %158 = vector.extract_strided_slice %155 {offsets = [0, 64], sizes = [256, 32], strides = [1, 1]} : vector<256x128xf32> to vector<256x32xf32>
    %159 = vector.extract_strided_slice %155 {offsets = [0, 96], sizes = [256, 32], strides = [1, 1]} : vector<256x128xf32> to vector<256x32xf32>
    %160 = arith.mulf %157, %148 : vector<256x32xf32>
    %161 = arith.mulf %156, %159 : vector<256x32xf32>
    %162 = arith.addf %160, %161 : vector<256x32xf32>
    %163 = math.tanh %162 : vector<256x32xf32>
    %164 = arith.mulf %158, %163 : vector<256x32xf32>
    %c0_127 = arith.constant 0 : index
    %c0_128 = arith.constant 0 : index
    %165 = vector.load %arg15[%c0_127, %c0_128] : memref<256x32xf32, #tpu.memory_space<vmem>>, vector<256x32xf32>
    tpu.vector_store %arg15[%c0_127, %c0_128], %162 {strides = array<i32>} : memref<256x32xf32, #tpu.memory_space<vmem>>, vector<256x32xf32>,
    %166 = vector.shape_cast %164 : vector<256x32xf32> to vector<16x16x32xf32>
    %c1_129 = arith.constant 1 : index
    %c1_130 = arith.constant 1 : index
    %c0_131 = arith.constant 0 : index
    %167 = vector.load %arg13[%c1_129, %c1_130, %c0_131] : memref<18x18x32xf32, #tpu.memory_space<vmem>>, vector<16x16x32xf32>
    tpu.vector_store %arg13[%c1_129, %c1_130, %c0_131], %166 {strides = array<i32>} : memref<18x18x32xf32, #tpu.memory_space<vmem>>, vector<16x16x32xf32>,
    %cst_132 = arith.constant 0.000000e+00 : f32
    %168 = vector.broadcast %cst_132 : f32 to vector<256x128xf32>
    %c0_133 = arith.constant 0 : index
    %c0_134 = arith.constant 0 : index
    %c0_135 = arith.constant 0 : index
    %169 = vector.load %arg13[%c0_133, %c0_134, %c0_135] : memref<18x18x32xf32, #tpu.memory_space<vmem>>, vector<16x16x32xf32>
    %170 = vector.shape_cast %169 : vector<16x16x32xf32> to vector<256x32xf32>
    %c0_136 = arith.constant 0 : index
    %c0_137 = arith.constant 0 : index
    %c0_138 = arith.constant 0 : index
    %171 = vector.load %arg6[%c0_136, %c0_137, %c0_138] : memref<9x32x128xf32, #tpu.memory_space<vmem>>, vector<1x32x128xf32>
    %172 = vector.shape_cast %171 : vector<1x32x128xf32> to vector<32x128xf32>
    %cst_139 = arith.constant dense<0.000000e+00> : vector<256x128xf32>
    %173 = tpu.matmul %170, %172, %cst_139 {dimension_numbers = #tpu.dot_dimension_numbers<[1], [0], [0], [1], [0, 0, 1, 1], [], []>} : vector<256x32xf32>, vector<32x128xf32>, vector<256x128xf32> -> vector<256x128xf32>
    %174 = arith.addf %168, %173 : vector<256x128xf32>
    %c0_140 = arith.constant 0 : index
    %c0_141 = arith.constant 0 : index
    %c0_142 = arith.constant 0 : index
    %175 = vector.load %arg14[%c0_140, %c0_141, %c0_142] : memref<18x18x32xf32, #tpu.memory_space<vmem>>, vector<16x16x32xf32>
    %176 = vector.shape_cast %175 : vector<16x16x32xf32> to vector<256x32xf32>
    %c0_143 = arith.constant 0 : index
    %c0_144 = arith.constant 0 : index
    %c0_145 = arith.constant 0 : index
    %177 = vector.load %arg7[%c0_143, %c0_144, %c0_145] : memref<9x32x128xf32, #tpu.memory_space<vmem>>, vector<1x32x128xf32>
    %178 = vector.shape_cast %177 : vector<1x32x128xf32> to vector<32x128xf32>
    %cst_146 = arith.constant dense<0.000000e+00> : vector<256x128xf32>
    %179 = tpu.matmul %176, %178, %cst_146 {dimension_numbers = #tpu.dot_dimension_numbers<[1], [0], [0], [1], [0, 0, 1, 1], [], []>} : vector<256x32xf32>, vector<32x128xf32>, vector<256x128xf32> -> vector<256x128xf32>
    %180 = arith.addf %174, %179 : vector<256x128xf32>
    %c0_147 = arith.constant 0 : index
    %c1_148 = arith.constant 1 : index
    %c0_149 = arith.constant 0 : index
    %181 = vector.load %arg13[%c0_147, %c1_148, %c0_149] : memref<18x18x32xf32, #tpu.memory_space<vmem>>, vector<16x16x32xf32>
    %182 = vector.shape_cast %181 : vector<16x16x32xf32> to vector<256x32xf32>
    %c1_150 = arith.constant 1 : index
    %c0_151 = arith.constant 0 : index
    %c0_152 = arith.constant 0 : index
    %183 = vector.load %arg6[%c1_150, %c0_151, %c0_152] : memref<9x32x128xf32, #tpu.memory_space<vmem>>, vector<1x32x128xf32>
    %184 = vector.shape_cast %183 : vector<1x32x128xf32> to vector<32x128xf32>
    %cst_153 = arith.constant dense<0.000000e+00> : vector<256x128xf32>
    %185 = tpu.matmul %182, %184, %cst_153 {dimension_numbers = #tpu.dot_dimension_numbers<[1], [0], [0], [1], [0, 0, 1, 1], [], []>} : vector<256x32xf32>, vector<32x128xf32>, vector<256x128xf32> -> vector<256x128xf32>
    %186 = arith.addf %180, %185 : vector<256x128xf32>
    %c0_154 = arith.constant 0 : index
    %c1_155 = arith.constant 1 : index
    %c0_156 = arith.constant 0 : index
    %187 = vector.load %arg14[%c0_154, %c1_155, %c0_156] : memref<18x18x32xf32, #tpu.memory_space<vmem>>, vector<16x16x32xf32>
    %188 = vector.shape_cast %187 : vector<16x16x32xf32> to vector<256x32xf32>
    %c1_157 = arith.constant 1 : index
    %c0_158 = arith.constant 0 : index
    %c0_159 = arith.constant 0 : index
    %189 = vector.load %arg7[%c1_157, %c0_158, %c0_159] : memref<9x32x128xf32, #tpu.memory_space<vmem>>, vector<1x32x128xf32>
    %190 = vector.shape_cast %189 : vector<1x32x128xf32> to vector<32x128xf32>
    %cst_160 = arith.constant dense<0.000000e+00> : vector<256x128xf32>
    %191 = tpu.matmul %188, %190, %cst_160 {dimension_numbers = #tpu.dot_dimension_numbers<[1], [0], [0], [1], [0, 0, 1, 1], [], []>} : vector<256x32xf32>, vector<32x128xf32>, vector<256x128xf32> -> vector<256x128xf32>
    %192 = arith.addf %186, %191 : vector<256x128xf32>
    %c0_161 = arith.constant 0 : index
    %c2_162 = arith.constant 2 : index
    %c0_163 = arith.constant 0 : index
    %193 = vector.load %arg13[%c0_161, %c2_162, %c0_163] : memref<18x18x32xf32, #tpu.memory_space<vmem>>, vector<16x16x32xf32>
    %194 = vector.shape_cast %193 : vector<16x16x32xf32> to vector<256x32xf32>
    %c2_164 = arith.constant 2 : index
    %c0_165 = arith.constant 0 : index
    %c0_166 = arith.constant 0 : index
    %195 = vector.load %arg6[%c2_164, %c0_165, %c0_166] : memref<9x32x128xf32, #tpu.memory_space<vmem>>, vector<1x32x128xf32>
    %196 = vector.shape_cast %195 : vector<1x32x128xf32> to vector<32x128xf32>
    %cst_167 = arith.constant dense<0.000000e+00> : vector<256x128xf32>
    %197 = tpu.matmul %194, %196, %cst_167 {dimension_numbers = #tpu.dot_dimension_numbers<[1], [0], [0], [1], [0, 0, 1, 1], [], []>} : vector<256x32xf32>, vector<32x128xf32>, vector<256x128xf32> -> vector<256x128xf32>
    %198 = arith.addf %192, %197 : vector<256x128xf32>
    %c0_168 = arith.constant 0 : index
    %c2_169 = arith.constant 2 : index
    %c0_170 = arith.constant 0 : index
    %199 = vector.load %arg14[%c0_168, %c2_169, %c0_170] : memref<18x18x32xf32, #tpu.memory_space<vmem>>, vector<16x16x32xf32>
    %200 = vector.shape_cast %199 : vector<16x16x32xf32> to vector<256x32xf32>
    %c2_171 = arith.constant 2 : index
    %c0_172 = arith.constant 0 : index
    %c0_173 = arith.constant 0 : index
    %201 = vector.load %arg7[%c2_171, %c0_172, %c0_173] : memref<9x32x128xf32, #tpu.memory_space<vmem>>, vector<1x32x128xf32>
    %202 = vector.shape_cast %201 : vector<1x32x128xf32> to vector<32x128xf32>
    %cst_174 = arith.constant dense<0.000000e+00> : vector<256x128xf32>
    %203 = tpu.matmul %200, %202, %cst_174 {dimension_numbers = #tpu.dot_dimension_numbers<[1], [0], [0], [1], [0, 0, 1, 1], [], []>} : vector<256x32xf32>, vector<32x128xf32>, vector<256x128xf32> -> vector<256x128xf32>
    %204 = arith.addf %198, %203 : vector<256x128xf32>
    %c1_175 = arith.constant 1 : index
    %c0_176 = arith.constant 0 : index
    %c0_177 = arith.constant 0 : index
    %205 = vector.load %arg13[%c1_175, %c0_176, %c0_177] : memref<18x18x32xf32, #tpu.memory_space<vmem>>, vector<16x16x32xf32>
    %206 = vector.shape_cast %205 : vector<16x16x32xf32> to vector<256x32xf32>
    %c3_178 = arith.constant 3 : index
    %c0_179 = arith.constant 0 : index
    %c0_180 = arith.constant 0 : index
    %207 = vector.load %arg6[%c3_178, %c0_179, %c0_180] : memref<9x32x128xf32, #tpu.memory_space<vmem>>, vector<1x32x128xf32>
    %208 = vector.shape_cast %207 : vector<1x32x128xf32> to vector<32x128xf32>
    %cst_181 = arith.constant dense<0.000000e+00> : vector<256x128xf32>
    %209 = tpu.matmul %206, %208, %cst_181 {dimension_numbers = #tpu.dot_dimension_numbers<[1], [0], [0], [1], [0, 0, 1, 1], [], []>} : vector<256x32xf32>, vector<32x128xf32>, vector<256x128xf32> -> vector<256x128xf32>
    %210 = arith.addf %204, %209 : vector<256x128xf32>
    %c1_182 = arith.constant 1 : index
    %c0_183 = arith.constant 0 : index
    %c0_184 = arith.constant 0 : index
    %211 = vector.load %arg14[%c1_182, %c0_183, %c0_184] : memref<18x18x32xf32, #tpu.memory_space<vmem>>, vector<16x16x32xf32>
    %212 = vector.shape_cast %211 : vector<16x16x32xf32> to vector<256x32xf32>
    %c3_185 = arith.constant 3 : index
    %c0_186 = arith.constant 0 : index
    %c0_187 = arith.constant 0 : index
    %213 = vector.load %arg7[%c3_185, %c0_186, %c0_187] : memref<9x32x128xf32, #tpu.memory_space<vmem>>, vector<1x32x128xf32>
    %214 = vector.shape_cast %213 : vector<1x32x128xf32> to vector<32x128xf32>
    %cst_188 = arith.constant dense<0.000000e+00> : vector<256x128xf32>
    %215 = tpu.matmul %212, %214, %cst_188 {dimension_numbers = #tpu.dot_dimension_numbers<[1], [0], [0], [1], [0, 0, 1, 1], [], []>} : vector<256x32xf32>, vector<32x128xf32>, vector<256x128xf32> -> vector<256x128xf32>
    %216 = arith.addf %210, %215 : vector<256x128xf32>
    %c1_189 = arith.constant 1 : index
    %c1_190 = arith.constant 1 : index
    %c0_191 = arith.constant 0 : index
    %217 = vector.load %arg13[%c1_189, %c1_190, %c0_191] : memref<18x18x32xf32, #tpu.memory_space<vmem>>, vector<16x16x32xf32>
    %218 = vector.shape_cast %217 : vector<16x16x32xf32> to vector<256x32xf32>
    %c4_192 = arith.constant 4 : index
    %c0_193 = arith.constant 0 : index
    %c0_194 = arith.constant 0 : index
    %219 = vector.load %arg6[%c4_192, %c0_193, %c0_194] : memref<9x32x128xf32, #tpu.memory_space<vmem>>, vector<1x32x128xf32>
    %220 = vector.shape_cast %219 : vector<1x32x128xf32> to vector<32x128xf32>
    %cst_195 = arith.constant dense<0.000000e+00> : vector<256x128xf32>
    %221 = tpu.matmul %218, %220, %cst_195 {dimension_numbers = #tpu.dot_dimension_numbers<[1], [0], [0], [1], [0, 0, 1, 1], [], []>} : vector<256x32xf32>, vector<32x128xf32>, vector<256x128xf32> -> vector<256x128xf32>
    %222 = arith.addf %216, %221 : vector<256x128xf32>
    %c1_196 = arith.constant 1 : index
    %c1_197 = arith.constant 1 : index
    %c0_198 = arith.constant 0 : index
    %223 = vector.load %arg14[%c1_196, %c1_197, %c0_198] : memref<18x18x32xf32, #tpu.memory_space<vmem>>, vector<16x16x32xf32>
    %224 = vector.shape_cast %223 : vector<16x16x32xf32> to vector<256x32xf32>
    %c4_199 = arith.constant 4 : index
    %c0_200 = arith.constant 0 : index
    %c0_201 = arith.constant 0 : index
    %225 = vector.load %arg7[%c4_199, %c0_200, %c0_201] : memref<9x32x128xf32, #tpu.memory_space<vmem>>, vector<1x32x128xf32>
    %226 = vector.shape_cast %225 : vector<1x32x128xf32> to vector<32x128xf32>
    %cst_202 = arith.constant dense<0.000000e+00> : vector<256x128xf32>
    %227 = tpu.matmul %224, %226, %cst_202 {dimension_numbers = #tpu.dot_dimension_numbers<[1], [0], [0], [1], [0, 0, 1, 1], [], []>} : vector<256x32xf32>, vector<32x128xf32>, vector<256x128xf32> -> vector<256x128xf32>
    %228 = arith.addf %222, %227 : vector<256x128xf32>
    %c1_203 = arith.constant 1 : index
    %c2_204 = arith.constant 2 : index
    %c0_205 = arith.constant 0 : index
    %229 = vector.load %arg13[%c1_203, %c2_204, %c0_205] : memref<18x18x32xf32, #tpu.memory_space<vmem>>, vector<16x16x32xf32>
    %230 = vector.shape_cast %229 : vector<16x16x32xf32> to vector<256x32xf32>
    %c5_206 = arith.constant 5 : index
    %c0_207 = arith.constant 0 : index
    %c0_208 = arith.constant 0 : index
    %231 = vector.load %arg6[%c5_206, %c0_207, %c0_208] : memref<9x32x128xf32, #tpu.memory_space<vmem>>, vector<1x32x128xf32>
    %232 = vector.shape_cast %231 : vector<1x32x128xf32> to vector<32x128xf32>
    %cst_209 = arith.constant dense<0.000000e+00> : vector<256x128xf32>
    %233 = tpu.matmul %230, %232, %cst_209 {dimension_numbers = #tpu.dot_dimension_numbers<[1], [0], [0], [1], [0, 0, 1, 1], [], []>} : vector<256x32xf32>, vector<32x128xf32>, vector<256x128xf32> -> vector<256x128xf32>
    %234 = arith.addf %228, %233 : vector<256x128xf32>
    %c1_210 = arith.constant 1 : index
    %c2_211 = arith.constant 2 : index
    %c0_212 = arith.constant 0 : index
    %235 = vector.load %arg14[%c1_210, %c2_211, %c0_212] : memref<18x18x32xf32, #tpu.memory_space<vmem>>, vector<16x16x32xf32>
    %236 = vector.shape_cast %235 : vector<16x16x32xf32> to vector<256x32xf32>
    %c5_213 = arith.constant 5 : index
    %c0_214 = arith.constant 0 : index
    %c0_215 = arith.constant 0 : index
    %237 = vector.load %arg7[%c5_213, %c0_214, %c0_215] : memref<9x32x128xf32, #tpu.memory_space<vmem>>, vector<1x32x128xf32>
    %238 = vector.shape_cast %237 : vector<1x32x128xf32> to vector<32x128xf32>
    %cst_216 = arith.constant dense<0.000000e+00> : vector<256x128xf32>
    %239 = tpu.matmul %236, %238, %cst_216 {dimension_numbers = #tpu.dot_dimension_numbers<[1], [0], [0], [1], [0, 0, 1, 1], [], []>} : vector<256x32xf32>, vector<32x128xf32>, vector<256x128xf32> -> vector<256x128xf32>
    %240 = arith.addf %234, %239 : vector<256x128xf32>
    %c2_217 = arith.constant 2 : index
    %c0_218 = arith.constant 0 : index
    %c0_219 = arith.constant 0 : index
    %241 = vector.load %arg13[%c2_217, %c0_218, %c0_219] : memref<18x18x32xf32, #tpu.memory_space<vmem>>, vector<16x16x32xf32>
    %242 = vector.shape_cast %241 : vector<16x16x32xf32> to vector<256x32xf32>
    %c6_220 = arith.constant 6 : index
    %c0_221 = arith.constant 0 : index
    %c0_222 = arith.constant 0 : index
    %243 = vector.load %arg6[%c6_220, %c0_221, %c0_222] : memref<9x32x128xf32, #tpu.memory_space<vmem>>, vector<1x32x128xf32>
    %244 = vector.shape_cast %243 : vector<1x32x128xf32> to vector<32x128xf32>
    %cst_223 = arith.constant dense<0.000000e+00> : vector<256x128xf32>
    %245 = tpu.matmul %242, %244, %cst_223 {dimension_numbers = #tpu.dot_dimension_numbers<[1], [0], [0], [1], [0, 0, 1, 1], [], []>} : vector<256x32xf32>, vector<32x128xf32>, vector<256x128xf32> -> vector<256x128xf32>
    %246 = arith.addf %240, %245 : vector<256x128xf32>
    %c2_224 = arith.constant 2 : index
    %c0_225 = arith.constant 0 : index
    %c0_226 = arith.constant 0 : index
    %247 = vector.load %arg14[%c2_224, %c0_225, %c0_226] : memref<18x18x32xf32, #tpu.memory_space<vmem>>, vector<16x16x32xf32>
    %248 = vector.shape_cast %247 : vector<16x16x32xf32> to vector<256x32xf32>
    %c6_227 = arith.constant 6 : index
    %c0_228 = arith.constant 0 : index
    %c0_229 = arith.constant 0 : index
    %249 = vector.load %arg7[%c6_227, %c0_228, %c0_229] : memref<9x32x128xf32, #tpu.memory_space<vmem>>, vector<1x32x128xf32>
    %250 = vector.shape_cast %249 : vector<1x32x128xf32> to vector<32x128xf32>
    %cst_230 = arith.constant dense<0.000000e+00> : vector<256x128xf32>
    %251 = tpu.matmul %248, %250, %cst_230 {dimension_numbers = #tpu.dot_dimension_numbers<[1], [0], [0], [1], [0, 0, 1, 1], [], []>} : vector<256x32xf32>, vector<32x128xf32>, vector<256x128xf32> -> vector<256x128xf32>
    %252 = arith.addf %246, %251 : vector<256x128xf32>
    %c2_231 = arith.constant 2 : index
    %c1_232 = arith.constant 1 : index
    %c0_233 = arith.constant 0 : index
    %253 = vector.load %arg13[%c2_231, %c1_232, %c0_233] : memref<18x18x32xf32, #tpu.memory_space<vmem>>, vector<16x16x32xf32>
    %254 = vector.shape_cast %253 : vector<16x16x32xf32> to vector<256x32xf32>
    %c7_234 = arith.constant 7 : index
    %c0_235 = arith.constant 0 : index
    %c0_236 = arith.constant 0 : index
    %255 = vector.load %arg6[%c7_234, %c0_235, %c0_236] : memref<9x32x128xf32, #tpu.memory_space<vmem>>, vector<1x32x128xf32>
    %256 = vector.shape_cast %255 : vector<1x32x128xf32> to vector<32x128xf32>
    %cst_237 = arith.constant dense<0.000000e+00> : vector<256x128xf32>
    %257 = tpu.matmul %254, %256, %cst_237 {dimension_numbers = #tpu.dot_dimension_numbers<[1], [0], [0], [1], [0, 0, 1, 1], [], []>} : vector<256x32xf32>, vector<32x128xf32>, vector<256x128xf32> -> vector<256x128xf32>
    %258 = arith.addf %252, %257 : vector<256x128xf32>
    %c2_238 = arith.constant 2 : index
    %c1_239 = arith.constant 1 : index
    %c0_240 = arith.constant 0 : index
    %259 = vector.load %arg14[%c2_238, %c1_239, %c0_240] : memref<18x18x32xf32, #tpu.memory_space<vmem>>, vector<16x16x32xf32>
    %260 = vector.shape_cast %259 : vector<16x16x32xf32> to vector<256x32xf32>
    %c7_241 = arith.constant 7 : index
    %c0_242 = arith.constant 0 : index
    %c0_243 = arith.constant 0 : index
    %261 = vector.load %arg7[%c7_241, %c0_242, %c0_243] : memref<9x32x128xf32, #tpu.memory_space<vmem>>, vector<1x32x128xf32>
    %262 = vector.shape_cast %261 : vector<1x32x128xf32> to vector<32x128xf32>
    %cst_244 = arith.constant dense<0.000000e+00> : vector<256x128xf32>
    %263 = tpu.matmul %260, %262, %cst_244 {dimension_numbers = #tpu.dot_dimension_numbers<[1], [0], [0], [1], [0, 0, 1, 1], [], []>} : vector<256x32xf32>, vector<32x128xf32>, vector<256x128xf32> -> vector<256x128xf32>
    %264 = arith.addf %258, %263 : vector<256x128xf32>
    %c2_245 = arith.constant 2 : index
    %c2_246 = arith.constant 2 : index
    %c0_247 = arith.constant 0 : index
    %265 = vector.load %arg13[%c2_245, %c2_246, %c0_247] : memref<18x18x32xf32, #tpu.memory_space<vmem>>, vector<16x16x32xf32>
    %266 = vector.shape_cast %265 : vector<16x16x32xf32> to vector<256x32xf32>
    %c8_248 = arith.constant 8 : index
    %c0_249 = arith.constant 0 : index
    %c0_250 = arith.constant 0 : index
    %267 = vector.load %arg6[%c8_248, %c0_249, %c0_250] : memref<9x32x128xf32, #tpu.memory_space<vmem>>, vector<1x32x128xf32>
    %268 = vector.shape_cast %267 : vector<1x32x128xf32> to vector<32x128xf32>
    %cst_251 = arith.constant dense<0.000000e+00> : vector<256x128xf32>
    %269 = tpu.matmul %266, %268, %cst_251 {dimension_numbers = #tpu.dot_dimension_numbers<[1], [0], [0], [1], [0, 0, 1, 1], [], []>} : vector<256x32xf32>, vector<32x128xf32>, vector<256x128xf32> -> vector<256x128xf32>
    %270 = arith.addf %264, %269 : vector<256x128xf32>
    %c2_252 = arith.constant 2 : index
    %c2_253 = arith.constant 2 : index
    %c0_254 = arith.constant 0 : index
    %271 = vector.load %arg14[%c2_252, %c2_253, %c0_254] : memref<18x18x32xf32, #tpu.memory_space<vmem>>, vector<16x16x32xf32>
    %272 = vector.shape_cast %271 : vector<16x16x32xf32> to vector<256x32xf32>
    %c8_255 = arith.constant 8 : index
    %c0_256 = arith.constant 0 : index
    %c0_257 = arith.constant 0 : index
    %273 = vector.load %arg7[%c8_255, %c0_256, %c0_257] : memref<9x32x128xf32, #tpu.memory_space<vmem>>, vector<1x32x128xf32>
    %274 = vector.shape_cast %273 : vector<1x32x128xf32> to vector<32x128xf32>
    %cst_258 = arith.constant dense<0.000000e+00> : vector<256x128xf32>
    %275 = tpu.matmul %272, %274, %cst_258 {dimension_numbers = #tpu.dot_dimension_numbers<[1], [0], [0], [1], [0, 0, 1, 1], [], []>} : vector<256x32xf32>, vector<32x128xf32>, vector<256x128xf32> -> vector<256x128xf32>
    %276 = arith.addf %270, %275 : vector<256x128xf32>
    %c0_259 = arith.constant 0 : index
    %c0_260 = arith.constant 0 : index
    %277 = vector.load %arg8[%c0_259, %c0_260] : memref<1x128xf32, #tpu.memory_space<vmem>>, vector<1x128xf32>
    %278 = vector.broadcast %277 : vector<1x128xf32> to vector<256x128xf32>
    %279 = arith.addf %276, %278 : vector<256x128xf32>
    %c0_261 = arith.constant 0 : index
    %c0_262 = arith.constant 0 : index
    %280 = vector.load %arg16[%c0_261, %c0_262] : memref<256x32xf32, #tpu.memory_space<vmem>>, vector<256x32xf32>
    %281 = vector.broadcast %11 : vector<1x128xf32> to vector<256x128xf32>
    %282 = arith.mulf %279, %281 : vector<256x128xf32>
    %283 = math.tanh %282 : vector<256x128xf32>
    %284 = vector.broadcast %14 : vector<1x128xf32> to vector<256x128xf32>
    %285 = arith.mulf %283, %284 : vector<256x128xf32>
    %286 = vector.broadcast %17 : vector<1x128xf32> to vector<256x128xf32>
    %287 = arith.addf %285, %286 : vector<256x128xf32>
    %288 = vector.extract_strided_slice %287 {offsets = [0, 0], sizes = [256, 32], strides = [1, 1]} : vector<256x128xf32> to vector<256x32xf32>
    %289 = vector.extract_strided_slice %287 {offsets = [0, 32], sizes = [256, 32], strides = [1, 1]} : vector<256x128xf32> to vector<256x32xf32>
    %290 = vector.extract_strided_slice %287 {offsets = [0, 64], sizes = [256, 32], strides = [1, 1]} : vector<256x128xf32> to vector<256x32xf32>
    %291 = vector.extract_strided_slice %287 {offsets = [0, 96], sizes = [256, 32], strides = [1, 1]} : vector<256x128xf32> to vector<256x32xf32>
    %292 = arith.mulf %289, %280 : vector<256x32xf32>
    %293 = arith.mulf %288, %291 : vector<256x32xf32>
    %294 = arith.addf %292, %293 : vector<256x32xf32>
    %295 = math.tanh %294 : vector<256x32xf32>
    %296 = arith.mulf %290, %295 : vector<256x32xf32>
    %c0_263 = arith.constant 0 : index
    %c0_264 = arith.constant 0 : index
    %297 = vector.load %arg16[%c0_263, %c0_264] : memref<256x32xf32, #tpu.memory_space<vmem>>, vector<256x32xf32>
    tpu.vector_store %arg16[%c0_263, %c0_264], %294 {strides = array<i32>} : memref<256x32xf32, #tpu.memory_space<vmem>>, vector<256x32xf32>,
    %298 = vector.shape_cast %296 : vector<256x32xf32> to vector<16x16x32xf32>
    %c1_265 = arith.constant 1 : index
    %c1_266 = arith.constant 1 : index
    %c0_267 = arith.constant 0 : index
    %299 = vector.load %arg14[%c1_265, %c1_266, %c0_267] : memref<18x18x32xf32, #tpu.memory_space<vmem>>, vector<16x16x32xf32>
    tpu.vector_store %arg14[%c1_265, %c1_266, %c0_267], %298 {strides = array<i32>} : memref<18x18x32xf32, #tpu.memory_space<vmem>>, vector<16x16x32xf32>,
    %c3_i32 = arith.constant 3 : i32
    %300 = arith.cmpi eq, %arg1, %c3_i32 : i32
    %301 = arith.extui %300 : i1 to i32
    %c0_i32_268 = arith.constant 0 : i32
    %302 = arith.cmpi ne, %301, %c0_i32_268 : i32
    scf.if %302 {
      %c0_269 = arith.constant 0 : index
      %c0_270 = arith.constant 0 : index
      %303 = vector.load %arg9[%c0_269, %c0_270] : memref<1x32xf32, #tpu.memory_space<vmem>>, vector<1x32xf32>
      %304 = vector.broadcast %303 : vector<1x32xf32> to vector<256x32xf32>
      %305 = arith.mulf %296, %304 : vector<256x32xf32>
      %cst_271 = arith.constant dense<0.000000e+00> : vector<256xf32>
      %306 = vector.multi_reduction <add>, %305, %cst_271 [1] : vector<256x32xf32> to vector<256xf32>
      %307 = vector.shape_cast %306 : vector<256xf32> to vector<256x1xf32>
      %c0_272 = arith.constant 0 : index
      %c0_273 = arith.constant 0 : index
      %308 = vector.load %arg10[%c0_272, %c0_273] : memref<1x1xf32, #tpu.memory_space<vmem>>, vector<1x1xf32>
      %309 = vector.broadcast %308 : vector<1x1xf32> to vector<256x1xf32>
      %310 = arith.addf %307, %309 : vector<256x1xf32>
      %cst_274 = arith.constant 0.000000e+00 : f32
      %311 = vector.broadcast %cst_274 : f32 to vector<256x1xf32>
      %312 = arith.maximumf %310, %311 : vector<256x1xf32>
      %313 = vector.shape_cast %312 : vector<256x1xf32> to vector<1x256x1xf32>
      %c0_275 = arith.constant 0 : index
      %c0_276 = arith.constant 0 : index
      %c0_277 = arith.constant 0 : index
      %314 = vector.load %arg11[%c0_275, %c0_276, %c0_277] : memref<1x256x1xf32, #tpu.memory_space<vmem>>, vector<1x256x1xf32>
      tpu.vector_store %arg11[%c0_275, %c0_276, %c0_277], %313 {strides = array<i32>} : memref<1x256x1xf32, #tpu.memory_space<vmem>>, vector<1x256x1xf32>,
    } else {
    }
    return
  }
  func.func @transform_0(%arg0: i32, %arg1: i32) -> (i32, i32, i32, i32, i32) {
    %c0_i32 = arith.constant 0 : i32
    %c0_i32_0 = arith.constant 0 : i32
    %c0_i32_1 = arith.constant 0 : i32
    %c0_i32_2 = arith.constant 0 : i32
    return %arg0, %arg1, %c0_i32, %c0_i32_0, %c0_i32_1 : i32, i32, i32, i32, i32
  }
  func.func @transform_1(%arg0: i32, %arg1: i32) -> (i32, i32, i32) {
    %c0_i32 = arith.constant 0 : i32
    %c0_i32_0 = arith.constant 0 : i32
    %c0_i32_1 = arith.constant 0 : i32
    %c0_i32_2 = arith.constant 0 : i32
    return %c0_i32, %c0_i32_0, %c0_i32_1 : i32, i32, i32
  }
  func.func @transform_2(%arg0: i32, %arg1: i32) -> (i32, i32, i32) {
    %c0_i32 = arith.constant 0 : i32
    %c0_i32_0 = arith.constant 0 : i32
    %c0_i32_1 = arith.constant 0 : i32
    %c0_i32_2 = arith.constant 0 : i32
    return %c0_i32, %c0_i32_0, %c0_i32_1 : i32, i32, i32
  }
  func.func @transform_3(%arg0: i32, %arg1: i32) -> (i32, i32) {
    %c0_i32 = arith.constant 0 : i32
    %c0_i32_0 = arith.constant 0 : i32
    %c0_i32_1 = arith.constant 0 : i32
    return %c0_i32, %c0_i32_0 : i32, i32
  }
  func.func @transform_4(%arg0: i32, %arg1: i32) -> (i32, i32, i32) {
    %c0_i32 = arith.constant 0 : i32
    %c0_i32_0 = arith.constant 0 : i32
    %c0_i32_1 = arith.constant 0 : i32
    %c0_i32_2 = arith.constant 0 : i32
    return %c0_i32, %c0_i32_0, %c0_i32_1 : i32, i32, i32
  }
  func.func @transform_5(%arg0: i32, %arg1: i32) -> (i32, i32, i32) {
    %c0_i32 = arith.constant 0 : i32
    %c0_i32_0 = arith.constant 0 : i32
    %c0_i32_1 = arith.constant 0 : i32
    %c0_i32_2 = arith.constant 0 : i32
    return %c0_i32, %c0_i32_0, %c0_i32_1 : i32, i32, i32
  }
  func.func @transform_6(%arg0: i32, %arg1: i32) -> (i32, i32) {
    %c0_i32 = arith.constant 0 : i32
    %c0_i32_0 = arith.constant 0 : i32
    %c0_i32_1 = arith.constant 0 : i32
    return %c0_i32, %c0_i32_0 : i32, i32
  }
  func.func @transform_7(%arg0: i32, %arg1: i32) -> (i32, i32) {
    %c0_i32 = arith.constant 0 : i32
    %c0_i32_0 = arith.constant 0 : i32
    %c0_i32_1 = arith.constant 0 : i32
    return %c0_i32, %c0_i32_0 : i32, i32
  }
  func.func @transform_8(%arg0: i32, %arg1: i32) -> (i32, i32) {
    %c0_i32 = arith.constant 0 : i32
    %c0_i32_0 = arith.constant 0 : i32
    %c0_i32_1 = arith.constant 0 : i32
    return %c0_i32, %c0_i32_0 : i32, i32
  }
  func.func @transform_9(%arg0: i32, %arg1: i32) -> (i32, i32, i32) {
    %c0_i32 = arith.constant 0 : i32
    %c0_i32_0 = arith.constant 0 : i32
    %c0_i32_1 = arith.constant 0 : i32
    return %arg0, %c0_i32, %c0_i32_0 : i32, i32, i32
  }
}

</mosaic_0001>

<llo_original>
// kernel: vehicle_grid_predictor.1
$region0: #{vehicle_grid_predictor.1}
  #allocation0 [shape = 'u32[]', space=smem, size = 0x4, offset = 0x4, fixed_abs, tag = 'smem constant byte address 0x4 - core index']
  #allocation1 [shape = 'u32[72,128]{1,0:T(1,128)}', space=vmem, size = 0x9000, scoped, tag = 'internal scratch']
  #allocation2 [shape = 'f32[18,18,1]{2,1,0:T(8,128)}', space=vmem, size = 0x36000, scoped, tag = 'scratch operand']
  #allocation3 [shape = 'f32[18,18,32]{2,1,0:T(8,128)}', space=vmem, size = 0x36000, scoped, tag = 'scratch operand']
  #allocation4 [shape = 'f32[18,18,32]{2,1,0:T(8,128)}', space=vmem, size = 0x36000, scoped, tag = 'scratch operand']
  #allocation5 [shape = 'f32[256,32]{1,0:T(8,128)}', space=vmem, size = 0x20000, scoped, tag = 'scratch operand']
  #allocation6 [shape = 'f32[256,32]{1,0:T(8,128)}', space=vmem, size = 0x20000, scoped, tag = 'scratch operand']
  #allocation7 [shape = 'f32[1,1]{1,0:T(1,128)S(1)}', space=vmem, size = 0x200, scoped, tag = 'scoped memory for vehicle_grid_predictor.1']
  %s0 = inlined_call_operand.vmem [shape: f32[2,4,16,16,1], index: 0, kind: input, shape index: {}]
  %s1 = inlined_call_operand.vmem [shape: f32[9,1,128], index: 1, kind: input, shape index: {}]
  %s2 = inlined_call_operand.vmem [shape: f32[9,32,128], index: 2, kind: input, shape index: {}]
  %s3 = inlined_call_operand.vmem [shape: f32[1,128], index: 3, kind: input, shape index: {}]
  %s4 = inlined_call_operand.vmem [shape: f32[9,32,128], index: 4, kind: input, shape index: {}]
  %s5 = inlined_call_operand.vmem [shape: f32[9,32,128], index: 5, kind: input, shape index: {}]
  %s6 = inlined_call_operand.vmem [shape: f32[1,128], index: 6, kind: input, shape index: {}]
  %s7 = inlined_call_operand.vmem [shape: f32[1,32], index: 7, kind: input, shape index: {}]
  %s8 = inlined_call_operand.<no memory space> [shape: f32[1,1], index: 8, kind: input, shape index: {}]
  %s9 = inlined_call_operand.vmem [shape: f32[2,256,1], index: 9, kind: output, shape index: {}]
  %s10 = sld [smem:[#allocation0]]
  $region77: #{vehicle_grid_predictor.1} parent=0
    _
  %s12 = ssub.s32 1, %s10
  %s13 = scalar_select 0, %s12, %s10
  %v14 = vstv %s8
  %15 = vst [vmem:[#allocation7] sm:$0x1] %v14
  loop: start=0, step=1, limit=10
  $region2: #{vehicle_grid_predictor.1} parent=0 // loop_pre_header
    _
  $region3: #{vehicle_grid_predictor.1} parent=0 // loop_header
    %s17 = sphi 0, %s21
    %p18 = scmp.ge.s32.totalorder %s17, 10
    %s24 = sphi 0, %s36
    %s25 = sphi 0, %s32
    %s26 = sphi 0, %s24
    %s27 = sphi 0, %s25
    %s28 = sphi 0, %s26
    %s29 = sphi 0, %s27
    %s41 = sphi 0, %s43
    %s44 = sphi 0, %s41
    %s45 = sphi 0, %s44
    %s61 = sphi 0, %s45
    %s65 = sphi 0, %s65
    %s67 = sphi 0, %s65
    %s68 = sphi 0, %s67
    %s82 = sphi 0, %s68
    %s86 = sphi 0, %s86
    %s88 = sphi 0, %s86
    %s89 = sphi 0, %s88
    %s103 = sphi 0, %s89
    %s107 = sphi 0, %s107
    %s109 = sphi 0, %s107
    %s110 = sphi 0, %s109
    %s124 = sphi 0, %s110
    %s128 = sphi 0, %s128
    %s130 = sphi 0, %s128
    %s131 = sphi 0, %s130
    %s145 = sphi 0, %s131
    %s149 = sphi 0, %s149
    %s151 = sphi 0, %s149
    %s152 = sphi 0, %s151
    %s166 = sphi 0, %s152
    %s170 = sphi 0, %s170
    %s172 = sphi 0, %s170
    %s173 = sphi 0, %s172
    %s187 = sphi 0, %s173
    %s191 = sphi 0, %s191
    %s193 = sphi 0, %s191
    %s194 = sphi 0, %s193
    %s208 = sphi 0, %s194
    %s212 = sphi 0, %s212
    %s214 = sphi 0, %s212
    %s215 = sphi 0, %s214
    %s229 = sphi 0, %s215
    %s235 = sphi 0, %s237
    %s238 = sphi 0, %s235
    %s239 = sphi 0, %s238
    %s255 = sphi 0, %s239
  $region4: #{vehicle_grid_predictor.1} parent=0 // loop_header_branch
    %20 = sbr.rel (%p18) target = $region8
  $region5: #{vehicle_grid_predictor.1} parent=0 // loop_body
    %s22 = ssub.s32 %s17, 1
    %s23 = ssub.s32 %s17, 2
    %s30 = sadd.s32 1, %s25
    %p31 = scmp.ge.s32.totalorder %s30, 4
    %s32 = scalar_select %p31, 0, %s30
    %s33 = sadd.s32 1, %s24
    %s34 = scalar_select %p31, %s33, %s24
    %p35 = scmp.ge.s32.totalorder %s34, 2
    %s36 = scalar_select %p35, 0, %s34
    %s37 = ssub.s32 %s24, %s36
    %s38 = ssub.s32 %s25, %s32
    %s39 = sor.u32 %s37, %s38
    %p40 = scmp.eq.s32.totalorder %s39, 0
    %s42 = sadd.s32 %s41, 1
    %s43 = scalar_select %p40, %s41, %s42
    %p46 = pneg %p40
    %p47 = scmp.eq.s32.totalorder %s17, 7
    %p48 = por %p46, %p47
    %p49 = scmp.ne.s32.totalorder %s41, %s44
    %p50 = scmp.eq.s32.totalorder %s17, 0
    %p51 = por %p49, %p50
    %p52 = scmp.ne.s32.totalorder %s41, %s44
    %p53 = scmp.eq.s32.totalorder %s22, 7
    %p54 = por %p52, %p53
    %p55 = scmp.ne.s32.totalorder %s44, %s45
    %p56 = scmp.eq.s32.totalorder %s22, 0
    %p57 = por %p55, %p56
    %p58 = scmp.ne.s32.totalorder %s44, %s45
    %p59 = scmp.eq.s32.totalorder %s23, 7
    %p60 = por %p58, %p59
    %p62 = scmp.ne.s32.totalorder %s45, %s61
    %p63 = scmp.eq.s32.totalorder %s23, 0
    %p64 = por %p62, %p63
    %s66 = sadd.s32 %s65, 1
    %p69 = scmp.eq.s32.totalorder %s17, 7
    %p70 = scmp.ne.s32.totalorder %s65, %s67
    %p71 = scmp.eq.s32.totalorder %s17, 0
    %p72 = por %p70, %p71
    %p73 = scmp.ne.s32.totalorder %s65, %s67
    %p74 = scmp.eq.s32.totalorder %s22, 7
    %p75 = por %p73, %p74
    %p76 = scmp.ne.s32.totalorder %s67, %s68
    %p77 = scmp.eq.s32.totalorder %s22, 0
    %p78 = por %p76, %p77
    %p79 = scmp.ne.s32.totalorder %s67, %s68
    %p80 = scmp.eq.s32.totalorder %s23, 7
    %p81 = por %p79, %p80
    %p83 = scmp.ne.s32.totalorder %s68, %s82
    %p84 = scmp.eq.s32.totalorder %s23, 0
    %p85 = por %p83, %p84
    %s87 = sadd.s32 %s86, 1
    %p90 = scmp.eq.s32.totalorder %s17, 7
    %p91 = scmp.ne.s32.totalorder %s86, %s88
    %p92 = scmp.eq.s32.totalorder %s17, 0
    %p93 = por %p91, %p92
    %p94 = scmp.ne.s32.totalorder %s86, %s88
    %p95 = scmp.eq.s32.totalorder %s22, 7
    %p96 = por %p94, %p95
    %p97 = scmp.ne.s32.totalorder %s88, %s89
    %p98 = scmp.eq.s32.totalorder %s22, 0
    %p99 = por %p97, %p98
    %p100 = scmp.ne.s32.totalorder %s88, %s89
    %p101 = scmp.eq.s32.totalorder %s23, 7
    %p102 = por %p100, %p101
    %p104 = scmp.ne.s32.totalorder %s89, %s103
    %p105 = scmp.eq.s32.totalorder %s23, 0
    %p106 = por %p104, %p105
    %s108 = sadd.s32 %s107, 1
    %p111 = scmp.eq.s32.totalorder %s17, 7
    %p112 = scmp.ne.s32.totalorder %s107, %s109
    %p113 = scmp.eq.s32.totalorder %s17, 0
    %p114 = por %p112, %p113
    %p115 = scmp.ne.s32.totalorder %s107, %s109
    %p116 = scmp.eq.s32.totalorder %s22, 7
    %p117 = por %p115, %p116
    %p118 = scmp.ne.s32.totalorder %s109, %s110
    %p119 = scmp.eq.s32.totalorder %s22, 0
    %p120 = por %p118, %p119
    %p121 = scmp.ne.s32.totalorder %s109, %s110
    %p122 = scmp.eq.s32.totalorder %s23, 7
    %p123 = por %p121, %p122
    %p125 = scmp.ne.s32.totalorder %s110, %s124
    %p126 = scmp.eq.s32.totalorder %s23, 0
    %p127 = por %p125, %p126
    %s129 = sadd.s32 %s128, 1
    %p132 = scmp.eq.s32.totalorder %s17, 7
    %p133 = scmp.ne.s32.totalorder %s128, %s130
    %p134 = scmp.eq.s32.totalorder %s17, 0
    %p135 = por %p133, %p134
    %p136 = scmp.ne.s32.totalorder %s128, %s130
    %p137 = scmp.eq.s32.totalorder %s22, 7
    %p138 = por %p136, %p137
    %p139 = scmp.ne.s32.totalorder %s130, %s131
    %p140 = scmp.eq.s32.totalorder %s22, 0
    %p141 = por %p139, %p140
    %p142 = scmp.ne.s32.totalorder %s130, %s131
    %p143 = scmp.eq.s32.totalorder %s23, 7
    %p144 = por %p142, %p143
    %p146 = scmp.ne.s32.totalorder %s131, %s145
    %p147 = scmp.eq.s32.totalorder %s23, 0
    %p148 = por %p146, %p147
    %s150 = sadd.s32 %s149, 1
    %p153 = scmp.eq.s32.totalorder %s17, 7
    %p154 = scmp.ne.s32.totalorder %s149, %s151
    %p155 = scmp.eq.s32.totalorder %s17, 0
    %p156 = por %p154, %p155
    %p157 = scmp.ne.s32.totalorder %s149, %s151
    %p158 = scmp.eq.s32.totalorder %s22, 7
    %p159 = por %p157, %p158
    %p160 = scmp.ne.s32.totalorder %s151, %s152
    %p161 = scmp.eq.s32.totalorder %s22, 0
    %p162 = por %p160, %p161
    %p163 = scmp.ne.s32.totalorder %s151, %s152
    %p164 = scmp.eq.s32.totalorder %s23, 7
    %p165 = por %p163, %p164
    %p167 = scmp.ne.s32.totalorder %s152, %s166
    %p168 = scmp.eq.s32.totalorder %s23, 0
    %p169 = por %p167, %p168
    %s171 = sadd.s32 %s170, 1
    %p174 = scmp.eq.s32.totalorder %s17, 7
    %p175 = scmp.ne.s32.totalorder %s170, %s172
    %p176 = scmp.eq.s32.totalorder %s17, 0
    %p177 = por %p175, %p176
    %p178 = scmp.ne.s32.totalorder %s170, %s172
    %p179 = scmp.eq.s32.totalorder %s22, 7
    %p180 = por %p178, %p179
    %p181 = scmp.ne.s32.totalorder %s172, %s173
    %p182 = scmp.eq.s32.totalorder %s22, 0
    %p183 = por %p181, %p182
    %p184 = scmp.ne.s32.totalorder %s172, %s173
    %p185 = scmp.eq.s32.totalorder %s23, 7
    %p186 = por %p184, %p185
    %p188 = scmp.ne.s32.totalorder %s173, %s187
    %p189 = scmp.eq.s32.totalorder %s23, 0
    %p190 = por %p188, %p189
    %s192 = sadd.s32 %s191, 1
    %p195 = scmp.eq.s32.totalorder %s17, 7
    %p196 = scmp.ne.s32.totalorder %s191, %s193
    %p197 = scmp.eq.s32.totalorder %s17, 0
    %p198 = por %p196, %p197
    %p199 = scmp.ne.s32.totalorder %s191, %s193
    %p200 = scmp.eq.s32.totalorder %s22, 7
    %p201 = por %p199, %p200
    %p202 = scmp.ne.s32.totalorder %s193, %s194
    %p203 = scmp.eq.s32.totalorder %s22, 0
    %p204 = por %p202, %p203
    %p205 = scmp.ne.s32.totalorder %s193, %s194
    %p206 = scmp.eq.s32.totalorder %s23, 7
    %p207 = por %p205, %p206
    %p209 = scmp.ne.s32.totalorder %s194, %s208
    %p210 = scmp.eq.s32.totalorder %s23, 0
    %p211 = por %p209, %p210
    %s213 = sadd.s32 %s212, 1
    %p216 = scmp.eq.s32.totalorder %s17, 7
    %p217 = scmp.ne.s32.totalorder %s212, %s214
    %p218 = scmp.eq.s32.totalorder %s17, 0
    %p219 = por %p217, %p218
    %p220 = scmp.ne.s32.totalorder %s212, %s214
    %p221 = scmp.eq.s32.totalorder %s22, 7
    %p222 = por %p220, %p221
    %p223 = scmp.ne.s32.totalorder %s214, %s215
    %p224 = scmp.eq.s32.totalorder %s22, 0
    %p225 = por %p223, %p224
    %p226 = scmp.ne.s32.totalorder %s214, %s215
    %p227 = scmp.eq.s32.totalorder %s23, 7
    %p228 = por %p226, %p227
    %p230 = scmp.ne.s32.totalorder %s215, %s229
    %p231 = scmp.eq.s32.totalorder %s23, 0
    %p232 = por %p230, %p231
    %s233 = ssub.s32 %s24, %s36
    %p234 = scmp.eq.s32.totalorder %s233, 0
    %s236 = sadd.s32 %s235, 1
    %s237 = scalar_select %p234, %s235, %s236
    %p240 = pneg %p234
    %p241 = scmp.eq.s32.totalorder %s17, 7
    %p242 = por %p240, %p241
    %p243 = scmp.ne.s32.totalorder %s235, %s238
    %p244 = scmp.eq.s32.totalorder %s17, 0
    %p245 = por %p243, %p244
    %p246 = scmp.ne.s32.totalorder %s235, %s238
    %p247 = scmp.eq.s32.totalorder %s22, 7
    %p248 = por %p246, %p247
    %p249 = scmp.ne.s32.totalorder %s238, %s239
    %p250 = scmp.eq.s32.totalorder %s22, 0
    %p251 = por %p249, %p250
    %p252 = scmp.ne.s32.totalorder %s238, %s239
    %p253 = scmp.eq.s32.totalorder %s23, 7
    %p254 = por %p252, %p253
    %p256 = scmp.ne.s32.totalorder %s239, %s255
    %p257 = scmp.eq.s32.totalorder %s23, 0
    %p258 = por %p256, %p257
    %p259 = scmp.le.s32.totalorder 1, %s17
    %p260 = scmp.lt.s32.totalorder %s17, 9
    %p261 = pnand %p259, %p260
    %p262 = pneg %p261
    // Predicated region
    $region9: #{vehicle_grid_predictor.1} parent=5 // pred_check
      _
    $region10: #{vehicle_grid_predictor.1} parent=5 // pred_check_branch
      %264 = sbr.rel (%p261) target = $region12
    $region11: #{vehicle_grid_predictor.1} parent=5 // pred_region
      %s265 = ssub.s32 %s17, 1
      // Predicated region
      $region13: #{vehicle_grid_predictor.1} parent=11 // pred_check
        %p266 = pneg %p78
      $region14: #{vehicle_grid_predictor.1} parent=11 // pred_check_branch
        %268 = sbr.rel (%p266) target = $region16
      $region15: #{vehicle_grid_predictor.1} parent=11 // pred_region
        _
      $region16: #{vehicle_grid_predictor.1} parent=11 // pred_fallthru
        _
      // Predicated region
      $region17: #{vehicle_grid_predictor.1} parent=11 // pred_check
        %p269 = pneg %p99
      $region18: #{vehicle_grid_predictor.1} parent=11 // pred_check_branch
        %271 = sbr.rel (%p269) target = $region20
      $region19: #{vehicle_grid_predictor.1} parent=11 // pred_region
        _
      $region20: #{vehicle_grid_predictor.1} parent=11 // pred_fallthru
        _
      // Predicated region
      $region21: #{vehicle_grid_predictor.1} parent=11 // pred_check
        %p272 = pneg %p120
      $region22: #{vehicle_grid_predictor.1} parent=11 // pred_check_branch
        %274 = sbr.rel (%p272) target = $region24
      $region23: #{vehicle_grid_predictor.1} parent=11 // pred_region
        _
      $region24: #{vehicle_grid_predictor.1} parent=11 // pred_fallthru
        _
      // Predicated region
      $region25: #{vehicle_grid_predictor.1} parent=11 // pred_check
        %p275 = pneg %p141
      $region26: #{vehicle_grid_predictor.1} parent=11 // pred_check_branch
        %277 = sbr.rel (%p275) target = $region28
      $region27: #{vehicle_grid_predictor.1} parent=11 // pred_region
        _
      $region28: #{vehicle_grid_predictor.1} parent=11 // pred_fallthru
        _
      // Predicated region
      $region29: #{vehicle_grid_predictor.1} parent=11 // pred_check
        %p278 = pneg %p162
      $region30: #{vehicle_grid_predictor.1} parent=11 // pred_check_branch
        %280 = sbr.rel (%p278) target = $region32
      $region31: #{vehicle_grid_predictor.1} parent=11 // pred_region
        _
      $region32: #{vehicle_grid_predictor.1} parent=11 // pred_fallthru
        _
      // Predicated region
      $region33: #{vehicle_grid_predictor.1} parent=11 // pred_check
        %p281 = pneg %p183
      $region34: #{vehicle_grid_predictor.1} parent=11 // pred_check_branch
        %283 = sbr.rel (%p281) target = $region36
      $region35: #{vehicle_grid_predictor.1} parent=11 // pred_region
        _
      $region36: #{vehicle_grid_predictor.1} parent=11 // pred_fallthru
        _
      // Predicated region
      $region37: #{vehicle_grid_predictor.1} parent=11 // pred_check
        %p284 = pneg %p204
      $region38: #{vehicle_grid_predictor.1} parent=11 // pred_check_branch
        %286 = sbr.rel (%p284) target = $region40
      $region39: #{vehicle_grid_predictor.1} parent=11 // pred_region
        _
      $region40: #{vehicle_grid_predictor.1} parent=11 // pred_fallthru
        _
      // Predicated region
      $region41: #{vehicle_grid_predictor.1} parent=11 // pred_check
        %p287 = pneg %p225
      $region42: #{vehicle_grid_predictor.1} parent=11 // pred_check_branch
        %289 = sbr.rel (%p287) target = $region44
      $region43: #{vehicle_grid_predictor.1} parent=11 // pred_region
        _
      $region44: #{vehicle_grid_predictor.1} parent=11 // pred_fallthru
        _
    $region12: #{vehicle_grid_predictor.1} parent=5 // pred_fallthru
      _
    %p290 = scmp.lt.s32.totalorder %s17, 8
    // Predicated region
    $region45: #{vehicle_grid_predictor.1} parent=5 // pred_check
      %p291 = pneg %p290
    $region46: #{vehicle_grid_predictor.1} parent=5 // pred_check_branch
      %293 = sbr.rel (%p291) target = $region48
    $region47: #{vehicle_grid_predictor.1} parent=5 // pred_region
      // Predicated region
      $region49: #{vehicle_grid_predictor.1} parent=47 // pred_check
        %p294 = pneg %p51
      $region50: #{vehicle_grid_predictor.1} parent=47 // pred_check_branch
        %296 = sbr.rel (%p294) target = $region52
      $region51: #{vehicle_grid_predictor.1} parent=47 // pred_region
        %p297 = scmp.lt.s32.totalorder %s24, 1
        %s298 = scalar_select %p297, %s24, 1
        %p299 = scmp.lt.s32.totalorder %s25, 3
        %s300 = scalar_select %p299, %s25, 3
        %s301 = smul.addr %s300, 32
        %s302 = smul.addr %s298, 128
        %s303 = sadd.s32 %s301, %s302
        %s304 = smul.addr %s303, 8
        %s305 = scalar_lea.vmem %s0, %s304
      $region52: #{vehicle_grid_predictor.1} parent=47 // pred_fallthru
        _
    $region48: #{vehicle_grid_predictor.1} parent=5 // pred_fallthru
      _
    %p306 = scmp.le.s32.totalorder 1, %s17
    %p307 = scmp.lt.s32.totalorder %s17, 9
    %p308 = pnand %p306, %p307
    %p309 = pneg %p308
    // Predicated region
    $region53: #{vehicle_grid_predictor.1} parent=5 // pred_check
      _
    $region54: #{vehicle_grid_predictor.1} parent=5 // pred_check_branch
      %311 = sbr.rel (%p308) target = $region56
    $region55: #{vehicle_grid_predictor.1} parent=5 // pred_region
      %s312 = ssub.s32 %s17, 1
      %p313 = scmp.lt.s32.totalorder %s26, 1
      %s314 = scalar_select %p313, %s26, 1
      %p315 = scmp.lt.s32.totalorder %s27, 3
      %s316 = scalar_select %p315, %s27, 3
      %s317 = smul.addr %s316, 32
      %s318 = smul.addr %s314, 128
      %s319 = sadd.s32 %s317, %s318
      %s320 = smul.addr %s319, 8
      %s321 = scalar_lea.vmem %s0, %s320
      %p322 = pneg %p57
      %p323 = pneg %p54
      %p324 = pneg %p78
      %p325 = pneg %p75
      %p326 = pneg %p99
      %p327 = pneg %p96
      %p328 = pneg %p120
      %p329 = pneg %p117
      %p330 = pneg %p141
      %p331 = pneg %p138
      %p332 = pneg %p162
      %p333 = pneg %p159
      %p334 = pneg %p183
      %p335 = pneg %p180
      %p336 = pneg %p204
      %p337 = pneg %p201
      %p338 = pneg %p225
      %p339 = pneg %p222
      %p340 = pneg %p251
      %p341 = pneg %p248
      %p342 = scmp.lt.s32.totalorder %s26, 1
      %s343 = scalar_select %p342, %s26, 1
      %s344 = smul.addr %s343, 32
      %s345 = smul.addr %s344, 8
      %s346 = scalar_lea.vmem %s9, %s345
      %p347 = scmp.lt.s32.totalorder %s26, 1
      %s348 = scalar_select %p347, %s26, 1
      %p349 = scmp.lt.s32.totalorder %s27, 3
      %s350 = scalar_select %p349, %s27, 3
      %s351 = smul.addr %s350, 32
      %s352 = smul.addr %s348, 128
      %s353 = sadd.s32 %s351, %s352
      %s354 = smul.addr %s353, 8
      %s355 = scalar_lea.vmem %s0, %s354
      %p356 = scmp.lt.s32.totalorder %s26, 1
      %s357 = scalar_select %p356, %s26, 1
      %s358 = smul.addr %s357, 32
      %s359 = smul.addr %s358, 8
      %s360 = scalar_lea.vmem %s9, %s359
      %p361 = scmp.eq.s32.totalorder %s27, 0
      // Predicated region
      $region57: #{vehicle_grid_predictor.1} parent=55 // pred_check
        %p362 = pneg %p361
      $region58: #{vehicle_grid_predictor.1} parent=55 // pred_check_branch
        %364 = sbr.rel (%p362) target = $region60
      $region59: #{vehicle_grid_predictor.1} parent=55 // pred_region
        %vm365 = vcmask 7168
        %366 = vst.msk [vmem:[#allocation2] sm:$0xff] %vm365, 0.0
        %367 = vst.msk [vmem:[#allocation2 + $0x8] sm:$0xff] %vm365, 0.0
        %vm368 = vcmask 1024
        %369 = vst.msk [vmem:[#allocation2 + $0x10] sm:$0x3] %vm368, 0.0
        %370 = vst.msk [vmem:[#allocation2 + $0x18] sm:$0xff] %vm365, 0.0
        %371 = vst.msk [vmem:[#allocation2 + $0x20] sm:$0xff] %vm365, 0.0
        %372 = vst.msk [vmem:[#allocation2 + $0x28] sm:$0x3] %vm368, 0.0
        %373 = vst.msk [vmem:[#allocation2 + $0x30] sm:$0xff] %vm365, 0.0
        %374 = vst.msk [vmem:[#allocation2 + $0x38] sm:$0xff] %vm365, 0.0
        %375 = vst.msk [vmem:[#allocation2 + $0x40] sm:$0x3] %vm368, 0.0
        %376 = vst.msk [vmem:[#allocation2 + $0x48] sm:$0xff] %vm365, 0.0
        %377 = vst.msk [vmem:[#allocation2 + $0x50] sm:$0xff] %vm365, 0.0
        %378 = vst.msk [vmem:[#allocation2 + $0x58] sm:$0x3] %vm368, 0.0
        %379 = vst.msk [vmem:[#allocation2 + $0x60] sm:$0xff] %vm365, 0.0
        %380 = vst.msk [vmem:[#allocation2 + $0x68] sm:$0xff] %vm365, 0.0
        %381 = vst.msk [vmem:[#allocation2 + $0x70] sm:$0x3] %vm368, 0.0
        %382 = vst.msk [vmem:[#allocation2 + $0x78] sm:$0xff] %vm365, 0.0
        %383 = vst.msk [vmem:[#allocation2 + $0x80] sm:$0xff] %vm365, 0.0
        %384 = vst.msk [vmem:[#allocation2 + $0x88] sm:$0x3] %vm368, 0.0
        %385 = vst.msk [vmem:[#allocation2 + $0x90] sm:$0xff] %vm365, 0.0
        %386 = vst.msk [vmem:[#allocation2 + $0x98] sm:$0xff] %vm365, 0.0
        %387 = vst.msk [vmem:[#allocation2 + $0xa0] sm:$0x3] %vm368, 0.0
        %388 = vst.msk [vmem:[#allocation2 + $0xa8] sm:$0xff] %vm365, 0.0
        %389 = vst.msk [vmem:[#allocation2 + $0xb0] sm:$0xff] %vm365, 0.0
        %390 = vst.msk [vmem:[#allocation2 + $0xb8] sm:$0x3] %vm368, 0.0
        %391 = vst.msk [vmem:[#allocation2 + $0xc0] sm:$0xff] %vm365, 0.0
        %392 = vst.msk [vmem:[#allocation2 + $0xc8] sm:$0xff] %vm365, 0.0
        %393 = vst.msk [vmem:[#allocation2 + $0xd0] sm:$0x3] %vm368, 0.0
        %394 = vst.msk [vmem:[#allocation2 + $0xd8] sm:$0xff] %vm365, 0.0
        %395 = vst.msk [vmem:[#allocation2 + $0xe0] sm:$0xff] %vm365, 0.0
        %396 = vst.msk [vmem:[#allocation2 + $0xe8] sm:$0x3] %vm368, 0.0
        %397 = vst.msk [vmem:[#allocation2 + $0xf0] sm:$0xff] %vm365, 0.0
        %398 = vst.msk [vmem:[#allocation2 + $0xf8] sm:$0xff] %vm365, 0.0
        %399 = vst.msk [vmem:[#allocation2 + $0x100] sm:$0x3] %vm368, 0.0
        %400 = vst.msk [vmem:[#allocation2 + $0x108] sm:$0xff] %vm365, 0.0
        %401 = vst.msk [vmem:[#allocation2 + $0x110] sm:$0xff] %vm365, 0.0
        %402 = vst.msk [vmem:[#allocation2 + $0x118] sm:$0x3] %vm368, 0.0
        %403 = vst.msk [vmem:[#allocation2 + $0x120] sm:$0xff] %vm365, 0.0
        %404 = vst.msk [vmem:[#allocation2 + $0x128] sm:$0xff] %vm365, 0.0
        %405 = vst.msk [vmem:[#allocation2 + $0x130] sm:$0x3] %vm368, 0.0
        %406 = vst.msk [vmem:[#allocation2 + $0x138] sm:$0xff] %vm365, 0.0
        %407 = vst.msk [vmem:[#allocation2 + $0x140] sm:$0xff] %vm365, 0.0
        %408 = vst.msk [vmem:[#allocation2 + $0x148] sm:$0x3] %vm368, 0.0
        %409 = vst.msk [vmem:[#allocation2 + $0x150] sm:$0xff] %vm365, 0.0
        %410 = vst.msk [vmem:[#allocation2 + $0x158] sm:$0xff] %vm365, 0.0
        %411 = vst.msk [vmem:[#allocation2 + $0x160] sm:$0x3] %vm368, 0.0
        %412 = vst.msk [vmem:[#allocation2 + $0x168] sm:$0xff] %vm365, 0.0
        %413 = vst.msk [vmem:[#allocation2 + $0x170] sm:$0xff] %vm365, 0.0
        %414 = vst.msk [vmem:[#allocation2 + $0x178] sm:$0x3] %vm368, 0.0
        %415 = vst.msk [vmem:[#allocation2 + $0x180] sm:$0xff] %vm365, 0.0
        %416 = vst.msk [vmem:[#allocation2 + $0x188] sm:$0xff] %vm365, 0.0
        %417 = vst.msk [vmem:[#allocation2 + $0x190] sm:$0x3] %vm368, 0.0
        %418 = vst.msk [vmem:[#allocation2 + $0x198] sm:$0xff] %vm365, 0.0
        %419 = vst.msk [vmem:[#allocation2 + $0x1a0] sm:$0xff] %vm365, 0.0
        %420 = vst.msk [vmem:[#allocation2 + $0x1a8] sm:$0x3] %vm368, 0.0
        %vm421 = vcmask 261120
        %422 = vst.msk [vmem:[#allocation3] sm:$0xff] %vm421, 0.0
        %423 = vst.msk [vmem:[#allocation3 + $0x8] sm:$0xff] %vm421, 0.0
        %vm424 = vcmask 254976
        %425 = vst.msk [vmem:[#allocation3 + $0x10] sm:$0x3] %vm424, 0.0
        %426 = vst.msk [vmem:[#allocation3 + $0x18] sm:$0xff] %vm421, 0.0
        %427 = vst.msk [vmem:[#allocation3 + $0x20] sm:$0xff] %vm421, 0.0
        %428 = vst.msk [vmem:[#allocation3 + $0x28] sm:$0x3] %vm424, 0.0
        %429 = vst.msk [vmem:[#allocation3 + $0x30] sm:$0xff] %vm421, 0.0
        %430 = vst.msk [vmem:[#allocation3 + $0x38] sm:$0xff] %vm421, 0.0
        %431 = vst.msk [vmem:[#allocation3 + $0x40] sm:$0x3] %vm424, 0.0
        %432 = vst.msk [vmem:[#allocation3 + $0x48] sm:$0xff] %vm421, 0.0
        %433 = vst.msk [vmem:[#allocation3 + $0x50] sm:$0xff] %vm421, 0.0
        %434 = vst.msk [vmem:[#allocation3 + $0x58] sm:$0x3] %vm424, 0.0
        %435 = vst.msk [vmem:[#allocation3 + $0x60] sm:$0xff] %vm421, 0.0
        %436 = vst.msk [vmem:[#allocation3 + $0x68] sm:$0xff] %vm421, 0.0
        %437 = vst.msk [vmem:[#allocation3 + $0x70] sm:$0x3] %vm424, 0.0
        %438 = vst.msk [vmem:[#allocation3 + $0x78] sm:$0xff] %vm421, 0.0
        %439 = vst.msk [vmem:[#allocation3 + $0x80] sm:$0xff] %vm421, 0.0
        %440 = vst.msk [vmem:[#allocation3 + $0x88] sm:$0x3] %vm424, 0.0
        %441 = vst.msk [vmem:[#allocation3 + $0x90] sm:$0xff] %vm421, 0.0
        %442 = vst.msk [vmem:[#allocation3 + $0x98] sm:$0xff] %vm421, 0.0
        %443 = vst.msk [vmem:[#allocation3 + $0xa0] sm:$0x3] %vm424, 0.0
        %444 = vst.msk [vmem:[#allocation3 + $0xa8] sm:$0xff] %vm421, 0.0
        %445 = vst.msk [vmem:[#allocation3 + $0xb0] sm:$0xff] %vm421, 0.0
        %446 = vst.msk [vmem:[#allocation3 + $0xb8] sm:$0x3] %vm424, 0.0
        %447 = vst.msk [vmem:[#allocation3 + $0xc0] sm:$0xff] %vm421, 0.0
        %448 = vst.msk [vmem:[#allocation3 + $0xc8] sm:$0xff] %vm421, 0.0
        %449 = vst.msk [vmem:[#allocation3 + $0xd0] sm:$0x3] %vm424, 0.0
        %450 = vst.msk [vmem:[#allocation3 + $0xd8] sm:$0xff] %vm421, 0.0
        %451 = vst.msk [vmem:[#allocation3 + $0xe0] sm:$0xff] %vm421, 0.0
        %452 = vst.msk [vmem:[#allocation3 + $0xe8] sm:$0x3] %vm424, 0.0
        %453 = vst.msk [vmem:[#allocation3 + $0xf0] sm:$0xff] %vm421, 0.0
        %454 = vst.msk [vmem:[#allocation3 + $0xf8] sm:$0xff] %vm421, 0.0
        %455 = vst.msk [vmem:[#allocation3 + $0x100] sm:$0x3] %vm424, 0.0
        %456 = vst.msk [vmem:[#allocation3 + $0x108] sm:$0xff] %vm421, 0.0
        %457 = vst.msk [vmem:[#allocation3 + $0x110] sm:$0xff] %vm421, 0.0
        %458 = vst.msk [vmem:[#allocation3 + $0x118] sm:$0x3] %vm424, 0.0
        %459 = vst.msk [vmem:[#allocation3 + $0x120] sm:$0xff] %vm421, 0.0
        %460 = vst.msk [vmem:[#allocation3 + $0x128] sm:$0xff] %vm421, 0.0
        %461 = vst.msk [vmem:[#allocation3 + $0x130] sm:$0x3] %vm424, 0.0
        %462 = vst.msk [vmem:[#allocation3 + $0x138] sm:$0xff] %vm421, 0.0
        %463 = vst.msk [vmem:[#allocation3 + $0x140] sm:$0xff] %vm421, 0.0
        %464 = vst.msk [vmem:[#allocation3 + $0x148] sm:$0x3] %vm424, 0.0
        %465 = vst.msk [vmem:[#allocation3 + $0x150] sm:$0xff] %vm421, 0.0
        %466 = vst.msk [vmem:[#allocation3 + $0x158] sm:$0xff] %vm421, 0.0
        %467 = vst.msk [vmem:[#allocation3 + $0x160] sm:$0x3] %vm424, 0.0
        %468 = vst.msk [vmem:[#allocation3 + $0x168] sm:$0xff] %vm421, 0.0
        %469 = vst.msk [vmem:[#allocation3 + $0x170] sm:$0xff] %vm421, 0.0
        %470 = vst.msk [vmem:[#allocation3 + $0x178] sm:$0x3] %vm424, 0.0
        %471 = vst.msk [vmem:[#allocation3 + $0x180] sm:$0xff] %vm421, 0.0
        %472 = vst.msk [vmem:[#allocation3 + $0x188] sm:$0xff] %vm421, 0.0
        %473 = vst.msk [vmem:[#allocation3 + $0x190] sm:$0x3] %vm424, 0.0
        %474 = vst.msk [vmem:[#allocation3 + $0x198] sm:$0xff] %vm421, 0.0
        %475 = vst.msk [vmem:[#allocation3 + $0x1a0] sm:$0xff] %vm421, 0.0
        %476 = vst.msk [vmem:[#allocation3 + $0x1a8] sm:$0x3] %vm424, 0.0
        %477 = vst.msk [vmem:[#allocation4] sm:$0xff] %vm421, 0.0
        %478 = vst.msk [vmem:[#allocation4 + $0x8] sm:$0xff] %vm421, 0.0
        %479 = vst.msk [vmem:[#allocation4 + $0x10] sm:$0x3] %vm424, 0.0
        %480 = vst.msk [vmem:[#allocation4 + $0x18] sm:$0xff] %vm421, 0.0
        %481 = vst.msk [vmem:[#allocation4 + $0x20] sm:$0xff] %vm421, 0.0
        %482 = vst.msk [vmem:[#allocation4 + $0x28] sm:$0x3] %vm424, 0.0
        %483 = vst.msk [vmem:[#allocation4 + $0x30] sm:$0xff] %vm421, 0.0
        %484 = vst.msk [vmem:[#allocation4 + $0x38] sm:$0xff] %vm421, 0.0
        %485 = vst.msk [vmem:[#allocation4 + $0x40] sm:$0x3] %vm424, 0.0
        %486 = vst.msk [vmem:[#allocation4 + $0x48] sm:$0xff] %vm421, 0.0
        %487 = vst.msk [vmem:[#allocation4 + $0x50] sm:$0xff] %vm421, 0.0
        %488 = vst.msk [vmem:[#allocation4 + $0x58] sm:$0x3] %vm424, 0.0
        %489 = vst.msk [vmem:[#allocation4 + $0x60] sm:$0xff] %vm421, 0.0
        %490 = vst.msk [vmem:[#allocation4 + $0x68] sm:$0xff] %vm421, 0.0
        %491 = vst.msk [vmem:[#allocation4 + $0x70] sm:$0x3] %vm424, 0.0
        %492 = vst.msk [vmem:[#allocation4 + $0x78] sm:$0xff] %vm421, 0.0
        %493 = vst.msk [vmem:[#allocation4 + $0x80] sm:$0xff] %vm421, 0.0
        %494 = vst.msk [vmem:[#allocation4 + $0x88] sm:$0x3] %vm424, 0.0
        %495 = vst.msk [vmem:[#allocation4 + $0x90] sm:$0xff] %vm421, 0.0
        %496 = vst.msk [vmem:[#allocation4 + $0x98] sm:$0xff] %vm421, 0.0
        %497 = vst.msk [vmem:[#allocation4 + $0xa0] sm:$0x3] %vm424, 0.0
        %498 = vst.msk [vmem:[#allocation4 + $0xa8] sm:$0xff] %vm421, 0.0
        %499 = vst.msk [vmem:[#allocation4 + $0xb0] sm:$0xff] %vm421, 0.0
        %500 = vst.msk [vmem:[#allocation4 + $0xb8] sm:$0x3] %vm424, 0.0
        %501 = vst.msk [vmem:[#allocation4 + $0xc0] sm:$0xff] %vm421, 0.0
        %502 = vst.msk [vmem:[#allocation4 + $0xc8] sm:$0xff] %vm421, 0.0
        %503 = vst.msk [vmem:[#allocation4 + $0xd0] sm:$0x3] %vm424, 0.0
        %504 = vst.msk [vmem:[#allocation4 + $0xd8] sm:$0xff] %vm421, 0.0
        %505 = vst.msk [vmem:[#allocation4 + $0xe0] sm:$0xff] %vm421, 0.0
        %506 = vst.msk [vmem:[#allocation4 + $0xe8] sm:$0x3] %vm424, 0.0
        %507 = vst.msk [vmem:[#allocation4 + $0xf0] sm:$0xff] %vm421, 0.0
        %508 = vst.msk [vmem:[#allocation4 + $0xf8] sm:$0xff] %vm421, 0.0
        %509 = vst.msk [vmem:[#allocation4 + $0x100] sm:$0x3] %vm424, 0.0
        %510 = vst.msk [vmem:[#allocation4 + $0x108] sm:$0xff] %vm421, 0.0
        %511 = vst.msk [vmem:[#allocation4 + $0x110] sm:$0xff] %vm421, 0.0
        %512 = vst.msk [vmem:[#allocation4 + $0x118] sm:$0x3] %vm424, 0.0
        %513 = vst.msk [vmem:[#allocation4 + $0x120] sm:$0xff] %vm421, 0.0
        %514 = vst.msk [vmem:[#allocation4 + $0x128] sm:$0xff] %vm421, 0.0
        %515 = vst.msk [vmem:[#allocation4 + $0x130] sm:$0x3] %vm424, 0.0
        %516 = vst.msk [vmem:[#allocation4 + $0x138] sm:$0xff] %vm421, 0.0
        %517 = vst.msk [vmem:[#allocation4 + $0x140] sm:$0xff] %vm421, 0.0
        %518 = vst.msk [vmem:[#allocation4 + $0x148] sm:$0x3] %vm424, 0.0
        %519 = vst.msk [vmem:[#allocation4 + $0x150] sm:$0xff] %vm421, 0.0
        %520 = vst.msk [vmem:[#allocation4 + $0x158] sm:$0xff] %vm421, 0.0
        %521 = vst.msk [vmem:[#allocation4 + $0x160] sm:$0x3] %vm424, 0.0
        %522 = vst.msk [vmem:[#allocation4 + $0x168] sm:$0xff] %vm421, 0.0
        %523 = vst.msk [vmem:[#allocation4 + $0x170] sm:$0xff] %vm421, 0.0
        %524 = vst.msk [vmem:[#allocation4 + $0x178] sm:$0x3] %vm424, 0.0
        %525 = vst.msk [vmem:[#allocation4 + $0x180] sm:$0xff] %vm421, 0.0
        %526 = vst.msk [vmem:[#allocation4 + $0x188] sm:$0xff] %vm421, 0.0
        %527 = vst.msk [vmem:[#allocation4 + $0x190] sm:$0x3] %vm424, 0.0
        %528 = vst.msk [vmem:[#allocation4 + $0x198] sm:$0xff] %vm421, 0.0
        %529 = vst.msk [vmem:[#allocation4 + $0x1a0] sm:$0xff] %vm421, 0.0
        %530 = vst.msk [vmem:[#allocation4 + $0x1a8] sm:$0x3] %vm424, 0.0
        %531 = vst.msk [vmem:[#allocation5] sm:$0xff] %vm421, 0.0
        %532 = vst.msk [vmem:[#allocation5 + $0x8] sm:$0xff] %vm421, 0.0
        %533 = vst.msk [vmem:[#allocation5 + $0x10] sm:$0xff] %vm421, 0.0
        %534 = vst.msk [vmem:[#allocation5 + $0x18] sm:$0xff] %vm421, 0.0
        %535 = vst.msk [vmem:[#allocation5 + $0x20] sm:$0xff] %vm421, 0.0
        %536 = vst.msk [vmem:[#allocation5 + $0x28] sm:$0xff] %vm421, 0.0
        %537 = vst.msk [vmem:[#allocation5 + $0x30] sm:$0xff] %vm421, 0.0
        %538 = vst.msk [vmem:[#allocation5 + $0x38] sm:$0xff] %vm421, 0.0
        %539 = vst.msk [vmem:[#allocation5 + $0x40] sm:$0xff] %vm421, 0.0
        %540 = vst.msk [vmem:[#allocation5 + $0x48] sm:$0xff] %vm421, 0.0
        %541 = vst.msk [vmem:[#allocation5 + $0x50] sm:$0xff] %vm421, 0.0
        %542 = vst.msk [vmem:[#allocation5 + $0x58] sm:$0xff] %vm421, 0.0
        %543 = vst.msk [vmem:[#allocation5 + $0x60] sm:$0xff] %vm421, 0.0
        %544 = vst.msk [vmem:[#allocation5 + $0x68] sm:$0xff] %vm421, 0.0
        %545 = vst.msk [vmem:[#allocation5 + $0x70] sm:$0xff] %vm421, 0.0
        %546 = vst.msk [vmem:[#allocation5 + $0x78] sm:$0xff] %vm421, 0.0
        %547 = vst.msk [vmem:[#allocation5 + $0x80] sm:$0xff] %vm421, 0.0
        %548 = vst.msk [vmem:[#allocation5 + $0x88] sm:$0xff] %vm421, 0.0
        %549 = vst.msk [vmem:[#allocation5 + $0x90] sm:$0xff] %vm421, 0.0
        %550 = vst.msk [vmem:[#allocation5 + $0x98] sm:$0xff] %vm421, 0.0
        %551 = vst.msk [vmem:[#allocation5 + $0xa0] sm:$0xff] %vm421, 0.0
        %552 = vst.msk [vmem:[#allocation5 + $0xa8] sm:$0xff] %vm421, 0.0
        %553 = vst.msk [vmem:[#allocation5 + $0xb0] sm:$0xff] %vm421, 0.0
        %554 = vst.msk [vmem:[#allocation5 + $0xb8] sm:$0xff] %vm421, 0.0
        %555 = vst.msk [vmem:[#allocation5 + $0xc0] sm:$0xff] %vm421, 0.0
        %556 = vst.msk [vmem:[#allocation5 + $0xc8] sm:$0xff] %vm421, 0.0
        %557 = vst.msk [vmem:[#allocation5 + $0xd0] sm:$0xff] %vm421, 0.0
        %558 = vst.msk [vmem:[#allocation5 + $0xd8] sm:$0xff] %vm421, 0.0
        %559 = vst.msk [vmem:[#allocation5 + $0xe0] sm:$0xff] %vm421, 0.0
        %560 = vst.msk [vmem:[#allocation5 + $0xe8] sm:$0xff] %vm421, 0.0
        %561 = vst.msk [vmem:[#allocation5 + $0xf0] sm:$0xff] %vm421, 0.0
        %562 = vst.msk [vmem:[#allocation5 + $0xf8] sm:$0xff] %vm421, 0.0
        %563 = vst.msk [vmem:[#allocation6] sm:$0xff] %vm421, 0.0
        %564 = vst.msk [vmem:[#allocation6 + $0x8] sm:$0xff] %vm421, 0.0
        %565 = vst.msk [vmem:[#allocation6 + $0x10] sm:$0xff] %vm421, 0.0
        %566 = vst.msk [vmem:[#allocation6 + $0x18] sm:$0xff] %vm421, 0.0
        %567 = vst.msk [vmem:[#allocation6 + $0x20] sm:$0xff] %vm421, 0.0
        %568 = vst.msk [vmem:[#allocation6 + $0x28] sm:$0xff] %vm421, 0.0
        %569 = vst.msk [vmem:[#allocation6 + $0x30] sm:$0xff] %vm421, 0.0
        %570 = vst.msk [vmem:[#allocation6 + $0x38] sm:$0xff] %vm421, 0.0
        %571 = vst.msk [vmem:[#allocation6 + $0x40] sm:$0xff] %vm421, 0.0
        %572 = vst.msk [vmem:[#allocation6 + $0x48] sm:$0xff] %vm421, 0.0
        %573 = vst.msk [vmem:[#allocation6 + $0x50] sm:$0xff] %vm421, 0.0
        %574 = vst.msk [vmem:[#allocation6 + $0x58] sm:$0xff] %vm421, 0.0
        %575 = vst.msk [vmem:[#allocation6 + $0x60] sm:$0xff] %vm421, 0.0
        %576 = vst.msk [vmem:[#allocation6 + $0x68] sm:$0xff] %vm421, 0.0
        %577 = vst.msk [vmem:[#allocation6 + $0x70] sm:$0xff] %vm421, 0.0
        %578 = vst.msk [vmem:[#allocation6 + $0x78] sm:$0xff] %vm421, 0.0
        %579 = vst.msk [vmem:[#allocation6 + $0x80] sm:$0xff] %vm421, 0.0
        %580 = vst.msk [vmem:[#allocation6 + $0x88] sm:$0xff] %vm421, 0.0
        %581 = vst.msk [vmem:[#allocation6 + $0x90] sm:$0xff] %vm421, 0.0
        %582 = vst.msk [vmem:[#allocation6 + $0x98] sm:$0xff] %vm421, 0.0
        %583 = vst.msk [vmem:[#allocation6 + $0xa0] sm:$0xff] %vm421, 0.0
        %584 = vst.msk [vmem:[#allocation6 + $0xa8] sm:$0xff] %vm421, 0.0
        %585 = vst.msk [vmem:[#allocation6 + $0xb0] sm:$0xff] %vm421, 0.0
        %586 = vst.msk [vmem:[#allocation6 + $0xb8] sm:$0xff] %vm421, 0.0
        %587 = vst.msk [vmem:[#allocation6 + $0xc0] sm:$0xff] %vm421, 0.0
        %588 = vst.msk [vmem:[#allocation6 + $0xc8] sm:$0xff] %vm421, 0.0
        %589 = vst.msk [vmem:[#allocation6 + $0xd0] sm:$0xff] %vm421, 0.0
        %590 = vst.msk [vmem:[#allocation6 + $0xd8] sm:$0xff] %vm421, 0.0
        %591 = vst.msk [vmem:[#allocation6 + $0xe0] sm:$0xff] %vm421, 0.0
        %592 = vst.msk [vmem:[#allocation6 + $0xe8] sm:$0xff] %vm421, 0.0
        %593 = vst.msk [vmem:[#allocation6 + $0xf0] sm:$0xff] %vm421, 0.0
        %594 = vst.msk [vmem:[#allocation6 + $0xf8] sm:$0xff] %vm421, 0.0
      $region60: #{vehicle_grid_predictor.1} parent=55 // pred_fallthru
        _
      %v595 = vld [vmem:[%s355] sm:$0xff]
      %v596 = vld [vmem:[%s355 + $0x8] sm:$0xff]
      %v597 = vld [vmem:[%s355 + $0x10] sm:$0xff]
      %v598 = vld [vmem:[%s355 + $0x18] sm:$0xff]
      %v599 = vld [vmem:[%s355 + $0x20] sm:$0xff]
      %v600 = vld [vmem:[%s355 + $0x28] sm:$0xff]
      %v601 = vld [vmem:[%s355 + $0x30] sm:$0xff]
      %v602 = vld [vmem:[%s355 + $0x38] sm:$0xff]
      %v603 = vld [vmem:[%s355 + $0x40] sm:$0xff]
      %v604 = vld [vmem:[%s355 + $0x48] sm:$0xff]
      %v605 = vld [vmem:[%s355 + $0x50] sm:$0xff]
      %v606 = vld [vmem:[%s355 + $0x58] sm:$0xff]
      %v607 = vld [vmem:[%s355 + $0x60] sm:$0xff]
      %v608 = vld [vmem:[%s355 + $0x68] sm:$0xff]
      %v609 = vld [vmem:[%s355 + $0x70] sm:$0xff]
      %v610 = vld [vmem:[%s355 + $0x78] sm:$0xff]
      %v611 = vld [vmem:[%s355 + $0x80] sm:$0xff]
      %v612 = vld [vmem:[%s355 + $0x88] sm:$0xff]
      %v613 = vld [vmem:[%s355 + $0x90] sm:$0xff]
      %v614 = vld [vmem:[%s355 + $0x98] sm:$0xff]
      %v615 = vld [vmem:[%s355 + $0xa0] sm:$0xff]
      %v616 = vld [vmem:[%s355 + $0xa8] sm:$0xff]
      %v617 = vld [vmem:[%s355 + $0xb0] sm:$0xff]
      %v618 = vld [vmem:[%s355 + $0xb8] sm:$0xff]
      %v619 = vld [vmem:[%s355 + $0xc0] sm:$0xff]
      %v620 = vld [vmem:[%s355 + $0xc8] sm:$0xff]
      %v621 = vld [vmem:[%s355 + $0xd0] sm:$0xff]
      %v622 = vld [vmem:[%s355 + $0xd8] sm:$0xff]
      %v623 = vld [vmem:[%s355 + $0xe0] sm:$0xff]
      %v624 = vld [vmem:[%s355 + $0xe8] sm:$0xff]
      %v625 = vld [vmem:[%s355 + $0xf0] sm:$0xff]
      %v626 = vld [vmem:[%s355 + $0xf8] sm:$0xff]
      %s627 = scalar_lea.vmem [#allocation2], 24
      %vm628 = vcmask 7168
      %629 = vst.msk [vmem:[%s627 + $0x1] sm:$0xff] %vm628, %v595
      %630 = vst.msk [vmem:[%s627 + $0x9] sm:$0xff] %vm628, %v596
      %631 = vst.msk [vmem:[%s627 + $0x19] sm:$0xff] %vm628, %v597
      %632 = vst.msk [vmem:[%s627 + $0x21] sm:$0xff] %vm628, %v598
      %633 = vst.msk [vmem:[%s627 + $0x31] sm:$0xff] %vm628, %v599
      %634 = vst.msk [vmem:[%s627 + $0x39] sm:$0xff] %vm628, %v600
      %635 = vst.msk [vmem:[%s627 + $0x49] sm:$0xff] %vm628, %v601
      %636 = vst.msk [vmem:[%s627 + $0x51] sm:$0xff] %vm628, %v602
      %637 = vst.msk [vmem:[%s627 + $0x61] sm:$0xff] %vm628, %v603
      %638 = vst.msk [vmem:[%s627 + $0x69] sm:$0xff] %vm628, %v604
      %639 = vst.msk [vmem:[%s627 + $0x79] sm:$0xff] %vm628, %v605
      %640 = vst.msk [vmem:[%s627 + $0x81] sm:$0xff] %vm628, %v606
      %641 = vst.msk [vmem:[%s627 + $0x91] sm:$0xff] %vm628, %v607
      %642 = vst.msk [vmem:[%s627 + $0x99] sm:$0xff] %vm628, %v608
      %643 = vst.msk [vmem:[%s627 + $0xa9] sm:$0xff] %vm628, %v609
      %644 = vst.msk [vmem:[%s627 + $0xb1] sm:$0xff] %vm628, %v610
      %645 = vst.msk [vmem:[%s627 + $0xc1] sm:$0xff] %vm628, %v611
      %646 = vst.msk [vmem:[%s627 + $0xc9] sm:$0xff] %vm628, %v612
      %647 = vst.msk [vmem:[%s627 + $0xd9] sm:$0xff] %vm628, %v613
      %648 = vst.msk [vmem:[%s627 + $0xe1] sm:$0xff] %vm628, %v614
      %649 = vst.msk [vmem:[%s627 + $0xf1] sm:$0xff] %vm628, %v615
      %650 = vst.msk [vmem:[%s627 + $0xf9] sm:$0xff] %vm628, %v616
      %651 = vst.msk [vmem:[%s627 + $0x109] sm:$0xff] %vm628, %v617
      %652 = vst.msk [vmem:[%s627 + $0x111] sm:$0xff] %vm628, %v618
      %653 = vst.msk [vmem:[%s627 + $0x121] sm:$0xff] %vm628, %v619
      %654 = vst.msk [vmem:[%s627 + $0x129] sm:$0xff] %vm628, %v620
      %655 = vst.msk [vmem:[%s627 + $0x139] sm:$0xff] %vm628, %v621
      %656 = vst.msk [vmem:[%s627 + $0x141] sm:$0xff] %vm628, %v622
      %657 = vst.msk [vmem:[%s627 + $0x151] sm:$0xff] %vm628, %v623
      %658 = vst.msk [vmem:[%s627 + $0x159] sm:$0xff] %vm628, %v624
      %659 = vst.msk [vmem:[%s627 + $0x169] sm:$0xff] %vm628, %v625
      %660 = vst.msk [vmem:[%s627 + $0x171] sm:$0xff] %vm628, %v626
      %v661 = vlaneseq
      %v662 = vand.u32 %v661, 127
      %vm663 = vcmp.lt.s32.totalorder %v662, 96
      %v664 = vsel %vm663, 0.5, 1.0
      %v665 = vsel %vm663, 0.5, 0.0
      %v666 = vld [vmem:[#allocation2] sm:$0xff]
      %v667 = vld [vmem:[#allocation2 + $0x8] sm:$0xff]
      %v668 = vld [vmem:[#allocation2 + $0x18] sm:$0xff]
      %v669 = vld [vmem:[#allocation2 + $0x20] sm:$0xff]
      %v670 = vld [vmem:[#allocation2 + $0x30] sm:$0xff]
      %v671 = vld [vmem:[#allocation2 + $0x38] sm:$0xff]
      %v672 = vld [vmem:[#allocation2 + $0x48] sm:$0xff]
      %v673 = vld [vmem:[#allocation2 + $0x50] sm:$0xff]
      %v674 = vld [vmem:[#allocation2 + $0x60] sm:$0xff]
      %v675 = vld [vmem:[#allocation2 + $0x68] sm:$0xff]
      %v676 = vld [vmem:[#allocation2 + $0x78] sm:$0xff]
      %v677 = vld [vmem:[#allocation2 + $0x80] sm:$0xff]
      %v678 = vld [vmem:[#allocation2 + $0x90] sm:$0xff]
      %v679 = vld [vmem:[#allocation2 + $0x98] sm:$0xff]
      %v680 = vld [vmem:[#allocation2 + $0xa8] sm:$0xff]
      %v681 = vld [vmem:[#allocation2 + $0xb0] sm:$0xff]
      %v682 = vld [vmem:[#allocation2 + $0xc0] sm:$0xff]
      %v683 = vld [vmem:[#allocation2 + $0xc8] sm:$0xff]
      %v684 = vld [vmem:[#allocation2 + $0xd8] sm:$0xff]
      %v685 = vld [vmem:[#allocation2 + $0xe0] sm:$0xff]
      %v686 = vld [vmem:[#allocation2 + $0xf0] sm:$0xff]
      %v687 = vld [vmem:[#allocation2 + $0xf8] sm:$0xff]
      %v688 = vld [vmem:[#allocation2 + $0x108] sm:$0xff]
      %v689 = vld [vmem:[#allocation2 + $0x110] sm:$0xff]
      %v690 = vld [vmem:[#allocation2 + $0x120] sm:$0xff]
      %v691 = vld [vmem:[#allocation2 + $0x128] sm:$0xff]
      %v692 = vld [vmem:[#allocation2 + $0x138] sm:$0xff]
      %v693 = vld [vmem:[#allocation2 + $0x140] sm:$0xff]
      %v694 = vld [vmem:[#allocation2 + $0x150] sm:$0xff]
      %v695 = vld [vmem:[#allocation2 + $0x158] sm:$0xff]
      %v696 = vld [vmem:[#allocation2 + $0x168] sm:$0xff]
      %v697 = vld [vmem:[#allocation2 + $0x170] sm:$0xff]
      %v698 = vld [vmem:[%s1] sm:$0x1]
      %700 = vset.pattern.permute.xlu0 0
      %701 = vperm.xlu0 %700, %v666
      %v702 = vpop.permute.xlu0 %701
      %705 = vset.pattern.permute.xlu0 0
      %706 = vperm.xlu0 %705, %v667
      %v707 = vpop.permute.xlu0 %706
      %710 = vset.pattern.permute.xlu0 0
      %711 = vperm.xlu0 %710, %v668
      %v712 = vpop.permute.xlu0 %711
      %715 = vset.pattern.permute.xlu0 0
      %716 = vperm.xlu0 %715, %v669
      %v717 = vpop.permute.xlu0 %716
      %720 = vset.pattern.permute.xlu0 0
      %721 = vperm.xlu0 %720, %v670
      %v722 = vpop.permute.xlu0 %721
      %725 = vset.pattern.permute.xlu0 0
      %726 = vperm.xlu0 %725, %v671
      %v727 = vpop.permute.xlu0 %726
      %730 = vset.pattern.permute.xlu0 0
      %731 = vperm.xlu0 %730, %v672
      %v732 = vpop.permute.xlu0 %731
      %735 = vset.pattern.permute.xlu0 0
      %736 = vperm.xlu0 %735, %v673
      %v737 = vpop.permute.xlu0 %736
      %740 = vset.pattern.permute.xlu0 0
      %741 = vperm.xlu0 %740, %v674
      %v742 = vpop.permute.xlu0 %741
      %745 = vset.pattern.permute.xlu0 0
      %746 = vperm.xlu0 %745, %v675
      %v747 = vpop.permute.xlu0 %746
      %750 = vset.pattern.permute.xlu0 0
      %751 = vperm.xlu0 %750, %v676
      %v752 = vpop.permute.xlu0 %751
      %755 = vset.pattern.permute.xlu0 0
      %756 = vperm.xlu0 %755, %v677
      %v757 = vpop.permute.xlu0 %756
      %760 = vset.pattern.permute.xlu0 0
      %761 = vperm.xlu0 %760, %v678
      %v762 = vpop.permute.xlu0 %761
      %765 = vset.pattern.permute.xlu0 0
      %766 = vperm.xlu0 %765, %v679
      %v767 = vpop.permute.xlu0 %766
      %770 = vset.pattern.permute.xlu0 0
      %771 = vperm.xlu0 %770, %v680
      %v772 = vpop.permute.xlu0 %771
      %775 = vset.pattern.permute.xlu0 0
      %776 = vperm.xlu0 %775, %v681
      %v777 = vpop.permute.xlu0 %776
      %780 = vset.pattern.permute.xlu0 0
      %781 = vperm.xlu0 %780, %v682
      %v782 = vpop.permute.xlu0 %781
      %785 = vset.pattern.permute.xlu0 0
      %786 = vperm.xlu0 %785, %v683
      %v787 = vpop.permute.xlu0 %786
      %790 = vset.pattern.permute.xlu0 0
      %791 = vperm.xlu0 %790, %v684
      %v792 = vpop.permute.xlu0 %791
      %795 = vset.pattern.permute.xlu0 0
      %796 = vperm.xlu0 %795, %v685
      %v797 = vpop.permute.xlu0 %796
      %800 = vset.pattern.permute.xlu0 0
      %801 = vperm.xlu0 %800, %v686
      %v802 = vpop.permute.xlu0 %801
      %805 = vset.pattern.permute.xlu0 0
      %806 = vperm.xlu0 %805, %v687
      %v807 = vpop.permute.xlu0 %806
      %810 = vset.pattern.permute.xlu0 0
      %811 = vperm.xlu0 %810, %v688
      %v812 = vpop.permute.xlu0 %811
      %815 = vset.pattern.permute.xlu0 0
      %816 = vperm.xlu0 %815, %v689
      %v817 = vpop.permute.xlu0 %816
      %820 = vset.pattern.permute.xlu0 0
      %821 = vperm.xlu0 %820, %v690
      %v822 = vpop.permute.xlu0 %821
      %825 = vset.pattern.permute.xlu0 0
      %826 = vperm.xlu0 %825, %v691
      %v827 = vpop.permute.xlu0 %826
      %830 = vset.pattern.permute.xlu0 0
      %831 = vperm.xlu0 %830, %v692
      %v832 = vpop.permute.xlu0 %831
      %835 = vset.pattern.permute.xlu0 0
      %836 = vperm.xlu0 %835, %v693
      %v837 = vpop.permute.xlu0 %836
      %840 = vset.pattern.permute.xlu0 0
      %841 = vperm.xlu0 %840, %v694
      %v842 = vpop.permute.xlu0 %841
      %845 = vset.pattern.permute.xlu0 0
      %846 = vperm.xlu0 %845, %v695
      %v847 = vpop.permute.xlu0 %846
      %850 = vset.pattern.permute.xlu0 0
      %851 = vperm.xlu0 %850, %v696
      %v852 = vpop.permute.xlu0 %851
      %855 = vset.pattern.permute.xlu0 0
      %856 = vperm.xlu0 %855, %v697
      %v857 = vpop.permute.xlu0 %856
      %v860 = vperm.slane %v698, 0
      %v862 = vmul.f32 %v702, %v860
      %v863 = vmul.f32 %v707, %v860
      %v864 = vmul.f32 %v712, %v860
      %v865 = vmul.f32 %v717, %v860
      %v866 = vmul.f32 %v722, %v860
      %v867 = vmul.f32 %v727, %v860
      %v868 = vmul.f32 %v732, %v860
      %v869 = vmul.f32 %v737, %v860
      %v870 = vmul.f32 %v742, %v860
      %v871 = vmul.f32 %v747, %v860
      %v872 = vmul.f32 %v752, %v860
      %v873 = vmul.f32 %v757, %v860
      %v874 = vmul.f32 %v762, %v860
      %v875 = vmul.f32 %v767, %v860
      %v876 = vmul.f32 %v772, %v860
      %v877 = vmul.f32 %v777, %v860
      %v878 = vmul.f32 %v782, %v860
      %v879 = vmul.f32 %v787, %v860
      %v880 = vmul.f32 %v792, %v860
      %v881 = vmul.f32 %v797, %v860
      %v882 = vmul.f32 %v802, %v860
      %v883 = vmul.f32 %v807, %v860
      %v884 = vmul.f32 %v812, %v860
      %v885 = vmul.f32 %v817, %v860
      %v886 = vmul.f32 %v822, %v860
      %v887 = vmul.f32 %v827, %v860
      %v888 = vmul.f32 %v832, %v860
      %v889 = vmul.f32 %v837, %v860
      %v890 = vmul.f32 %v842, %v860
      %v891 = vmul.f32 %v847, %v860
      %v892 = vmul.f32 %v852, %v860
      %v893 = vmul.f32 %v857, %v860
      %v894 = vadd.f32 %v862, 0.0
      %v895 = vadd.f32 %v863, 0.0
      %v896 = vadd.f32 %v864, 0.0
      %v897 = vadd.f32 %v865, 0.0
      %v898 = vadd.f32 %v866, 0.0
      %v899 = vadd.f32 %v867, 0.0
      %v900 = vadd.f32 %v868, 0.0
      %v901 = vadd.f32 %v869, 0.0
      %v902 = vadd.f32 %v870, 0.0
      %v903 = vadd.f32 %v871, 0.0
      %v904 = vadd.f32 %v872, 0.0
      %v905 = vadd.f32 %v873, 0.0
      %v906 = vadd.f32 %v874, 0.0
      %v907 = vadd.f32 %v875, 0.0
      %v908 = vadd.f32 %v876, 0.0
      %v909 = vadd.f32 %v877, 0.0
      %v910 = vadd.f32 %v878, 0.0
      %v911 = vadd.f32 %v879, 0.0
      %v912 = vadd.f32 %v880, 0.0
      %v913 = vadd.f32 %v881, 0.0
      %v914 = vadd.f32 %v882, 0.0
      %v915 = vadd.f32 %v883, 0.0
      %v916 = vadd.f32 %v884, 0.0
      %v917 = vadd.f32 %v885, 0.0
      %v918 = vadd.f32 %v886, 0.0
      %v919 = vadd.f32 %v887, 0.0
      %v920 = vadd.f32 %v888, 0.0
      %v921 = vadd.f32 %v889, 0.0
      %v922 = vadd.f32 %v890, 0.0
      %v923 = vadd.f32 %v891, 0.0
      %v924 = vadd.f32 %v892, 0.0
      %v925 = vadd.f32 %v893, 0.0
      %v926 = vld [vmem:[#allocation3] sm:$0xff]
      %v927 = vld [vmem:[#allocation3 + $0x8] sm:$0xff]
      %v928 = vld [vmem:[#allocation3 + $0x18] sm:$0xff]
      %v929 = vld [vmem:[#allocation3 + $0x20] sm:$0xff]
      %v930 = vld [vmem:[#allocation3 + $0x30] sm:$0xff]
      %v931 = vld [vmem:[#allocation3 + $0x38] sm:$0xff]
      %v932 = vld [vmem:[#allocation3 + $0x48] sm:$0xff]
      %v933 = vld [vmem:[#allocation3 + $0x50] sm:$0xff]
      %v934 = vld [vmem:[#allocation3 + $0x60] sm:$0xff]
      %v935 = vld [vmem:[#allocation3 + $0x68] sm:$0xff]
      %v936 = vld [vmem:[#allocation3 + $0x78] sm:$0xff]
      %v937 = vld [vmem:[#allocation3 + $0x80] sm:$0xff]
      %v938 = vld [vmem:[#allocation3 + $0x90] sm:$0xff]
      %v939 = vld [vmem:[#allocation3 + $0x98] sm:$0xff]
      %v940 = vld [vmem:[#allocation3 + $0xa8] sm:$0xff]
      %v941 = vld [vmem:[#allocation3 + $0xb0] sm:$0xff]
      %v942 = vld [vmem:[#allocation3 + $0xc0] sm:$0xff]
      %v943 = vld [vmem:[#allocation3 + $0xc8] sm:$0xff]
      %v944 = vld [vmem:[#allocation3 + $0xd8] sm:$0xff]
      %v945 = vld [vmem:[#allocation3 + $0xe0] sm:$0xff]
      %v946 = vld [vmem:[#allocation3 + $0xf0] sm:$0xff]
      %v947 = vld [vmem:[#allocation3 + $0xf8] sm:$0xff]
      %v948 = vld [vmem:[#allocation3 + $0x108] sm:$0xff]
      %v949 = vld [vmem:[#allocation3 + $0x110] sm:$0xff]
      %v950 = vld [vmem:[#allocation3 + $0x120] sm:$0xff]
      %v951 = vld [vmem:[#allocation3 + $0x128] sm:$0xff]
      %v952 = vld [vmem:[#allocation3 + $0x138] sm:$0xff]
      %v953 = vld [vmem:[#allocation3 + $0x140] sm:$0xff]
      %v954 = vld [vmem:[#allocation3 + $0x150] sm:$0xff]
      %v955 = vld [vmem:[#allocation3 + $0x158] sm:$0xff]
      %v956 = vld [vmem:[#allocation3 + $0x168] sm:$0xff]
      %v957 = vld [vmem:[#allocation3 + $0x170] sm:$0xff]
      %v958 = vld [vmem:[%s2] sm:$0xff]
      %v959 = vld [vmem:[%s2 + $0x8] sm:$0xff]
      %v960 = vld [vmem:[%s2 + $0x10] sm:$0xff]
      %v961 = vld [vmem:[%s2 + $0x18] sm:$0xff]
      %vm962 = vcmask 261120
      %v964 = vsel %vm962, %v926, 0
      %v967 = vsel %vm962, %v927, 0
      %v970 = vsel %vm962, %v928, 0
      %v973 = vsel %vm962, %v929, 0
      %v976 = vsel %vm962, %v930, 0
      %v979 = vsel %vm962, %v931, 0
      %v982 = vsel %vm962, %v932, 0
      %v985 = vsel %vm962, %v933, 0
      %v988 = vsel %vm962, %v934, 0
      %v991 = vsel %vm962, %v935, 0
      %v994 = vsel %vm962, %v936, 0
      %v997 = vsel %vm962, %v937, 0
      %v1000 = vsel %vm962, %v938, 0
      %v1003 = vsel %vm962, %v939, 0
      %v1006 = vsel %vm962, %v940, 0
      %v1009 = vsel %vm962, %v941, 0
      %v1012 = vsel %vm962, %v942, 0
      %v1015 = vsel %vm962, %v943, 0
      %v1018 = vsel %vm962, %v944, 0
      %v1021 = vsel %vm962, %v945, 0
      %v1024 = vsel %vm962, %v946, 0
      %v1027 = vsel %vm962, %v947, 0
      %v1030 = vsel %vm962, %v948, 0
      %v1033 = vsel %vm962, %v949, 0
      %v1036 = vsel %vm962, %v950, 0
      %v1039 = vsel %vm962, %v951, 0
      %v1042 = vsel %vm962, %v952, 0
      %v1045 = vsel %vm962, %v953, 0
      %v1048 = vsel %vm962, %v954, 0
      %v1051 = vsel %vm962, %v955, 0
      %v1054 = vsel %vm962, %v956, 0
      %v1057 = vsel %vm962, %v957, 0
      %1059 = vmatpush.msra.mxu0 0.0
      %1060 = vmatpush.msra.mxu0 0.0
      %1061 = vmatpush.msra.mxu0 0.0
      %1062 = vmatpush.msra.mxu0 0.0
      %1063 = vmatpush.msra.mxu0 0.0
      %1064 = vmatpush.msra.mxu0 0.0
      %1065 = vmatpush.msra.mxu0 0.0
      %1066 = vmatpush.msra.mxu0 0.0
      %1067 = vmatpush.msra.mxu0 0.0
      %1068 = vmatpush.msra.mxu0 0.0
      %1069 = vmatpush.msra.mxu0 0.0
      %1070 = vmatpush.msra.mxu0 0.0
      %1071 = vmatpush.msra.mxu0 %v961
      %1072 = vmatpush.msra.mxu0 %v960
      %1073 = vmatpush.msra.mxu0 %v959
      %1074 = vmatpush.msra.mxu0 %v958
      %1075 = vmatmul.f32.gmra.mxu0 %v964
      %v1076 = vpop.f32.mrf.mxu0
      %v1077 = vadd.f32 0.0, %v1076
      %1078 = vmatmul.f32.gmra.mxu0 %v967
      %v1079 = vpop.f32.mrf.mxu0
      %v1080 = vadd.f32 0.0, %v1079
      %1081 = vmatmul.f32.gmra.mxu0 %v970
      %v1082 = vpop.f32.mrf.mxu0
      %v1083 = vadd.f32 0.0, %v1082
      %1084 = vmatmul.f32.gmra.mxu0 %v973
      %v1085 = vpop.f32.mrf.mxu0
      %v1086 = vadd.f32 0.0, %v1085
      %1087 = vmatmul.f32.gmra.mxu0 %v976
      %v1088 = vpop.f32.mrf.mxu0
      %v1089 = vadd.f32 0.0, %v1088
      %1090 = vmatmul.f32.gmra.mxu0 %v979
      %v1091 = vpop.f32.mrf.mxu0
      %v1092 = vadd.f32 0.0, %v1091
      %1093 = vmatmul.f32.gmra.mxu0 %v982
      %v1094 = vpop.f32.mrf.mxu0
      %v1095 = vadd.f32 0.0, %v1094
      %1096 = vmatmul.f32.gmra.mxu0 %v985
      %v1097 = vpop.f32.mrf.mxu0
      %v1098 = vadd.f32 0.0, %v1097
      %1099 = vmatmul.f32.gmra.mxu0 %v988
      %v1100 = vpop.f32.mrf.mxu0
      %v1101 = vadd.f32 0.0, %v1100
      %1102 = vmatmul.f32.gmra.mxu0 %v991
      %v1103 = vpop.f32.mrf.mxu0
      %v1104 = vadd.f32 0.0, %v1103
      %1105 = vmatmul.f32.gmra.mxu0 %v994
      %v1106 = vpop.f32.mrf.mxu0
      %v1107 = vadd.f32 0.0, %v1106
      %1108 = vmatmul.f32.gmra.mxu0 %v997
      %v1109 = vpop.f32.mrf.mxu0
      %v1110 = vadd.f32 0.0, %v1109
      %1111 = vmatmul.f32.gmra.mxu0 %v1000
      %v1112 = vpop.f32.mrf.mxu0
      %v1113 = vadd.f32 0.0, %v1112
      %1114 = vmatmul.f32.gmra.mxu0 %v1003
      %v1115 = vpop.f32.mrf.mxu0
      %v1116 = vadd.f32 0.0, %v1115
      %1117 = vmatmul.f32.gmra.mxu0 %v1006
      %v1118 = vpop.f32.mrf.mxu0
      %v1119 = vadd.f32 0.0, %v1118
      %1120 = vmatmul.f32.gmra.mxu0 %v1009
      %v1121 = vpop.f32.mrf.mxu0
      %v1122 = vadd.f32 0.0, %v1121
      %1123 = vmatmul.f32.gmra.mxu0 %v1012
      %v1124 = vpop.f32.mrf.mxu0
      %v1125 = vadd.f32 0.0, %v1124
      %1126 = vmatmul.f32.gmra.mxu0 %v1015
      %v1127 = vpop.f32.mrf.mxu0
      %v1128 = vadd.f32 0.0, %v1127
      %1129 = vmatmul.f32.gmra.mxu0 %v1018
      %v1130 = vpop.f32.mrf.mxu0
      %v1131 = vadd.f32 0.0, %v1130
      %1132 = vmatmul.f32.gmra.mxu0 %v1021
      %v1133 = vpop.f32.mrf.mxu0
      %v1134 = vadd.f32 0.0, %v1133
      %1135 = vmatmul.f32.gmra.mxu0 %v1024
      %v1136 = vpop.f32.mrf.mxu0
      %v1137 = vadd.f32 0.0, %v1136
      %1138 = vmatmul.f32.gmra.mxu0 %v1027
      %v1139 = vpop.f32.mrf.mxu0
      %v1140 = vadd.f32 0.0, %v1139
      %1141 = vmatmul.f32.gmra.mxu0 %v1030
      %v1142 = vpop.f32.mrf.mxu0
      %v1143 = vadd.f32 0.0, %v1142
      %1144 = vmatmul.f32.gmra.mxu0 %v1033
      %v1145 = vpop.f32.mrf.mxu0
      %v1146 = vadd.f32 0.0, %v1145
      %1147 = vmatmul.f32.gmra.mxu0 %v1036
      %v1148 = vpop.f32.mrf.mxu0
      %v1149 = vadd.f32 0.0, %v1148
      %1150 = vmatmul.f32.gmra.mxu0 %v1039
      %v1151 = vpop.f32.mrf.mxu0
      %v1152 = vadd.f32 0.0, %v1151
      %1153 = vmatmul.f32.gmra.mxu0 %v1042
      %v1154 = vpop.f32.mrf.mxu0
      %v1155 = vadd.f32 0.0, %v1154
      %1156 = vmatmul.f32.gmra.mxu0 %v1045
      %v1157 = vpop.f32.mrf.mxu0
      %v1158 = vadd.f32 0.0, %v1157
      %1159 = vmatmul.f32.gmra.mxu0 %v1048
      %v1160 = vpop.f32.mrf.mxu0
      %v1161 = vadd.f32 0.0, %v1160
      %1162 = vmatmul.f32.gmra.mxu0 %v1051
      %v1163 = vpop.f32.mrf.mxu0
      %v1164 = vadd.f32 0.0, %v1163
      %1165 = vmatmul.f32.gmra.mxu0 %v1054
      %v1166 = vpop.f32.mrf.mxu0
      %v1167 = vadd.f32 0.0, %v1166
      %1168 = vmatmul.f32.gmra.mxu0 %v1057
      %v1169 = vpop.f32.mrf.mxu0
      %v1170 = vadd.f32 0.0, %v1169
      %1171 = vdwg.mxu0
      %v1172 = vadd.f32 %v894, %v1077
      %v1173 = vadd.f32 %v895, %v1080
      %v1174 = vadd.f32 %v896, %v1083
      %v1175 = vadd.f32 %v897, %v1086
      %v1176 = vadd.f32 %v898, %v1089
      %v1177 = vadd.f32 %v899, %v1092
      %v1178 = vadd.f32 %v900, %v1095
      %v1179 = vadd.f32 %v901, %v1098
      %v1180 = vadd.f32 %v902, %v1101
      %v1181 = vadd.f32 %v903, %v1104
      %v1182 = vadd.f32 %v904, %v1107
      %v1183 = vadd.f32 %v905, %v1110
      %v1184 = vadd.f32 %v906, %v1113
      %v1185 = vadd.f32 %v907, %v1116
      %v1186 = vadd.f32 %v908, %v1119
      %v1187 = vadd.f32 %v909, %v1122
      %v1188 = vadd.f32 %v910, %v1125
      %v1189 = vadd.f32 %v911, %v1128
      %v1190 = vadd.f32 %v912, %v1131
      %v1191 = vadd.f32 %v913, %v1134
      %v1192 = vadd.f32 %v914, %v1137
      %v1193 = vadd.f32 %v915, %v1140
      %v1194 = vadd.f32 %v916, %v1143
      %v1195 = vadd.f32 %v917, %v1146
      %v1196 = vadd.f32 %v918, %v1149
      %v1197 = vadd.f32 %v919, %v1152
      %v1198 = vadd.f32 %v920, %v1155
      %v1199 = vadd.f32 %v921, %v1158
      %v1200 = vadd.f32 %v922, %v1161
      %v1201 = vadd.f32 %v923, %v1164
      %v1202 = vadd.f32 %v924, %v1167
      %v1203 = vadd.f32 %v925, %v1170
      %v1204 = vld [vmem:[#allocation2 + $0x1] sm:$0xff]
      %v1205 = vld [vmem:[#allocation2 + $0x9] sm:$0xff]
      %v1206 = vld [vmem:[#allocation2 + $0x19] sm:$0xff]
      %v1207 = vld [vmem:[#allocation2 + $0x21] sm:$0xff]
      %v1208 = vld [vmem:[#allocation2 + $0x31] sm:$0xff]
      %v1209 = vld [vmem:[#allocation2 + $0x39] sm:$0xff]
      %v1210 = vld [vmem:[#allocation2 + $0x49] sm:$0xff]
      %v1211 = vld [vmem:[#allocation2 + $0x51] sm:$0xff]
      %v1212 = vld [vmem:[#allocation2 + $0x61] sm:$0xff]
      %v1213 = vld [vmem:[#allocation2 + $0x69] sm:$0xff]
      %v1214 = vld [vmem:[#allocation2 + $0x79] sm:$0xff]
      %v1215 = vld [vmem:[#allocation2 + $0x81] sm:$0xff]
      %v1216 = vld [vmem:[#allocation2 + $0x91] sm:$0xff]
      %v1217 = vld [vmem:[#allocation2 + $0x99] sm:$0xff]
      %v1218 = vld [vmem:[#allocation2 + $0xa9] sm:$0xff]
      %v1219 = vld [vmem:[#allocation2 + $0xb1] sm:$0xff]
      %v1220 = vld [vmem:[#allocation2 + $0xc1] sm:$0xff]
      %v1221 = vld [vmem:[#allocation2 + $0xc9] sm:$0xff]
      %v1222 = vld [vmem:[#allocation2 + $0xd9] sm:$0xff]
      %v1223 = vld [vmem:[#allocation2 + $0xe1] sm:$0xff]
      %v1224 = vld [vmem:[#allocation2 + $0xf1] sm:$0xff]
      %v1225 = vld [vmem:[#allocation2 + $0xf9] sm:$0xff]
      %v1226 = vld [vmem:[#allocation2 + $0x109] sm:$0xff]
      %v1227 = vld [vmem:[#allocation2 + $0x111] sm:$0xff]
      %v1228 = vld [vmem:[#allocation2 + $0x121] sm:$0xff]
      %v1229 = vld [vmem:[#allocation2 + $0x129] sm:$0xff]
      %v1230 = vld [vmem:[#allocation2 + $0x139] sm:$0xff]
      %v1231 = vld [vmem:[#allocation2 + $0x141] sm:$0xff]
      %v1232 = vld [vmem:[#allocation2 + $0x151] sm:$0xff]
      %v1233 = vld [vmem:[#allocation2 + $0x159] sm:$0xff]
      %v1234 = vld [vmem:[#allocation2 + $0x169] sm:$0xff]
      %v1235 = vld [vmem:[#allocation2 + $0x171] sm:$0xff]
      %s1236 = scalar_lea.vmem %s1, 1
      %v1237 = vld [vmem:[%s1236] sm:$0x1]
      %1239 = vset.pattern.permute.xlu0 0
      %1240 = vperm.xlu0 %1239, %v1204
      %v1241 = vpop.permute.xlu0 %1240
      %1244 = vset.pattern.permute.xlu0 0
      %1245 = vperm.xlu0 %1244, %v1205
      %v1246 = vpop.permute.xlu0 %1245
      %1249 = vset.pattern.permute.xlu0 0
      %1250 = vperm.xlu0 %1249, %v1206
      %v1251 = vpop.permute.xlu0 %1250
      %1254 = vset.pattern.permute.xlu0 0
      %1255 = vperm.xlu0 %1254, %v1207
      %v1256 = vpop.permute.xlu0 %1255
      %1259 = vset.pattern.permute.xlu0 0
      %1260 = vperm.xlu0 %1259, %v1208
      %v1261 = vpop.permute.xlu0 %1260
      %1264 = vset.pattern.permute.xlu0 0
      %1265 = vperm.xlu0 %1264, %v1209
      %v1266 = vpop.permute.xlu0 %1265
      %1269 = vset.pattern.permute.xlu0 0
      %1270 = vperm.xlu0 %1269, %v1210
      %v1271 = vpop.permute.xlu0 %1270
      %1274 = vset.pattern.permute.xlu0 0
      %1275 = vperm.xlu0 %1274, %v1211
      %v1276 = vpop.permute.xlu0 %1275
      %1279 = vset.pattern.permute.xlu0 0
      %1280 = vperm.xlu0 %1279, %v1212
      %v1281 = vpop.permute.xlu0 %1280
      %1284 = vset.pattern.permute.xlu0 0
      %1285 = vperm.xlu0 %1284, %v1213
      %v1286 = vpop.permute.xlu0 %1285
      %1289 = vset.pattern.permute.xlu0 0
      %1290 = vperm.xlu0 %1289, %v1214
      %v1291 = vpop.permute.xlu0 %1290
      %1294 = vset.pattern.permute.xlu0 0
      %1295 = vperm.xlu0 %1294, %v1215
      %v1296 = vpop.permute.xlu0 %1295
      %1299 = vset.pattern.permute.xlu0 0
      %1300 = vperm.xlu0 %1299, %v1216
      %v1301 = vpop.permute.xlu0 %1300
      %1304 = vset.pattern.permute.xlu0 0
      %1305 = vperm.xlu0 %1304, %v1217
      %v1306 = vpop.permute.xlu0 %1305
      %1309 = vset.pattern.permute.xlu0 0
      %1310 = vperm.xlu0 %1309, %v1218
      %v1311 = vpop.permute.xlu0 %1310
      %1314 = vset.pattern.permute.xlu0 0
      %1315 = vperm.xlu0 %1314, %v1219
      %v1316 = vpop.permute.xlu0 %1315
      %1319 = vset.pattern.permute.xlu0 0
      %1320 = vperm.xlu0 %1319, %v1220
      %v1321 = vpop.permute.xlu0 %1320
      %1324 = vset.pattern.permute.xlu0 0
      %1325 = vperm.xlu0 %1324, %v1221
      %v1326 = vpop.permute.xlu0 %1325
      %1329 = vset.pattern.permute.xlu0 0
      %1330 = vperm.xlu0 %1329, %v1222
      %v1331 = vpop.permute.xlu0 %1330
      %1334 = vset.pattern.permute.xlu0 0
      %1335 = vperm.xlu0 %1334, %v1223
      %v1336 = vpop.permute.xlu0 %1335
      %1339 = vset.pattern.permute.xlu0 0
      %1340 = vperm.xlu0 %1339, %v1224
      %v1341 = vpop.permute.xlu0 %1340
      %1344 = vset.pattern.permute.xlu0 0
      %1345 = vperm.xlu0 %1344, %v1225
      %v1346 = vpop.permute.xlu0 %1345
      %1349 = vset.pattern.permute.xlu0 0
      %1350 = vperm.xlu0 %1349, %v1226
      %v1351 = vpop.permute.xlu0 %1350
      %1354 = vset.pattern.permute.xlu0 0
      %1355 = vperm.xlu0 %1354, %v1227
      %v1356 = vpop.permute.xlu0 %1355
      %1359 = vset.pattern.permute.xlu0 0
      %1360 = vperm.xlu0 %1359, %v1228
      %v1361 = vpop.permute.xlu0 %1360
      %1364 = vset.pattern.permute.xlu0 0
      %1365 = vperm.xlu0 %1364, %v1229
      %v1366 = vpop.permute.xlu0 %1365
      %1369 = vset.pattern.permute.xlu0 0
      %1370 = vperm.xlu0 %1369, %v1230
      %v1371 = vpop.permute.xlu0 %1370
      %1374 = vset.pattern.permute.xlu0 0
      %1375 = vperm.xlu0 %1374, %v1231
      %v1376 = vpop.permute.xlu0 %1375
      %1379 = vset.pattern.permute.xlu0 0
      %1380 = vperm.xlu0 %1379, %v1232
      %v1381 = vpop.permute.xlu0 %1380
      %1384 = vset.pattern.permute.xlu0 0
      %1385 = vperm.xlu0 %1384, %v1233
      %v1386 = vpop.permute.xlu0 %1385
      %1389 = vset.pattern.permute.xlu0 0
      %1390 = vperm.xlu0 %1389, %v1234
      %v1391 = vpop.permute.xlu0 %1390
      %1394 = vset.pattern.permute.xlu0 0
      %1395 = vperm.xlu0 %1394, %v1235
      %v1396 = vpop.permute.xlu0 %1395
      %v1399 = vperm.slane %v1237, 0
      %v1401 = vmul.f32 %v1241, %v1399
      %v1402 = vmul.f32 %v1246, %v1399
      %v1403 = vmul.f32 %v1251, %v1399
      %v1404 = vmul.f32 %v1256, %v1399
      %v1405 = vmul.f32 %v1261, %v1399
      %v1406 = vmul.f32 %v1266, %v1399
      %v1407 = vmul.f32 %v1271, %v1399
      %v1408 = vmul.f32 %v1276, %v1399
      %v1409 = vmul.f32 %v1281, %v1399
      %v1410 = vmul.f32 %v1286, %v1399
      %v1411 = vmul.f32 %v1291, %v1399
      %v1412 = vmul.f32 %v1296, %v1399
      %v1413 = vmul.f32 %v1301, %v1399
      %v1414 = vmul.f32 %v1306, %v1399
      %v1415 = vmul.f32 %v1311, %v1399
      %v1416 = vmul.f32 %v1316, %v1399
      %v1417 = vmul.f32 %v1321, %v1399
      %v1418 = vmul.f32 %v1326, %v1399
      %v1419 = vmul.f32 %v1331, %v1399
      %v1420 = vmul.f32 %v1336, %v1399
      %v1421 = vmul.f32 %v1341, %v1399
      %v1422 = vmul.f32 %v1346, %v1399
      %v1423 = vmul.f32 %v1351, %v1399
      %v1424 = vmul.f32 %v1356, %v1399
      %v1425 = vmul.f32 %v1361, %v1399
      %v1426 = vmul.f32 %v1366, %v1399
      %v1427 = vmul.f32 %v1371, %v1399
      %v1428 = vmul.f32 %v1376, %v1399
      %v1429 = vmul.f32 %v1381, %v1399
      %v1430 = vmul.f32 %v1386, %v1399
      %v1431 = vmul.f32 %v1391, %v1399
      %v1432 = vmul.f32 %v1396, %v1399
      %v1433 = vadd.f32 %v1172, %v1401
      %v1434 = vadd.f32 %v1173, %v1402
      %v1435 = vadd.f32 %v1174, %v1403
      %v1436 = vadd.f32 %v1175, %v1404
      %v1437 = vadd.f32 %v1176, %v1405
      %v1438 = vadd.f32 %v1177, %v1406
      %v1439 = vadd.f32 %v1178, %v1407
      %v1440 = vadd.f32 %v1179, %v1408
      %v1441 = vadd.f32 %v1180, %v1409
      %v1442 = vadd.f32 %v1181, %v1410
      %v1443 = vadd.f32 %v1182, %v1411
      %v1444 = vadd.f32 %v1183, %v1412
      %v1445 = vadd.f32 %v1184, %v1413
      %v1446 = vadd.f32 %v1185, %v1414
      %v1447 = vadd.f32 %v1186, %v1415
      %v1448 = vadd.f32 %v1187, %v1416
      %v1449 = vadd.f32 %v1188, %v1417
      %v1450 = vadd.f32 %v1189, %v1418
      %v1451 = vadd.f32 %v1190, %v1419
      %v1452 = vadd.f32 %v1191, %v1420
      %v1453 = vadd.f32 %v1192, %v1421
      %v1454 = vadd.f32 %v1193, %v1422
      %v1455 = vadd.f32 %v1194, %v1423
      %v1456 = vadd.f32 %v1195, %v1424
      %v1457 = vadd.f32 %v1196, %v1425
      %v1458 = vadd.f32 %v1197, %v1426
      %v1459 = vadd.f32 %v1198, %v1427
      %v1460 = vadd.f32 %v1199, %v1428
      %v1461 = vadd.f32 %v1200, %v1429
      %v1462 = vadd.f32 %v1201, %v1430
      %v1463 = vadd.f32 %v1202, %v1431
      %v1464 = vadd.f32 %v1203, %v1432
      %v1465 = vld [vmem:[#allocation3 + $0x1] sm:$0xff]
      %v1466 = vld [vmem:[#allocation3 + $0x9] sm:$0xff]
      %v1467 = vld [vmem:[#allocation3 + $0x19] sm:$0xff]
      %v1468 = vld [vmem:[#allocation3 + $0x21] sm:$0xff]
      %v1469 = vld [vmem:[#allocation3 + $0x31] sm:$0xff]
      %v1470 = vld [vmem:[#allocation3 + $0x39] sm:$0xff]
      %v1471 = vld [vmem:[#allocation3 + $0x49] sm:$0xff]
      %v1472 = vld [vmem:[#allocation3 + $0x51] sm:$0xff]
      %v1473 = vld [vmem:[#allocation3 + $0x61] sm:$0xff]
      %v1474 = vld [vmem:[#allocation3 + $0x69] sm:$0xff]
      %v1475 = vld [vmem:[#allocation3 + $0x79] sm:$0xff]
      %v1476 = vld [vmem:[#allocation3 + $0x81] sm:$0xff]
      %v1477 = vld [vmem:[#allocation3 + $0x91] sm:$0xff]
      %v1478 = vld [vmem:[#allocation3 + $0x99] sm:$0xff]
      %v1479 = vld [vmem:[#allocation3 + $0xa9] sm:$0xff]
      %v1480 = vld [vmem:[#allocation3 + $0xb1] sm:$0xff]
      %v1481 = vld [vmem:[#allocation3 + $0xc1] sm:$0xff]
      %v1482 = vld [vmem:[#allocation3 + $0xc9] sm:$0xff]
      %v1483 = vld [vmem:[#allocation3 + $0xd9] sm:$0xff]
      %v1484 = vld [vmem:[#allocation3 + $0xe1] sm:$0xff]
      %v1485 = vld [vmem:[#allocation3 + $0xf1] sm:$0xff]
      %v1486 = vld [vmem:[#allocation3 + $0xf9] sm:$0xff]
      %v1487 = vld [vmem:[#allocation3 + $0x109] sm:$0xff]
      %v1488 = vld [vmem:[#allocation3 + $0x111] sm:$0xff]
      %v1489 = vld [vmem:[#allocation3 + $0x121] sm:$0xff]
      %v1490 = vld [vmem:[#allocation3 + $0x129] sm:$0xff]
      %v1491 = vld [vmem:[#allocation3 + $0x139] sm:$0xff]
      %v1492 = vld [vmem:[#allocation3 + $0x141] sm:$0xff]
      %v1493 = vld [vmem:[#allocation3 + $0x151] sm:$0xff]
      %v1494 = vld [vmem:[#allocation3 + $0x159] sm:$0xff]
      %v1495 = vld [vmem:[#allocation3 + $0x169] sm:$0xff]
      %v1496 = vld [vmem:[#allocation3 + $0x171] sm:$0xff]
      %s1497 = scalar_lea.vmem %s2, 32
      %v1498 = vld [vmem:[%s1497] sm:$0xff]
      %v1499 = vld [vmem:[%s1497 + $0x8] sm:$0xff]
      %v1500 = vld [vmem:[%s1497 + $0x10] sm:$0xff]
      %v1501 = vld [vmem:[%s1497 + $0x18] sm:$0xff]
      %v1503 = vsel %vm962, %v1465, 0
      %v1506 = vsel %vm962, %v1466, 0
      %v1509 = vsel %vm962, %v1467, 0
      %v1512 = vsel %vm962, %v1468, 0
      %v1515 = vsel %vm962, %v1469, 0
      %v1518 = vsel %vm962, %v1470, 0
      %v1521 = vsel %vm962, %v1471, 0
      %v1524 = vsel %vm962, %v1472, 0
      %v1527 = vsel %vm962, %v1473, 0
      %v1530 = vsel %vm962, %v1474, 0
      %v1533 = vsel %vm962, %v1475, 0
      %v1536 = vsel %vm962, %v1476, 0
      %v1539 = vsel %vm962, %v1477, 0
      %v1542 = vsel %vm962, %v1478, 0
      %v1545 = vsel %vm962, %v1479, 0
      %v1548 = vsel %vm962, %v1480, 0
      %v1551 = vsel %vm962, %v1481, 0
      %v1554 = vsel %vm962, %v1482, 0
      %v1557 = vsel %vm962, %v1483, 0
      %v1560 = vsel %vm962, %v1484, 0
      %v1563 = vsel %vm962, %v1485, 0
      %v1566 = vsel %vm962, %v1486, 0
      %v1569 = vsel %vm962, %v1487, 0
      %v1572 = vsel %vm962, %v1488, 0
      %v1575 = vsel %vm962, %v1489, 0
      %v1578 = vsel %vm962, %v1490, 0
      %v1581 = vsel %vm962, %v1491, 0
      %v1584 = vsel %vm962, %v1492, 0
      %v1587 = vsel %vm962, %v1493, 0
      %v1590 = vsel %vm962, %v1494, 0
      %v1593 = vsel %vm962, %v1495, 0
      %v1596 = vsel %vm962, %v1496, 0
      %1598 = vmatpush.msra.mxu0 0.0
      %1599 = vmatpush.msra.mxu0 0.0
      %1600 = vmatpush.msra.mxu0 0.0
      %1601 = vmatpush.msra.mxu0 0.0
      %1602 = vmatpush.msra.mxu0 0.0
      %1603 = vmatpush.msra.mxu0 0.0
      %1604 = vmatpush.msra.mxu0 0.0
      %1605 = vmatpush.msra.mxu0 0.0
      %1606 = vmatpush.msra.mxu0 0.0
      %1607 = vmatpush.msra.mxu0 0.0
      %1608 = vmatpush.msra.mxu0 0.0
      %1609 = vmatpush.msra.mxu0 0.0
      %1610 = vmatpush.msra.mxu0 %v1501
      %1611 = vmatpush.msra.mxu0 %v1500
      %1612 = vmatpush.msra.mxu0 %v1499
      %1613 = vmatpush.msra.mxu0 %v1498
      %1614 = vmatmul.f32.gmra.mxu0 %v1503
      %v1615 = vpop.f32.mrf.mxu0
      %v1616 = vadd.f32 0.0, %v1615
      %1617 = vmatmul.f32.gmra.mxu0 %v1506
      %v1618 = vpop.f32.mrf.mxu0
      %v1619 = vadd.f32 0.0, %v1618
      %1620 = vmatmul.f32.gmra.mxu0 %v1509
      %v1621 = vpop.f32.mrf.mxu0
      %v1622 = vadd.f32 0.0, %v1621
      %1623 = vmatmul.f32.gmra.mxu0 %v1512
      %v1624 = vpop.f32.mrf.mxu0
      %v1625 = vadd.f32 0.0, %v1624
      %1626 = vmatmul.f32.gmra.mxu0 %v1515
      %v1627 = vpop.f32.mrf.mxu0
      %v1628 = vadd.f32 0.0, %v1627
      %1629 = vmatmul.f32.gmra.mxu0 %v1518
      %v1630 = vpop.f32.mrf.mxu0
      %v1631 = vadd.f32 0.0, %v1630
      %1632 = vmatmul.f32.gmra.mxu0 %v1521
      %v1633 = vpop.f32.mrf.mxu0
      %v1634 = vadd.f32 0.0, %v1633
      %1635 = vmatmul.f32.gmra.mxu0 %v1524
      %v1636 = vpop.f32.mrf.mxu0
      %v1637 = vadd.f32 0.0, %v1636
      %1638 = vmatmul.f32.gmra.mxu0 %v1527
      %v1639 = vpop.f32.mrf.mxu0
      %v1640 = vadd.f32 0.0, %v1639
      %1641 = vmatmul.f32.gmra.mxu0 %v1530
      %v1642 = vpop.f32.mrf.mxu0
      %v1643 = vadd.f32 0.0, %v1642
      %1644 = vmatmul.f32.gmra.mxu0 %v1533
      %v1645 = vpop.f32.mrf.mxu0
      %v1646 = vadd.f32 0.0, %v1645
      %1647 = vmatmul.f32.gmra.mxu0 %v1536
      %v1648 = vpop.f32.mrf.mxu0
      %v1649 = vadd.f32 0.0, %v1648
      %1650 = vmatmul.f32.gmra.mxu0 %v1539
      %v1651 = vpop.f32.mrf.mxu0
      %v1652 = vadd.f32 0.0, %v1651
      %1653 = vmatmul.f32.gmra.mxu0 %v1542
      %v1654 = vpop.f32.mrf.mxu0
      %v1655 = vadd.f32 0.0, %v1654
      %1656 = vmatmul.f32.gmra.mxu0 %v1545
      %v1657 = vpop.f32.mrf.mxu0
      %v1658 = vadd.f32 0.0, %v1657
      %1659 = vmatmul.f32.gmra.mxu0 %v1548
      %v1660 = vpop.f32.mrf.mxu0
      %v1661 = vadd.f32 0.0, %v1660
      %1662 = vmatmul.f32.gmra.mxu0 %v1551
      %v1663 = vpop.f32.mrf.mxu0
      %v1664 = vadd.f32 0.0, %v1663
      %1665 = vmatmul.f32.gmra.mxu0 %v1554
      %v1666 = vpop.f32.mrf.mxu0
      %v1667 = vadd.f32 0.0, %v1666
      %1668 = vmatmul.f32.gmra.mxu0 %v1557
      %v1669 = vpop.f32.mrf.mxu0
      %v1670 = vadd.f32 0.0, %v1669
      %1671 = vmatmul.f32.gmra.mxu0 %v1560
      %v1672 = vpop.f32.mrf.mxu0
      %v1673 = vadd.f32 0.0, %v1672
      %1674 = vmatmul.f32.gmra.mxu0 %v1563
      %v1675 = vpop.f32.mrf.mxu0
      %v1676 = vadd.f32 0.0, %v1675
      %1677 = vmatmul.f32.gmra.mxu0 %v1566
      %v1678 = vpop.f32.mrf.mxu0
      %v1679 = vadd.f32 0.0, %v1678
      %1680 = vmatmul.f32.gmra.mxu0 %v1569
      %v1681 = vpop.f32.mrf.mxu0
      %v1682 = vadd.f32 0.0, %v1681
      %1683 = vmatmul.f32.gmra.mxu0 %v1572
      %v1684 = vpop.f32.mrf.mxu0
      %v1685 = vadd.f32 0.0, %v1684
      %1686 = vmatmul.f32.gmra.mxu0 %v1575
      %v1687 = vpop.f32.mrf.mxu0
      %v1688 = vadd.f32 0.0, %v1687
      %1689 = vmatmul.f32.gmra.mxu0 %v1578
      %v1690 = vpop.f32.mrf.mxu0
      %v1691 = vadd.f32 0.0, %v1690
      %1692 = vmatmul.f32.gmra.mxu0 %v1581
      %v1693 = vpop.f32.mrf.mxu0
      %v1694 = vadd.f32 0.0, %v1693
      %1695 = vmatmul.f32.gmra.mxu0 %v1584
      %v1696 = vpop.f32.mrf.mxu0
      %v1697 = vadd.f32 0.0, %v1696
      %1698 = vmatmul.f32.gmra.mxu0 %v1587
      %v1699 = vpop.f32.mrf.mxu0
      %v1700 = vadd.f32 0.0, %v1699
      %1701 = vmatmul.f32.gmra.mxu0 %v1590
      %v1702 = vpop.f32.mrf.mxu0
      %v1703 = vadd.f32 0.0, %v1702
      %1704 = vmatmul.f32.gmra.mxu0 %v1593
      %v1705 = vpop.f32.mrf.mxu0
      %v1706 = vadd.f32 0.0, %v1705
      %1707 = vmatmul.f32.gmra.mxu0 %v1596
      %v1708 = vpop.f32.mrf.mxu0
      %v1709 = vadd.f32 0.0, %v1708
      %1710 = vdwg.mxu0
      %v1711 = vadd.f32 %v1433, %v1616
      %v1712 = vadd.f32 %v1434, %v1619
      %v1713 = vadd.f32 %v1435, %v1622
      %v1714 = vadd.f32 %v1436, %v1625
      %v1715 = vadd.f32 %v1437, %v1628
      %v1716 = vadd.f32 %v1438, %v1631
      %v1717 = vadd.f32 %v1439, %v1634
      %v1718 = vadd.f32 %v1440, %v1637
      %v1719 = vadd.f32 %v1441, %v1640
      %v1720 = vadd.f32 %v1442, %v1643
      %v1721 = vadd.f32 %v1443, %v1646
      %v1722 = vadd.f32 %v1444, %v1649
      %v1723 = vadd.f32 %v1445, %v1652
      %v1724 = vadd.f32 %v1446, %v1655
      %v1725 = vadd.f32 %v1447, %v1658
      %v1726 = vadd.f32 %v1448, %v1661
      %v1727 = vadd.f32 %v1449, %v1664
      %v1728 = vadd.f32 %v1450, %v1667
      %v1729 = vadd.f32 %v1451, %v1670
      %v1730 = vadd.f32 %v1452, %v1673
      %v1731 = vadd.f32 %v1453, %v1676
      %v1732 = vadd.f32 %v1454, %v1679
      %v1733 = vadd.f32 %v1455, %v1682
      %v1734 = vadd.f32 %v1456, %v1685
      %v1735 = vadd.f32 %v1457, %v1688
      %v1736 = vadd.f32 %v1458, %v1691
      %v1737 = vadd.f32 %v1459, %v1694
      %v1738 = vadd.f32 %v1460, %v1697
      %v1739 = vadd.f32 %v1461, %v1700
      %v1740 = vadd.f32 %v1462, %v1703
      %v1741 = vadd.f32 %v1463, %v1706
      %v1742 = vadd.f32 %v1464, %v1709
      %v1743 = vld [vmem:[#allocation2 + $0x2] sm:$0xff]
      %v1744 = vld [vmem:[#allocation2 + $0xa] sm:$0xff]
      %v1745 = vld [vmem:[#allocation2 + $0x1a] sm:$0xff]
      %v1746 = vld [vmem:[#allocation2 + $0x22] sm:$0xff]
      %v1747 = vld [vmem:[#allocation2 + $0x32] sm:$0xff]
      %v1748 = vld [vmem:[#allocation2 + $0x3a] sm:$0xff]
      %v1749 = vld [vmem:[#allocation2 + $0x4a] sm:$0xff]
      %v1750 = vld [vmem:[#allocation2 + $0x52] sm:$0xff]
      %v1751 = vld [vmem:[#allocation2 + $0x62] sm:$0xff]
      %v1752 = vld [vmem:[#allocation2 + $0x6a] sm:$0xff]
      %v1753 = vld [vmem:[#allocation2 + $0x7a] sm:$0xff]
      %v1754 = vld [vmem:[#allocation2 + $0x82] sm:$0xff]
      %v1755 = vld [vmem:[#allocation2 + $0x92] sm:$0xff]
      %v1756 = vld [vmem:[#allocation2 + $0x9a] sm:$0xff]
      %v1757 = vld [vmem:[#allocation2 + $0xaa] sm:$0xff]
      %v1758 = vld [vmem:[#allocation2 + $0xb2] sm:$0xff]
      %v1759 = vld [vmem:[#allocation2 + $0xc2] sm:$0xff]
      %v1760 = vld [vmem:[#allocation2 + $0xca] sm:$0xff]
      %v1761 = vld [vmem:[#allocation2 + $0xda] sm:$0xff]
      %v1762 = vld [vmem:[#allocation2 + $0xe2] sm:$0xff]
      %v1763 = vld [vmem:[#allocation2 + $0xf2] sm:$0xff]
      %v1764 = vld [vmem:[#allocation2 + $0xfa] sm:$0xff]
      %v1765 = vld [vmem:[#allocation2 + $0x10a] sm:$0xff]
      %v1766 = vld [vmem:[#allocation2 + $0x112] sm:$0xff]
      %v1767 = vld [vmem:[#allocation2 + $0x122] sm:$0xff]
      %v1768 = vld [vmem:[#allocation2 + $0x12a] sm:$0xff]
      %v1769 = vld [vmem:[#allocation2 + $0x13a] sm:$0xff]
      %v1770 = vld [vmem:[#allocation2 + $0x142] sm:$0xff]
      %v1771 = vld [vmem:[#allocation2 + $0x152] sm:$0xff]
      %v1772 = vld [vmem:[#allocation2 + $0x15a] sm:$0xff]
      %v1773 = vld [vmem:[#allocation2 + $0x16a] sm:$0xff]
      %v1774 = vld [vmem:[#allocation2 + $0x172] sm:$0xff]
      %s1775 = scalar_lea.vmem %s1, 2
      %v1776 = vld [vmem:[%s1775] sm:$0x1]
      %1778 = vset.pattern.permute.xlu0 0
      %1779 = vperm.xlu0 %1778, %v1743
      %v1780 = vpop.permute.xlu0 %1779
      %1783 = vset.pattern.permute.xlu0 0
      %1784 = vperm.xlu0 %1783, %v1744
      %v1785 = vpop.permute.xlu0 %1784
      %1788 = vset.pattern.permute.xlu0 0
      %1789 = vperm.xlu0 %1788, %v1745
      %v1790 = vpop.permute.xlu0 %1789
      %1793 = vset.pattern.permute.xlu0 0
      %1794 = vperm.xlu0 %1793, %v1746
      %v1795 = vpop.permute.xlu0 %1794
      %1798 = vset.pattern.permute.xlu0 0
      %1799 = vperm.xlu0 %1798, %v1747
      %v1800 = vpop.permute.xlu0 %1799
      %1803 = vset.pattern.permute.xlu0 0
      %1804 = vperm.xlu0 %1803, %v1748
      %v1805 = vpop.permute.xlu0 %1804
      %1808 = vset.pattern.permute.xlu0 0
      %1809 = vperm.xlu0 %1808, %v1749
      %v1810 = vpop.permute.xlu0 %1809
      %1813 = vset.pattern.permute.xlu0 0
      %1814 = vperm.xlu0 %1813, %v1750
      %v1815 = vpop.permute.xlu0 %1814
      %1818 = vset.pattern.permute.xlu0 0
      %1819 = vperm.xlu0 %1818, %v1751
      %v1820 = vpop.permute.xlu0 %1819
      %1823 = vset.pattern.permute.xlu0 0
      %1824 = vperm.xlu0 %1823, %v1752
      %v1825 = vpop.permute.xlu0 %1824
      %1828 = vset.pattern.permute.xlu0 0
      %1829 = vperm.xlu0 %1828, %v1753
      %v1830 = vpop.permute.xlu0 %1829
      %1833 = vset.pattern.permute.xlu0 0
      %1834 = vperm.xlu0 %1833, %v1754
      %v1835 = vpop.permute.xlu0 %1834
      %1838 = vset.pattern.permute.xlu0 0
      %1839 = vperm.xlu0 %1838, %v1755
      %v1840 = vpop.permute.xlu0 %1839
      %1843 = vset.pattern.permute.xlu0 0
      %1844 = vperm.xlu0 %1843, %v1756
      %v1845 = vpop.permute.xlu0 %1844
      %1848 = vset.pattern.permute.xlu0 0
      %1849 = vperm.xlu0 %1848, %v1757
      %v1850 = vpop.permute.xlu0 %1849
      %1853 = vset.pattern.permute.xlu0 0
      %1854 = vperm.xlu0 %1853, %v1758
      %v1855 = vpop.permute.xlu0 %1854
      %1858 = vset.pattern.permute.xlu0 0
      %1859 = vperm.xlu0 %1858, %v1759
      %v1860 = vpop.permute.xlu0 %1859
      %1863 = vset.pattern.permute.xlu0 0
      %1864 = vperm.xlu0 %1863, %v1760
      %v1865 = vpop.permute.xlu0 %1864
      %1868 = vset.pattern.permute.xlu0 0
      %1869 = vperm.xlu0 %1868, %v1761
      %v1870 = vpop.permute.xlu0 %1869
      %1873 = vset.pattern.permute.xlu0 0
      %1874 = vperm.xlu0 %1873, %v1762
      %v1875 = vpop.permute.xlu0 %1874
      %1878 = vset.pattern.permute.xlu0 0
      %1879 = vperm.xlu0 %1878, %v1763
      %v1880 = vpop.permute.xlu0 %1879
      %1883 = vset.pattern.permute.xlu0 0
      %1884 = vperm.xlu0 %1883, %v1764
      %v1885 = vpop.permute.xlu0 %1884
      %1888 = vset.pattern.permute.xlu0 0
      %1889 = vperm.xlu0 %1888, %v1765
      %v1890 = vpop.permute.xlu0 %1889
      %1893 = vset.pattern.permute.xlu0 0
      %1894 = vperm.xlu0 %1893, %v1766
      %v1895 = vpop.permute.xlu0 %1894
      %1898 = vset.pattern.permute.xlu0 0
      %1899 = vperm.xlu0 %1898, %v1767
      %v1900 = vpop.permute.xlu0 %1899
      %1903 = vset.pattern.permute.xlu0 0
      %1904 = vperm.xlu0 %1903, %v1768
      %v1905 = vpop.permute.xlu0 %1904
      %1908 = vset.pattern.permute.xlu0 0
      %1909 = vperm.xlu0 %1908, %v1769
      %v1910 = vpop.permute.xlu0 %1909
      %1913 = vset.pattern.permute.xlu0 0
      %1914 = vperm.xlu0 %1913, %v1770
      %v1915 = vpop.permute.xlu0 %1914
      %1918 = vset.pattern.permute.xlu0 0
      %1919 = vperm.xlu0 %1918, %v1771
      %v1920 = vpop.permute.xlu0 %1919
      %1923 = vset.pattern.permute.xlu0 0
      %1924 = vperm.xlu0 %1923, %v1772
      %v1925 = vpop.permute.xlu0 %1924
      %1928 = vset.pattern.permute.xlu0 0
      %1929 = vperm.xlu0 %1928, %v1773
      %v1930 = vpop.permute.xlu0 %1929
      %1933 = vset.pattern.permute.xlu0 0
      %1934 = vperm.xlu0 %1933, %v1774
      %v1935 = vpop.permute.xlu0 %1934
      %v1938 = vperm.slane %v1776, 0
      %v1940 = vmul.f32 %v1780, %v1938
      %v1941 = vmul.f32 %v1785, %v1938
      %v1942 = vmul.f32 %v1790, %v1938
      %v1943 = vmul.f32 %v1795, %v1938
      %v1944 = vmul.f32 %v1800, %v1938
      %v1945 = vmul.f32 %v1805, %v1938
      %v1946 = vmul.f32 %v1810, %v1938
      %v1947 = vmul.f32 %v1815, %v1938
      %v1948 = vmul.f32 %v1820, %v1938
      %v1949 = vmul.f32 %v1825, %v1938
      %v1950 = vmul.f32 %v1830, %v1938
      %v1951 = vmul.f32 %v1835, %v1938
      %v1952 = vmul.f32 %v1840, %v1938
      %v1953 = vmul.f32 %v1845, %v1938
      %v1954 = vmul.f32 %v1850, %v1938
      %v1955 = vmul.f32 %v1855, %v1938
      %v1956 = vmul.f32 %v1860, %v1938
      %v1957 = vmul.f32 %v1865, %v1938
      %v1958 = vmul.f32 %v1870, %v1938
      %v1959 = vmul.f32 %v1875, %v1938
      %v1960 = vmul.f32 %v1880, %v1938
      %v1961 = vmul.f32 %v1885, %v1938
      %v1962 = vmul.f32 %v1890, %v1938
      %v1963 = vmul.f32 %v1895, %v1938
      %v1964 = vmul.f32 %v1900, %v1938
      %v1965 = vmul.f32 %v1905, %v1938
      %v1966 = vmul.f32 %v1910, %v1938
      %v1967 = vmul.f32 %v1915, %v1938
      %v1968 = vmul.f32 %v1920, %v1938
      %v1969 = vmul.f32 %v1925, %v1938
      %v1970 = vmul.f32 %v1930, %v1938
      %v1971 = vmul.f32 %v1935, %v1938
      %v1972 = vadd.f32 %v1711, %v1940
      %v1973 = vadd.f32 %v1712, %v1941
      %v1974 = vadd.f32 %v1713, %v1942
      %v1975 = vadd.f32 %v1714, %v1943
      %v1976 = vadd.f32 %v1715, %v1944
      %v1977 = vadd.f32 %v1716, %v1945
      %v1978 = vadd.f32 %v1717, %v1946
      %v1979 = vadd.f32 %v1718, %v1947
      %v1980 = vadd.f32 %v1719, %v1948
      %v1981 = vadd.f32 %v1720, %v1949
      %v1982 = vadd.f32 %v1721, %v1950
      %v1983 = vadd.f32 %v1722, %v1951
      %v1984 = vadd.f32 %v1723, %v1952
      %v1985 = vadd.f32 %v1724, %v1953
      %v1986 = vadd.f32 %v1725, %v1954
      %v1987 = vadd.f32 %v1726, %v1955
      %v1988 = vadd.f32 %v1727, %v1956
      %v1989 = vadd.f32 %v1728, %v1957
      %v1990 = vadd.f32 %v1729, %v1958
      %v1991 = vadd.f32 %v1730, %v1959
      %v1992 = vadd.f32 %v1731, %v1960
      %v1993 = vadd.f32 %v1732, %v1961
      %v1994 = vadd.f32 %v1733, %v1962
      %v1995 = vadd.f32 %v1734, %v1963
      %v1996 = vadd.f32 %v1735, %v1964
      %v1997 = vadd.f32 %v1736, %v1965
      %v1998 = vadd.f32 %v1737, %v1966
      %v1999 = vadd.f32 %v1738, %v1967
      %v2000 = vadd.f32 %v1739, %v1968
      %v2001 = vadd.f32 %v1740, %v1969
      %v2002 = vadd.f32 %v1741, %v1970
      %v2003 = vadd.f32 %v1742, %v1971
      %v2004 = vld [vmem:[#allocation3 + $0x2] sm:$0xff]
      %v2005 = vld [vmem:[#allocation3 + $0xa] sm:$0xff]
      %v2006 = vld [vmem:[#allocation3 + $0x1a] sm:$0xff]
      %v2007 = vld [vmem:[#allocation3 + $0x22] sm:$0xff]
      %v2008 = vld [vmem:[#allocation3 + $0x32] sm:$0xff]
      %v2009 = vld [vmem:[#allocation3 + $0x3a] sm:$0xff]
      %v2010 = vld [vmem:[#allocation3 + $0x4a] sm:$0xff]
      %v2011 = vld [vmem:[#allocation3 + $0x52] sm:$0xff]
      %v2012 = vld [vmem:[#allocation3 + $0x62] sm:$0xff]
      %v2013 = vld [vmem:[#allocation3 + $0x6a] sm:$0xff]
      %v2014 = vld [vmem:[#allocation3 + $0x7a] sm:$0xff]
      %v2015 = vld [vmem:[#allocation3 + $0x82] sm:$0xff]
      %v2016 = vld [vmem:[#allocation3 + $0x92] sm:$0xff]
      %v2017 = vld [vmem:[#allocation3 + $0x9a] sm:$0xff]
      %v2018 = vld [vmem:[#allocation3 + $0xaa] sm:$0xff]
      %v2019 = vld [vmem:[#allocation3 + $0xb2] sm:$0xff]
      %v2020 = vld [vmem:[#allocation3 + $0xc2] sm:$0xff]
      %v2021 = vld [vmem:[#allocation3 + $0xca] sm:$0xff]
      %v2022 = vld [vmem:[#allocation3 + $0xda] sm:$0xff]
      %v2023 = vld [vmem:[#allocation3 + $0xe2] sm:$0xff]
      %v2024 = vld [vmem:[#allocation3 + $0xf2] sm:$0xff]
      %v2025 = vld [vmem:[#allocation3 + $0xfa] sm:$0xff]
      %v2026 = vld [vmem:[#allocation3 + $0x10a] sm:$0xff]
      %v2027 = vld [vmem:[#allocation3 + $0x112] sm:$0xff]
      %v2028 = vld [vmem:[#allocation3 + $0x122] sm:$0xff]
      %v2029 = vld [vmem:[#allocation3 + $0x12a] sm:$0xff]
      %v2030 = vld [vmem:[#allocation3 + $0x13a] sm:$0xff]
      %v2031 = vld [vmem:[#allocation3 + $0x142] sm:$0xff]
      %v2032 = vld [vmem:[#allocation3 + $0x152] sm:$0xff]
      %v2033 = vld [vmem:[#allocation3 + $0x15a] sm:$0xff]
      %v2034 = vld [vmem:[#allocation3 + $0x16a] sm:$0xff]
      %v2035 = vld [vmem:[#allocation3 + $0x172] sm:$0xff]
      %s2036 = scalar_lea.vmem %s2, 64
      %v2037 = vld [vmem:[%s2036] sm:$0xff]
      %v2038 = vld [vmem:[%s2036 + $0x8] sm:$0xff]
      %v2039 = vld [vmem:[%s2036 + $0x10] sm:$0xff]
      %v2040 = vld [vmem:[%s2036 + $0x18] sm:$0xff]
      %v2042 = vsel %vm962, %v2004, 0
      %v2045 = vsel %vm962, %v2005, 0
      %v2048 = vsel %vm962, %v2006, 0
      %v2051 = vsel %vm962, %v2007, 0
      %v2054 = vsel %vm962, %v2008, 0
      %v2057 = vsel %vm962, %v2009, 0
      %v2060 = vsel %vm962, %v2010, 0
      %v2063 = vsel %vm962, %v2011, 0
      %v2066 = vsel %vm962, %v2012, 0
      %v2069 = vsel %vm962, %v2013, 0
      %v2072 = vsel %vm962, %v2014, 0
      %v2075 = vsel %vm962, %v2015, 0
      %v2078 = vsel %vm962, %v2016, 0
      %v2081 = vsel %vm962, %v2017, 0
      %v2084 = vsel %vm962, %v2018, 0
      %v2087 = vsel %vm962, %v2019, 0
      %v2090 = vsel %vm962, %v2020, 0
      %v2093 = vsel %vm962, %v2021, 0
      %v2096 = vsel %vm962, %v2022, 0
      %v2099 = vsel %vm962, %v2023, 0
      %v2102 = vsel %vm962, %v2024, 0
      %v2105 = vsel %vm962, %v2025, 0
      %v2108 = vsel %vm962, %v2026, 0
      %v2111 = vsel %vm962, %v2027, 0
      %v2114 = vsel %vm962, %v2028, 0
      %v2117 = vsel %vm962, %v2029, 0
      %v2120 = vsel %vm962, %v2030, 0
      %v2123 = vsel %vm962, %v2031, 0
      %v2126 = vsel %vm962, %v2032, 0
      %v2129 = vsel %vm962, %v2033, 0
      %v2132 = vsel %vm962, %v2034, 0
      %v2135 = vsel %vm962, %v2035, 0
      %2137 = vmatpush.msra.mxu0 0.0
      %2138 = vmatpush.msra.mxu0 0.0
      %2139 = vmatpush.msra.mxu0 0.0
      %2140 = vmatpush.msra.mxu0 0.0
      %2141 = vmatpush.msra.mxu0 0.0
      %2142 = vmatpush.msra.mxu0 0.0
      %2143 = vmatpush.msra.mxu0 0.0
      %2144 = vmatpush.msra.mxu0 0.0
      %2145 = vmatpush.msra.mxu0 0.0
      %2146 = vmatpush.msra.mxu0 0.0
      %2147 = vmatpush.msra.mxu0 0.0
      %2148 = vmatpush.msra.mxu0 0.0
      %2149 = vmatpush.msra.mxu0 %v2040
      %2150 = vmatpush.msra.mxu0 %v2039
      %2151 = vmatpush.msra.mxu0 %v2038
      %2152 = vmatpush.msra.mxu0 %v2037
      %2153 = vmatmul.f32.gmra.mxu0 %v2042
      %v2154 = vpop.f32.mrf.mxu0
      %v2155 = vadd.f32 0.0, %v2154
      %2156 = vmatmul.f32.gmra.mxu0 %v2045
      %v2157 = vpop.f32.mrf.mxu0
      %v2158 = vadd.f32 0.0, %v2157
      %2159 = vmatmul.f32.gmra.mxu0 %v2048
      %v2160 = vpop.f32.mrf.mxu0
      %v2161 = vadd.f32 0.0, %v2160
      %2162 = vmatmul.f32.gmra.mxu0 %v2051
      %v2163 = vpop.f32.mrf.mxu0
      %v2164 = vadd.f32 0.0, %v2163
      %2165 = vmatmul.f32.gmra.mxu0 %v2054
      %v2166 = vpop.f32.mrf.mxu0
      %v2167 = vadd.f32 0.0, %v2166
      %2168 = vmatmul.f32.gmra.mxu0 %v2057
      %v2169 = vpop.f32.mrf.mxu0
      %v2170 = vadd.f32 0.0, %v2169
      %2171 = vmatmul.f32.gmra.mxu0 %v2060
      %v2172 = vpop.f32.mrf.mxu0
      %v2173 = vadd.f32 0.0, %v2172
      %2174 = vmatmul.f32.gmra.mxu0 %v2063
      %v2175 = vpop.f32.mrf.mxu0
      %v2176 = vadd.f32 0.0, %v2175
      %2177 = vmatmul.f32.gmra.mxu0 %v2066
      %v2178 = vpop.f32.mrf.mxu0
      %v2179 = vadd.f32 0.0, %v2178
      %2180 = vmatmul.f32.gmra.mxu0 %v2069
      %v2181 = vpop.f32.mrf.mxu0
      %v2182 = vadd.f32 0.0, %v2181
      %2183 = vmatmul.f32.gmra.mxu0 %v2072
      %v2184 = vpop.f32.mrf.mxu0
      %v2185 = vadd.f32 0.0, %v2184
      %2186 = vmatmul.f32.gmra.mxu0 %v2075
      %v2187 = vpop.f32.mrf.mxu0
      %v2188 = vadd.f32 0.0, %v2187
      %2189 = vmatmul.f32.gmra.mxu0 %v2078
      %v2190 = vpop.f32.mrf.mxu0
      %v2191 = vadd.f32 0.0, %v2190
      %2192 = vmatmul.f32.gmra.mxu0 %v2081
      %v2193 = vpop.f32.mrf.mxu0
      %v2194 = vadd.f32 0.0, %v2193
      %2195 = vmatmul.f32.gmra.mxu0 %v2084
      %v2196 = vpop.f32.mrf.mxu0
      %v2197 = vadd.f32 0.0, %v2196
      %2198 = vmatmul.f32.gmra.mxu0 %v2087
      %v2199 = vpop.f32.mrf.mxu0
      %v2200 = vadd.f32 0.0, %v2199
      %2201 = vmatmul.f32.gmra.mxu0 %v2090
      %v2202 = vpop.f32.mrf.mxu0
      %v2203 = vadd.f32 0.0, %v2202
      %2204 = vmatmul.f32.gmra.mxu0 %v2093
      %v2205 = vpop.f32.mrf.mxu0
      %v2206 = vadd.f32 0.0, %v2205
      %2207 = vmatmul.f32.gmra.mxu0 %v2096
      %v2208 = vpop.f32.mrf.mxu0
      %v2209 = vadd.f32 0.0, %v2208
      %2210 = vmatmul.f32.gmra.mxu0 %v2099
      %v2211 = vpop.f32.mrf.mxu0
      %v2212 = vadd.f32 0.0, %v2211
      %2213 = vmatmul.f32.gmra.mxu0 %v2102
      %v2214 = vpop.f32.mrf.mxu0
      %v2215 = vadd.f32 0.0, %v2214
      %2216 = vmatmul.f32.gmra.mxu0 %v2105
      %v2217 = vpop.f32.mrf.mxu0
      %v2218 = vadd.f32 0.0, %v2217
      %2219 = vmatmul.f32.gmra.mxu0 %v2108
      %v2220 = vpop.f32.mrf.mxu0
      %v2221 = vadd.f32 0.0, %v2220
      %2222 = vmatmul.f32.gmra.mxu0 %v2111
      %v2223 = vpop.f32.mrf.mxu0
      %v2224 = vadd.f32 0.0, %v2223
      %2225 = vmatmul.f32.gmra.mxu0 %v2114
      %v2226 = vpop.f32.mrf.mxu0
      %v2227 = vadd.f32 0.0, %v2226
      %2228 = vmatmul.f32.gmra.mxu0 %v2117
      %v2229 = vpop.f32.mrf.mxu0
      %v2230 = vadd.f32 0.0, %v2229
      %2231 = vmatmul.f32.gmra.mxu0 %v2120
      %v2232 = vpop.f32.mrf.mxu0
      %v2233 = vadd.f32 0.0, %v2232
      %2234 = vmatmul.f32.gmra.mxu0 %v2123
      %v2235 = vpop.f32.mrf.mxu0
      %v2236 = vadd.f32 0.0, %v2235
      %2237 = vmatmul.f32.gmra.mxu0 %v2126
      %v2238 = vpop.f32.mrf.mxu0
      %v2239 = vadd.f32 0.0, %v2238
      %2240 = vmatmul.f32.gmra.mxu0 %v2129
      %v2241 = vpop.f32.mrf.mxu0
      %v2242 = vadd.f32 0.0, %v2241
      %2243 = vmatmul.f32.gmra.mxu0 %v2132
      %v2244 = vpop.f32.mrf.mxu0
      %v2245 = vadd.f32 0.0, %v2244
      %2246 = vmatmul.f32.gmra.mxu0 %v2135
      %v2247 = vpop.f32.mrf.mxu0
      %v2248 = vadd.f32 0.0, %v2247
      %2249 = vdwg.mxu0
      %v2250 = vadd.f32 %v1972, %v2155
      %v2251 = vadd.f32 %v1973, %v2158
      %v2252 = vadd.f32 %v1974, %v2161
      %v2253 = vadd.f32 %v1975, %v2164
      %v2254 = vadd.f32 %v1976, %v2167
      %v2255 = vadd.f32 %v1977, %v2170
      %v2256 = vadd.f32 %v1978, %v2173
      %v2257 = vadd.f32 %v1979, %v2176
      %v2258 = vadd.f32 %v1980, %v2179
      %v2259 = vadd.f32 %v1981, %v2182
      %v2260 = vadd.f32 %v1982, %v2185
      %v2261 = vadd.f32 %v1983, %v2188
      %v2262 = vadd.f32 %v1984, %v2191
      %v2263 = vadd.f32 %v1985, %v2194
      %v2264 = vadd.f32 %v1986, %v2197
      %v2265 = vadd.f32 %v1987, %v2200
      %v2266 = vadd.f32 %v1988, %v2203
      %v2267 = vadd.f32 %v1989, %v2206
      %v2268 = vadd.f32 %v1990, %v2209
      %v2269 = vadd.f32 %v1991, %v2212
      %v2270 = vadd.f32 %v1992, %v2215
      %v2271 = vadd.f32 %v1993, %v2218
      %v2272 = vadd.f32 %v1994, %v2221
      %v2273 = vadd.f32 %v1995, %v2224
      %v2274 = vadd.f32 %v1996, %v2227
      %v2275 = vadd.f32 %v1997, %v2230
      %v2276 = vadd.f32 %v1998, %v2233
      %v2277 = vadd.f32 %v1999, %v2236
      %v2278 = vadd.f32 %v2000, %v2239
      %v2279 = vadd.f32 %v2001, %v2242
      %v2280 = vadd.f32 %v2002, %v2245
      %v2281 = vadd.f32 %v2003, %v2248
      %v2282 = vld [vmem:[%s627] sm:$0xff]
      %v2283 = vld [vmem:[%s627 + $0x8] sm:$0xff]
      %v2284 = vld [vmem:[%s627 + $0x18] sm:$0xff]
      %v2285 = vld [vmem:[%s627 + $0x20] sm:$0xff]
      %v2286 = vld [vmem:[%s627 + $0x30] sm:$0xff]
      %v2287 = vld [vmem:[%s627 + $0x38] sm:$0xff]
      %v2288 = vld [vmem:[%s627 + $0x48] sm:$0xff]
      %v2289 = vld [vmem:[%s627 + $0x50] sm:$0xff]
      %v2290 = vld [vmem:[%s627 + $0x60] sm:$0xff]
      %v2291 = vld [vmem:[%s627 + $0x68] sm:$0xff]
      %v2292 = vld [vmem:[%s627 + $0x78] sm:$0xff]
      %v2293 = vld [vmem:[%s627 + $0x80] sm:$0xff]
      %v2294 = vld [vmem:[%s627 + $0x90] sm:$0xff]
      %v2295 = vld [vmem:[%s627 + $0x98] sm:$0xff]
      %v2296 = vld [vmem:[%s627 + $0xa8] sm:$0xff]
      %v2297 = vld [vmem:[%s627 + $0xb0] sm:$0xff]
      %v2298 = vld [vmem:[%s627 + $0xc0] sm:$0xff]
      %v2299 = vld [vmem:[%s627 + $0xc8] sm:$0xff]
      %v2300 = vld [vmem:[%s627 + $0xd8] sm:$0xff]
      %v2301 = vld [vmem:[%s627 + $0xe0] sm:$0xff]
      %v2302 = vld [vmem:[%s627 + $0xf0] sm:$0xff]
      %v2303 = vld [vmem:[%s627 + $0xf8] sm:$0xff]
      %v2304 = vld [vmem:[%s627 + $0x108] sm:$0xff]
      %v2305 = vld [vmem:[%s627 + $0x110] sm:$0xff]
      %v2306 = vld [vmem:[%s627 + $0x120] sm:$0xff]
      %v2307 = vld [vmem:[%s627 + $0x128] sm:$0xff]
      %v2308 = vld [vmem:[%s627 + $0x138] sm:$0xff]
      %v2309 = vld [vmem:[%s627 + $0x140] sm:$0xff]
      %v2310 = vld [vmem:[%s627 + $0x150] sm:$0xff]
      %v2311 = vld [vmem:[%s627 + $0x158] sm:$0xff]
      %v2312 = vld [vmem:[%s627 + $0x168] sm:$0xff]
      %v2313 = vld [vmem:[%s627 + $0x170] sm:$0xff]
      %s2314 = scalar_lea.vmem %s1, 3
      %v2315 = vld [vmem:[%s2314] sm:$0x1]
      %2317 = vset.pattern.permute.xlu0 0
      %2318 = vperm.xlu0 %2317, %v2282
      %v2319 = vpop.permute.xlu0 %2318
      %2322 = vset.pattern.permute.xlu0 0
      %2323 = vperm.xlu0 %2322, %v2283
      %v2324 = vpop.permute.xlu0 %2323
      %2327 = vset.pattern.permute.xlu0 0
      %2328 = vperm.xlu0 %2327, %v2284
      %v2329 = vpop.permute.xlu0 %2328
      %2332 = vset.pattern.permute.xlu0 0
      %2333 = vperm.xlu0 %2332, %v2285
      %v2334 = vpop.permute.xlu0 %2333
      %2337 = vset.pattern.permute.xlu0 0
      %2338 = vperm.xlu0 %2337, %v2286
      %v2339 = vpop.permute.xlu0 %2338
      %2342 = vset.pattern.permute.xlu0 0
      %2343 = vperm.xlu0 %2342, %v2287
      %v2344 = vpop.permute.xlu0 %2343
      %2347 = vset.pattern.permute.xlu0 0
      %2348 = vperm.xlu0 %2347, %v2288
      %v2349 = vpop.permute.xlu0 %2348
      %2352 = vset.pattern.permute.xlu0 0
      %2353 = vperm.xlu0 %2352, %v2289
      %v2354 = vpop.permute.xlu0 %2353
      %2357 = vset.pattern.permute.xlu0 0
      %2358 = vperm.xlu0 %2357, %v2290
      %v2359 = vpop.permute.xlu0 %2358
      %2362 = vset.pattern.permute.xlu0 0
      %2363 = vperm.xlu0 %2362, %v2291
      %v2364 = vpop.permute.xlu0 %2363
      %2367 = vset.pattern.permute.xlu0 0
      %2368 = vperm.xlu0 %2367, %v2292
      %v2369 = vpop.permute.xlu0 %2368
      %2372 = vset.pattern.permute.xlu0 0
      %2373 = vperm.xlu0 %2372, %v2293
      %v2374 = vpop.permute.xlu0 %2373
      %2377 = vset.pattern.permute.xlu0 0
      %2378 = vperm.xlu0 %2377, %v2294
      %v2379 = vpop.permute.xlu0 %2378
      %2382 = vset.pattern.permute.xlu0 0
      %2383 = vperm.xlu0 %2382, %v2295
      %v2384 = vpop.permute.xlu0 %2383
      %2387 = vset.pattern.permute.xlu0 0
      %2388 = vperm.xlu0 %2387, %v2296
      %v2389 = vpop.permute.xlu0 %2388
      %2392 = vset.pattern.permute.xlu0 0
      %2393 = vperm.xlu0 %2392, %v2297
      %v2394 = vpop.permute.xlu0 %2393
      %2397 = vset.pattern.permute.xlu0 0
      %2398 = vperm.xlu0 %2397, %v2298
      %v2399 = vpop.permute.xlu0 %2398
      %2402 = vset.pattern.permute.xlu0 0
      %2403 = vperm.xlu0 %2402, %v2299
      %v2404 = vpop.permute.xlu0 %2403
      %2407 = vset.pattern.permute.xlu0 0
      %2408 = vperm.xlu0 %2407, %v2300
      %v2409 = vpop.permute.xlu0 %2408
      %2412 = vset.pattern.permute.xlu0 0
      %2413 = vperm.xlu0 %2412, %v2301
      %v2414 = vpop.permute.xlu0 %2413
      %2417 = vset.pattern.permute.xlu0 0
      %2418 = vperm.xlu0 %2417, %v2302
      %v2419 = vpop.permute.xlu0 %2418
      %2422 = vset.pattern.permute.xlu0 0
      %2423 = vperm.xlu0 %2422, %v2303
      %v2424 = vpop.permute.xlu0 %2423
      %2427 = vset.pattern.permute.xlu0 0
      %2428 = vperm.xlu0 %2427, %v2304
      %v2429 = vpop.permute.xlu0 %2428
      %2432 = vset.pattern.permute.xlu0 0
      %2433 = vperm.xlu0 %2432, %v2305
      %v2434 = vpop.permute.xlu0 %2433
      %2437 = vset.pattern.permute.xlu0 0
      %2438 = vperm.xlu0 %2437, %v2306
      %v2439 = vpop.permute.xlu0 %2438
      %2442 = vset.pattern.permute.xlu0 0
      %2443 = vperm.xlu0 %2442, %v2307
      %v2444 = vpop.permute.xlu0 %2443
      %2447 = vset.pattern.permute.xlu0 0
      %2448 = vperm.xlu0 %2447, %v2308
      %v2449 = vpop.permute.xlu0 %2448
      %2452 = vset.pattern.permute.xlu0 0
      %2453 = vperm.xlu0 %2452, %v2309
      %v2454 = vpop.permute.xlu0 %2453
      %2457 = vset.pattern.permute.xlu0 0
      %2458 = vperm.xlu0 %2457, %v2310
      %v2459 = vpop.permute.xlu0 %2458
      %2462 = vset.pattern.permute.xlu0 0
      %2463 = vperm.xlu0 %2462, %v2311
      %v2464 = vpop.permute.xlu0 %2463
      %2467 = vset.pattern.permute.xlu0 0
      %2468 = vperm.xlu0 %2467, %v2312
      %v2469 = vpop.permute.xlu0 %2468
      %2472 = vset.pattern.permute.xlu0 0
      %2473 = vperm.xlu0 %2472, %v2313
      %v2474 = vpop.permute.xlu0 %2473
      %v2477 = vperm.slane %v2315, 0
      %v2479 = vmul.f32 %v2319, %v2477
      %v2480 = vmul.f32 %v2324, %v2477
      %v2481 = vmul.f32 %v2329, %v2477
      %v2482 = vmul.f32 %v2334, %v2477
      %v2483 = vmul.f32 %v2339, %v2477
      %v2484 = vmul.f32 %v2344, %v2477
      %v2485 = vmul.f32 %v2349, %v2477
      %v2486 = vmul.f32 %v2354, %v2477
      %v2487 = vmul.f32 %v2359, %v2477
      %v2488 = vmul.f32 %v2364, %v2477
      %v2489 = vmul.f32 %v2369, %v2477
      %v2490 = vmul.f32 %v2374, %v2477
      %v2491 = vmul.f32 %v2379, %v2477
      %v2492 = vmul.f32 %v2384, %v2477
      %v2493 = vmul.f32 %v2389, %v2477
      %v2494 = vmul.f32 %v2394, %v2477
      %v2495 = vmul.f32 %v2399, %v2477
      %v2496 = vmul.f32 %v2404, %v2477
      %v2497 = vmul.f32 %v2409, %v2477
      %v2498 = vmul.f32 %v2414, %v2477
      %v2499 = vmul.f32 %v2419, %v2477
      %v2500 = vmul.f32 %v2424, %v2477
      %v2501 = vmul.f32 %v2429, %v2477
      %v2502 = vmul.f32 %v2434, %v2477
      %v2503 = vmul.f32 %v2439, %v2477
      %v2504 = vmul.f32 %v2444, %v2477
      %v2505 = vmul.f32 %v2449, %v2477
      %v2506 = vmul.f32 %v2454, %v2477
      %v2507 = vmul.f32 %v2459, %v2477
      %v2508 = vmul.f32 %v2464, %v2477
      %v2509 = vmul.f32 %v2469, %v2477
      %v2510 = vmul.f32 %v2474, %v2477
      %v2511 = vadd.f32 %v2250, %v2479
      %v2512 = vadd.f32 %v2251, %v2480
      %v2513 = vadd.f32 %v2252, %v2481
      %v2514 = vadd.f32 %v2253, %v2482
      %v2515 = vadd.f32 %v2254, %v2483
      %v2516 = vadd.f32 %v2255, %v2484
      %v2517 = vadd.f32 %v2256, %v2485
      %v2518 = vadd.f32 %v2257, %v2486
      %v2519 = vadd.f32 %v2258, %v2487
      %v2520 = vadd.f32 %v2259, %v2488
      %v2521 = vadd.f32 %v2260, %v2489
      %v2522 = vadd.f32 %v2261, %v2490
      %v2523 = vadd.f32 %v2262, %v2491
      %v2524 = vadd.f32 %v2263, %v2492
      %v2525 = vadd.f32 %v2264, %v2493
      %v2526 = vadd.f32 %v2265, %v2494
      %v2527 = vadd.f32 %v2266, %v2495
      %v2528 = vadd.f32 %v2267, %v2496
      %v2529 = vadd.f32 %v2268, %v2497
      %v2530 = vadd.f32 %v2269, %v2498
      %v2531 = vadd.f32 %v2270, %v2499
      %v2532 = vadd.f32 %v2271, %v2500
      %v2533 = vadd.f32 %v2272, %v2501
      %v2534 = vadd.f32 %v2273, %v2502
      %v2535 = vadd.f32 %v2274, %v2503
      %v2536 = vadd.f32 %v2275, %v2504
      %v2537 = vadd.f32 %v2276, %v2505
      %v2538 = vadd.f32 %v2277, %v2506
      %v2539 = vadd.f32 %v2278, %v2507
      %v2540 = vadd.f32 %v2279, %v2508
      %v2541 = vadd.f32 %v2280, %v2509
      %v2542 = vadd.f32 %v2281, %v2510
      %s2543 = scalar_lea.vmem [#allocation3], 24
      %v2544 = vld [vmem:[%s2543] sm:$0xff]
      %v2545 = vld [vmem:[%s2543 + $0x8] sm:$0xff]
      %v2546 = vld [vmem:[%s2543 + $0x18] sm:$0xff]
      %v2547 = vld [vmem:[%s2543 + $0x20] sm:$0xff]
      %v2548 = vld [vmem:[%s2543 + $0x30] sm:$0xff]
      %v2549 = vld [vmem:[%s2543 + $0x38] sm:$0xff]
      %v2550 = vld [vmem:[%s2543 + $0x48] sm:$0xff]
      %v2551 = vld [vmem:[%s2543 + $0x50] sm:$0xff]
      %v2552 = vld [vmem:[%s2543 + $0x60] sm:$0xff]
      %v2553 = vld [vmem:[%s2543 + $0x68] sm:$0xff]
      %v2554 = vld [vmem:[%s2543 + $0x78] sm:$0xff]
      %v2555 = vld [vmem:[%s2543 + $0x80] sm:$0xff]
      %v2556 = vld [vmem:[%s2543 + $0x90] sm:$0xff]
      %v2557 = vld [vmem:[%s2543 + $0x98] sm:$0xff]
      %v2558 = vld [vmem:[%s2543 + $0xa8] sm:$0xff]
      %v2559 = vld [vmem:[%s2543 + $0xb0] sm:$0xff]
      %v2560 = vld [vmem:[%s2543 + $0xc0] sm:$0xff]
      %v2561 = vld [vmem:[%s2543 + $0xc8] sm:$0xff]
      %v2562 = vld [vmem:[%s2543 + $0xd8] sm:$0xff]
      %v2563 = vld [vmem:[%s2543 + $0xe0] sm:$0xff]
      %v2564 = vld [vmem:[%s2543 + $0xf0] sm:$0xff]
      %v2565 = vld [vmem:[%s2543 + $0xf8] sm:$0xff]
      %v2566 = vld [vmem:[%s2543 + $0x108] sm:$0xff]
      %v2567 = vld [vmem:[%s2543 + $0x110] sm:$0xff]
      %v2568 = vld [vmem:[%s2543 + $0x120] sm:$0xff]
      %v2569 = vld [vmem:[%s2543 + $0x128] sm:$0xff]
      %v2570 = vld [vmem:[%s2543 + $0x138] sm:$0xff]
      %v2571 = vld [vmem:[%s2543 + $0x140] sm:$0xff]
      %v2572 = vld [vmem:[%s2543 + $0x150] sm:$0xff]
      %v2573 = vld [vmem:[%s2543 + $0x158] sm:$0xff]
      %v2574 = vld [vmem:[%s2543 + $0x168] sm:$0xff]
      %v2575 = vld [vmem:[%s2543 + $0x170] sm:$0xff]
      %s2576 = scalar_lea.vmem %s2, 96
      %v2577 = vld [vmem:[%s2576] sm:$0xff]
      %v2578 = vld [vmem:[%s2576 + $0x8] sm:$0xff]
      %v2579 = vld [vmem:[%s2576 + $0x10] sm:$0xff]
      %v2580 = vld [vmem:[%s2576 + $0x18] sm:$0xff]
      %v2582 = vsel %vm962, %v2544, 0
      %v2585 = vsel %vm962, %v2545, 0
      %v2588 = vsel %vm962, %v2546, 0
      %v2591 = vsel %vm962, %v2547, 0
      %v2594 = vsel %vm962, %v2548, 0
      %v2597 = vsel %vm962, %v2549, 0
      %v2600 = vsel %vm962, %v2550, 0
      %v2603 = vsel %vm962, %v2551, 0
      %v2606 = vsel %vm962, %v2552, 0
      %v2609 = vsel %vm962, %v2553, 0
      %v2612 = vsel %vm962, %v2554, 0
      %v2615 = vsel %vm962, %v2555, 0
      %v2618 = vsel %vm962, %v2556, 0
      %v2621 = vsel %vm962, %v2557, 0
      %v2624 = vsel %vm962, %v2558, 0
      %v2627 = vsel %vm962, %v2559, 0
      %v2630 = vsel %vm962, %v2560, 0
      %v2633 = vsel %vm962, %v2561, 0
      %v2636 = vsel %vm962, %v2562, 0
      %v2639 = vsel %vm962, %v2563, 0
      %v2642 = vsel %vm962, %v2564, 0
      %v2645 = vsel %vm962, %v2565, 0
      %v2648 = vsel %vm962, %v2566, 0
      %v2651 = vsel %vm962, %v2567, 0
      %v2654 = vsel %vm962, %v2568, 0
      %v2657 = vsel %vm962, %v2569, 0
      %v2660 = vsel %vm962, %v2570, 0
      %v2663 = vsel %vm962, %v2571, 0
      %v2666 = vsel %vm962, %v2572, 0
      %v2669 = vsel %vm962, %v2573, 0
      %v2672 = vsel %vm962, %v2574, 0
      %v2675 = vsel %vm962, %v2575, 0
      %2677 = vmatpush.msra.mxu0 0.0
      %2678 = vmatpush.msra.mxu0 0.0
      %2679 = vmatpush.msra.mxu0 0.0
      %2680 = vmatpush.msra.mxu0 0.0
      %2681 = vmatpush.msra.mxu0 0.0
      %2682 = vmatpush.msra.mxu0 0.0
      %2683 = vmatpush.msra.mxu0 0.0
      %2684 = vmatpush.msra.mxu0 0.0
      %2685 = vmatpush.msra.mxu0 0.0
      %2686 = vmatpush.msra.mxu0 0.0
      %2687 = vmatpush.msra.mxu0 0.0
      %2688 = vmatpush.msra.mxu0 0.0
      %2689 = vmatpush.msra.mxu0 %v2580
      %2690 = vmatpush.msra.mxu0 %v2579
      %2691 = vmatpush.msra.mxu0 %v2578
      %2692 = vmatpush.msra.mxu0 %v2577
      %2693 = vmatmul.f32.gmra.mxu0 %v2582
      %v2694 = vpop.f32.mrf.mxu0
      %v2695 = vadd.f32 0.0, %v2694
      %2696 = vmatmul.f32.gmra.mxu0 %v2585
      %v2697 = vpop.f32.mrf.mxu0
      %v2698 = vadd.f32 0.0, %v2697
      %2699 = vmatmul.f32.gmra.mxu0 %v2588
      %v2700 = vpop.f32.mrf.mxu0
      %v2701 = vadd.f32 0.0, %v2700
      %2702 = vmatmul.f32.gmra.mxu0 %v2591
      %v2703 = vpop.f32.mrf.mxu0
      %v2704 = vadd.f32 0.0, %v2703
      %2705 = vmatmul.f32.gmra.mxu0 %v2594
      %v2706 = vpop.f32.mrf.mxu0
      %v2707 = vadd.f32 0.0, %v2706
      %2708 = vmatmul.f32.gmra.mxu0 %v2597
      %v2709 = vpop.f32.mrf.mxu0
      %v2710 = vadd.f32 0.0, %v2709
      %2711 = vmatmul.f32.gmra.mxu0 %v2600
      %v2712 = vpop.f32.mrf.mxu0
      %v2713 = vadd.f32 0.0, %v2712
      %2714 = vmatmul.f32.gmra.mxu0 %v2603
      %v2715 = vpop.f32.mrf.mxu0
      %v2716 = vadd.f32 0.0, %v2715
      %2717 = vmatmul.f32.gmra.mxu0 %v2606
      %v2718 = vpop.f32.mrf.mxu0
      %v2719 = vadd.f32 0.0, %v2718
      %2720 = vmatmul.f32.gmra.mxu0 %v2609
      %v2721 = vpop.f32.mrf.mxu0
      %v2722 = vadd.f32 0.0, %v2721
      %2723 = vmatmul.f32.gmra.mxu0 %v2612
      %v2724 = vpop.f32.mrf.mxu0
      %v2725 = vadd.f32 0.0, %v2724
      %2726 = vmatmul.f32.gmra.mxu0 %v2615
      %v2727 = vpop.f32.mrf.mxu0
      %v2728 = vadd.f32 0.0, %v2727
      %2729 = vmatmul.f32.gmra.mxu0 %v2618
      %v2730 = vpop.f32.mrf.mxu0
      %v2731 = vadd.f32 0.0, %v2730
      %2732 = vmatmul.f32.gmra.mxu0 %v2621
      %v2733 = vpop.f32.mrf.mxu0
      %v2734 = vadd.f32 0.0, %v2733
      %2735 = vmatmul.f32.gmra.mxu0 %v2624
      %v2736 = vpop.f32.mrf.mxu0
      %v2737 = vadd.f32 0.0, %v2736
      %2738 = vmatmul.f32.gmra.mxu0 %v2627
      %v2739 = vpop.f32.mrf.mxu0
      %v2740 = vadd.f32 0.0, %v2739
      %2741 = vmatmul.f32.gmra.mxu0 %v2630
      %v2742 = vpop.f32.mrf.mxu0
      %v2743 = vadd.f32 0.0, %v2742
      %2744 = vmatmul.f32.gmra.mxu0 %v2633
      %v2745 = vpop.f32.mrf.mxu0
      %v2746 = vadd.f32 0.0, %v2745
      %2747 = vmatmul.f32.gmra.mxu0 %v2636
      %v2748 = vpop.f32.mrf.mxu0
      %v2749 = vadd.f32 0.0, %v2748
      %2750 = vmatmul.f32.gmra.mxu0 %v2639
      %v2751 = vpop.f32.mrf.mxu0
      %v2752 = vadd.f32 0.0, %v2751
      %2753 = vmatmul.f32.gmra.mxu0 %v2642
      %v2754 = vpop.f32.mrf.mxu0
      %v2755 = vadd.f32 0.0, %v2754
      %2756 = vmatmul.f32.gmra.mxu0 %v2645
      %v2757 = vpop.f32.mrf.mxu0
      %v2758 = vadd.f32 0.0, %v2757
      %2759 = vmatmul.f32.gmra.mxu0 %v2648
      %v2760 = vpop.f32.mrf.mxu0
      %v2761 = vadd.f32 0.0, %v2760
      %2762 = vmatmul.f32.gmra.mxu0 %v2651
      %v2763 = vpop.f32.mrf.mxu0
      %v2764 = vadd.f32 0.0, %v2763
      %2765 = vmatmul.f32.gmra.mxu0 %v2654
      %v2766 = vpop.f32.mrf.mxu0
      %v2767 = vadd.f32 0.0, %v2766
      %2768 = vmatmul.f32.gmra.mxu0 %v2657
      %v2769 = vpop.f32.mrf.mxu0
      %v2770 = vadd.f32 0.0, %v2769
      %2771 = vmatmul.f32.gmra.mxu0 %v2660
      %v2772 = vpop.f32.mrf.mxu0
      %v2773 = vadd.f32 0.0, %v2772
      %2774 = vmatmul.f32.gmra.mxu0 %v2663
      %v2775 = vpop.f32.mrf.mxu0
      %v2776 = vadd.f32 0.0, %v2775
      %2777 = vmatmul.f32.gmra.mxu0 %v2666
      %v2778 = vpop.f32.mrf.mxu0
      %v2779 = vadd.f32 0.0, %v2778
      %2780 = vmatmul.f32.gmra.mxu0 %v2669
      %v2781 = vpop.f32.mrf.mxu0
      %v2782 = vadd.f32 0.0, %v2781
      %2783 = vmatmul.f32.gmra.mxu0 %v2672
      %v2784 = vpop.f32.mrf.mxu0
      %v2785 = vadd.f32 0.0, %v2784
      %2786 = vmatmul.f32.gmra.mxu0 %v2675
      %v2787 = vpop.f32.mrf.mxu0
      %v2788 = vadd.f32 0.0, %v2787
      %2789 = vdwg.mxu0
      %v2790 = vadd.f32 %v2511, %v2695
      %v2791 = vadd.f32 %v2512, %v2698
      %v2792 = vadd.f32 %v2513, %v2701
      %v2793 = vadd.f32 %v2514, %v2704
      %v2794 = vadd.f32 %v2515, %v2707
      %v2795 = vadd.f32 %v2516, %v2710
      %v2796 = vadd.f32 %v2517, %v2713
      %v2797 = vadd.f32 %v2518, %v2716
      %v2798 = vadd.f32 %v2519, %v2719
      %v2799 = vadd.f32 %v2520, %v2722
      %v2800 = vadd.f32 %v2521, %v2725
      %v2801 = vadd.f32 %v2522, %v2728
      %v2802 = vadd.f32 %v2523, %v2731
      %v2803 = vadd.f32 %v2524, %v2734
      %v2804 = vadd.f32 %v2525, %v2737
      %v2805 = vadd.f32 %v2526, %v2740
      %v2806 = vadd.f32 %v2527, %v2743
      %v2807 = vadd.f32 %v2528, %v2746
      %v2808 = vadd.f32 %v2529, %v2749
      %v2809 = vadd.f32 %v2530, %v2752
      %v2810 = vadd.f32 %v2531, %v2755
      %v2811 = vadd.f32 %v2532, %v2758
      %v2812 = vadd.f32 %v2533, %v2761
      %v2813 = vadd.f32 %v2534, %v2764
      %v2814 = vadd.f32 %v2535, %v2767
      %v2815 = vadd.f32 %v2536, %v2770
      %v2816 = vadd.f32 %v2537, %v2773
      %v2817 = vadd.f32 %v2538, %v2776
      %v2818 = vadd.f32 %v2539, %v2779
      %v2819 = vadd.f32 %v2540, %v2782
      %v2820 = vadd.f32 %v2541, %v2785
      %v2821 = vadd.f32 %v2542, %v2788
      %v2822 = vld [vmem:[%s627 + $0x1] sm:$0xff]
      %v2823 = vld [vmem:[%s627 + $0x9] sm:$0xff]
      %v2824 = vld [vmem:[%s627 + $0x19] sm:$0xff]
      %v2825 = vld [vmem:[%s627 + $0x21] sm:$0xff]
      %v2826 = vld [vmem:[%s627 + $0x31] sm:$0xff]
      %v2827 = vld [vmem:[%s627 + $0x39] sm:$0xff]
      %v2828 = vld [vmem:[%s627 + $0x49] sm:$0xff]
      %v2829 = vld [vmem:[%s627 + $0x51] sm:$0xff]
      %v2830 = vld [vmem:[%s627 + $0x61] sm:$0xff]
      %v2831 = vld [vmem:[%s627 + $0x69] sm:$0xff]
      %v2832 = vld [vmem:[%s627 + $0x79] sm:$0xff]
      %v2833 = vld [vmem:[%s627 + $0x81] sm:$0xff]
      %v2834 = vld [vmem:[%s627 + $0x91] sm:$0xff]
      %v2835 = vld [vmem:[%s627 + $0x99] sm:$0xff]
      %v2836 = vld [vmem:[%s627 + $0xa9] sm:$0xff]
      %v2837 = vld [vmem:[%s627 + $0xb1] sm:$0xff]
      %v2838 = vld [vmem:[%s627 + $0xc1] sm:$0xff]
      %v2839 = vld [vmem:[%s627 + $0xc9] sm:$0xff]
      %v2840 = vld [vmem:[%s627 + $0xd9] sm:$0xff]
      %v2841 = vld [vmem:[%s627 + $0xe1] sm:$0xff]
      %v2842 = vld [vmem:[%s627 + $0xf1] sm:$0xff]
      %v2843 = vld [vmem:[%s627 + $0xf9] sm:$0xff]
      %v2844 = vld [vmem:[%s627 + $0x109] sm:$0xff]
      %v2845 = vld [vmem:[%s627 + $0x111] sm:$0xff]
      %v2846 = vld [vmem:[%s627 + $0x121] sm:$0xff]
      %v2847 = vld [vmem:[%s627 + $0x129] sm:$0xff]
      %v2848 = vld [vmem:[%s627 + $0x139] sm:$0xff]
      %v2849 = vld [vmem:[%s627 + $0x141] sm:$0xff]
      %v2850 = vld [vmem:[%s627 + $0x151] sm:$0xff]
      %v2851 = vld [vmem:[%s627 + $0x159] sm:$0xff]
      %v2852 = vld [vmem:[%s627 + $0x169] sm:$0xff]
      %v2853 = vld [vmem:[%s627 + $0x171] sm:$0xff]
      %s2854 = scalar_lea.vmem %s1, 4
      %v2855 = vld [vmem:[%s2854] sm:$0x1]
      %2857 = vset.pattern.permute.xlu0 0
      %2858 = vperm.xlu0 %2857, %v2822
      %v2859 = vpop.permute.xlu0 %2858
      %2862 = vset.pattern.permute.xlu0 0
      %2863 = vperm.xlu0 %2862, %v2823
      %v2864 = vpop.permute.xlu0 %2863
      %2867 = vset.pattern.permute.xlu0 0
      %2868 = vperm.xlu0 %2867, %v2824
      %v2869 = vpop.permute.xlu0 %2868
      %2872 = vset.pattern.permute.xlu0 0
      %2873 = vperm.xlu0 %2872, %v2825
      %v2874 = vpop.permute.xlu0 %2873
      %2877 = vset.pattern.permute.xlu0 0
      %2878 = vperm.xlu0 %2877, %v2826
      %v2879 = vpop.permute.xlu0 %2878
      %2882 = vset.pattern.permute.xlu0 0
      %2883 = vperm.xlu0 %2882, %v2827
      %v2884 = vpop.permute.xlu0 %2883
      %2887 = vset.pattern.permute.xlu0 0
      %2888 = vperm.xlu0 %2887, %v2828
      %v2889 = vpop.permute.xlu0 %2888
      %2892 = vset.pattern.permute.xlu0 0
      %2893 = vperm.xlu0 %2892, %v2829
      %v2894 = vpop.permute.xlu0 %2893
      %2897 = vset.pattern.permute.xlu0 0
      %2898 = vperm.xlu0 %2897, %v2830
      %v2899 = vpop.permute.xlu0 %2898
      %2902 = vset.pattern.permute.xlu0 0
      %2903 = vperm.xlu0 %2902, %v2831
      %v2904 = vpop.permute.xlu0 %2903
      %2907 = vset.pattern.permute.xlu0 0
      %2908 = vperm.xlu0 %2907, %v2832
      %v2909 = vpop.permute.xlu0 %2908
      %2912 = vset.pattern.permute.xlu0 0
      %2913 = vperm.xlu0 %2912, %v2833
      %v2914 = vpop.permute.xlu0 %2913
      %2917 = vset.pattern.permute.xlu0 0
      %2918 = vperm.xlu0 %2917, %v2834
      %v2919 = vpop.permute.xlu0 %2918
      %2922 = vset.pattern.permute.xlu0 0
      %2923 = vperm.xlu0 %2922, %v2835
      %v2924 = vpop.permute.xlu0 %2923
      %2927 = vset.pattern.permute.xlu0 0
      %2928 = vperm.xlu0 %2927, %v2836
      %v2929 = vpop.permute.xlu0 %2928
      %2932 = vset.pattern.permute.xlu0 0
      %2933 = vperm.xlu0 %2932, %v2837
      %v2934 = vpop.permute.xlu0 %2933
      %2937 = vset.pattern.permute.xlu0 0
      %2938 = vperm.xlu0 %2937, %v2838
      %v2939 = vpop.permute.xlu0 %2938
      %2942 = vset.pattern.permute.xlu0 0
      %2943 = vperm.xlu0 %2942, %v2839
      %v2944 = vpop.permute.xlu0 %2943
      %2947 = vset.pattern.permute.xlu0 0
      %2948 = vperm.xlu0 %2947, %v2840
      %v2949 = vpop.permute.xlu0 %2948
      %2952 = vset.pattern.permute.xlu0 0
      %2953 = vperm.xlu0 %2952, %v2841
      %v2954 = vpop.permute.xlu0 %2953
      %2957 = vset.pattern.permute.xlu0 0
      %2958 = vperm.xlu0 %2957, %v2842
      %v2959 = vpop.permute.xlu0 %2958
      %2962 = vset.pattern.permute.xlu0 0
      %2963 = vperm.xlu0 %2962, %v2843
      %v2964 = vpop.permute.xlu0 %2963
      %2967 = vset.pattern.permute.xlu0 0
      %2968 = vperm.xlu0 %2967, %v2844
      %v2969 = vpop.permute.xlu0 %2968
      %2972 = vset.pattern.permute.xlu0 0
      %2973 = vperm.xlu0 %2972, %v2845
      %v2974 = vpop.permute.xlu0 %2973
      %2977 = vset.pattern.permute.xlu0 0
      %2978 = vperm.xlu0 %2977, %v2846
      %v2979 = vpop.permute.xlu0 %2978
      %2982 = vset.pattern.permute.xlu0 0
      %2983 = vperm.xlu0 %2982, %v2847
      %v2984 = vpop.permute.xlu0 %2983
      %2987 = vset.pattern.permute.xlu0 0
      %2988 = vperm.xlu0 %2987, %v2848
      %v2989 = vpop.permute.xlu0 %2988
      %2992 = vset.pattern.permute.xlu0 0
      %2993 = vperm.xlu0 %2992, %v2849
      %v2994 = vpop.permute.xlu0 %2993
      %2997 = vset.pattern.permute.xlu0 0
      %2998 = vperm.xlu0 %2997, %v2850
      %v2999 = vpop.permute.xlu0 %2998
      %3002 = vset.pattern.permute.xlu0 0
      %3003 = vperm.xlu0 %3002, %v2851
      %v3004 = vpop.permute.xlu0 %3003
      %3007 = vset.pattern.permute.xlu0 0
      %3008 = vperm.xlu0 %3007, %v2852
      %v3009 = vpop.permute.xlu0 %3008
      %3012 = vset.pattern.permute.xlu0 0
      %3013 = vperm.xlu0 %3012, %v2853
      %v3014 = vpop.permute.xlu0 %3013
      %v3017 = vperm.slane %v2855, 0
      %v3019 = vmul.f32 %v2859, %v3017
      %v3020 = vmul.f32 %v2864, %v3017
      %v3021 = vmul.f32 %v2869, %v3017
      %v3022 = vmul.f32 %v2874, %v3017
      %v3023 = vmul.f32 %v2879, %v3017
      %v3024 = vmul.f32 %v2884, %v3017
      %v3025 = vmul.f32 %v2889, %v3017
      %v3026 = vmul.f32 %v2894, %v3017
      %v3027 = vmul.f32 %v2899, %v3017
      %v3028 = vmul.f32 %v2904, %v3017
      %v3029 = vmul.f32 %v2909, %v3017
      %v3030 = vmul.f32 %v2914, %v3017
      %v3031 = vmul.f32 %v2919, %v3017
      %v3032 = vmul.f32 %v2924, %v3017
      %v3033 = vmul.f32 %v2929, %v3017
      %v3034 = vmul.f32 %v2934, %v3017
      %v3035 = vmul.f32 %v2939, %v3017
      %v3036 = vmul.f32 %v2944, %v3017
      %v3037 = vmul.f32 %v2949, %v3017
      %v3038 = vmul.f32 %v2954, %v3017
      %v3039 = vmul.f32 %v2959, %v3017
      %v3040 = vmul.f32 %v2964, %v3017
      %v3041 = vmul.f32 %v2969, %v3017
      %v3042 = vmul.f32 %v2974, %v3017
      %v3043 = vmul.f32 %v2979, %v3017
      %v3044 = vmul.f32 %v2984, %v3017
      %v3045 = vmul.f32 %v2989, %v3017
      %v3046 = vmul.f32 %v2994, %v3017
      %v3047 = vmul.f32 %v2999, %v3017
      %v3048 = vmul.f32 %v3004, %v3017
      %v3049 = vmul.f32 %v3009, %v3017
      %v3050 = vmul.f32 %v3014, %v3017
      %v3051 = vadd.f32 %v2790, %v3019
      %v3052 = vadd.f32 %v2791, %v3020
      %v3053 = vadd.f32 %v2792, %v3021
      %v3054 = vadd.f32 %v2793, %v3022
      %v3055 = vadd.f32 %v2794, %v3023
      %v3056 = vadd.f32 %v2795, %v3024
      %v3057 = vadd.f32 %v2796, %v3025
      %v3058 = vadd.f32 %v2797, %v3026
      %v3059 = vadd.f32 %v2798, %v3027
      %v3060 = vadd.f32 %v2799, %v3028
      %v3061 = vadd.f32 %v2800, %v3029
      %v3062 = vadd.f32 %v2801, %v3030
      %v3063 = vadd.f32 %v2802, %v3031
      %v3064 = vadd.f32 %v2803, %v3032
      %v3065 = vadd.f32 %v2804, %v3033
      %v3066 = vadd.f32 %v2805, %v3034
      %v3067 = vadd.f32 %v2806, %v3035
      %v3068 = vadd.f32 %v2807, %v3036
      %v3069 = vadd.f32 %v2808, %v3037
      %v3070 = vadd.f32 %v2809, %v3038
      %v3071 = vadd.f32 %v2810, %v3039
      %v3072 = vadd.f32 %v2811, %v3040
      %v3073 = vadd.f32 %v2812, %v3041
      %v3074 = vadd.f32 %v2813, %v3042
      %v3075 = vadd.f32 %v2814, %v3043
      %v3076 = vadd.f32 %v2815, %v3044
      %v3077 = vadd.f32 %v2816, %v3045
      %v3078 = vadd.f32 %v2817, %v3046
      %v3079 = vadd.f32 %v2818, %v3047
      %v3080 = vadd.f32 %v2819, %v3048
      %v3081 = vadd.f32 %v2820, %v3049
      %v3082 = vadd.f32 %v2821, %v3050
      %v3083 = vld [vmem:[%s2543 + $0x1] sm:$0xff]
      %v3084 = vld [vmem:[%s2543 + $0x9] sm:$0xff]
      %v3085 = vld [vmem:[%s2543 + $0x19] sm:$0xff]
      %v3086 = vld [vmem:[%s2543 + $0x21] sm:$0xff]
      %v3087 = vld [vmem:[%s2543 + $0x31] sm:$0xff]
      %v3088 = vld [vmem:[%s2543 + $0x39] sm:$0xff]
      %v3089 = vld [vmem:[%s2543 + $0x49] sm:$0xff]
      %v3090 = vld [vmem:[%s2543 + $0x51] sm:$0xff]
      %v3091 = vld [vmem:[%s2543 + $0x61] sm:$0xff]
      %v3092 = vld [vmem:[%s2543 + $0x69] sm:$0xff]
      %v3093 = vld [vmem:[%s2543 + $0x79] sm:$0xff]
      %v3094 = vld [vmem:[%s2543 + $0x81] sm:$0xff]
      %v3095 = vld [vmem:[%s2543 + $0x91] sm:$0xff]
      %v3096 = vld [vmem:[%s2543 + $0x99] sm:$0xff]
      %v3097 = vld [vmem:[%s2543 + $0xa9] sm:$0xff]
      %v3098 = vld [vmem:[%s2543 + $0xb1] sm:$0xff]
      %v3099 = vld [vmem:[%s2543 + $0xc1] sm:$0xff]
      %v3100 = vld [vmem:[%s2543 + $0xc9] sm:$0xff]
      %v3101 = vld [vmem:[%s2543 + $0xd9] sm:$0xff]
      %v3102 = vld [vmem:[%s2543 + $0xe1] sm:$0xff]
      %v3103 = vld [vmem:[%s2543 + $0xf1] sm:$0xff]
      %v3104 = vld [vmem:[%s2543 + $0xf9] sm:$0xff]
      %v3105 = vld [vmem:[%s2543 + $0x109] sm:$0xff]
      %v3106 = vld [vmem:[%s2543 + $0x111] sm:$0xff]
      %v3107 = vld [vmem:[%s2543 + $0x121] sm:$0xff]
      %v3108 = vld [vmem:[%s2543 + $0x129] sm:$0xff]
      %v3109 = vld [vmem:[%s2543 + $0x139] sm:$0xff]
      %v3110 = vld [vmem:[%s2543 + $0x141] sm:$0xff]
      %v3111 = vld [vmem:[%s2543 + $0x151] sm:$0xff]
      %v3112 = vld [vmem:[%s2543 + $0x159] sm:$0xff]
      %v3113 = vld [vmem:[%s2543 + $0x169] sm:$0xff]
      %v3114 = vld [vmem:[%s2543 + $0x171] sm:$0xff]
      %s3115 = scalar_lea.vmem %s2, 128
      %v3116 = vld [vmem:[%s3115] sm:$0xff]
      %v3117 = vld [vmem:[%s3115 + $0x8] sm:$0xff]
      %v3118 = vld [vmem:[%s3115 + $0x10] sm:$0xff]
      %v3119 = vld [vmem:[%s3115 + $0x18] sm:$0xff]
      %v3121 = vsel %vm962, %v3083, 0
      %v3124 = vsel %vm962, %v3084, 0
      %v3127 = vsel %vm962, %v3085, 0
      %v3130 = vsel %vm962, %v3086, 0
      %v3133 = vsel %vm962, %v3087, 0
      %v3136 = vsel %vm962, %v3088, 0
      %v3139 = vsel %vm962, %v3089, 0
      %v3142 = vsel %vm962, %v3090, 0
      %v3145 = vsel %vm962, %v3091, 0
      %v3148 = vsel %vm962, %v3092, 0
      %v3151 = vsel %vm962, %v3093, 0
      %v3154 = vsel %vm962, %v3094, 0
      %v3157 = vsel %vm962, %v3095, 0
      %v3160 = vsel %vm962, %v3096, 0
      %v3163 = vsel %vm962, %v3097, 0
      %v3166 = vsel %vm962, %v3098, 0
      %v3169 = vsel %vm962, %v3099, 0
      %v3172 = vsel %vm962, %v3100, 0
      %v3175 = vsel %vm962, %v3101, 0
      %v3178 = vsel %vm962, %v3102, 0
      %v3181 = vsel %vm962, %v3103, 0
      %v3184 = vsel %vm962, %v3104, 0
      %v3187 = vsel %vm962, %v3105, 0
      %v3190 = vsel %vm962, %v3106, 0
      %v3193 = vsel %vm962, %v3107, 0
      %v3196 = vsel %vm962, %v3108, 0
      %v3199 = vsel %vm962, %v3109, 0
      %v3202 = vsel %vm962, %v3110, 0
      %v3205 = vsel %vm962, %v3111, 0
      %v3208 = vsel %vm962, %v3112, 0
      %v3211 = vsel %vm962, %v3113, 0
      %v3214 = vsel %vm962, %v3114, 0
      %3216 = vmatpush.msra.mxu0 0.0
      %3217 = vmatpush.msra.mxu0 0.0
      %3218 = vmatpush.msra.mxu0 0.0
      %3219 = vmatpush.msra.mxu0 0.0
      %3220 = vmatpush.msra.mxu0 0.0
      %3221 = vmatpush.msra.mxu0 0.0
      %3222 = vmatpush.msra.mxu0 0.0
      %3223 = vmatpush.msra.mxu0 0.0
      %3224 = vmatpush.msra.mxu0 0.0
      %3225 = vmatpush.msra.mxu0 0.0
      %3226 = vmatpush.msra.mxu0 0.0
      %3227 = vmatpush.msra.mxu0 0.0
      %3228 = vmatpush.msra.mxu0 %v3119
      %3229 = vmatpush.msra.mxu0 %v3118
      %3230 = vmatpush.msra.mxu0 %v3117
      %3231 = vmatpush.msra.mxu0 %v3116
      %3232 = vmatmul.f32.gmra.mxu0 %v3121
      %v3233 = vpop.f32.mrf.mxu0
      %v3234 = vadd.f32 0.0, %v3233
      %3235 = vmatmul.f32.gmra.mxu0 %v3124
      %v3236 = vpop.f32.mrf.mxu0
      %v3237 = vadd.f32 0.0, %v3236
      %3238 = vmatmul.f32.gmra.mxu0 %v3127
      %v3239 = vpop.f32.mrf.mxu0
      %v3240 = vadd.f32 0.0, %v3239
      %3241 = vmatmul.f32.gmra.mxu0 %v3130
      %v3242 = vpop.f32.mrf.mxu0
      %v3243 = vadd.f32 0.0, %v3242
      %3244 = vmatmul.f32.gmra.mxu0 %v3133
      %v3245 = vpop.f32.mrf.mxu0
      %v3246 = vadd.f32 0.0, %v3245
      %3247 = vmatmul.f32.gmra.mxu0 %v3136
      %v3248 = vpop.f32.mrf.mxu0
      %v3249 = vadd.f32 0.0, %v3248
      %3250 = vmatmul.f32.gmra.mxu0 %v3139
      %v3251 = vpop.f32.mrf.mxu0
      %v3252 = vadd.f32 0.0, %v3251
      %3253 = vmatmul.f32.gmra.mxu0 %v3142
      %v3254 = vpop.f32.mrf.mxu0
      %v3255 = vadd.f32 0.0, %v3254
      %3256 = vmatmul.f32.gmra.mxu0 %v3145
      %v3257 = vpop.f32.mrf.mxu0
      %v3258 = vadd.f32 0.0, %v3257
      %3259 = vmatmul.f32.gmra.mxu0 %v3148
      %v3260 = vpop.f32.mrf.mxu0
      %v3261 = vadd.f32 0.0, %v3260
      %3262 = vmatmul.f32.gmra.mxu0 %v3151
      %v3263 = vpop.f32.mrf.mxu0
      %v3264 = vadd.f32 0.0, %v3263
      %3265 = vmatmul.f32.gmra.mxu0 %v3154
      %v3266 = vpop.f32.mrf.mxu0
      %v3267 = vadd.f32 0.0, %v3266
      %3268 = vmatmul.f32.gmra.mxu0 %v3157
      %v3269 = vpop.f32.mrf.mxu0
      %v3270 = vadd.f32 0.0, %v3269
      %3271 = vmatmul.f32.gmra.mxu0 %v3160
      %v3272 = vpop.f32.mrf.mxu0
      %v3273 = vadd.f32 0.0, %v3272
      %3274 = vmatmul.f32.gmra.mxu0 %v3163
      %v3275 = vpop.f32.mrf.mxu0
      %v3276 = vadd.f32 0.0, %v3275
      %3277 = vmatmul.f32.gmra.mxu0 %v3166
      %v3278 = vpop.f32.mrf.mxu0
      %v3279 = vadd.f32 0.0, %v3278
      %3280 = vmatmul.f32.gmra.mxu0 %v3169
      %v3281 = vpop.f32.mrf.mxu0
      %v3282 = vadd.f32 0.0, %v3281
      %3283 = vmatmul.f32.gmra.mxu0 %v3172
      %v3284 = vpop.f32.mrf.mxu0
      %v3285 = vadd.f32 0.0, %v3284
      %3286 = vmatmul.f32.gmra.mxu0 %v3175
      %v3287 = vpop.f32.mrf.mxu0
      %v3288 = vadd.f32 0.0, %v3287
      %3289 = vmatmul.f32.gmra.mxu0 %v3178
      %v3290 = vpop.f32.mrf.mxu0
      %v3291 = vadd.f32 0.0, %v3290
      %3292 = vmatmul.f32.gmra.mxu0 %v3181
      %v3293 = vpop.f32.mrf.mxu0
      %v3294 = vadd.f32 0.0, %v3293
      %3295 = vmatmul.f32.gmra.mxu0 %v3184
      %v3296 = vpop.f32.mrf.mxu0
      %v3297 = vadd.f32 0.0, %v3296
      %3298 = vmatmul.f32.gmra.mxu0 %v3187
      %v3299 = vpop.f32.mrf.mxu0
      %v3300 = vadd.f32 0.0, %v3299
      %3301 = vmatmul.f32.gmra.mxu0 %v3190
      %v3302 = vpop.f32.mrf.mxu0
      %v3303 = vadd.f32 0.0, %v3302
      %3304 = vmatmul.f32.gmra.mxu0 %v3193
      %v3305 = vpop.f32.mrf.mxu0
      %v3306 = vadd.f32 0.0, %v3305
      %3307 = vmatmul.f32.gmra.mxu0 %v3196
      %v3308 = vpop.f32.mrf.mxu0
      %v3309 = vadd.f32 0.0, %v3308
      %3310 = vmatmul.f32.gmra.mxu0 %v3199
      %v3311 = vpop.f32.mrf.mxu0
      %v3312 = vadd.f32 0.0, %v3311
      %3313 = vmatmul.f32.gmra.mxu0 %v3202
      %v3314 = vpop.f32.mrf.mxu0
      %v3315 = vadd.f32 0.0, %v3314
      %3316 = vmatmul.f32.gmra.mxu0 %v3205
      %v3317 = vpop.f32.mrf.mxu0
      %v3318 = vadd.f32 0.0, %v3317
      %3319 = vmatmul.f32.gmra.mxu0 %v3208
      %v3320 = vpop.f32.mrf.mxu0
      %v3321 = vadd.f32 0.0, %v3320
      %3322 = vmatmul.f32.gmra.mxu0 %v3211
      %v3323 = vpop.f32.mrf.mxu0
      %v3324 = vadd.f32 0.0, %v3323
      %3325 = vmatmul.f32.gmra.mxu0 %v3214
      %v3326 = vpop.f32.mrf.mxu0
      %v3327 = vadd.f32 0.0, %v3326
      %3328 = vdwg.mxu0
      %v3329 = vadd.f32 %v3051, %v3234
      %v3330 = vadd.f32 %v3052, %v3237
      %v3331 = vadd.f32 %v3053, %v3240
      %v3332 = vadd.f32 %v3054, %v3243
      %v3333 = vadd.f32 %v3055, %v3246
      %v3334 = vadd.f32 %v3056, %v3249
      %v3335 = vadd.f32 %v3057, %v3252
      %v3336 = vadd.f32 %v3058, %v3255
      %v3337 = vadd.f32 %v3059, %v3258
      %v3338 = vadd.f32 %v3060, %v3261
      %v3339 = vadd.f32 %v3061, %v3264
      %v3340 = vadd.f32 %v3062, %v3267
      %v3341 = vadd.f32 %v3063, %v3270
      %v3342 = vadd.f32 %v3064, %v3273
      %v3343 = vadd.f32 %v3065, %v3276
      %v3344 = vadd.f32 %v3066, %v3279
      %v3345 = vadd.f32 %v3067, %v3282
      %v3346 = vadd.f32 %v3068, %v3285
      %v3347 = vadd.f32 %v3069, %v3288
      %v3348 = vadd.f32 %v3070, %v3291
      %v3349 = vadd.f32 %v3071, %v3294
      %v3350 = vadd.f32 %v3072, %v3297
      %v3351 = vadd.f32 %v3073, %v3300
      %v3352 = vadd.f32 %v3074, %v3303
      %v3353 = vadd.f32 %v3075, %v3306
      %v3354 = vadd.f32 %v3076, %v3309
      %v3355 = vadd.f32 %v3077, %v3312
      %v3356 = vadd.f32 %v3078, %v3315
      %v3357 = vadd.f32 %v3079, %v3318
      %v3358 = vadd.f32 %v3080, %v3321
      %v3359 = vadd.f32 %v3081, %v3324
      %v3360 = vadd.f32 %v3082, %v3327
      %v3361 = vld [vmem:[%s627 + $0x2] sm:$0xff]
      %v3362 = vld [vmem:[%s627 + $0xa] sm:$0xff]
      %v3363 = vld [vmem:[%s627 + $0x1a] sm:$0xff]
      %v3364 = vld [vmem:[%s627 + $0x22] sm:$0xff]
      %v3365 = vld [vmem:[%s627 + $0x32] sm:$0xff]
      %v3366 = vld [vmem:[%s627 + $0x3a] sm:$0xff]
      %v3367 = vld [vmem:[%s627 + $0x4a] sm:$0xff]
      %v3368 = vld [vmem:[%s627 + $0x52] sm:$0xff]
      %v3369 = vld [vmem:[%s627 + $0x62] sm:$0xff]
      %v3370 = vld [vmem:[%s627 + $0x6a] sm:$0xff]
      %v3371 = vld [vmem:[%s627 + $0x7a] sm:$0xff]
      %v3372 = vld [vmem:[%s627 + $0x82] sm:$0xff]
      %v3373 = vld [vmem:[%s627 + $0x92] sm:$0xff]
      %v3374 = vld [vmem:[%s627 + $0x9a] sm:$0xff]
      %v3375 = vld [vmem:[%s627 + $0xaa] sm:$0xff]
      %v3376 = vld [vmem:[%s627 + $0xb2] sm:$0xff]
      %v3377 = vld [vmem:[%s627 + $0xc2] sm:$0xff]
      %v3378 = vld [vmem:[%s627 + $0xca] sm:$0xff]
      %v3379 = vld [vmem:[%s627 + $0xda] sm:$0xff]
      %v3380 = vld [vmem:[%s627 + $0xe2] sm:$0xff]
      %v3381 = vld [vmem:[%s627 + $0xf2] sm:$0xff]
      %v3382 = vld [vmem:[%s627 + $0xfa] sm:$0xff]
      %v3383 = vld [vmem:[%s627 + $0x10a] sm:$0xff]
      %v3384 = vld [vmem:[%s627 + $0x112] sm:$0xff]
      %v3385 = vld [vmem:[%s627 + $0x122] sm:$0xff]
      %v3386 = vld [vmem:[%s627 + $0x12a] sm:$0xff]
      %v3387 = vld [vmem:[%s627 + $0x13a] sm:$0xff]
      %v3388 = vld [vmem:[%s627 + $0x142] sm:$0xff]
      %v3389 = vld [vmem:[%s627 + $0x152] sm:$0xff]
      %v3390 = vld [vmem:[%s627 + $0x15a] sm:$0xff]
      %v3391 = vld [vmem:[%s627 + $0x16a] sm:$0xff]
      %v3392 = vld [vmem:[%s627 + $0x172] sm:$0xff]
      %s3393 = scalar_lea.vmem %s1, 5
      %v3394 = vld [vmem:[%s3393] sm:$0x1]
      %3396 = vset.pattern.permute.xlu0 0
      %3397 = vperm.xlu0 %3396, %v3361
      %v3398 = vpop.permute.xlu0 %3397
      %3401 = vset.pattern.permute.xlu0 0
      %3402 = vperm.xlu0 %3401, %v3362
      %v3403 = vpop.permute.xlu0 %3402
      %3406 = vset.pattern.permute.xlu0 0
      %3407 = vperm.xlu0 %3406, %v3363
      %v3408 = vpop.permute.xlu0 %3407
      %3411 = vset.pattern.permute.xlu0 0
      %3412 = vperm.xlu0 %3411, %v3364
      %v3413 = vpop.permute.xlu0 %3412
      %3416 = vset.pattern.permute.xlu0 0
      %3417 = vperm.xlu0 %3416, %v3365
      %v3418 = vpop.permute.xlu0 %3417
      %3421 = vset.pattern.permute.xlu0 0
      %3422 = vperm.xlu0 %3421, %v3366
      %v3423 = vpop.permute.xlu0 %3422
      %3426 = vset.pattern.permute.xlu0 0
      %3427 = vperm.xlu0 %3426, %v3367
      %v3428 = vpop.permute.xlu0 %3427
      %3431 = vset.pattern.permute.xlu0 0
      %3432 = vperm.xlu0 %3431, %v3368
      %v3433 = vpop.permute.xlu0 %3432
      %3436 = vset.pattern.permute.xlu0 0
      %3437 = vperm.xlu0 %3436, %v3369
      %v3438 = vpop.permute.xlu0 %3437
      %3441 = vset.pattern.permute.xlu0 0
      %3442 = vperm.xlu0 %3441, %v3370
      %v3443 = vpop.permute.xlu0 %3442
      %3446 = vset.pattern.permute.xlu0 0
      %3447 = vperm.xlu0 %3446, %v3371
      %v3448 = vpop.permute.xlu0 %3447
      %3451 = vset.pattern.permute.xlu0 0
      %3452 = vperm.xlu0 %3451, %v3372
      %v3453 = vpop.permute.xlu0 %3452
      %3456 = vset.pattern.permute.xlu0 0
      %3457 = vperm.xlu0 %3456, %v3373
      %v3458 = vpop.permute.xlu0 %3457
      %3461 = vset.pattern.permute.xlu0 0
      %3462 = vperm.xlu0 %3461, %v3374
      %v3463 = vpop.permute.xlu0 %3462
      %3466 = vset.pattern.permute.xlu0 0
      %3467 = vperm.xlu0 %3466, %v3375
      %v3468 = vpop.permute.xlu0 %3467
      %3471 = vset.pattern.permute.xlu0 0
      %3472 = vperm.xlu0 %3471, %v3376
      %v3473 = vpop.permute.xlu0 %3472
      %3476 = vset.pattern.permute.xlu0 0
      %3477 = vperm.xlu0 %3476, %v3377
      %v3478 = vpop.permute.xlu0 %3477
      %3481 = vset.pattern.permute.xlu0 0
      %3482 = vperm.xlu0 %3481, %v3378
      %v3483 = vpop.permute.xlu0 %3482
      %3486 = vset.pattern.permute.xlu0 0
      %3487 = vperm.xlu0 %3486, %v3379
      %v3488 = vpop.permute.xlu0 %3487
      %3491 = vset.pattern.permute.xlu0 0
      %3492 = vperm.xlu0 %3491, %v3380
      %v3493 = vpop.permute.xlu0 %3492
      %3496 = vset.pattern.permute.xlu0 0
      %3497 = vperm.xlu0 %3496, %v3381
      %v3498 = vpop.permute.xlu0 %3497
      %3501 = vset.pattern.permute.xlu0 0
      %3502 = vperm.xlu0 %3501, %v3382
      %v3503 = vpop.permute.xlu0 %3502
      %3506 = vset.pattern.permute.xlu0 0
      %3507 = vperm.xlu0 %3506, %v3383
      %v3508 = vpop.permute.xlu0 %3507
      %3511 = vset.pattern.permute.xlu0 0
      %3512 = vperm.xlu0 %3511, %v3384
      %v3513 = vpop.permute.xlu0 %3512
      %3516 = vset.pattern.permute.xlu0 0
      %3517 = vperm.xlu0 %3516, %v3385
      %v3518 = vpop.permute.xlu0 %3517
      %3521 = vset.pattern.permute.xlu0 0
      %3522 = vperm.xlu0 %3521, %v3386
      %v3523 = vpop.permute.xlu0 %3522
      %3526 = vset.pattern.permute.xlu0 0
      %3527 = vperm.xlu0 %3526, %v3387
      %v3528 = vpop.permute.xlu0 %3527
      %3531 = vset.pattern.permute.xlu0 0
      %3532 = vperm.xlu0 %3531, %v3388
      %v3533 = vpop.permute.xlu0 %3532
      %3536 = vset.pattern.permute.xlu0 0
      %3537 = vperm.xlu0 %3536, %v3389
      %v3538 = vpop.permute.xlu0 %3537
      %3541 = vset.pattern.permute.xlu0 0
      %3542 = vperm.xlu0 %3541, %v3390
      %v3543 = vpop.permute.xlu0 %3542
      %3546 = vset.pattern.permute.xlu0 0
      %3547 = vperm.xlu0 %3546, %v3391
      %v3548 = vpop.permute.xlu0 %3547
      %3551 = vset.pattern.permute.xlu0 0
      %3552 = vperm.xlu0 %3551, %v3392
      %v3553 = vpop.permute.xlu0 %3552
      %v3556 = vperm.slane %v3394, 0
      %v3558 = vmul.f32 %v3398, %v3556
      %v3559 = vmul.f32 %v3403, %v3556
      %v3560 = vmul.f32 %v3408, %v3556
      %v3561 = vmul.f32 %v3413, %v3556
      %v3562 = vmul.f32 %v3418, %v3556
      %v3563 = vmul.f32 %v3423, %v3556
      %v3564 = vmul.f32 %v3428, %v3556
      %v3565 = vmul.f32 %v3433, %v3556
      %v3566 = vmul.f32 %v3438, %v3556
      %v3567 = vmul.f32 %v3443, %v3556
      %v3568 = vmul.f32 %v3448, %v3556
      %v3569 = vmul.f32 %v3453, %v3556
      %v3570 = vmul.f32 %v3458, %v3556
      %v3571 = vmul.f32 %v3463, %v3556
      %v3572 = vmul.f32 %v3468, %v3556
      %v3573 = vmul.f32 %v3473, %v3556
      %v3574 = vmul.f32 %v3478, %v3556
      %v3575 = vmul.f32 %v3483, %v3556
      %v3576 = vmul.f32 %v3488, %v3556
      %v3577 = vmul.f32 %v3493, %v3556
      %v3578 = vmul.f32 %v3498, %v3556
      %v3579 = vmul.f32 %v3503, %v3556
      %v3580 = vmul.f32 %v3508, %v3556
      %v3581 = vmul.f32 %v3513, %v3556
      %v3582 = vmul.f32 %v3518, %v3556
      %v3583 = vmul.f32 %v3523, %v3556
      %v3584 = vmul.f32 %v3528, %v3556
      %v3585 = vmul.f32 %v3533, %v3556
      %v3586 = vmul.f32 %v3538, %v3556
      %v3587 = vmul.f32 %v3543, %v3556
      %v3588 = vmul.f32 %v3548, %v3556
      %v3589 = vmul.f32 %v3553, %v3556
      %v3590 = vadd.f32 %v3329, %v3558
      %v3591 = vadd.f32 %v3330, %v3559
      %v3592 = vadd.f32 %v3331, %v3560
      %v3593 = vadd.f32 %v3332, %v3561
      %v3594 = vadd.f32 %v3333, %v3562
      %v3595 = vadd.f32 %v3334, %v3563
      %v3596 = vadd.f32 %v3335, %v3564
      %v3597 = vadd.f32 %v3336, %v3565
      %v3598 = vadd.f32 %v3337, %v3566
      %v3599 = vadd.f32 %v3338, %v3567
      %v3600 = vadd.f32 %v3339, %v3568
      %v3601 = vadd.f32 %v3340, %v3569
      %v3602 = vadd.f32 %v3341, %v3570
      %v3603 = vadd.f32 %v3342, %v3571
      %v3604 = vadd.f32 %v3343, %v3572
      %v3605 = vadd.f32 %v3344, %v3573
      %v3606 = vadd.f32 %v3345, %v3574
      %v3607 = vadd.f32 %v3346, %v3575
      %v3608 = vadd.f32 %v3347, %v3576
      %v3609 = vadd.f32 %v3348, %v3577
      %v3610 = vadd.f32 %v3349, %v3578
      %v3611 = vadd.f32 %v3350, %v3579
      %v3612 = vadd.f32 %v3351, %v3580
      %v3613 = vadd.f32 %v3352, %v3581
      %v3614 = vadd.f32 %v3353, %v3582
      %v3615 = vadd.f32 %v3354, %v3583
      %v3616 = vadd.f32 %v3355, %v3584
      %v3617 = vadd.f32 %v3356, %v3585
      %v3618 = vadd.f32 %v3357, %v3586
      %v3619 = vadd.f32 %v3358, %v3587
      %v3620 = vadd.f32 %v3359, %v3588
      %v3621 = vadd.f32 %v3360, %v3589
      %v3622 = vld [vmem:[%s2543 + $0x2] sm:$0xff]
      %v3623 = vld [vmem:[%s2543 + $0xa] sm:$0xff]
      %v3624 = vld [vmem:[%s2543 + $0x1a] sm:$0xff]
      %v3625 = vld [vmem:[%s2543 + $0x22] sm:$0xff]
      %v3626 = vld [vmem:[%s2543 + $0x32] sm:$0xff]
      %v3627 = vld [vmem:[%s2543 + $0x3a] sm:$0xff]
      %v3628 = vld [vmem:[%s2543 + $0x4a] sm:$0xff]
      %v3629 = vld [vmem:[%s2543 + $0x52] sm:$0xff]
      %v3630 = vld [vmem:[%s2543 + $0x62] sm:$0xff]
      %v3631 = vld [vmem:[%s2543 + $0x6a] sm:$0xff]
      %v3632 = vld [vmem:[%s2543 + $0x7a] sm:$0xff]
      %v3633 = vld [vmem:[%s2543 + $0x82] sm:$0xff]
      %v3634 = vld [vmem:[%s2543 + $0x92] sm:$0xff]
      %v3635 = vld [vmem:[%s2543 + $0x9a] sm:$0xff]
      %v3636 = vld [vmem:[%s2543 + $0xaa] sm:$0xff]
      %v3637 = vld [vmem:[%s2543 + $0xb2] sm:$0xff]
      %v3638 = vld [vmem:[%s2543 + $0xc2] sm:$0xff]
      %v3639 = vld [vmem:[%s2543 + $0xca] sm:$0xff]
      %v3640 = vld [vmem:[%s2543 + $0xda] sm:$0xff]
      %v3641 = vld [vmem:[%s2543 + $0xe2] sm:$0xff]
      %v3642 = vld [vmem:[%s2543 + $0xf2] sm:$0xff]
      %v3643 = vld [vmem:[%s2543 + $0xfa] sm:$0xff]
      %v3644 = vld [vmem:[%s2543 + $0x10a] sm:$0xff]
      %v3645 = vld [vmem:[%s2543 + $0x112] sm:$0xff]
      %v3646 = vld [vmem:[%s2543 + $0x122] sm:$0xff]
      %v3647 = vld [vmem:[%s2543 + $0x12a] sm:$0xff]
      %v3648 = vld [vmem:[%s2543 + $0x13a] sm:$0xff]
      %v3649 = vld [vmem:[%s2543 + $0x142] sm:$0xff]
      %v3650 = vld [vmem:[%s2543 + $0x152] sm:$0xff]
      %v3651 = vld [vmem:[%s2543 + $0x15a] sm:$0xff]
      %v3652 = vld [vmem:[%s2543 + $0x16a] sm:$0xff]
      %v3653 = vld [vmem:[%s2543 + $0x172] sm:$0xff]
      %s3654 = scalar_lea.vmem %s2, 160
      %v3655 = vld [vmem:[%s3654] sm:$0xff]
      %v3656 = vld [vmem:[%s3654 + $0x8] sm:$0xff]
      %v3657 = vld [vmem:[%s3654 + $0x10] sm:$0xff]
      %v3658 = vld [vmem:[%s3654 + $0x18] sm:$0xff]
      %v3660 = vsel %vm962, %v3622, 0
      %v3663 = vsel %vm962, %v3623, 0
      %v3666 = vsel %vm962, %v3624, 0
      %v3669 = vsel %vm962, %v3625, 0
      %v3672 = vsel %vm962, %v3626, 0
      %v3675 = vsel %vm962, %v3627, 0
      %v3678 = vsel %vm962, %v3628, 0
      %v3681 = vsel %vm962, %v3629, 0
      %v3684 = vsel %vm962, %v3630, 0
      %v3687 = vsel %vm962, %v3631, 0
      %v3690 = vsel %vm962, %v3632, 0
      %v3693 = vsel %vm962, %v3633, 0
      %v3696 = vsel %vm962, %v3634, 0
      %v3699 = vsel %vm962, %v3635, 0
      %v3702 = vsel %vm962, %v3636, 0
      %v3705 = vsel %vm962, %v3637, 0
      %v3708 = vsel %vm962, %v3638, 0
      %v3711 = vsel %vm962, %v3639, 0
      %v3714 = vsel %vm962, %v3640, 0
      %v3717 = vsel %vm962, %v3641, 0
      %v3720 = vsel %vm962, %v3642, 0
      %v3723 = vsel %vm962, %v3643, 0
      %v3726 = vsel %vm962, %v3644, 0
      %v3729 = vsel %vm962, %v3645, 0
      %v3732 = vsel %vm962, %v3646, 0
      %v3735 = vsel %vm962, %v3647, 0
      %v3738 = vsel %vm962, %v3648, 0
      %v3741 = vsel %vm962, %v3649, 0
      %v3744 = vsel %vm962, %v3650, 0
      %v3747 = vsel %vm962, %v3651, 0
      %v3750 = vsel %vm962, %v3652, 0
      %v3753 = vsel %vm962, %v3653, 0
      %3755 = vmatpush.msra.mxu0 0.0
      %3756 = vmatpush.msra.mxu0 0.0
      %3757 = vmatpush.msra.mxu0 0.0
      %3758 = vmatpush.msra.mxu0 0.0
      %3759 = vmatpush.msra.mxu0 0.0
      %3760 = vmatpush.msra.mxu0 0.0
      %3761 = vmatpush.msra.mxu0 0.0
      %3762 = vmatpush.msra.mxu0 0.0
      %3763 = vmatpush.msra.mxu0 0.0
      %3764 = vmatpush.msra.mxu0 0.0
      %3765 = vmatpush.msra.mxu0 0.0
      %3766 = vmatpush.msra.mxu0 0.0
      %3767 = vmatpush.msra.mxu0 %v3658
      %3768 = vmatpush.msra.mxu0 %v3657
      %3769 = vmatpush.msra.mxu0 %v3656
      %3770 = vmatpush.msra.mxu0 %v3655
      %3771 = vmatmul.f32.gmra.mxu0 %v3660
      %v3772 = vpop.f32.mrf.mxu0
      %v3773 = vadd.f32 0.0, %v3772
      %3774 = vmatmul.f32.gmra.mxu0 %v3663
      %v3775 = vpop.f32.mrf.mxu0
      %v3776 = vadd.f32 0.0, %v3775
      %3777 = vmatmul.f32.gmra.mxu0 %v3666
      %v3778 = vpop.f32.mrf.mxu0
      %v3779 = vadd.f32 0.0, %v3778
      %3780 = vmatmul.f32.gmra.mxu0 %v3669
      %v3781 = vpop.f32.mrf.mxu0
      %v3782 = vadd.f32 0.0, %v3781
      %3783 = vmatmul.f32.gmra.mxu0 %v3672
      %v3784 = vpop.f32.mrf.mxu0
      %v3785 = vadd.f32 0.0, %v3784
      %3786 = vmatmul.f32.gmra.mxu0 %v3675
      %v3787 = vpop.f32.mrf.mxu0
      %v3788 = vadd.f32 0.0, %v3787
      %3789 = vmatmul.f32.gmra.mxu0 %v3678
      %v3790 = vpop.f32.mrf.mxu0
      %v3791 = vadd.f32 0.0, %v3790
      %3792 = vmatmul.f32.gmra.mxu0 %v3681
      %v3793 = vpop.f32.mrf.mxu0
      %v3794 = vadd.f32 0.0, %v3793
      %3795 = vmatmul.f32.gmra.mxu0 %v3684
      %v3796 = vpop.f32.mrf.mxu0
      %v3797 = vadd.f32 0.0, %v3796
      %3798 = vmatmul.f32.gmra.mxu0 %v3687
      %v3799 = vpop.f32.mrf.mxu0
      %v3800 = vadd.f32 0.0, %v3799
      %3801 = vmatmul.f32.gmra.mxu0 %v3690
      %v3802 = vpop.f32.mrf.mxu0
      %v3803 = vadd.f32 0.0, %v3802
      %3804 = vmatmul.f32.gmra.mxu0 %v3693
      %v3805 = vpop.f32.mrf.mxu0
      %v3806 = vadd.f32 0.0, %v3805
      %3807 = vmatmul.f32.gmra.mxu0 %v3696
      %v3808 = vpop.f32.mrf.mxu0
      %v3809 = vadd.f32 0.0, %v3808
      %3810 = vmatmul.f32.gmra.mxu0 %v3699
      %v3811 = vpop.f32.mrf.mxu0
      %v3812 = vadd.f32 0.0, %v3811
      %3813 = vmatmul.f32.gmra.mxu0 %v3702
      %v3814 = vpop.f32.mrf.mxu0
      %v3815 = vadd.f32 0.0, %v3814
      %3816 = vmatmul.f32.gmra.mxu0 %v3705
      %v3817 = vpop.f32.mrf.mxu0
      %v3818 = vadd.f32 0.0, %v3817
      %3819 = vmatmul.f32.gmra.mxu0 %v3708
      %v3820 = vpop.f32.mrf.mxu0
      %v3821 = vadd.f32 0.0, %v3820
      %3822 = vmatmul.f32.gmra.mxu0 %v3711
      %v3823 = vpop.f32.mrf.mxu0
      %v3824 = vadd.f32 0.0, %v3823
      %3825 = vmatmul.f32.gmra.mxu0 %v3714
      %v3826 = vpop.f32.mrf.mxu0
      %v3827 = vadd.f32 0.0, %v3826
      %3828 = vmatmul.f32.gmra.mxu0 %v3717
      %v3829 = vpop.f32.mrf.mxu0
      %v3830 = vadd.f32 0.0, %v3829
      %3831 = vmatmul.f32.gmra.mxu0 %v3720
      %v3832 = vpop.f32.mrf.mxu0
      %v3833 = vadd.f32 0.0, %v3832
      %3834 = vmatmul.f32.gmra.mxu0 %v3723
      %v3835 = vpop.f32.mrf.mxu0
      %v3836 = vadd.f32 0.0, %v3835
      %3837 = vmatmul.f32.gmra.mxu0 %v3726
      %v3838 = vpop.f32.mrf.mxu0
      %v3839 = vadd.f32 0.0, %v3838
      %3840 = vmatmul.f32.gmra.mxu0 %v3729
      %v3841 = vpop.f32.mrf.mxu0
      %v3842 = vadd.f32 0.0, %v3841
      %3843 = vmatmul.f32.gmra.mxu0 %v3732
      %v3844 = vpop.f32.mrf.mxu0
      %v3845 = vadd.f32 0.0, %v3844
      %3846 = vmatmul.f32.gmra.mxu0 %v3735
      %v3847 = vpop.f32.mrf.mxu0
      %v3848 = vadd.f32 0.0, %v3847
      %3849 = vmatmul.f32.gmra.mxu0 %v3738
      %v3850 = vpop.f32.mrf.mxu0
      %v3851 = vadd.f32 0.0, %v3850
      %3852 = vmatmul.f32.gmra.mxu0 %v3741
      %v3853 = vpop.f32.mrf.mxu0
      %v3854 = vadd.f32 0.0, %v3853
      %3855 = vmatmul.f32.gmra.mxu0 %v3744
      %v3856 = vpop.f32.mrf.mxu0
      %v3857 = vadd.f32 0.0, %v3856
      %3858 = vmatmul.f32.gmra.mxu0 %v3747
      %v3859 = vpop.f32.mrf.mxu0
      %v3860 = vadd.f32 0.0, %v3859
      %3861 = vmatmul.f32.gmra.mxu0 %v3750
      %v3862 = vpop.f32.mrf.mxu0
      %v3863 = vadd.f32 0.0, %v3862
      %3864 = vmatmul.f32.gmra.mxu0 %v3753
      %v3865 = vpop.f32.mrf.mxu0
      %v3866 = vadd.f32 0.0, %v3865
      %3867 = vdwg.mxu0
      %v3868 = vadd.f32 %v3590, %v3773
      %v3869 = vadd.f32 %v3591, %v3776
      %v3870 = vadd.f32 %v3592, %v3779
      %v3871 = vadd.f32 %v3593, %v3782
      %v3872 = vadd.f32 %v3594, %v3785
      %v3873 = vadd.f32 %v3595, %v3788
      %v3874 = vadd.f32 %v3596, %v3791
      %v3875 = vadd.f32 %v3597, %v3794
      %v3876 = vadd.f32 %v3598, %v3797
      %v3877 = vadd.f32 %v3599, %v3800
      %v3878 = vadd.f32 %v3600, %v3803
      %v3879 = vadd.f32 %v3601, %v3806
      %v3880 = vadd.f32 %v3602, %v3809
      %v3881 = vadd.f32 %v3603, %v3812
      %v3882 = vadd.f32 %v3604, %v3815
      %v3883 = vadd.f32 %v3605, %v3818
      %v3884 = vadd.f32 %v3606, %v3821
      %v3885 = vadd.f32 %v3607, %v3824
      %v3886 = vadd.f32 %v3608, %v3827
      %v3887 = vadd.f32 %v3609, %v3830
      %v3888 = vadd.f32 %v3610, %v3833
      %v3889 = vadd.f32 %v3611, %v3836
      %v3890 = vadd.f32 %v3612, %v3839
      %v3891 = vadd.f32 %v3613, %v3842
      %v3892 = vadd.f32 %v3614, %v3845
      %v3893 = vadd.f32 %v3615, %v3848
      %v3894 = vadd.f32 %v3616, %v3851
      %v3895 = vadd.f32 %v3617, %v3854
      %v3896 = vadd.f32 %v3618, %v3857
      %v3897 = vadd.f32 %v3619, %v3860
      %v3898 = vadd.f32 %v3620, %v3863
      %v3899 = vadd.f32 %v3621, %v3866
      %s3900 = scalar_lea.vmem [#allocation2], 48
      %v3901 = vld [vmem:[%s3900] sm:$0xff]
      %v3902 = vld [vmem:[%s3900 + $0x8] sm:$0xff]
      %v3903 = vld [vmem:[%s3900 + $0x18] sm:$0xff]
      %v3904 = vld [vmem:[%s3900 + $0x20] sm:$0xff]
      %v3905 = vld [vmem:[%s3900 + $0x30] sm:$0xff]
      %v3906 = vld [vmem:[%s3900 + $0x38] sm:$0xff]
      %v3907 = vld [vmem:[%s3900 + $0x48] sm:$0xff]
      %v3908 = vld [vmem:[%s3900 + $0x50] sm:$0xff]
      %v3909 = vld [vmem:[%s3900 + $0x60] sm:$0xff]
      %v3910 = vld [vmem:[%s3900 + $0x68] sm:$0xff]
      %v3911 = vld [vmem:[%s3900 + $0x78] sm:$0xff]
      %v3912 = vld [vmem:[%s3900 + $0x80] sm:$0xff]
      %v3913 = vld [vmem:[%s3900 + $0x90] sm:$0xff]
      %v3914 = vld [vmem:[%s3900 + $0x98] sm:$0xff]
      %v3915 = vld [vmem:[%s3900 + $0xa8] sm:$0xff]
      %v3916 = vld [vmem:[%s3900 + $0xb0] sm:$0xff]
      %v3917 = vld [vmem:[%s3900 + $0xc0] sm:$0xff]
      %v3918 = vld [vmem:[%s3900 + $0xc8] sm:$0xff]
      %v3919 = vld [vmem:[%s3900 + $0xd8] sm:$0xff]
      %v3920 = vld [vmem:[%s3900 + $0xe0] sm:$0xff]
      %v3921 = vld [vmem:[%s3900 + $0xf0] sm:$0xff]
      %v3922 = vld [vmem:[%s3900 + $0xf8] sm:$0xff]
      %v3923 = vld [vmem:[%s3900 + $0x108] sm:$0xff]
      %v3924 = vld [vmem:[%s3900 + $0x110] sm:$0xff]
      %v3925 = vld [vmem:[%s3900 + $0x120] sm:$0xff]
      %v3926 = vld [vmem:[%s3900 + $0x128] sm:$0xff]
      %v3927 = vld [vmem:[%s3900 + $0x138] sm:$0xff]
      %v3928 = vld [vmem:[%s3900 + $0x140] sm:$0xff]
      %v3929 = vld [vmem:[%s3900 + $0x150] sm:$0xff]
      %v3930 = vld [vmem:[%s3900 + $0x158] sm:$0xff]
      %v3931 = vld [vmem:[%s3900 + $0x168] sm:$0xff]
      %v3932 = vld [vmem:[%s3900 + $0x170] sm:$0xff]
      %s3933 = scalar_lea.vmem %s1, 6
      %v3934 = vld [vmem:[%s3933] sm:$0x1]
      %3936 = vset.pattern.permute.xlu0 0
      %3937 = vperm.xlu0 %3936, %v3901
      %v3938 = vpop.permute.xlu0 %3937
      %3941 = vset.pattern.permute.xlu0 0
      %3942 = vperm.xlu0 %3941, %v3902
      %v3943 = vpop.permute.xlu0 %3942
      %3946 = vset.pattern.permute.xlu0 0
      %3947 = vperm.xlu0 %3946, %v3903
      %v3948 = vpop.permute.xlu0 %3947
      %3951 = vset.pattern.permute.xlu0 0
      %3952 = vperm.xlu0 %3951, %v3904
      %v3953 = vpop.permute.xlu0 %3952
      %3956 = vset.pattern.permute.xlu0 0
      %3957 = vperm.xlu0 %3956, %v3905
      %v3958 = vpop.permute.xlu0 %3957
      %3961 = vset.pattern.permute.xlu0 0
      %3962 = vperm.xlu0 %3961, %v3906
      %v3963 = vpop.permute.xlu0 %3962
      %3966 = vset.pattern.permute.xlu0 0
      %3967 = vperm.xlu0 %3966, %v3907
      %v3968 = vpop.permute.xlu0 %3967
      %3971 = vset.pattern.permute.xlu0 0
      %3972 = vperm.xlu0 %3971, %v3908
      %v3973 = vpop.permute.xlu0 %3972
      %3976 = vset.pattern.permute.xlu0 0
      %3977 = vperm.xlu0 %3976, %v3909
      %v3978 = vpop.permute.xlu0 %3977
      %3981 = vset.pattern.permute.xlu0 0
      %3982 = vperm.xlu0 %3981, %v3910
      %v3983 = vpop.permute.xlu0 %3982
      %3986 = vset.pattern.permute.xlu0 0
      %3987 = vperm.xlu0 %3986, %v3911
      %v3988 = vpop.permute.xlu0 %3987
      %3991 = vset.pattern.permute.xlu0 0
      %3992 = vperm.xlu0 %3991, %v3912
      %v3993 = vpop.permute.xlu0 %3992
      %3996 = vset.pattern.permute.xlu0 0
      %3997 = vperm.xlu0 %3996, %v3913
      %v3998 = vpop.permute.xlu0 %3997
      %4001 = vset.pattern.permute.xlu0 0
      %4002 = vperm.xlu0 %4001, %v3914
      %v4003 = vpop.permute.xlu0 %4002
      %4006 = vset.pattern.permute.xlu0 0
      %4007 = vperm.xlu0 %4006, %v3915
      %v4008 = vpop.permute.xlu0 %4007
      %4011 = vset.pattern.permute.xlu0 0
      %4012 = vperm.xlu0 %4011, %v3916
      %v4013 = vpop.permute.xlu0 %4012
      %4016 = vset.pattern.permute.xlu0 0
      %4017 = vperm.xlu0 %4016, %v3917
      %v4018 = vpop.permute.xlu0 %4017
      %4021 = vset.pattern.permute.xlu0 0
      %4022 = vperm.xlu0 %4021, %v3918
      %v4023 = vpop.permute.xlu0 %4022
      %4026 = vset.pattern.permute.xlu0 0
      %4027 = vperm.xlu0 %4026, %v3919
      %v4028 = vpop.permute.xlu0 %4027
      %4031 = vset.pattern.permute.xlu0 0
      %4032 = vperm.xlu0 %4031, %v3920
      %v4033 = vpop.permute.xlu0 %4032
      %4036 = vset.pattern.permute.xlu0 0
      %4037 = vperm.xlu0 %4036, %v3921
      %v4038 = vpop.permute.xlu0 %4037
      %4041 = vset.pattern.permute.xlu0 0
      %4042 = vperm.xlu0 %4041, %v3922
      %v4043 = vpop.permute.xlu0 %4042
      %4046 = vset.pattern.permute.xlu0 0
      %4047 = vperm.xlu0 %4046, %v3923
      %v4048 = vpop.permute.xlu0 %4047
      %4051 = vset.pattern.permute.xlu0 0
      %4052 = vperm.xlu0 %4051, %v3924
      %v4053 = vpop.permute.xlu0 %4052
      %4056 = vset.pattern.permute.xlu0 0
      %4057 = vperm.xlu0 %4056, %v3925
      %v4058 = vpop.permute.xlu0 %4057
      %4061 = vset.pattern.permute.xlu0 0
      %4062 = vperm.xlu0 %4061, %v3926
      %v4063 = vpop.permute.xlu0 %4062
      %4066 = vset.pattern.permute.xlu0 0
      %4067 = vperm.xlu0 %4066, %v3927
      %v4068 = vpop.permute.xlu0 %4067
      %4071 = vset.pattern.permute.xlu0 0
      %4072 = vperm.xlu0 %4071, %v3928
      %v4073 = vpop.permute.xlu0 %4072
      %4076 = vset.pattern.permute.xlu0 0
      %4077 = vperm.xlu0 %4076, %v3929
      %v4078 = vpop.permute.xlu0 %4077
      %4081 = vset.pattern.permute.xlu0 0
      %4082 = vperm.xlu0 %4081, %v3930
      %v4083 = vpop.permute.xlu0 %4082
      %4086 = vset.pattern.permute.xlu0 0
      %4087 = vperm.xlu0 %4086, %v3931
      %v4088 = vpop.permute.xlu0 %4087
      %4091 = vset.pattern.permute.xlu0 0
      %4092 = vperm.xlu0 %4091, %v3932
      %v4093 = vpop.permute.xlu0 %4092
      %v4096 = vperm.slane %v3934, 0
      %v4098 = vmul.f32 %v3938, %v4096
      %v4099 = vmul.f32 %v3943, %v4096
      %v4100 = vmul.f32 %v3948, %v4096
      %v4101 = vmul.f32 %v3953, %v4096
      %v4102 = vmul.f32 %v3958, %v4096
      %v4103 = vmul.f32 %v3963, %v4096
      %v4104 = vmul.f32 %v3968, %v4096
      %v4105 = vmul.f32 %v3973, %v4096
      %v4106 = vmul.f32 %v3978, %v4096
      %v4107 = vmul.f32 %v3983, %v4096
      %v4108 = vmul.f32 %v3988, %v4096
      %v4109 = vmul.f32 %v3993, %v4096
      %v4110 = vmul.f32 %v3998, %v4096
      %v4111 = vmul.f32 %v4003, %v4096
      %v4112 = vmul.f32 %v4008, %v4096
      %v4113 = vmul.f32 %v4013, %v4096
      %v4114 = vmul.f32 %v4018, %v4096
      %v4115 = vmul.f32 %v4023, %v4096
      %v4116 = vmul.f32 %v4028, %v4096
      %v4117 = vmul.f32 %v4033, %v4096
      %v4118 = vmul.f32 %v4038, %v4096
      %v4119 = vmul.f32 %v4043, %v4096
      %v4120 = vmul.f32 %v4048, %v4096
      %v4121 = vmul.f32 %v4053, %v4096
      %v4122 = vmul.f32 %v4058, %v4096
      %v4123 = vmul.f32 %v4063, %v4096
      %v4124 = vmul.f32 %v4068, %v4096
      %v4125 = vmul.f32 %v4073, %v4096
      %v4126 = vmul.f32 %v4078, %v4096
      %v4127 = vmul.f32 %v4083, %v4096
      %v4128 = vmul.f32 %v4088, %v4096
      %v4129 = vmul.f32 %v4093, %v4096
      %v4130 = vadd.f32 %v3868, %v4098
      %v4131 = vadd.f32 %v3869, %v4099
      %v4132 = vadd.f32 %v3870, %v4100
      %v4133 = vadd.f32 %v3871, %v4101
      %v4134 = vadd.f32 %v3872, %v4102
      %v4135 = vadd.f32 %v3873, %v4103
      %v4136 = vadd.f32 %v3874, %v4104
      %v4137 = vadd.f32 %v3875, %v4105
      %v4138 = vadd.f32 %v3876, %v4106
      %v4139 = vadd.f32 %v3877, %v4107
      %v4140 = vadd.f32 %v3878, %v4108
      %v4141 = vadd.f32 %v3879, %v4109
      %v4142 = vadd.f32 %v3880, %v4110
      %v4143 = vadd.f32 %v3881, %v4111
      %v4144 = vadd.f32 %v3882, %v4112
      %v4145 = vadd.f32 %v3883, %v4113
      %v4146 = vadd.f32 %v3884, %v4114
      %v4147 = vadd.f32 %v3885, %v4115
      %v4148 = vadd.f32 %v3886, %v4116
      %v4149 = vadd.f32 %v3887, %v4117
      %v4150 = vadd.f32 %v3888, %v4118
      %v4151 = vadd.f32 %v3889, %v4119
      %v4152 = vadd.f32 %v3890, %v4120
      %v4153 = vadd.f32 %v3891, %v4121
      %v4154 = vadd.f32 %v3892, %v4122
      %v4155 = vadd.f32 %v3893, %v4123
      %v4156 = vadd.f32 %v3894, %v4124
      %v4157 = vadd.f32 %v3895, %v4125
      %v4158 = vadd.f32 %v3896, %v4126
      %v4159 = vadd.f32 %v3897, %v4127
      %v4160 = vadd.f32 %v3898, %v4128
      %v4161 = vadd.f32 %v3899, %v4129
      %s4162 = scalar_lea.vmem [#allocation3], 48
      %v4163 = vld [vmem:[%s4162] sm:$0xff]
      %v4164 = vld [vmem:[%s4162 + $0x8] sm:$0xff]
      %v4165 = vld [vmem:[%s4162 + $0x18] sm:$0xff]
      %v4166 = vld [vmem:[%s4162 + $0x20] sm:$0xff]
      %v4167 = vld [vmem:[%s4162 + $0x30] sm:$0xff]
      %v4168 = vld [vmem:[%s4162 + $0x38] sm:$0xff]
      %v4169 = vld [vmem:[%s4162 + $0x48] sm:$0xff]
      %v4170 = vld [vmem:[%s4162 + $0x50] sm:$0xff]
      %v4171 = vld [vmem:[%s4162 + $0x60] sm:$0xff]
      %v4172 = vld [vmem:[%s4162 + $0x68] sm:$0xff]
      %v4173 = vld [vmem:[%s4162 + $0x78] sm:$0xff]
      %v4174 = vld [vmem:[%s4162 + $0x80] sm:$0xff]
      %v4175 = vld [vmem:[%s4162 + $0x90] sm:$0xff]
      %v4176 = vld [vmem:[%s4162 + $0x98] sm:$0xff]
      %v4177 = vld [vmem:[%s4162 + $0xa8] sm:$0xff]
      %v4178 = vld [vmem:[%s4162 + $0xb0] sm:$0xff]
      %v4179 = vld [vmem:[%s4162 + $0xc0] sm:$0xff]
      %v4180 = vld [vmem:[%s4162 + $0xc8] sm:$0xff]
      %v4181 = vld [vmem:[%s4162 + $0xd8] sm:$0xff]
      %v4182 = vld [vmem:[%s4162 + $0xe0] sm:$0xff]
      %v4183 = vld [vmem:[%s4162 + $0xf0] sm:$0xff]
      %v4184 = vld [vmem:[%s4162 + $0xf8] sm:$0xff]
      %v4185 = vld [vmem:[%s4162 + $0x108] sm:$0xff]
      %v4186 = vld [vmem:[%s4162 + $0x110] sm:$0xff]
      %v4187 = vld [vmem:[%s4162 + $0x120] sm:$0xff]
      %v4188 = vld [vmem:[%s4162 + $0x128] sm:$0xff]
      %v4189 = vld [vmem:[%s4162 + $0x138] sm:$0xff]
      %v4190 = vld [vmem:[%s4162 + $0x140] sm:$0xff]
      %v4191 = vld [vmem:[%s4162 + $0x150] sm:$0xff]
      %v4192 = vld [vmem:[%s4162 + $0x158] sm:$0xff]
      %v4193 = vld [vmem:[%s4162 + $0x168] sm:$0xff]
      %v4194 = vld [vmem:[%s4162 + $0x170] sm:$0xff]
      %s4195 = scalar_lea.vmem %s2, 192
      %v4196 = vld [vmem:[%s4195] sm:$0xff]
      %v4197 = vld [vmem:[%s4195 + $0x8] sm:$0xff]
      %v4198 = vld [vmem:[%s4195 + $0x10] sm:$0xff]
      %v4199 = vld [vmem:[%s4195 + $0x18] sm:$0xff]
      %v4201 = vsel %vm962, %v4163, 0
      %v4204 = vsel %vm962, %v4164, 0
      %v4207 = vsel %vm962, %v4165, 0
      %v4210 = vsel %vm962, %v4166, 0
      %v4213 = vsel %vm962, %v4167, 0
      %v4216 = vsel %vm962, %v4168, 0
      %v4219 = vsel %vm962, %v4169, 0
      %v4222 = vsel %vm962, %v4170, 0
      %v4225 = vsel %vm962, %v4171, 0
      %v4228 = vsel %vm962, %v4172, 0
      %v4231 = vsel %vm962, %v4173, 0
      %v4234 = vsel %vm962, %v4174, 0
      %v4237 = vsel %vm962, %v4175, 0
      %v4240 = vsel %vm962, %v4176, 0
      %v4243 = vsel %vm962, %v4177, 0
      %v4246 = vsel %vm962, %v4178, 0
      %v4249 = vsel %vm962, %v4179, 0
      %v4252 = vsel %vm962, %v4180, 0
      %v4255 = vsel %vm962, %v4181, 0
      %v4258 = vsel %vm962, %v4182, 0
      %v4261 = vsel %vm962, %v4183, 0
      %v4264 = vsel %vm962, %v4184, 0
      %v4267 = vsel %vm962, %v4185, 0
      %v4270 = vsel %vm962, %v4186, 0
      %v4273 = vsel %vm962, %v4187, 0
      %v4276 = vsel %vm962, %v4188, 0
      %v4279 = vsel %vm962, %v4189, 0
      %v4282 = vsel %vm962, %v4190, 0
      %v4285 = vsel %vm962, %v4191, 0
      %v4288 = vsel %vm962, %v4192, 0
      %v4291 = vsel %vm962, %v4193, 0
      %v4294 = vsel %vm962, %v4194, 0
      %4296 = vmatpush.msra.mxu0 0.0
      %4297 = vmatpush.msra.mxu0 0.0
      %4298 = vmatpush.msra.mxu0 0.0
      %4299 = vmatpush.msra.mxu0 0.0
      %4300 = vmatpush.msra.mxu0 0.0
      %4301 = vmatpush.msra.mxu0 0.0
      %4302 = vmatpush.msra.mxu0 0.0
      %4303 = vmatpush.msra.mxu0 0.0
      %4304 = vmatpush.msra.mxu0 0.0
      %4305 = vmatpush.msra.mxu0 0.0
      %4306 = vmatpush.msra.mxu0 0.0
      %4307 = vmatpush.msra.mxu0 0.0
      %4308 = vmatpush.msra.mxu0 %v4199
      %4309 = vmatpush.msra.mxu0 %v4198
      %4310 = vmatpush.msra.mxu0 %v4197
      %4311 = vmatpush.msra.mxu0 %v4196
      %4312 = vmatmul.f32.gmra.mxu0 %v4201
      %v4313 = vpop.f32.mrf.mxu0
      %v4314 = vadd.f32 0.0, %v4313
      %4315 = vmatmul.f32.gmra.mxu0 %v4204
      %v4316 = vpop.f32.mrf.mxu0
      %v4317 = vadd.f32 0.0, %v4316
      %4318 = vmatmul.f32.gmra.mxu0 %v4207
      %v4319 = vpop.f32.mrf.mxu0
      %v4320 = vadd.f32 0.0, %v4319
      %4321 = vmatmul.f32.gmra.mxu0 %v4210
      %v4322 = vpop.f32.mrf.mxu0
      %v4323 = vadd.f32 0.0, %v4322
      %4324 = vmatmul.f32.gmra.mxu0 %v4213
      %v4325 = vpop.f32.mrf.mxu0
      %v4326 = vadd.f32 0.0, %v4325
      %4327 = vmatmul.f32.gmra.mxu0 %v4216
      %v4328 = vpop.f32.mrf.mxu0
      %v4329 = vadd.f32 0.0, %v4328
      %4330 = vmatmul.f32.gmra.mxu0 %v4219
      %v4331 = vpop.f32.mrf.mxu0
      %v4332 = vadd.f32 0.0, %v4331
      %4333 = vmatmul.f32.gmra.mxu0 %v4222
      %v4334 = vpop.f32.mrf.mxu0
      %v4335 = vadd.f32 0.0, %v4334
      %4336 = vmatmul.f32.gmra.mxu0 %v4225
      %v4337 = vpop.f32.mrf.mxu0
      %v4338 = vadd.f32 0.0, %v4337
      %4339 = vmatmul.f32.gmra.mxu0 %v4228
      %v4340 = vpop.f32.mrf.mxu0
      %v4341 = vadd.f32 0.0, %v4340
      %4342 = vmatmul.f32.gmra.mxu0 %v4231
      %v4343 = vpop.f32.mrf.mxu0
      %v4344 = vadd.f32 0.0, %v4343
      %4345 = vmatmul.f32.gmra.mxu0 %v4234
      %v4346 = vpop.f32.mrf.mxu0
      %v4347 = vadd.f32 0.0, %v4346
      %4348 = vmatmul.f32.gmra.mxu0 %v4237
      %v4349 = vpop.f32.mrf.mxu0
      %v4350 = vadd.f32 0.0, %v4349
      %4351 = vmatmul.f32.gmra.mxu0 %v4240
      %v4352 = vpop.f32.mrf.mxu0
      %v4353 = vadd.f32 0.0, %v4352
      %4354 = vmatmul.f32.gmra.mxu0 %v4243
      %v4355 = vpop.f32.mrf.mxu0
      %v4356 = vadd.f32 0.0, %v4355
      %4357 = vmatmul.f32.gmra.mxu0 %v4246
      %v4358 = vpop.f32.mrf.mxu0
      %v4359 = vadd.f32 0.0, %v4358
      %4360 = vmatmul.f32.gmra.mxu0 %v4249
      %v4361 = vpop.f32.mrf.mxu0
      %v4362 = vadd.f32 0.0, %v4361
      %4363 = vmatmul.f32.gmra.mxu0 %v4252
      %v4364 = vpop.f32.mrf.mxu0
      %v4365 = vadd.f32 0.0, %v4364
      %4366 = vmatmul.f32.gmra.mxu0 %v4255
      %v4367 = vpop.f32.mrf.mxu0
      %v4368 = vadd.f32 0.0, %v4367
      %4369 = vmatmul.f32.gmra.mxu0 %v4258
      %v4370 = vpop.f32.mrf.mxu0
      %v4371 = vadd.f32 0.0, %v4370
      %4372 = vmatmul.f32.gmra.mxu0 %v4261
      %v4373 = vpop.f32.mrf.mxu0
      %v4374 = vadd.f32 0.0, %v4373
      %4375 = vmatmul.f32.gmra.mxu0 %v4264
      %v4376 = vpop.f32.mrf.mxu0
      %v4377 = vadd.f32 0.0, %v4376
      %4378 = vmatmul.f32.gmra.mxu0 %v4267
      %v4379 = vpop.f32.mrf.mxu0
      %v4380 = vadd.f32 0.0, %v4379
      %4381 = vmatmul.f32.gmra.mxu0 %v4270
      %v4382 = vpop.f32.mrf.mxu0
      %v4383 = vadd.f32 0.0, %v4382
      %4384 = vmatmul.f32.gmra.mxu0 %v4273
      %v4385 = vpop.f32.mrf.mxu0
      %v4386 = vadd.f32 0.0, %v4385
      %4387 = vmatmul.f32.gmra.mxu0 %v4276
      %v4388 = vpop.f32.mrf.mxu0
      %v4389 = vadd.f32 0.0, %v4388
      %4390 = vmatmul.f32.gmra.mxu0 %v4279
      %v4391 = vpop.f32.mrf.mxu0
      %v4392 = vadd.f32 0.0, %v4391
      %4393 = vmatmul.f32.gmra.mxu0 %v4282
      %v4394 = vpop.f32.mrf.mxu0
      %v4395 = vadd.f32 0.0, %v4394
      %4396 = vmatmul.f32.gmra.mxu0 %v4285
      %v4397 = vpop.f32.mrf.mxu0
      %v4398 = vadd.f32 0.0, %v4397
      %4399 = vmatmul.f32.gmra.mxu0 %v4288
      %v4400 = vpop.f32.mrf.mxu0
      %v4401 = vadd.f32 0.0, %v4400
      %4402 = vmatmul.f32.gmra.mxu0 %v4291
      %v4403 = vpop.f32.mrf.mxu0
      %v4404 = vadd.f32 0.0, %v4403
      %4405 = vmatmul.f32.gmra.mxu0 %v4294
      %v4406 = vpop.f32.mrf.mxu0
      %v4407 = vadd.f32 0.0, %v4406
      %4408 = vdwg.mxu0
      %v4409 = vadd.f32 %v4130, %v4314
      %v4410 = vadd.f32 %v4131, %v4317
      %v4411 = vadd.f32 %v4132, %v4320
      %v4412 = vadd.f32 %v4133, %v4323
      %v4413 = vadd.f32 %v4134, %v4326
      %v4414 = vadd.f32 %v4135, %v4329
      %v4415 = vadd.f32 %v4136, %v4332
      %v4416 = vadd.f32 %v4137, %v4335
      %v4417 = vadd.f32 %v4138, %v4338
      %v4418 = vadd.f32 %v4139, %v4341
      %v4419 = vadd.f32 %v4140, %v4344
      %v4420 = vadd.f32 %v4141, %v4347
      %v4421 = vadd.f32 %v4142, %v4350
      %v4422 = vadd.f32 %v4143, %v4353
      %v4423 = vadd.f32 %v4144, %v4356
      %v4424 = vadd.f32 %v4145, %v4359
      %v4425 = vadd.f32 %v4146, %v4362
      %v4426 = vadd.f32 %v4147, %v4365
      %v4427 = vadd.f32 %v4148, %v4368
      %v4428 = vadd.f32 %v4149, %v4371
      %v4429 = vadd.f32 %v4150, %v4374
      %v4430 = vadd.f32 %v4151, %v4377
      %v4431 = vadd.f32 %v4152, %v4380
      %v4432 = vadd.f32 %v4153, %v4383
      %v4433 = vadd.f32 %v4154, %v4386
      %v4434 = vadd.f32 %v4155, %v4389
      %v4435 = vadd.f32 %v4156, %v4392
      %v4436 = vadd.f32 %v4157, %v4395
      %v4437 = vadd.f32 %v4158, %v4398
      %v4438 = vadd.f32 %v4159, %v4401
      %v4439 = vadd.f32 %v4160, %v4404
      %v4440 = vadd.f32 %v4161, %v4407
      %v4441 = vld [vmem:[%s3900 + $0x1] sm:$0xff]
      %v4442 = vld [vmem:[%s3900 + $0x9] sm:$0xff]
      %v4443 = vld [vmem:[%s3900 + $0x19] sm:$0xff]
      %v4444 = vld [vmem:[%s3900 + $0x21] sm:$0xff]
      %v4445 = vld [vmem:[%s3900 + $0x31] sm:$0xff]
      %v4446 = vld [vmem:[%s3900 + $0x39] sm:$0xff]
      %v4447 = vld [vmem:[%s3900 + $0x49] sm:$0xff]
      %v4448 = vld [vmem:[%s3900 + $0x51] sm:$0xff]
      %v4449 = vld [vmem:[%s3900 + $0x61] sm:$0xff]
      %v4450 = vld [vmem:[%s3900 + $0x69] sm:$0xff]
      %v4451 = vld [vmem:[%s3900 + $0x79] sm:$0xff]
      %v4452 = vld [vmem:[%s3900 + $0x81] sm:$0xff]
      %v4453 = vld [vmem:[%s3900 + $0x91] sm:$0xff]
      %v4454 = vld [vmem:[%s3900 + $0x99] sm:$0xff]
      %v4455 = vld [vmem:[%s3900 + $0xa9] sm:$0xff]
      %v4456 = vld [vmem:[%s3900 + $0xb1] sm:$0xff]
      %v4457 = vld [vmem:[%s3900 + $0xc1] sm:$0xff]
      %v4458 = vld [vmem:[%s3900 + $0xc9] sm:$0xff]
      %v4459 = vld [vmem:[%s3900 + $0xd9] sm:$0xff]
      %v4460 = vld [vmem:[%s3900 + $0xe1] sm:$0xff]
      %v4461 = vld [vmem:[%s3900 + $0xf1] sm:$0xff]
      %v4462 = vld [vmem:[%s3900 + $0xf9] sm:$0xff]
      %v4463 = vld [vmem:[%s3900 + $0x109] sm:$0xff]
      %v4464 = vld [vmem:[%s3900 + $0x111] sm:$0xff]
      %v4465 = vld [vmem:[%s3900 + $0x121] sm:$0xff]
      %v4466 = vld [vmem:[%s3900 + $0x129] sm:$0xff]
      %v4467 = vld [vmem:[%s3900 + $0x139] sm:$0xff]
      %v4468 = vld [vmem:[%s3900 + $0x141] sm:$0xff]
      %v4469 = vld [vmem:[%s3900 + $0x151] sm:$0xff]
      %v4470 = vld [vmem:[%s3900 + $0x159] sm:$0xff]
      %v4471 = vld [vmem:[%s3900 + $0x169] sm:$0xff]
      %v4472 = vld [vmem:[%s3900 + $0x171] sm:$0xff]
      %s4473 = scalar_lea.vmem %s1, 7
      %v4474 = vld [vmem:[%s4473] sm:$0x1]
      %4476 = vset.pattern.permute.xlu0 0
      %4477 = vperm.xlu0 %4476, %v4441
      %v4478 = vpop.permute.xlu0 %4477
      %4481 = vset.pattern.permute.xlu0 0
      %4482 = vperm.xlu0 %4481, %v4442
      %v4483 = vpop.permute.xlu0 %4482
      %4486 = vset.pattern.permute.xlu0 0
      %4487 = vperm.xlu0 %4486, %v4443
      %v4488 = vpop.permute.xlu0 %4487
      %4491 = vset.pattern.permute.xlu0 0
      %4492 = vperm.xlu0 %4491, %v4444
      %v4493 = vpop.permute.xlu0 %4492
      %4496 = vset.pattern.permute.xlu0 0
      %4497 = vperm.xlu0 %4496, %v4445
      %v4498 = vpop.permute.xlu0 %4497
      %4501 = vset.pattern.permute.xlu0 0
      %4502 = vperm.xlu0 %4501, %v4446
      %v4503 = vpop.permute.xlu0 %4502
      %4506 = vset.pattern.permute.xlu0 0
      %4507 = vperm.xlu0 %4506, %v4447
      %v4508 = vpop.permute.xlu0 %4507
      %4511 = vset.pattern.permute.xlu0 0
      %4512 = vperm.xlu0 %4511, %v4448
      %v4513 = vpop.permute.xlu0 %4512
      %4516 = vset.pattern.permute.xlu0 0
      %4517 = vperm.xlu0 %4516, %v4449
      %v4518 = vpop.permute.xlu0 %4517
      %4521 = vset.pattern.permute.xlu0 0
      %4522 = vperm.xlu0 %4521, %v4450
      %v4523 = vpop.permute.xlu0 %4522
      %4526 = vset.pattern.permute.xlu0 0
      %4527 = vperm.xlu0 %4526, %v4451
      %v4528 = vpop.permute.xlu0 %4527
      %4531 = vset.pattern.permute.xlu0 0
      %4532 = vperm.xlu0 %4531, %v4452
      %v4533 = vpop.permute.xlu0 %4532
      %4536 = vset.pattern.permute.xlu0 0
      %4537 = vperm.xlu0 %4536, %v4453
      %v4538 = vpop.permute.xlu0 %4537
      %4541 = vset.pattern.permute.xlu0 0
      %4542 = vperm.xlu0 %4541, %v4454
      %v4543 = vpop.permute.xlu0 %4542
      %4546 = vset.pattern.permute.xlu0 0
      %4547 = vperm.xlu0 %4546, %v4455
      %v4548 = vpop.permute.xlu0 %4547
      %4551 = vset.pattern.permute.xlu0 0
      %4552 = vperm.xlu0 %4551, %v4456
      %v4553 = vpop.permute.xlu0 %4552
      %4556 = vset.pattern.permute.xlu0 0
      %4557 = vperm.xlu0 %4556, %v4457
      %v4558 = vpop.permute.xlu0 %4557
      %4561 = vset.pattern.permute.xlu0 0
      %4562 = vperm.xlu0 %4561, %v4458
      %v4563 = vpop.permute.xlu0 %4562
      %4566 = vset.pattern.permute.xlu0 0
      %4567 = vperm.xlu0 %4566, %v4459
      %v4568 = vpop.permute.xlu0 %4567
      %4571 = vset.pattern.permute.xlu0 0
      %4572 = vperm.xlu0 %4571, %v4460
      %v4573 = vpop.permute.xlu0 %4572
      %4576 = vset.pattern.permute.xlu0 0
      %4577 = vperm.xlu0 %4576, %v4461
      %v4578 = vpop.permute.xlu0 %4577
      %4581 = vset.pattern.permute.xlu0 0
      %4582 = vperm.xlu0 %4581, %v4462
      %v4583 = vpop.permute.xlu0 %4582
      %4586 = vset.pattern.permute.xlu0 0
      %4587 = vperm.xlu0 %4586, %v4463
      %v4588 = vpop.permute.xlu0 %4587
      %4591 = vset.pattern.permute.xlu0 0
      %4592 = vperm.xlu0 %4591, %v4464
      %v4593 = vpop.permute.xlu0 %4592
      %4596 = vset.pattern.permute.xlu0 0
      %4597 = vperm.xlu0 %4596, %v4465
      %v4598 = vpop.permute.xlu0 %4597
      %4601 = vset.pattern.permute.xlu0 0
      %4602 = vperm.xlu0 %4601, %v4466
      %v4603 = vpop.permute.xlu0 %4602
      %4606 = vset.pattern.permute.xlu0 0
      %4607 = vperm.xlu0 %4606, %v4467
      %v4608 = vpop.permute.xlu0 %4607
      %4611 = vset.pattern.permute.xlu0 0
      %4612 = vperm.xlu0 %4611, %v4468
      %v4613 = vpop.permute.xlu0 %4612
      %4616 = vset.pattern.permute.xlu0 0
      %4617 = vperm.xlu0 %4616, %v4469
      %v4618 = vpop.permute.xlu0 %4617
      %4621 = vset.pattern.permute.xlu0 0
      %4622 = vperm.xlu0 %4621, %v4470
      %v4623 = vpop.permute.xlu0 %4622
      %4626 = vset.pattern.permute.xlu0 0
      %4627 = vperm.xlu0 %4626, %v4471
      %v4628 = vpop.permute.xlu0 %4627
      %4631 = vset.pattern.permute.xlu0 0
      %4632 = vperm.xlu0 %4631, %v4472
      %v4633 = vpop.permute.xlu0 %4632
      %v4636 = vperm.slane %v4474, 0
      %v4638 = vmul.f32 %v4478, %v4636
      %v4639 = vmul.f32 %v4483, %v4636
      %v4640 = vmul.f32 %v4488, %v4636
      %v4641 = vmul.f32 %v4493, %v4636
      %v4642 = vmul.f32 %v4498, %v4636
      %v4643 = vmul.f32 %v4503, %v4636
      %v4644 = vmul.f32 %v4508, %v4636
      %v4645 = vmul.f32 %v4513, %v4636
      %v4646 = vmul.f32 %v4518, %v4636
      %v4647 = vmul.f32 %v4523, %v4636
      %v4648 = vmul.f32 %v4528, %v4636
      %v4649 = vmul.f32 %v4533, %v4636
      %v4650 = vmul.f32 %v4538, %v4636
      %v4651 = vmul.f32 %v4543, %v4636
      %v4652 = vmul.f32 %v4548, %v4636
      %v4653 = vmul.f32 %v4553, %v4636
      %v4654 = vmul.f32 %v4558, %v4636
      %v4655 = vmul.f32 %v4563, %v4636
      %v4656 = vmul.f32 %v4568, %v4636
      %v4657 = vmul.f32 %v4573, %v4636
      %v4658 = vmul.f32 %v4578, %v4636
      %v4659 = vmul.f32 %v4583, %v4636
      %v4660 = vmul.f32 %v4588, %v4636
      %v4661 = vmul.f32 %v4593, %v4636
      %v4662 = vmul.f32 %v4598, %v4636
      %v4663 = vmul.f32 %v4603, %v4636
      %v4664 = vmul.f32 %v4608, %v4636
      %v4665 = vmul.f32 %v4613, %v4636
      %v4666 = vmul.f32 %v4618, %v4636
      %v4667 = vmul.f32 %v4623, %v4636
      %v4668 = vmul.f32 %v4628, %v4636
      %v4669 = vmul.f32 %v4633, %v4636
      %v4670 = vadd.f32 %v4409, %v4638
      %v4671 = vadd.f32 %v4410, %v4639
      %v4672 = vadd.f32 %v4411, %v4640
      %v4673 = vadd.f32 %v4412, %v4641
      %v4674 = vadd.f32 %v4413, %v4642
      %v4675 = vadd.f32 %v4414, %v4643
      %v4676 = vadd.f32 %v4415, %v4644
      %v4677 = vadd.f32 %v4416, %v4645
      %v4678 = vadd.f32 %v4417, %v4646
      %v4679 = vadd.f32 %v4418, %v4647
      %v4680 = vadd.f32 %v4419, %v4648
      %v4681 = vadd.f32 %v4420, %v4649
      %v4682 = vadd.f32 %v4421, %v4650
      %v4683 = vadd.f32 %v4422, %v4651
      %v4684 = vadd.f32 %v4423, %v4652
      %v4685 = vadd.f32 %v4424, %v4653
      %v4686 = vadd.f32 %v4425, %v4654
      %v4687 = vadd.f32 %v4426, %v4655
      %v4688 = vadd.f32 %v4427, %v4656
      %v4689 = vadd.f32 %v4428, %v4657
      %v4690 = vadd.f32 %v4429, %v4658
      %v4691 = vadd.f32 %v4430, %v4659
      %v4692 = vadd.f32 %v4431, %v4660
      %v4693 = vadd.f32 %v4432, %v4661
      %v4694 = vadd.f32 %v4433, %v4662
      %v4695 = vadd.f32 %v4434, %v4663
      %v4696 = vadd.f32 %v4435, %v4664
      %v4697 = vadd.f32 %v4436, %v4665
      %v4698 = vadd.f32 %v4437, %v4666
      %v4699 = vadd.f32 %v4438, %v4667
      %v4700 = vadd.f32 %v4439, %v4668
      %v4701 = vadd.f32 %v4440, %v4669
      %v4702 = vld [vmem:[%s4162 + $0x1] sm:$0xff]
      %v4703 = vld [vmem:[%s4162 + $0x9] sm:$0xff]
      %v4704 = vld [vmem:[%s4162 + $0x19] sm:$0xff]
      %v4705 = vld [vmem:[%s4162 + $0x21] sm:$0xff]
      %v4706 = vld [vmem:[%s4162 + $0x31] sm:$0xff]
      %v4707 = vld [vmem:[%s4162 + $0x39] sm:$0xff]
      %v4708 = vld [vmem:[%s4162 + $0x49] sm:$0xff]
      %v4709 = vld [vmem:[%s4162 + $0x51] sm:$0xff]
      %v4710 = vld [vmem:[%s4162 + $0x61] sm:$0xff]
      %v4711 = vld [vmem:[%s4162 + $0x69] sm:$0xff]
      %v4712 = vld [vmem:[%s4162 + $0x79] sm:$0xff]
      %v4713 = vld [vmem:[%s4162 + $0x81] sm:$0xff]
      %v4714 = vld [vmem:[%s4162 + $0x91] sm:$0xff]
      %v4715 = vld [vmem:[%s4162 + $0x99] sm:$0xff]
      %v4716 = vld [vmem:[%s4162 + $0xa9] sm:$0xff]
      %v4717 = vld [vmem:[%s4162 + $0xb1] sm:$0xff]
      %v4718 = vld [vmem:[%s4162 + $0xc1] sm:$0xff]
      %v4719 = vld [vmem:[%s4162 + $0xc9] sm:$0xff]
      %v4720 = vld [vmem:[%s4162 + $0xd9] sm:$0xff]
      %v4721 = vld [vmem:[%s4162 + $0xe1] sm:$0xff]
      %v4722 = vld [vmem:[%s4162 + $0xf1] sm:$0xff]
      %v4723 = vld [vmem:[%s4162 + $0xf9] sm:$0xff]
      %v4724 = vld [vmem:[%s4162 + $0x109] sm:$0xff]
      %v4725 = vld [vmem:[%s4162 + $0x111] sm:$0xff]
      %v4726 = vld [vmem:[%s4162 + $0x121] sm:$0xff]
      %v4727 = vld [vmem:[%s4162 + $0x129] sm:$0xff]
      %v4728 = vld [vmem:[%s4162 + $0x139] sm:$0xff]
      %v4729 = vld [vmem:[%s4162 + $0x141] sm:$0xff]
      %v4730 = vld [vmem:[%s4162 + $0x151] sm:$0xff]
      %v4731 = vld [vmem:[%s4162 + $0x159] sm:$0xff]
      %v4732 = vld [vmem:[%s4162 + $0x169] sm:$0xff]
      %v4733 = vld [vmem:[%s4162 + $0x171] sm:$0xff]
      %s4734 = scalar_lea.vmem %s2, 224
      %v4735 = vld [vmem:[%s4734] sm:$0xff]
      %v4736 = vld [vmem:[%s4734 + $0x8] sm:$0xff]
      %v4737 = vld [vmem:[%s4734 + $0x10] sm:$0xff]
      %v4738 = vld [vmem:[%s4734 + $0x18] sm:$0xff]
      %v4740 = vsel %vm962, %v4702, 0
      %v4743 = vsel %vm962, %v4703, 0
      %v4746 = vsel %vm962, %v4704, 0
      %v4749 = vsel %vm962, %v4705, 0
      %v4752 = vsel %vm962, %v4706, 0
      %v4755 = vsel %vm962, %v4707, 0
      %v4758 = vsel %vm962, %v4708, 0
      %v4761 = vsel %vm962, %v4709, 0
      %v4764 = vsel %vm962, %v4710, 0
      %v4767 = vsel %vm962, %v4711, 0
      %v4770 = vsel %vm962, %v4712, 0
      %v4773 = vsel %vm962, %v4713, 0
      %v4776 = vsel %vm962, %v4714, 0
      %v4779 = vsel %vm962, %v4715, 0
      %v4782 = vsel %vm962, %v4716, 0
      %v4785 = vsel %vm962, %v4717, 0
      %v4788 = vsel %vm962, %v4718, 0
      %v4791 = vsel %vm962, %v4719, 0
      %v4794 = vsel %vm962, %v4720, 0
      %v4797 = vsel %vm962, %v4721, 0
      %v4800 = vsel %vm962, %v4722, 0
      %v4803 = vsel %vm962, %v4723, 0
      %v4806 = vsel %vm962, %v4724, 0
      %v4809 = vsel %vm962, %v4725, 0
      %v4812 = vsel %vm962, %v4726, 0
      %v4815 = vsel %vm962, %v4727, 0
      %v4818 = vsel %vm962, %v4728, 0
      %v4821 = vsel %vm962, %v4729, 0
      %v4824 = vsel %vm962, %v4730, 0
      %v4827 = vsel %vm962, %v4731, 0
      %v4830 = vsel %vm962, %v4732, 0
      %v4833 = vsel %vm962, %v4733, 0
      %4835 = vmatpush.msra.mxu0 0.0
      %4836 = vmatpush.msra.mxu0 0.0
      %4837 = vmatpush.msra.mxu0 0.0
      %4838 = vmatpush.msra.mxu0 0.0
      %4839 = vmatpush.msra.mxu0 0.0
      %4840 = vmatpush.msra.mxu0 0.0
      %4841 = vmatpush.msra.mxu0 0.0
      %4842 = vmatpush.msra.mxu0 0.0
      %4843 = vmatpush.msra.mxu0 0.0
      %4844 = vmatpush.msra.mxu0 0.0
      %4845 = vmatpush.msra.mxu0 0.0
      %4846 = vmatpush.msra.mxu0 0.0
      %4847 = vmatpush.msra.mxu0 %v4738
      %4848 = vmatpush.msra.mxu0 %v4737
      %4849 = vmatpush.msra.mxu0 %v4736
      %4850 = vmatpush.msra.mxu0 %v4735
      %4851 = vmatmul.f32.gmra.mxu0 %v4740
      %v4852 = vpop.f32.mrf.mxu0
      %v4853 = vadd.f32 0.0, %v4852
      %4854 = vmatmul.f32.gmra.mxu0 %v4743
      %v4855 = vpop.f32.mrf.mxu0
      %v4856 = vadd.f32 0.0, %v4855
      %4857 = vmatmul.f32.gmra.mxu0 %v4746
      %v4858 = vpop.f32.mrf.mxu0
      %v4859 = vadd.f32 0.0, %v4858
      %4860 = vmatmul.f32.gmra.mxu0 %v4749
      %v4861 = vpop.f32.mrf.mxu0
      %v4862 = vadd.f32 0.0, %v4861
      %4863 = vmatmul.f32.gmra.mxu0 %v4752
      %v4864 = vpop.f32.mrf.mxu0
      %v4865 = vadd.f32 0.0, %v4864
      %4866 = vmatmul.f32.gmra.mxu0 %v4755
      %v4867 = vpop.f32.mrf.mxu0
      %v4868 = vadd.f32 0.0, %v4867
      %4869 = vmatmul.f32.gmra.mxu0 %v4758
      %v4870 = vpop.f32.mrf.mxu0
      %v4871 = vadd.f32 0.0, %v4870
      %4872 = vmatmul.f32.gmra.mxu0 %v4761
      %v4873 = vpop.f32.mrf.mxu0
      %v4874 = vadd.f32 0.0, %v4873
      %4875 = vmatmul.f32.gmra.mxu0 %v4764
      %v4876 = vpop.f32.mrf.mxu0
      %v4877 = vadd.f32 0.0, %v4876
      %4878 = vmatmul.f32.gmra.mxu0 %v4767
      %v4879 = vpop.f32.mrf.mxu0
      %v4880 = vadd.f32 0.0, %v4879
      %4881 = vmatmul.f32.gmra.mxu0 %v4770
      %v4882 = vpop.f32.mrf.mxu0
      %v4883 = vadd.f32 0.0, %v4882
      %4884 = vmatmul.f32.gmra.mxu0 %v4773
      %v4885 = vpop.f32.mrf.mxu0
      %v4886 = vadd.f32 0.0, %v4885
      %4887 = vmatmul.f32.gmra.mxu0 %v4776
      %v4888 = vpop.f32.mrf.mxu0
      %v4889 = vadd.f32 0.0, %v4888
      %4890 = vmatmul.f32.gmra.mxu0 %v4779
      %v4891 = vpop.f32.mrf.mxu0
      %v4892 = vadd.f32 0.0, %v4891
      %4893 = vmatmul.f32.gmra.mxu0 %v4782
      %v4894 = vpop.f32.mrf.mxu0
      %v4895 = vadd.f32 0.0, %v4894
      %4896 = vmatmul.f32.gmra.mxu0 %v4785
      %v4897 = vpop.f32.mrf.mxu0
      %v4898 = vadd.f32 0.0, %v4897
      %4899 = vmatmul.f32.gmra.mxu0 %v4788
      %v4900 = vpop.f32.mrf.mxu0
      %v4901 = vadd.f32 0.0, %v4900
      %4902 = vmatmul.f32.gmra.mxu0 %v4791
      %v4903 = vpop.f32.mrf.mxu0
      %v4904 = vadd.f32 0.0, %v4903
      %4905 = vmatmul.f32.gmra.mxu0 %v4794
      %v4906 = vpop.f32.mrf.mxu0
      %v4907 = vadd.f32 0.0, %v4906
      %4908 = vmatmul.f32.gmra.mxu0 %v4797
      %v4909 = vpop.f32.mrf.mxu0
      %v4910 = vadd.f32 0.0, %v4909
      %4911 = vmatmul.f32.gmra.mxu0 %v4800
      %v4912 = vpop.f32.mrf.mxu0
      %v4913 = vadd.f32 0.0, %v4912
      %4914 = vmatmul.f32.gmra.mxu0 %v4803
      %v4915 = vpop.f32.mrf.mxu0
      %v4916 = vadd.f32 0.0, %v4915
      %4917 = vmatmul.f32.gmra.mxu0 %v4806
      %v4918 = vpop.f32.mrf.mxu0
      %v4919 = vadd.f32 0.0, %v4918
      %4920 = vmatmul.f32.gmra.mxu0 %v4809
      %v4921 = vpop.f32.mrf.mxu0
      %v4922 = vadd.f32 0.0, %v4921
      %4923 = vmatmul.f32.gmra.mxu0 %v4812
      %v4924 = vpop.f32.mrf.mxu0
      %v4925 = vadd.f32 0.0, %v4924
      %4926 = vmatmul.f32.gmra.mxu0 %v4815
      %v4927 = vpop.f32.mrf.mxu0
      %v4928 = vadd.f32 0.0, %v4927
      %4929 = vmatmul.f32.gmra.mxu0 %v4818
      %v4930 = vpop.f32.mrf.mxu0
      %v4931 = vadd.f32 0.0, %v4930
      %4932 = vmatmul.f32.gmra.mxu0 %v4821
      %v4933 = vpop.f32.mrf.mxu0
      %v4934 = vadd.f32 0.0, %v4933
      %4935 = vmatmul.f32.gmra.mxu0 %v4824
      %v4936 = vpop.f32.mrf.mxu0
      %v4937 = vadd.f32 0.0, %v4936
      %4938 = vmatmul.f32.gmra.mxu0 %v4827
      %v4939 = vpop.f32.mrf.mxu0
      %v4940 = vadd.f32 0.0, %v4939
      %4941 = vmatmul.f32.gmra.mxu0 %v4830
      %v4942 = vpop.f32.mrf.mxu0
      %v4943 = vadd.f32 0.0, %v4942
      %4944 = vmatmul.f32.gmra.mxu0 %v4833
      %v4945 = vpop.f32.mrf.mxu0
      %v4946 = vadd.f32 0.0, %v4945
      %4947 = vdwg.mxu0
      %v4948 = vadd.f32 %v4670, %v4853
      %v4949 = vadd.f32 %v4671, %v4856
      %v4950 = vadd.f32 %v4672, %v4859
      %v4951 = vadd.f32 %v4673, %v4862
      %v4952 = vadd.f32 %v4674, %v4865
      %v4953 = vadd.f32 %v4675, %v4868
      %v4954 = vadd.f32 %v4676, %v4871
      %v4955 = vadd.f32 %v4677, %v4874
      %v4956 = vadd.f32 %v4678, %v4877
      %v4957 = vadd.f32 %v4679, %v4880
      %v4958 = vadd.f32 %v4680, %v4883
      %v4959 = vadd.f32 %v4681, %v4886
      %v4960 = vadd.f32 %v4682, %v4889
      %v4961 = vadd.f32 %v4683, %v4892
      %v4962 = vadd.f32 %v4684, %v4895
      %v4963 = vadd.f32 %v4685, %v4898
      %v4964 = vadd.f32 %v4686, %v4901
      %v4965 = vadd.f32 %v4687, %v4904
      %v4966 = vadd.f32 %v4688, %v4907
      %v4967 = vadd.f32 %v4689, %v4910
      %v4968 = vadd.f32 %v4690, %v4913
      %v4969 = vadd.f32 %v4691, %v4916
      %v4970 = vadd.f32 %v4692, %v4919
      %v4971 = vadd.f32 %v4693, %v4922
      %v4972 = vadd.f32 %v4694, %v4925
      %v4973 = vadd.f32 %v4695, %v4928
      %v4974 = vadd.f32 %v4696, %v4931
      %v4975 = vadd.f32 %v4697, %v4934
      %v4976 = vadd.f32 %v4698, %v4937
      %v4977 = vadd.f32 %v4699, %v4940
      %v4978 = vadd.f32 %v4700, %v4943
      %v4979 = vadd.f32 %v4701, %v4946
      %v4980 = vld [vmem:[%s3900 + $0x2] sm:$0xff]
      %v4981 = vld [vmem:[%s3900 + $0xa] sm:$0xff]
      %v4982 = vld [vmem:[%s3900 + $0x1a] sm:$0xff]
      %v4983 = vld [vmem:[%s3900 + $0x22] sm:$0xff]
      %v4984 = vld [vmem:[%s3900 + $0x32] sm:$0xff]
      %v4985 = vld [vmem:[%s3900 + $0x3a] sm:$0xff]
      %v4986 = vld [vmem:[%s3900 + $0x4a] sm:$0xff]
      %v4987 = vld [vmem:[%s3900 + $0x52] sm:$0xff]
      %v4988 = vld [vmem:[%s3900 + $0x62] sm:$0xff]
      %v4989 = vld [vmem:[%s3900 + $0x6a] sm:$0xff]
      %v4990 = vld [vmem:[%s3900 + $0x7a] sm:$0xff]
      %v4991 = vld [vmem:[%s3900 + $0x82] sm:$0xff]
      %v4992 = vld [vmem:[%s3900 + $0x92] sm:$0xff]
      %v4993 = vld [vmem:[%s3900 + $0x9a] sm:$0xff]
      %v4994 = vld [vmem:[%s3900 + $0xaa] sm:$0xff]
      %v4995 = vld [vmem:[%s3900 + $0xb2] sm:$0xff]
      %v4996 = vld [vmem:[%s3900 + $0xc2] sm:$0xff]
      %v4997 = vld [vmem:[%s3900 + $0xca] sm:$0xff]
      %v4998 = vld [vmem:[%s3900 + $0xda] sm:$0xff]
      %v4999 = vld [vmem:[%s3900 + $0xe2] sm:$0xff]
      %v5000 = vld [vmem:[%s3900 + $0xf2] sm:$0xff]
      %v5001 = vld [vmem:[%s3900 + $0xfa] sm:$0xff]
      %v5002 = vld [vmem:[%s3900 + $0x10a] sm:$0xff]
      %v5003 = vld [vmem:[%s3900 + $0x112] sm:$0xff]
      %v5004 = vld [vmem:[%s3900 + $0x122] sm:$0xff]
      %v5005 = vld [vmem:[%s3900 + $0x12a] sm:$0xff]
      %v5006 = vld [vmem:[%s3900 + $0x13a] sm:$0xff]
      %v5007 = vld [vmem:[%s3900 + $0x142] sm:$0xff]
      %v5008 = vld [vmem:[%s3900 + $0x152] sm:$0xff]
      %v5009 = vld [vmem:[%s3900 + $0x15a] sm:$0xff]
      %v5010 = vld [vmem:[%s3900 + $0x16a] sm:$0xff]
      %v5011 = vld [vmem:[%s3900 + $0x172] sm:$0xff]
      %s5012 = scalar_lea.vmem %s1, 8
      %v5013 = vld [vmem:[%s5012] sm:$0x1]
      %5015 = vset.pattern.permute.xlu0 0
      %5016 = vperm.xlu0 %5015, %v4980
      %v5017 = vpop.permute.xlu0 %5016
      %5020 = vset.pattern.permute.xlu0 0
      %5021 = vperm.xlu0 %5020, %v4981
      %v5022 = vpop.permute.xlu0 %5021
      %5025 = vset.pattern.permute.xlu0 0
      %5026 = vperm.xlu0 %5025, %v4982
      %v5027 = vpop.permute.xlu0 %5026
      %5030 = vset.pattern.permute.xlu0 0
      %5031 = vperm.xlu0 %5030, %v4983
      %v5032 = vpop.permute.xlu0 %5031
      %5035 = vset.pattern.permute.xlu0 0
      %5036 = vperm.xlu0 %5035, %v4984
      %v5037 = vpop.permute.xlu0 %5036
      %5040 = vset.pattern.permute.xlu0 0
      %5041 = vperm.xlu0 %5040, %v4985
      %v5042 = vpop.permute.xlu0 %5041
      %5045 = vset.pattern.permute.xlu0 0
      %5046 = vperm.xlu0 %5045, %v4986
      %v5047 = vpop.permute.xlu0 %5046
      %5050 = vset.pattern.permute.xlu0 0
      %5051 = vperm.xlu0 %5050, %v4987
      %v5052 = vpop.permute.xlu0 %5051
      %5055 = vset.pattern.permute.xlu0 0
      %5056 = vperm.xlu0 %5055, %v4988
      %v5057 = vpop.permute.xlu0 %5056
      %5060 = vset.pattern.permute.xlu0 0
      %5061 = vperm.xlu0 %5060, %v4989
      %v5062 = vpop.permute.xlu0 %5061
      %5065 = vset.pattern.permute.xlu0 0
      %5066 = vperm.xlu0 %5065, %v4990
      %v5067 = vpop.permute.xlu0 %5066
      %5070 = vset.pattern.permute.xlu0 0
      %5071 = vperm.xlu0 %5070, %v4991
      %v5072 = vpop.permute.xlu0 %5071
      %5075 = vset.pattern.permute.xlu0 0
      %5076 = vperm.xlu0 %5075, %v4992
      %v5077 = vpop.permute.xlu0 %5076
      %5080 = vset.pattern.permute.xlu0 0
      %5081 = vperm.xlu0 %5080, %v4993
      %v5082 = vpop.permute.xlu0 %5081
      %5085 = vset.pattern.permute.xlu0 0
      %5086 = vperm.xlu0 %5085, %v4994
      %v5087 = vpop.permute.xlu0 %5086
      %5090 = vset.pattern.permute.xlu0 0
      %5091 = vperm.xlu0 %5090, %v4995
      %v5092 = vpop.permute.xlu0 %5091
      %5095 = vset.pattern.permute.xlu0 0
      %5096 = vperm.xlu0 %5095, %v4996
      %v5097 = vpop.permute.xlu0 %5096
      %5100 = vset.pattern.permute.xlu0 0
      %5101 = vperm.xlu0 %5100, %v4997
      %v5102 = vpop.permute.xlu0 %5101
      %5105 = vset.pattern.permute.xlu0 0
      %5106 = vperm.xlu0 %5105, %v4998
      %v5107 = vpop.permute.xlu0 %5106
      %5110 = vset.pattern.permute.xlu0 0
      %5111 = vperm.xlu0 %5110, %v4999
      %v5112 = vpop.permute.xlu0 %5111
      %5115 = vset.pattern.permute.xlu0 0
      %5116 = vperm.xlu0 %5115, %v5000
      %v5117 = vpop.permute.xlu0 %5116
      %5120 = vset.pattern.permute.xlu0 0
      %5121 = vperm.xlu0 %5120, %v5001
      %v5122 = vpop.permute.xlu0 %5121
      %5125 = vset.pattern.permute.xlu0 0
      %5126 = vperm.xlu0 %5125, %v5002
      %v5127 = vpop.permute.xlu0 %5126
      %5130 = vset.pattern.permute.xlu0 0
      %5131 = vperm.xlu0 %5130, %v5003
      %v5132 = vpop.permute.xlu0 %5131
      %5135 = vset.pattern.permute.xlu0 0
      %5136 = vperm.xlu0 %5135, %v5004
      %v5137 = vpop.permute.xlu0 %5136
      %5140 = vset.pattern.permute.xlu0 0
      %5141 = vperm.xlu0 %5140, %v5005
      %v5142 = vpop.permute.xlu0 %5141
      %5145 = vset.pattern.permute.xlu0 0
      %5146 = vperm.xlu0 %5145, %v5006
      %v5147 = vpop.permute.xlu0 %5146
      %5150 = vset.pattern.permute.xlu0 0
      %5151 = vperm.xlu0 %5150, %v5007
      %v5152 = vpop.permute.xlu0 %5151
      %5155 = vset.pattern.permute.xlu0 0
      %5156 = vperm.xlu0 %5155, %v5008
      %v5157 = vpop.permute.xlu0 %5156
      %5160 = vset.pattern.permute.xlu0 0
      %5161 = vperm.xlu0 %5160, %v5009
      %v5162 = vpop.permute.xlu0 %5161
      %5165 = vset.pattern.permute.xlu0 0
      %5166 = vperm.xlu0 %5165, %v5010
      %v5167 = vpop.permute.xlu0 %5166
      %5170 = vset.pattern.permute.xlu0 0
      %5171 = vperm.xlu0 %5170, %v5011
      %v5172 = vpop.permute.xlu0 %5171
      %v5175 = vperm.slane %v5013, 0
      %v5177 = vmul.f32 %v5017, %v5175
      %v5178 = vmul.f32 %v5022, %v5175
      %v5179 = vmul.f32 %v5027, %v5175
      %v5180 = vmul.f32 %v5032, %v5175
      %v5181 = vmul.f32 %v5037, %v5175
      %v5182 = vmul.f32 %v5042, %v5175
      %v5183 = vmul.f32 %v5047, %v5175
      %v5184 = vmul.f32 %v5052, %v5175
      %v5185 = vmul.f32 %v5057, %v5175
      %v5186 = vmul.f32 %v5062, %v5175
      %v5187 = vmul.f32 %v5067, %v5175
      %v5188 = vmul.f32 %v5072, %v5175
      %v5189 = vmul.f32 %v5077, %v5175
      %v5190 = vmul.f32 %v5082, %v5175
      %v5191 = vmul.f32 %v5087, %v5175
      %v5192 = vmul.f32 %v5092, %v5175
      %v5193 = vmul.f32 %v5097, %v5175
      %v5194 = vmul.f32 %v5102, %v5175
      %v5195 = vmul.f32 %v5107, %v5175
      %v5196 = vmul.f32 %v5112, %v5175
      %v5197 = vmul.f32 %v5117, %v5175
      %v5198 = vmul.f32 %v5122, %v5175
      %v5199 = vmul.f32 %v5127, %v5175
      %v5200 = vmul.f32 %v5132, %v5175
      %v5201 = vmul.f32 %v5137, %v5175
      %v5202 = vmul.f32 %v5142, %v5175
      %v5203 = vmul.f32 %v5147, %v5175
      %v5204 = vmul.f32 %v5152, %v5175
      %v5205 = vmul.f32 %v5157, %v5175
      %v5206 = vmul.f32 %v5162, %v5175
      %v5207 = vmul.f32 %v5167, %v5175
      %v5208 = vmul.f32 %v5172, %v5175
      %v5209 = vadd.f32 %v4948, %v5177
      %v5210 = vadd.f32 %v4949, %v5178
      %v5211 = vadd.f32 %v4950, %v5179
      %v5212 = vadd.f32 %v4951, %v5180
      %v5213 = vadd.f32 %v4952, %v5181
      %v5214 = vadd.f32 %v4953, %v5182
      %v5215 = vadd.f32 %v4954, %v5183
      %v5216 = vadd.f32 %v4955, %v5184
      %v5217 = vadd.f32 %v4956, %v5185
      %v5218 = vadd.f32 %v4957, %v5186
      %v5219 = vadd.f32 %v4958, %v5187
      %v5220 = vadd.f32 %v4959, %v5188
      %v5221 = vadd.f32 %v4960, %v5189
      %v5222 = vadd.f32 %v4961, %v5190
      %v5223 = vadd.f32 %v4962, %v5191
      %v5224 = vadd.f32 %v4963, %v5192
      %v5225 = vadd.f32 %v4964, %v5193
      %v5226 = vadd.f32 %v4965, %v5194
      %v5227 = vadd.f32 %v4966, %v5195
      %v5228 = vadd.f32 %v4967, %v5196
      %v5229 = vadd.f32 %v4968, %v5197
      %v5230 = vadd.f32 %v4969, %v5198
      %v5231 = vadd.f32 %v4970, %v5199
      %v5232 = vadd.f32 %v4971, %v5200
      %v5233 = vadd.f32 %v4972, %v5201
      %v5234 = vadd.f32 %v4973, %v5202
      %v5235 = vadd.f32 %v4974, %v5203
      %v5236 = vadd.f32 %v4975, %v5204
      %v5237 = vadd.f32 %v4976, %v5205
      %v5238 = vadd.f32 %v4977, %v5206
      %v5239 = vadd.f32 %v4978, %v5207
      %v5240 = vadd.f32 %v4979, %v5208
      %v5241 = vld [vmem:[%s4162 + $0x2] sm:$0xff]
      %v5242 = vld [vmem:[%s4162 + $0xa] sm:$0xff]
      %v5243 = vld [vmem:[%s4162 + $0x1a] sm:$0xff]
      %v5244 = vld [vmem:[%s4162 + $0x22] sm:$0xff]
      %v5245 = vld [vmem:[%s4162 + $0x32] sm:$0xff]
      %v5246 = vld [vmem:[%s4162 + $0x3a] sm:$0xff]
      %v5247 = vld [vmem:[%s4162 + $0x4a] sm:$0xff]
      %v5248 = vld [vmem:[%s4162 + $0x52] sm:$0xff]
      %v5249 = vld [vmem:[%s4162 + $0x62] sm:$0xff]
      %v5250 = vld [vmem:[%s4162 + $0x6a] sm:$0xff]
      %v5251 = vld [vmem:[%s4162 + $0x7a] sm:$0xff]
      %v5252 = vld [vmem:[%s4162 + $0x82] sm:$0xff]
      %v5253 = vld [vmem:[%s4162 + $0x92] sm:$0xff]
      %v5254 = vld [vmem:[%s4162 + $0x9a] sm:$0xff]
      %v5255 = vld [vmem:[%s4162 + $0xaa] sm:$0xff]
      %v5256 = vld [vmem:[%s4162 + $0xb2] sm:$0xff]
      %v5257 = vld [vmem:[%s4162 + $0xc2] sm:$0xff]
      %v5258 = vld [vmem:[%s4162 + $0xca] sm:$0xff]
      %v5259 = vld [vmem:[%s4162 + $0xda] sm:$0xff]
      %v5260 = vld [vmem:[%s4162 + $0xe2] sm:$0xff]
      %v5261 = vld [vmem:[%s4162 + $0xf2] sm:$0xff]
      %v5262 = vld [vmem:[%s4162 + $0xfa] sm:$0xff]
      %v5263 = vld [vmem:[%s4162 + $0x10a] sm:$0xff]
      %v5264 = vld [vmem:[%s4162 + $0x112] sm:$0xff]
      %v5265 = vld [vmem:[%s4162 + $0x122] sm:$0xff]
      %v5266 = vld [vmem:[%s4162 + $0x12a] sm:$0xff]
      %v5267 = vld [vmem:[%s4162 + $0x13a] sm:$0xff]
      %v5268 = vld [vmem:[%s4162 + $0x142] sm:$0xff]
      %v5269 = vld [vmem:[%s4162 + $0x152] sm:$0xff]
      %v5270 = vld [vmem:[%s4162 + $0x15a] sm:$0xff]
      %v5271 = vld [vmem:[%s4162 + $0x16a] sm:$0xff]
      %v5272 = vld [vmem:[%s4162 + $0x172] sm:$0xff]
      %s5273 = scalar_lea.vmem %s2, 256
      %v5274 = vld [vmem:[%s5273] sm:$0xff]
      %v5275 = vld [vmem:[%s5273 + $0x8] sm:$0xff]
      %v5276 = vld [vmem:[%s5273 + $0x10] sm:$0xff]
      %v5277 = vld [vmem:[%s5273 + $0x18] sm:$0xff]
      %v5279 = vsel %vm962, %v5241, 0
      %v5282 = vsel %vm962, %v5242, 0
      %v5285 = vsel %vm962, %v5243, 0
      %v5288 = vsel %vm962, %v5244, 0
      %v5291 = vsel %vm962, %v5245, 0
      %v5294 = vsel %vm962, %v5246, 0
      %v5297 = vsel %vm962, %v5247, 0
      %v5300 = vsel %vm962, %v5248, 0
      %v5303 = vsel %vm962, %v5249, 0
      %v5306 = vsel %vm962, %v5250, 0
      %v5309 = vsel %vm962, %v5251, 0
      %v5312 = vsel %vm962, %v5252, 0
      %v5315 = vsel %vm962, %v5253, 0
      %v5318 = vsel %vm962, %v5254, 0
      %v5321 = vsel %vm962, %v5255, 0
      %v5324 = vsel %vm962, %v5256, 0
      %v5327 = vsel %vm962, %v5257, 0
      %v5330 = vsel %vm962, %v5258, 0
      %v5333 = vsel %vm962, %v5259, 0
      %v5336 = vsel %vm962, %v5260, 0
      %v5339 = vsel %vm962, %v5261, 0
      %v5342 = vsel %vm962, %v5262, 0
      %v5345 = vsel %vm962, %v5263, 0
      %v5348 = vsel %vm962, %v5264, 0
      %v5351 = vsel %vm962, %v5265, 0
      %v5354 = vsel %vm962, %v5266, 0
      %v5357 = vsel %vm962, %v5267, 0
      %v5360 = vsel %vm962, %v5268, 0
      %v5363 = vsel %vm962, %v5269, 0
      %v5366 = vsel %vm962, %v5270, 0
      %v5369 = vsel %vm962, %v5271, 0
      %v5372 = vsel %vm962, %v5272, 0
      %5374 = vmatpush.msra.mxu0 0.0
      %5375 = vmatpush.msra.mxu0 0.0
      %5376 = vmatpush.msra.mxu0 0.0
      %5377 = vmatpush.msra.mxu0 0.0
      %5378 = vmatpush.msra.mxu0 0.0
      %5379 = vmatpush.msra.mxu0 0.0
      %5380 = vmatpush.msra.mxu0 0.0
      %5381 = vmatpush.msra.mxu0 0.0
      %5382 = vmatpush.msra.mxu0 0.0
      %5383 = vmatpush.msra.mxu0 0.0
      %5384 = vmatpush.msra.mxu0 0.0
      %5385 = vmatpush.msra.mxu0 0.0
      %5386 = vmatpush.msra.mxu0 %v5277
      %5387 = vmatpush.msra.mxu0 %v5276
      %5388 = vmatpush.msra.mxu0 %v5275
      %5389 = vmatpush.msra.mxu0 %v5274
      %5390 = vmatmul.f32.gmra.mxu0 %v5279
      %v5391 = vpop.f32.mrf.mxu0
      %v5392 = vadd.f32 0.0, %v5391
      %5393 = vmatmul.f32.gmra.mxu0 %v5282
      %v5394 = vpop.f32.mrf.mxu0
      %v5395 = vadd.f32 0.0, %v5394
      %5396 = vmatmul.f32.gmra.mxu0 %v5285
      %v5397 = vpop.f32.mrf.mxu0
      %v5398 = vadd.f32 0.0, %v5397
      %5399 = vmatmul.f32.gmra.mxu0 %v5288
      %v5400 = vpop.f32.mrf.mxu0
      %v5401 = vadd.f32 0.0, %v5400
      %5402 = vmatmul.f32.gmra.mxu0 %v5291
      %v5403 = vpop.f32.mrf.mxu0
      %v5404 = vadd.f32 0.0, %v5403
      %5405 = vmatmul.f32.gmra.mxu0 %v5294
      %v5406 = vpop.f32.mrf.mxu0
      %v5407 = vadd.f32 0.0, %v5406
      %5408 = vmatmul.f32.gmra.mxu0 %v5297
      %v5409 = vpop.f32.mrf.mxu0
      %v5410 = vadd.f32 0.0, %v5409
      %5411 = vmatmul.f32.gmra.mxu0 %v5300
      %v5412 = vpop.f32.mrf.mxu0
      %v5413 = vadd.f32 0.0, %v5412
      %5414 = vmatmul.f32.gmra.mxu0 %v5303
      %v5415 = vpop.f32.mrf.mxu0
      %v5416 = vadd.f32 0.0, %v5415
      %5417 = vmatmul.f32.gmra.mxu0 %v5306
      %v5418 = vpop.f32.mrf.mxu0
      %v5419 = vadd.f32 0.0, %v5418
      %5420 = vmatmul.f32.gmra.mxu0 %v5309
      %v5421 = vpop.f32.mrf.mxu0
      %v5422 = vadd.f32 0.0, %v5421
      %5423 = vmatmul.f32.gmra.mxu0 %v5312
      %v5424 = vpop.f32.mrf.mxu0
      %v5425 = vadd.f32 0.0, %v5424
      %5426 = vmatmul.f32.gmra.mxu0 %v5315
      %v5427 = vpop.f32.mrf.mxu0
      %v5428 = vadd.f32 0.0, %v5427
      %5429 = vmatmul.f32.gmra.mxu0 %v5318
      %v5430 = vpop.f32.mrf.mxu0
      %v5431 = vadd.f32 0.0, %v5430
      %5432 = vmatmul.f32.gmra.mxu0 %v5321
      %v5433 = vpop.f32.mrf.mxu0
      %v5434 = vadd.f32 0.0, %v5433
      %5435 = vmatmul.f32.gmra.mxu0 %v5324
      %v5436 = vpop.f32.mrf.mxu0
      %v5437 = vadd.f32 0.0, %v5436
      %5438 = vmatmul.f32.gmra.mxu0 %v5327
      %v5439 = vpop.f32.mrf.mxu0
      %v5440 = vadd.f32 0.0, %v5439
      %5441 = vmatmul.f32.gmra.mxu0 %v5330
      %v5442 = vpop.f32.mrf.mxu0
      %v5443 = vadd.f32 0.0, %v5442
      %5444 = vmatmul.f32.gmra.mxu0 %v5333
      %v5445 = vpop.f32.mrf.mxu0
      %v5446 = vadd.f32 0.0, %v5445
      %5447 = vmatmul.f32.gmra.mxu0 %v5336
      %v5448 = vpop.f32.mrf.mxu0
      %v5449 = vadd.f32 0.0, %v5448
      %5450 = vmatmul.f32.gmra.mxu0 %v5339
      %v5451 = vpop.f32.mrf.mxu0
      %v5452 = vadd.f32 0.0, %v5451
      %5453 = vmatmul.f32.gmra.mxu0 %v5342
      %v5454 = vpop.f32.mrf.mxu0
      %v5455 = vadd.f32 0.0, %v5454
      %5456 = vmatmul.f32.gmra.mxu0 %v5345
      %v5457 = vpop.f32.mrf.mxu0
      %v5458 = vadd.f32 0.0, %v5457
      %5459 = vmatmul.f32.gmra.mxu0 %v5348
      %v5460 = vpop.f32.mrf.mxu0
      %v5461 = vadd.f32 0.0, %v5460
      %5462 = vmatmul.f32.gmra.mxu0 %v5351
      %v5463 = vpop.f32.mrf.mxu0
      %v5464 = vadd.f32 0.0, %v5463
      %5465 = vmatmul.f32.gmra.mxu0 %v5354
      %v5466 = vpop.f32.mrf.mxu0
      %v5467 = vadd.f32 0.0, %v5466
      %5468 = vmatmul.f32.gmra.mxu0 %v5357
      %v5469 = vpop.f32.mrf.mxu0
      %v5470 = vadd.f32 0.0, %v5469
      %5471 = vmatmul.f32.gmra.mxu0 %v5360
      %v5472 = vpop.f32.mrf.mxu0
      %v5473 = vadd.f32 0.0, %v5472
      %5474 = vmatmul.f32.gmra.mxu0 %v5363
      %v5475 = vpop.f32.mrf.mxu0
      %v5476 = vadd.f32 0.0, %v5475
      %5477 = vmatmul.f32.gmra.mxu0 %v5366
      %v5478 = vpop.f32.mrf.mxu0
      %v5479 = vadd.f32 0.0, %v5478
      %5480 = vmatmul.f32.gmra.mxu0 %v5369
      %v5481 = vpop.f32.mrf.mxu0
      %v5482 = vadd.f32 0.0, %v5481
      %5483 = vmatmul.f32.gmra.mxu0 %v5372
      %v5484 = vpop.f32.mrf.mxu0
      %v5485 = vadd.f32 0.0, %v5484
      %5486 = vdwg.mxu0
      %v5487 = vadd.f32 %v5209, %v5392
      %v5488 = vadd.f32 %v5210, %v5395
      %v5489 = vadd.f32 %v5211, %v5398
      %v5490 = vadd.f32 %v5212, %v5401
      %v5491 = vadd.f32 %v5213, %v5404
      %v5492 = vadd.f32 %v5214, %v5407
      %v5493 = vadd.f32 %v5215, %v5410
      %v5494 = vadd.f32 %v5216, %v5413
      %v5495 = vadd.f32 %v5217, %v5416
      %v5496 = vadd.f32 %v5218, %v5419
      %v5497 = vadd.f32 %v5219, %v5422
      %v5498 = vadd.f32 %v5220, %v5425
      %v5499 = vadd.f32 %v5221, %v5428
      %v5500 = vadd.f32 %v5222, %v5431
      %v5501 = vadd.f32 %v5223, %v5434
      %v5502 = vadd.f32 %v5224, %v5437
      %v5503 = vadd.f32 %v5225, %v5440
      %v5504 = vadd.f32 %v5226, %v5443
      %v5505 = vadd.f32 %v5227, %v5446
      %v5506 = vadd.f32 %v5228, %v5449
      %v5507 = vadd.f32 %v5229, %v5452
      %v5508 = vadd.f32 %v5230, %v5455
      %v5509 = vadd.f32 %v5231, %v5458
      %v5510 = vadd.f32 %v5232, %v5461
      %v5511 = vadd.f32 %v5233, %v5464
      %v5512 = vadd.f32 %v5234, %v5467
      %v5513 = vadd.f32 %v5235, %v5470
      %v5514 = vadd.f32 %v5236, %v5473
      %v5515 = vadd.f32 %v5237, %v5476
      %v5516 = vadd.f32 %v5238, %v5479
      %v5517 = vadd.f32 %v5239, %v5482
      %v5518 = vadd.f32 %v5240, %v5485
      %v5519 = vld [vmem:[%s3] sm:$0x1]
      %v5521 = vperm.slane %v5519, 0
      %v5523 = vadd.f32 %v5487, %v5521
      %v5524 = vadd.f32 %v5488, %v5521
      %v5525 = vadd.f32 %v5489, %v5521
      %v5526 = vadd.f32 %v5490, %v5521
      %v5527 = vadd.f32 %v5491, %v5521
      %v5528 = vadd.f32 %v5492, %v5521
      %v5529 = vadd.f32 %v5493, %v5521
      %v5530 = vadd.f32 %v5494, %v5521
      %v5531 = vadd.f32 %v5495, %v5521
      %v5532 = vadd.f32 %v5496, %v5521
      %v5533 = vadd.f32 %v5497, %v5521
      %v5534 = vadd.f32 %v5498, %v5521
      %v5535 = vadd.f32 %v5499, %v5521
      %v5536 = vadd.f32 %v5500, %v5521
      %v5537 = vadd.f32 %v5501, %v5521
      %v5538 = vadd.f32 %v5502, %v5521
      %v5539 = vadd.f32 %v5503, %v5521
      %v5540 = vadd.f32 %v5504, %v5521
      %v5541 = vadd.f32 %v5505, %v5521
      %v5542 = vadd.f32 %v5506, %v5521
      %v5543 = vadd.f32 %v5507, %v5521
      %v5544 = vadd.f32 %v5508, %v5521
      %v5545 = vadd.f32 %v5509, %v5521
      %v5546 = vadd.f32 %v5510, %v5521
      %v5547 = vadd.f32 %v5511, %v5521
      %v5548 = vadd.f32 %v5512, %v5521
      %v5549 = vadd.f32 %v5513, %v5521
      %v5550 = vadd.f32 %v5514, %v5521
      %v5551 = vadd.f32 %v5515, %v5521
      %v5552 = vadd.f32 %v5516, %v5521
      %v5553 = vadd.f32 %v5517, %v5521
      %v5554 = vadd.f32 %v5518, %v5521
      %v5555 = vld [vmem:[#allocation5] sm:$0xff]
      %v5556 = vld [vmem:[#allocation5 + $0x8] sm:$0xff]
      %v5557 = vld [vmem:[#allocation5 + $0x10] sm:$0xff]
      %v5558 = vld [vmem:[#allocation5 + $0x18] sm:$0xff]
      %v5559 = vld [vmem:[#allocation5 + $0x20] sm:$0xff]
      %v5560 = vld [vmem:[#allocation5 + $0x28] sm:$0xff]
      %v5561 = vld [vmem:[#allocation5 + $0x30] sm:$0xff]
      %v5562 = vld [vmem:[#allocation5 + $0x38] sm:$0xff]
      %v5563 = vld [vmem:[#allocation5 + $0x40] sm:$0xff]
      %v5564 = vld [vmem:[#allocation5 + $0x48] sm:$0xff]
      %v5565 = vld [vmem:[#allocation5 + $0x50] sm:$0xff]
      %v5566 = vld [vmem:[#allocation5 + $0x58] sm:$0xff]
      %v5567 = vld [vmem:[#allocation5 + $0x60] sm:$0xff]
      %v5568 = vld [vmem:[#allocation5 + $0x68] sm:$0xff]
      %v5569 = vld [vmem:[#allocation5 + $0x70] sm:$0xff]
      %v5570 = vld [vmem:[#allocation5 + $0x78] sm:$0xff]
      %v5571 = vld [vmem:[#allocation5 + $0x80] sm:$0xff]
      %v5572 = vld [vmem:[#allocation5 + $0x88] sm:$0xff]
      %v5573 = vld [vmem:[#allocation5 + $0x90] sm:$0xff]
      %v5574 = vld [vmem:[#allocation5 + $0x98] sm:$0xff]
      %v5575 = vld [vmem:[#allocation5 + $0xa0] sm:$0xff]
      %v5576 = vld [vmem:[#allocation5 + $0xa8] sm:$0xff]
      %v5577 = vld [vmem:[#allocation5 + $0xb0] sm:$0xff]
      %v5578 = vld [vmem:[#allocation5 + $0xb8] sm:$0xff]
      %v5579 = vld [vmem:[#allocation5 + $0xc0] sm:$0xff]
      %v5580 = vld [vmem:[#allocation5 + $0xc8] sm:$0xff]
      %v5581 = vld [vmem:[#allocation5 + $0xd0] sm:$0xff]
      %v5582 = vld [vmem:[#allocation5 + $0xd8] sm:$0xff]
      %v5583 = vld [vmem:[#allocation5 + $0xe0] sm:$0xff]
      %v5584 = vld [vmem:[#allocation5 + $0xe8] sm:$0xff]
      %v5585 = vld [vmem:[#allocation5 + $0xf0] sm:$0xff]
      %v5586 = vld [vmem:[#allocation5 + $0xf8] sm:$0xff]
      %v5587 = vmul.f32 %v5523, %v664
      %v5588 = vmul.f32 %v5524, %v664
      %v5589 = vmul.f32 %v5525, %v664
      %v5590 = vmul.f32 %v5526, %v664
      %v5591 = vmul.f32 %v5527, %v664
      %v5592 = vmul.f32 %v5528, %v664
      %v5593 = vmul.f32 %v5529, %v664
      %v5594 = vmul.f32 %v5530, %v664
      %v5595 = vmul.f32 %v5531, %v664
      %v5596 = vmul.f32 %v5532, %v664
      %v5597 = vmul.f32 %v5533, %v664
      %v5598 = vmul.f32 %v5534, %v664
      %v5599 = vmul.f32 %v5535, %v664
      %v5600 = vmul.f32 %v5536, %v664
      %v5601 = vmul.f32 %v5537, %v664
      %v5602 = vmul.f32 %v5538, %v664
      %v5603 = vmul.f32 %v5539, %v664
      %v5604 = vmul.f32 %v5540, %v664
      %v5605 = vmul.f32 %v5541, %v664
      %v5606 = vmul.f32 %v5542, %v664
      %v5607 = vmul.f32 %v5543, %v664
      %v5608 = vmul.f32 %v5544, %v664
      %v5609 = vmul.f32 %v5545, %v664
      %v5610 = vmul.f32 %v5546, %v664
      %v5611 = vmul.f32 %v5547, %v664
      %v5612 = vmul.f32 %v5548, %v664
      %v5613 = vmul.f32 %v5549, %v664
      %v5614 = vmul.f32 %v5550, %v664
      %v5615 = vmul.f32 %v5551, %v664
      %v5616 = vmul.f32 %v5552, %v664
      %v5617 = vmul.f32 %v5553, %v664
      %v5618 = vmul.f32 %v5554, %v664
      %v5619 = vtanh.pop %v5587
      %v5620 = vtanh.pop %v5588
      %v5621 = vtanh.pop %v5589
      %v5622 = vtanh.pop %v5590
      %v5623 = vtanh.pop %v5591
      %v5624 = vtanh.pop %v5592
      %v5625 = vtanh.pop %v5593
      %v5626 = vtanh.pop %v5594
      %v5627 = vtanh.pop %v5595
      %v5628 = vtanh.pop %v5596
      %v5629 = vtanh.pop %v5597
      %v5630 = vtanh.pop %v5598
      %v5631 = vtanh.pop %v5599
      %v5632 = vtanh.pop %v5600
      %v5633 = vtanh.pop %v5601
      %v5634 = vtanh.pop %v5602
      %v5635 = vtanh.pop %v5603
      %v5636 = vtanh.pop %v5604
      %v5637 = vtanh.pop %v5605
      %v5638 = vtanh.pop %v5606
      %v5639 = vtanh.pop %v5607
      %v5640 = vtanh.pop %v5608
      %v5641 = vtanh.pop %v5609
      %v5642 = vtanh.pop %v5610
      %v5643 = vtanh.pop %v5611
      %v5644 = vtanh.pop %v5612
      %v5645 = vtanh.pop %v5613
      %v5646 = vtanh.pop %v5614
      %v5647 = vtanh.pop %v5615
      %v5648 = vtanh.pop %v5616
      %v5649 = vtanh.pop %v5617
      %v5650 = vtanh.pop %v5618
      %v5651 = vmul.f32 %v5619, %v664
      %v5652 = vmul.f32 %v5620, %v664
      %v5653 = vmul.f32 %v5621, %v664
      %v5654 = vmul.f32 %v5622, %v664
      %v5655 = vmul.f32 %v5623, %v664
      %v5656 = vmul.f32 %v5624, %v664
      %v5657 = vmul.f32 %v5625, %v664
      %v5658 = vmul.f32 %v5626, %v664
      %v5659 = vmul.f32 %v5627, %v664
      %v5660 = vmul.f32 %v5628, %v664
      %v5661 = vmul.f32 %v5629, %v664
      %v5662 = vmul.f32 %v5630, %v664
      %v5663 = vmul.f32 %v5631, %v664
      %v5664 = vmul.f32 %v5632, %v664
      %v5665 = vmul.f32 %v5633, %v664
      %v5666 = vmul.f32 %v5634, %v664
      %v5667 = vmul.f32 %v5635, %v664
      %v5668 = vmul.f32 %v5636, %v664
      %v5669 = vmul.f32 %v5637, %v664
      %v5670 = vmul.f32 %v5638, %v664
      %v5671 = vmul.f32 %v5639, %v664
      %v5672 = vmul.f32 %v5640, %v664
      %v5673 = vmul.f32 %v5641, %v664
      %v5674 = vmul.f32 %v5642, %v664
      %v5675 = vmul.f32 %v5643, %v664
      %v5676 = vmul.f32 %v5644, %v664
      %v5677 = vmul.f32 %v5645, %v664
      %v5678 = vmul.f32 %v5646, %v664
      %v5679 = vmul.f32 %v5647, %v664
      %v5680 = vmul.f32 %v5648, %v664
      %v5681 = vmul.f32 %v5649, %v664
      %v5682 = vmul.f32 %v5650, %v664
      %v5683 = vadd.f32 %v5651, %v665
      %v5684 = vadd.f32 %v5652, %v665
      %v5685 = vadd.f32 %v5653, %v665
      %v5686 = vadd.f32 %v5654, %v665
      %v5687 = vadd.f32 %v5655, %v665
      %v5688 = vadd.f32 %v5656, %v665
      %v5689 = vadd.f32 %v5657, %v665
      %v5690 = vadd.f32 %v5658, %v665
      %v5691 = vadd.f32 %v5659, %v665
      %v5692 = vadd.f32 %v5660, %v665
      %v5693 = vadd.f32 %v5661, %v665
      %v5694 = vadd.f32 %v5662, %v665
      %v5695 = vadd.f32 %v5663, %v665
      %v5696 = vadd.f32 %v5664, %v665
      %v5697 = vadd.f32 %v5665, %v665
      %v5698 = vadd.f32 %v5666, %v665
      %v5699 = vadd.f32 %v5667, %v665
      %v5700 = vadd.f32 %v5668, %v665
      %v5701 = vadd.f32 %v5669, %v665
      %v5702 = vadd.f32 %v5670, %v665
      %v5703 = vadd.f32 %v5671, %v665
      %v5704 = vadd.f32 %v5672, %v665
      %v5705 = vadd.f32 %v5673, %v665
      %v5706 = vadd.f32 %v5674, %v665
      %v5707 = vadd.f32 %v5675, %v665
      %v5708 = vadd.f32 %v5676, %v665
      %v5709 = vadd.f32 %v5677, %v665
      %v5710 = vadd.f32 %v5678, %v665
      %v5711 = vadd.f32 %v5679, %v665
      %v5712 = vadd.f32 %v5680, %v665
      %v5713 = vadd.f32 %v5681, %v665
      %v5714 = vadd.f32 %v5682, %v665
      %5747 = vrot.lane.b32.xlu0 %v5555, 32
      %v5748 = vpop.permute.xlu0 %5747
      %5749 = vrot.lane.b32.xlu0 %v5556, 32
      %v5750 = vpop.permute.xlu0 %5749
      %5751 = vrot.lane.b32.xlu0 %v5557, 32
      %v5752 = vpop.permute.xlu0 %5751
      %5753 = vrot.lane.b32.xlu0 %v5558, 32
      %v5754 = vpop.permute.xlu0 %5753
      %5755 = vrot.lane.b32.xlu0 %v5559, 32
      %v5756 = vpop.permute.xlu0 %5755
      %5757 = vrot.lane.b32.xlu0 %v5560, 32
      %v5758 = vpop.permute.xlu0 %5757
      %5759 = vrot.lane.b32.xlu0 %v5561, 32
      %v5760 = vpop.permute.xlu0 %5759
      %5761 = vrot.lane.b32.xlu0 %v5562, 32
      %v5762 = vpop.permute.xlu0 %5761
      %5763 = vrot.lane.b32.xlu0 %v5563, 32
      %v5764 = vpop.permute.xlu0 %5763
      %5765 = vrot.lane.b32.xlu0 %v5564, 32
      %v5766 = vpop.permute.xlu0 %5765
      %5767 = vrot.lane.b32.xlu0 %v5565, 32
      %v5768 = vpop.permute.xlu0 %5767
      %5769 = vrot.lane.b32.xlu0 %v5566, 32
      %v5770 = vpop.permute.xlu0 %5769
      %5771 = vrot.lane.b32.xlu0 %v5567, 32
      %v5772 = vpop.permute.xlu0 %5771
      %5773 = vrot.lane.b32.xlu0 %v5568, 32
      %v5774 = vpop.permute.xlu0 %5773
      %5775 = vrot.lane.b32.xlu0 %v5569, 32
      %v5776 = vpop.permute.xlu0 %5775
      %5777 = vrot.lane.b32.xlu0 %v5570, 32
      %v5778 = vpop.permute.xlu0 %5777
      %5779 = vrot.lane.b32.xlu0 %v5571, 32
      %v5780 = vpop.permute.xlu0 %5779
      %5781 = vrot.lane.b32.xlu0 %v5572, 32
      %v5782 = vpop.permute.xlu0 %5781
      %5783 = vrot.lane.b32.xlu0 %v5573, 32
      %v5784 = vpop.permute.xlu0 %5783
      %5785 = vrot.lane.b32.xlu0 %v5574, 32
      %v5786 = vpop.permute.xlu0 %5785
      %5787 = vrot.lane.b32.xlu0 %v5575, 32
      %v5788 = vpop.permute.xlu0 %5787
      %5789 = vrot.lane.b32.xlu0 %v5576, 32
      %v5790 = vpop.permute.xlu0 %5789
      %5791 = vrot.lane.b32.xlu0 %v5577, 32
      %v5792 = vpop.permute.xlu0 %5791
      %5793 = vrot.lane.b32.xlu0 %v5578, 32
      %v5794 = vpop.permute.xlu0 %5793
      %5795 = vrot.lane.b32.xlu0 %v5579, 32
      %v5796 = vpop.permute.xlu0 %5795
      %5797 = vrot.lane.b32.xlu0 %v5580, 32
      %v5798 = vpop.permute.xlu0 %5797
      %5799 = vrot.lane.b32.xlu0 %v5581, 32
      %v5800 = vpop.permute.xlu0 %5799
      %5801 = vrot.lane.b32.xlu0 %v5582, 32
      %v5802 = vpop.permute.xlu0 %5801
      %5803 = vrot.lane.b32.xlu0 %v5583, 32
      %v5804 = vpop.permute.xlu0 %5803
      %5805 = vrot.lane.b32.xlu0 %v5584, 32
      %v5806 = vpop.permute.xlu0 %5805
      %5807 = vrot.lane.b32.xlu0 %v5585, 32
      %v5808 = vpop.permute.xlu0 %5807
      %5809 = vrot.lane.b32.xlu0 %v5586, 32
      %v5810 = vpop.permute.xlu0 %5809
      %v5843 = vmul.f32 %v5683, %v5748
      %v5844 = vmul.f32 %v5684, %v5750
      %v5845 = vmul.f32 %v5685, %v5752
      %v5846 = vmul.f32 %v5686, %v5754
      %v5847 = vmul.f32 %v5687, %v5756
      %v5848 = vmul.f32 %v5688, %v5758
      %v5849 = vmul.f32 %v5689, %v5760
      %v5850 = vmul.f32 %v5690, %v5762
      %v5851 = vmul.f32 %v5691, %v5764
      %v5852 = vmul.f32 %v5692, %v5766
      %v5853 = vmul.f32 %v5693, %v5768
      %v5854 = vmul.f32 %v5694, %v5770
      %v5855 = vmul.f32 %v5695, %v5772
      %v5856 = vmul.f32 %v5696, %v5774
      %v5857 = vmul.f32 %v5697, %v5776
      %v5858 = vmul.f32 %v5698, %v5778
      %v5859 = vmul.f32 %v5699, %v5780
      %v5860 = vmul.f32 %v5700, %v5782
      %v5861 = vmul.f32 %v5701, %v5784
      %v5862 = vmul.f32 %v5702, %v5786
      %v5863 = vmul.f32 %v5703, %v5788
      %v5864 = vmul.f32 %v5704, %v5790
      %v5865 = vmul.f32 %v5705, %v5792
      %v5866 = vmul.f32 %v5706, %v5794
      %v5867 = vmul.f32 %v5707, %v5796
      %v5868 = vmul.f32 %v5708, %v5798
      %v5869 = vmul.f32 %v5709, %v5800
      %v5870 = vmul.f32 %v5710, %v5802
      %v5871 = vmul.f32 %v5711, %v5804
      %v5872 = vmul.f32 %v5712, %v5806
      %v5873 = vmul.f32 %v5713, %v5808
      %v5874 = vmul.f32 %v5714, %v5810
      %5907 = vrot.lane.b32.xlu0 %v5683, 32
      %v5908 = vpop.permute.xlu0 %5907
      %5909 = vrot.lane.b32.xlu0 %v5684, 32
      %v5910 = vpop.permute.xlu0 %5909
      %5911 = vrot.lane.b32.xlu0 %v5685, 32
      %v5912 = vpop.permute.xlu0 %5911
      %5913 = vrot.lane.b32.xlu0 %v5686, 32
      %v5914 = vpop.permute.xlu0 %5913
      %5915 = vrot.lane.b32.xlu0 %v5687, 32
      %v5916 = vpop.permute.xlu0 %5915
      %5917 = vrot.lane.b32.xlu0 %v5688, 32
      %v5918 = vpop.permute.xlu0 %5917
      %5919 = vrot.lane.b32.xlu0 %v5689, 32
      %v5920 = vpop.permute.xlu0 %5919
      %5921 = vrot.lane.b32.xlu0 %v5690, 32
      %v5922 = vpop.permute.xlu0 %5921
      %5923 = vrot.lane.b32.xlu0 %v5691, 32
      %v5924 = vpop.permute.xlu0 %5923
      %5925 = vrot.lane.b32.xlu0 %v5692, 32
      %v5926 = vpop.permute.xlu0 %5925
      %5927 = vrot.lane.b32.xlu0 %v5693, 32
      %v5928 = vpop.permute.xlu0 %5927
      %5929 = vrot.lane.b32.xlu0 %v5694, 32
      %v5930 = vpop.permute.xlu0 %5929
      %5931 = vrot.lane.b32.xlu0 %v5695, 32
      %v5932 = vpop.permute.xlu0 %5931
      %5933 = vrot.lane.b32.xlu0 %v5696, 32
      %v5934 = vpop.permute.xlu0 %5933
      %5935 = vrot.lane.b32.xlu0 %v5697, 32
      %v5936 = vpop.permute.xlu0 %5935
      %5937 = vrot.lane.b32.xlu0 %v5698, 32
      %v5938 = vpop.permute.xlu0 %5937
      %5939 = vrot.lane.b32.xlu0 %v5699, 32
      %v5940 = vpop.permute.xlu0 %5939
      %5941 = vrot.lane.b32.xlu0 %v5700, 32
      %v5942 = vpop.permute.xlu0 %5941
      %5943 = vrot.lane.b32.xlu0 %v5701, 32
      %v5944 = vpop.permute.xlu0 %5943
      %5945 = vrot.lane.b32.xlu0 %v5702, 32
      %v5946 = vpop.permute.xlu0 %5945
      %5947 = vrot.lane.b32.xlu0 %v5703, 32
      %v5948 = vpop.permute.xlu0 %5947
      %5949 = vrot.lane.b32.xlu0 %v5704, 32
      %v5950 = vpop.permute.xlu0 %5949
      %5951 = vrot.lane.b32.xlu0 %v5705, 32
      %v5952 = vpop.permute.xlu0 %5951
      %5953 = vrot.lane.b32.xlu0 %v5706, 32
      %v5954 = vpop.permute.xlu0 %5953
      %5955 = vrot.lane.b32.xlu0 %v5707, 32
      %v5956 = vpop.permute.xlu0 %5955
      %5957 = vrot.lane.b32.xlu0 %v5708, 32
      %v5958 = vpop.permute.xlu0 %5957
      %5959 = vrot.lane.b32.xlu0 %v5709, 32
      %v5960 = vpop.permute.xlu0 %5959
      %5961 = vrot.lane.b32.xlu0 %v5710, 32
      %v5962 = vpop.permute.xlu0 %5961
      %5963 = vrot.lane.b32.xlu0 %v5711, 32
      %v5964 = vpop.permute.xlu0 %5963
      %5965 = vrot.lane.b32.xlu0 %v5712, 32
      %v5966 = vpop.permute.xlu0 %5965
      %5967 = vrot.lane.b32.xlu0 %v5713, 32
      %v5968 = vpop.permute.xlu0 %5967
      %5969 = vrot.lane.b32.xlu0 %v5714, 32
      %v5970 = vpop.permute.xlu0 %5969
      %v6003 = vmul.f32 %v5683, %v5908
      %v6004 = vmul.f32 %v5684, %v5910
      %v6005 = vmul.f32 %v5685, %v5912
      %v6006 = vmul.f32 %v5686, %v5914
      %v6007 = vmul.f32 %v5687, %v5916
      %v6008 = vmul.f32 %v5688, %v5918
      %v6009 = vmul.f32 %v5689, %v5920
      %v6010 = vmul.f32 %v5690, %v5922
      %v6011 = vmul.f32 %v5691, %v5924
      %v6012 = vmul.f32 %v5692, %v5926
      %v6013 = vmul.f32 %v5693, %v5928
      %v6014 = vmul.f32 %v5694, %v5930
      %v6015 = vmul.f32 %v5695, %v5932
      %v6016 = vmul.f32 %v5696, %v5934
      %v6017 = vmul.f32 %v5697, %v5936
      %v6018 = vmul.f32 %v5698, %v5938
      %v6019 = vmul.f32 %v5699, %v5940
      %v6020 = vmul.f32 %v5700, %v5942
      %v6021 = vmul.f32 %v5701, %v5944
      %v6022 = vmul.f32 %v5702, %v5946
      %v6023 = vmul.f32 %v5703, %v5948
      %v6024 = vmul.f32 %v5704, %v5950
      %v6025 = vmul.f32 %v5705, %v5952
      %v6026 = vmul.f32 %v5706, %v5954
      %v6027 = vmul.f32 %v5707, %v5956
      %v6028 = vmul.f32 %v5708, %v5958
      %v6029 = vmul.f32 %v5709, %v5960
      %v6030 = vmul.f32 %v5710, %v5962
      %v6031 = vmul.f32 %v5711, %v5964
      %v6032 = vmul.f32 %v5712, %v5966
      %v6033 = vmul.f32 %v5713, %v5968
      %v6034 = vmul.f32 %v5714, %v5970
      %6067 = vrot.lane.b32.xlu0 %v6003, 32
      %v6068 = vpop.permute.xlu0 %6067
      %6069 = vrot.lane.b32.xlu0 %v6004, 32
      %v6070 = vpop.permute.xlu0 %6069
      %6071 = vrot.lane.b32.xlu0 %v6005, 32
      %v6072 = vpop.permute.xlu0 %6071
      %6073 = vrot.lane.b32.xlu0 %v6006, 32
      %v6074 = vpop.permute.xlu0 %6073
      %6075 = vrot.lane.b32.xlu0 %v6007, 32
      %v6076 = vpop.permute.xlu0 %6075
      %6077 = vrot.lane.b32.xlu0 %v6008, 32
      %v6078 = vpop.permute.xlu0 %6077
      %6079 = vrot.lane.b32.xlu0 %v6009, 32
      %v6080 = vpop.permute.xlu0 %6079
      %6081 = vrot.lane.b32.xlu0 %v6010, 32
      %v6082 = vpop.permute.xlu0 %6081
      %6083 = vrot.lane.b32.xlu0 %v6011, 32
      %v6084 = vpop.permute.xlu0 %6083
      %6085 = vrot.lane.b32.xlu0 %v6012, 32
      %v6086 = vpop.permute.xlu0 %6085
      %6087 = vrot.lane.b32.xlu0 %v6013, 32
      %v6088 = vpop.permute.xlu0 %6087
      %6089 = vrot.lane.b32.xlu0 %v6014, 32
      %v6090 = vpop.permute.xlu0 %6089
      %6091 = vrot.lane.b32.xlu0 %v6015, 32
      %v6092 = vpop.permute.xlu0 %6091
      %6093 = vrot.lane.b32.xlu0 %v6016, 32
      %v6094 = vpop.permute.xlu0 %6093
      %6095 = vrot.lane.b32.xlu0 %v6017, 32
      %v6096 = vpop.permute.xlu0 %6095
      %6097 = vrot.lane.b32.xlu0 %v6018, 32
      %v6098 = vpop.permute.xlu0 %6097
      %6099 = vrot.lane.b32.xlu0 %v6019, 32
      %v6100 = vpop.permute.xlu0 %6099
      %6101 = vrot.lane.b32.xlu0 %v6020, 32
      %v6102 = vpop.permute.xlu0 %6101
      %6103 = vrot.lane.b32.xlu0 %v6021, 32
      %v6104 = vpop.permute.xlu0 %6103
      %6105 = vrot.lane.b32.xlu0 %v6022, 32
      %v6106 = vpop.permute.xlu0 %6105
      %6107 = vrot.lane.b32.xlu0 %v6023, 32
      %v6108 = vpop.permute.xlu0 %6107
      %6109 = vrot.lane.b32.xlu0 %v6024, 32
      %v6110 = vpop.permute.xlu0 %6109
      %6111 = vrot.lane.b32.xlu0 %v6025, 32
      %v6112 = vpop.permute.xlu0 %6111
      %6113 = vrot.lane.b32.xlu0 %v6026, 32
      %v6114 = vpop.permute.xlu0 %6113
      %6115 = vrot.lane.b32.xlu0 %v6027, 32
      %v6116 = vpop.permute.xlu0 %6115
      %6117 = vrot.lane.b32.xlu0 %v6028, 32
      %v6118 = vpop.permute.xlu0 %6117
      %6119 = vrot.lane.b32.xlu0 %v6029, 32
      %v6120 = vpop.permute.xlu0 %6119
      %6121 = vrot.lane.b32.xlu0 %v6030, 32
      %v6122 = vpop.permute.xlu0 %6121
      %6123 = vrot.lane.b32.xlu0 %v6031, 32
      %v6124 = vpop.permute.xlu0 %6123
      %6125 = vrot.lane.b32.xlu0 %v6032, 32
      %v6126 = vpop.permute.xlu0 %6125
      %6127 = vrot.lane.b32.xlu0 %v6033, 32
      %v6128 = vpop.permute.xlu0 %6127
      %6129 = vrot.lane.b32.xlu0 %v6034, 32
      %v6130 = vpop.permute.xlu0 %6129
      %v6163 = vadd.f32 %v5843, %v6068
      %v6164 = vadd.f32 %v5844, %v6070
      %v6165 = vadd.f32 %v5845, %v6072
      %v6166 = vadd.f32 %v5846, %v6074
      %v6167 = vadd.f32 %v5847, %v6076
      %v6168 = vadd.f32 %v5848, %v6078
      %v6169 = vadd.f32 %v5849, %v6080
      %v6170 = vadd.f32 %v5850, %v6082
      %v6171 = vadd.f32 %v5851, %v6084
      %v6172 = vadd.f32 %v5852, %v6086
      %v6173 = vadd.f32 %v5853, %v6088
      %v6174 = vadd.f32 %v5854, %v6090
      %v6175 = vadd.f32 %v5855, %v6092
      %v6176 = vadd.f32 %v5856, %v6094
      %v6177 = vadd.f32 %v5857, %v6096
      %v6178 = vadd.f32 %v5858, %v6098
      %v6179 = vadd.f32 %v5859, %v6100
      %v6180 = vadd.f32 %v5860, %v6102
      %v6181 = vadd.f32 %v5861, %v6104
      %v6182 = vadd.f32 %v5862, %v6106
      %v6183 = vadd.f32 %v5863, %v6108
      %v6184 = vadd.f32 %v5864, %v6110
      %v6185 = vadd.f32 %v5865, %v6112
      %v6186 = vadd.f32 %v5866, %v6114
      %v6187 = vadd.f32 %v5867, %v6116
      %v6188 = vadd.f32 %v5868, %v6118
      %v6189 = vadd.f32 %v5869, %v6120
      %v6190 = vadd.f32 %v5870, %v6122
      %v6191 = vadd.f32 %v5871, %v6124
      %v6192 = vadd.f32 %v5872, %v6126
      %v6193 = vadd.f32 %v5873, %v6128
      %v6194 = vadd.f32 %v5874, %v6130
      %v6195 = vtanh.pop %v6163
      %v6196 = vtanh.pop %v6164
      %v6197 = vtanh.pop %v6165
      %v6198 = vtanh.pop %v6166
      %v6199 = vtanh.pop %v6167
      %v6200 = vtanh.pop %v6168
      %v6201 = vtanh.pop %v6169
      %v6202 = vtanh.pop %v6170
      %v6203 = vtanh.pop %v6171
      %v6204 = vtanh.pop %v6172
      %v6205 = vtanh.pop %v6173
      %v6206 = vtanh.pop %v6174
      %v6207 = vtanh.pop %v6175
      %v6208 = vtanh.pop %v6176
      %v6209 = vtanh.pop %v6177
      %v6210 = vtanh.pop %v6178
      %v6211 = vtanh.pop %v6179
      %v6212 = vtanh.pop %v6180
      %v6213 = vtanh.pop %v6181
      %v6214 = vtanh.pop %v6182
      %v6215 = vtanh.pop %v6183
      %v6216 = vtanh.pop %v6184
      %v6217 = vtanh.pop %v6185
      %v6218 = vtanh.pop %v6186
      %v6219 = vtanh.pop %v6187
      %v6220 = vtanh.pop %v6188
      %v6221 = vtanh.pop %v6189
      %v6222 = vtanh.pop %v6190
      %v6223 = vtanh.pop %v6191
      %v6224 = vtanh.pop %v6192
      %v6225 = vtanh.pop %v6193
      %v6226 = vtanh.pop %v6194
      %6259 = vrot.lane.b32.xlu0 %v6195, 32
      %v6260 = vpop.permute.xlu0 %6259
      %6261 = vrot.lane.b32.xlu0 %v6196, 32
      %v6262 = vpop.permute.xlu0 %6261
      %6263 = vrot.lane.b32.xlu0 %v6197, 32
      %v6264 = vpop.permute.xlu0 %6263
      %6265 = vrot.lane.b32.xlu0 %v6198, 32
      %v6266 = vpop.permute.xlu0 %6265
      %6267 = vrot.lane.b32.xlu0 %v6199, 32
      %v6268 = vpop.permute.xlu0 %6267
      %6269 = vrot.lane.b32.xlu0 %v6200, 32
      %v6270 = vpop.permute.xlu0 %6269
      %6271 = vrot.lane.b32.xlu0 %v6201, 32
      %v6272 = vpop.permute.xlu0 %6271
      %6273 = vrot.lane.b32.xlu0 %v6202, 32
      %v6274 = vpop.permute.xlu0 %6273
      %6275 = vrot.lane.b32.xlu0 %v6203, 32
      %v6276 = vpop.permute.xlu0 %6275
      %6277 = vrot.lane.b32.xlu0 %v6204, 32
      %v6278 = vpop.permute.xlu0 %6277
      %6279 = vrot.lane.b32.xlu0 %v6205, 32
      %v6280 = vpop.permute.xlu0 %6279
      %6281 = vrot.lane.b32.xlu0 %v6206, 32
      %v6282 = vpop.permute.xlu0 %6281
      %6283 = vrot.lane.b32.xlu0 %v6207, 32
      %v6284 = vpop.permute.xlu0 %6283
      %6285 = vrot.lane.b32.xlu0 %v6208, 32
      %v6286 = vpop.permute.xlu0 %6285
      %6287 = vrot.lane.b32.xlu0 %v6209, 32
      %v6288 = vpop.permute.xlu0 %6287
      %6289 = vrot.lane.b32.xlu0 %v6210, 32
      %v6290 = vpop.permute.xlu0 %6289
      %6291 = vrot.lane.b32.xlu0 %v6211, 32
      %v6292 = vpop.permute.xlu0 %6291
      %6293 = vrot.lane.b32.xlu0 %v6212, 32
      %v6294 = vpop.permute.xlu0 %6293
      %6295 = vrot.lane.b32.xlu0 %v6213, 32
      %v6296 = vpop.permute.xlu0 %6295
      %6297 = vrot.lane.b32.xlu0 %v6214, 32
      %v6298 = vpop.permute.xlu0 %6297
      %6299 = vrot.lane.b32.xlu0 %v6215, 32
      %v6300 = vpop.permute.xlu0 %6299
      %6301 = vrot.lane.b32.xlu0 %v6216, 32
      %v6302 = vpop.permute.xlu0 %6301
      %6303 = vrot.lane.b32.xlu0 %v6217, 32
      %v6304 = vpop.permute.xlu0 %6303
      %6305 = vrot.lane.b32.xlu0 %v6218, 32
      %v6306 = vpop.permute.xlu0 %6305
      %6307 = vrot.lane.b32.xlu0 %v6219, 32
      %v6308 = vpop.permute.xlu0 %6307
      %6309 = vrot.lane.b32.xlu0 %v6220, 32
      %v6310 = vpop.permute.xlu0 %6309
      %6311 = vrot.lane.b32.xlu0 %v6221, 32
      %v6312 = vpop.permute.xlu0 %6311
      %6313 = vrot.lane.b32.xlu0 %v6222, 32
      %v6314 = vpop.permute.xlu0 %6313
      %6315 = vrot.lane.b32.xlu0 %v6223, 32
      %v6316 = vpop.permute.xlu0 %6315
      %6317 = vrot.lane.b32.xlu0 %v6224, 32
      %v6318 = vpop.permute.xlu0 %6317
      %6319 = vrot.lane.b32.xlu0 %v6225, 32
      %v6320 = vpop.permute.xlu0 %6319
      %6321 = vrot.lane.b32.xlu0 %v6226, 32
      %v6322 = vpop.permute.xlu0 %6321
      %v6355 = vmul.f32 %v5683, %v6260
      %v6356 = vmul.f32 %v5684, %v6262
      %v6357 = vmul.f32 %v5685, %v6264
      %v6358 = vmul.f32 %v5686, %v6266
      %v6359 = vmul.f32 %v5687, %v6268
      %v6360 = vmul.f32 %v5688, %v6270
      %v6361 = vmul.f32 %v5689, %v6272
      %v6362 = vmul.f32 %v5690, %v6274
      %v6363 = vmul.f32 %v5691, %v6276
      %v6364 = vmul.f32 %v5692, %v6278
      %v6365 = vmul.f32 %v5693, %v6280
      %v6366 = vmul.f32 %v5694, %v6282
      %v6367 = vmul.f32 %v5695, %v6284
      %v6368 = vmul.f32 %v5696, %v6286
      %v6369 = vmul.f32 %v5697, %v6288
      %v6370 = vmul.f32 %v5698, %v6290
      %v6371 = vmul.f32 %v5699, %v6292
      %v6372 = vmul.f32 %v5700, %v6294
      %v6373 = vmul.f32 %v5701, %v6296
      %v6374 = vmul.f32 %v5702, %v6298
      %v6375 = vmul.f32 %v5703, %v6300
      %v6376 = vmul.f32 %v5704, %v6302
      %v6377 = vmul.f32 %v5705, %v6304
      %v6378 = vmul.f32 %v5706, %v6306
      %v6379 = vmul.f32 %v5707, %v6308
      %v6380 = vmul.f32 %v5708, %v6310
      %v6381 = vmul.f32 %v5709, %v6312
      %v6382 = vmul.f32 %v5710, %v6314
      %v6383 = vmul.f32 %v5711, %v6316
      %v6384 = vmul.f32 %v5712, %v6318
      %v6385 = vmul.f32 %v5713, %v6320
      %v6386 = vmul.f32 %v5714, %v6322
      %6419 = vrot.lane.b32.xlu0 %v6163, 96
      %v6420 = vpop.permute.xlu0 %6419
      %6421 = vrot.lane.b32.xlu0 %v6164, 96
      %v6422 = vpop.permute.xlu0 %6421
      %6423 = vrot.lane.b32.xlu0 %v6165, 96
      %v6424 = vpop.permute.xlu0 %6423
      %6425 = vrot.lane.b32.xlu0 %v6166, 96
      %v6426 = vpop.permute.xlu0 %6425
      %6427 = vrot.lane.b32.xlu0 %v6167, 96
      %v6428 = vpop.permute.xlu0 %6427
      %6429 = vrot.lane.b32.xlu0 %v6168, 96
      %v6430 = vpop.permute.xlu0 %6429
      %6431 = vrot.lane.b32.xlu0 %v6169, 96
      %v6432 = vpop.permute.xlu0 %6431
      %6433 = vrot.lane.b32.xlu0 %v6170, 96
      %v6434 = vpop.permute.xlu0 %6433
      %6435 = vrot.lane.b32.xlu0 %v6171, 96
      %v6436 = vpop.permute.xlu0 %6435
      %6437 = vrot.lane.b32.xlu0 %v6172, 96
      %v6438 = vpop.permute.xlu0 %6437
      %6439 = vrot.lane.b32.xlu0 %v6173, 96
      %v6440 = vpop.permute.xlu0 %6439
      %6441 = vrot.lane.b32.xlu0 %v6174, 96
      %v6442 = vpop.permute.xlu0 %6441
      %6443 = vrot.lane.b32.xlu0 %v6175, 96
      %v6444 = vpop.permute.xlu0 %6443
      %6445 = vrot.lane.b32.xlu0 %v6176, 96
      %v6446 = vpop.permute.xlu0 %6445
      %6447 = vrot.lane.b32.xlu0 %v6177, 96
      %v6448 = vpop.permute.xlu0 %6447
      %6449 = vrot.lane.b32.xlu0 %v6178, 96
      %v6450 = vpop.permute.xlu0 %6449
      %6451 = vrot.lane.b32.xlu0 %v6179, 96
      %v6452 = vpop.permute.xlu0 %6451
      %6453 = vrot.lane.b32.xlu0 %v6180, 96
      %v6454 = vpop.permute.xlu0 %6453
      %6455 = vrot.lane.b32.xlu0 %v6181, 96
      %v6456 = vpop.permute.xlu0 %6455
      %6457 = vrot.lane.b32.xlu0 %v6182, 96
      %v6458 = vpop.permute.xlu0 %6457
      %6459 = vrot.lane.b32.xlu0 %v6183, 96
      %v6460 = vpop.permute.xlu0 %6459
      %6461 = vrot.lane.b32.xlu0 %v6184, 96
      %v6462 = vpop.permute.xlu0 %6461
      %6463 = vrot.lane.b32.xlu0 %v6185, 96
      %v6464 = vpop.permute.xlu0 %6463
      %6465 = vrot.lane.b32.xlu0 %v6186, 96
      %v6466 = vpop.permute.xlu0 %6465
      %6467 = vrot.lane.b32.xlu0 %v6187, 96
      %v6468 = vpop.permute.xlu0 %6467
      %6469 = vrot.lane.b32.xlu0 %v6188, 96
      %v6470 = vpop.permute.xlu0 %6469
      %6471 = vrot.lane.b32.xlu0 %v6189, 96
      %v6472 = vpop.permute.xlu0 %6471
      %6473 = vrot.lane.b32.xlu0 %v6190, 96
      %v6474 = vpop.permute.xlu0 %6473
      %6475 = vrot.lane.b32.xlu0 %v6191, 96
      %v6476 = vpop.permute.xlu0 %6475
      %6477 = vrot.lane.b32.xlu0 %v6192, 96
      %v6478 = vpop.permute.xlu0 %6477
      %6479 = vrot.lane.b32.xlu0 %v6193, 96
      %v6480 = vpop.permute.xlu0 %6479
      %6481 = vrot.lane.b32.xlu0 %v6194, 96
      %v6482 = vpop.permute.xlu0 %6481
      %6515 = vst.msk [vmem:[#allocation5] sm:$0xff] %vm962, %v6420
      %6516 = vst.msk [vmem:[#allocation5 + $0x8] sm:$0xff] %vm962, %v6422
      %6517 = vst.msk [vmem:[#allocation5 + $0x10] sm:$0xff] %vm962, %v6424
      %6518 = vst.msk [vmem:[#allocation5 + $0x18] sm:$0xff] %vm962, %v6426
      %6519 = vst.msk [vmem:[#allocation5 + $0x20] sm:$0xff] %vm962, %v6428
      %6520 = vst.msk [vmem:[#allocation5 + $0x28] sm:$0xff] %vm962, %v6430
      %6521 = vst.msk [vmem:[#allocation5 + $0x30] sm:$0xff] %vm962, %v6432
      %6522 = vst.msk [vmem:[#allocation5 + $0x38] sm:$0xff] %vm962, %v6434
      %6523 = vst.msk [vmem:[#allocation5 + $0x40] sm:$0xff] %vm962, %v6436
      %6524 = vst.msk [vmem:[#allocation5 + $0x48] sm:$0xff] %vm962, %v6438
      %6525 = vst.msk [vmem:[#allocation5 + $0x50] sm:$0xff] %vm962, %v6440
      %6526 = vst.msk [vmem:[#allocation5 + $0x58] sm:$0xff] %vm962, %v6442
      %6527 = vst.msk [vmem:[#allocation5 + $0x60] sm:$0xff] %vm962, %v6444
      %6528 = vst.msk [vmem:[#allocation5 + $0x68] sm:$0xff] %vm962, %v6446
      %6529 = vst.msk [vmem:[#allocation5 + $0x70] sm:$0xff] %vm962, %v6448
      %6530 = vst.msk [vmem:[#allocation5 + $0x78] sm:$0xff] %vm962, %v6450
      %6531 = vst.msk [vmem:[#allocation5 + $0x80] sm:$0xff] %vm962, %v6452
      %6532 = vst.msk [vmem:[#allocation5 + $0x88] sm:$0xff] %vm962, %v6454
      %6533 = vst.msk [vmem:[#allocation5 + $0x90] sm:$0xff] %vm962, %v6456
      %6534 = vst.msk [vmem:[#allocation5 + $0x98] sm:$0xff] %vm962, %v6458
      %6535 = vst.msk [vmem:[#allocation5 + $0xa0] sm:$0xff] %vm962, %v6460
      %6536 = vst.msk [vmem:[#allocation5 + $0xa8] sm:$0xff] %vm962, %v6462
      %6537 = vst.msk [vmem:[#allocation5 + $0xb0] sm:$0xff] %vm962, %v6464
      %6538 = vst.msk [vmem:[#allocation5 + $0xb8] sm:$0xff] %vm962, %v6466
      %6539 = vst.msk [vmem:[#allocation5 + $0xc0] sm:$0xff] %vm962, %v6468
      %6540 = vst.msk [vmem:[#allocation5 + $0xc8] sm:$0xff] %vm962, %v6470
      %6541 = vst.msk [vmem:[#allocation5 + $0xd0] sm:$0xff] %vm962, %v6472
      %6542 = vst.msk [vmem:[#allocation5 + $0xd8] sm:$0xff] %vm962, %v6474
      %6543 = vst.msk [vmem:[#allocation5 + $0xe0] sm:$0xff] %vm962, %v6476
      %6544 = vst.msk [vmem:[#allocation5 + $0xe8] sm:$0xff] %vm962, %v6478
      %6545 = vst.msk [vmem:[#allocation5 + $0xf0] sm:$0xff] %vm962, %v6480
      %6546 = vst.msk [vmem:[#allocation5 + $0xf8] sm:$0xff] %vm962, %v6482
      %6579 = vrot.lane.b32.xlu0 %v6355, 64
      %v6580 = vpop.permute.xlu0 %6579
      %6581 = vrot.lane.b32.xlu0 %v6356, 64
      %v6582 = vpop.permute.xlu0 %6581
      %6583 = vrot.lane.b32.xlu0 %v6357, 64
      %v6584 = vpop.permute.xlu0 %6583
      %6585 = vrot.lane.b32.xlu0 %v6358, 64
      %v6586 = vpop.permute.xlu0 %6585
      %6587 = vrot.lane.b32.xlu0 %v6359, 64
      %v6588 = vpop.permute.xlu0 %6587
      %6589 = vrot.lane.b32.xlu0 %v6360, 64
      %v6590 = vpop.permute.xlu0 %6589
      %6591 = vrot.lane.b32.xlu0 %v6361, 64
      %v6592 = vpop.permute.xlu0 %6591
      %6593 = vrot.lane.b32.xlu0 %v6362, 64
      %v6594 = vpop.permute.xlu0 %6593
      %6595 = vrot.lane.b32.xlu0 %v6363, 64
      %v6596 = vpop.permute.xlu0 %6595
      %6597 = vrot.lane.b32.xlu0 %v6364, 64
      %v6598 = vpop.permute.xlu0 %6597
      %6599 = vrot.lane.b32.xlu0 %v6365, 64
      %v6600 = vpop.permute.xlu0 %6599
      %6601 = vrot.lane.b32.xlu0 %v6366, 64
      %v6602 = vpop.permute.xlu0 %6601
      %6603 = vrot.lane.b32.xlu0 %v6367, 64
      %v6604 = vpop.permute.xlu0 %6603
      %6605 = vrot.lane.b32.xlu0 %v6368, 64
      %v6606 = vpop.permute.xlu0 %6605
      %6607 = vrot.lane.b32.xlu0 %v6369, 64
      %v6608 = vpop.permute.xlu0 %6607
      %6609 = vrot.lane.b32.xlu0 %v6370, 64
      %v6610 = vpop.permute.xlu0 %6609
      %6611 = vrot.lane.b32.xlu0 %v6371, 64
      %v6612 = vpop.permute.xlu0 %6611
      %6613 = vrot.lane.b32.xlu0 %v6372, 64
      %v6614 = vpop.permute.xlu0 %6613
      %6615 = vrot.lane.b32.xlu0 %v6373, 64
      %v6616 = vpop.permute.xlu0 %6615
      %6617 = vrot.lane.b32.xlu0 %v6374, 64
      %v6618 = vpop.permute.xlu0 %6617
      %6619 = vrot.lane.b32.xlu0 %v6375, 64
      %v6620 = vpop.permute.xlu0 %6619
      %6621 = vrot.lane.b32.xlu0 %v6376, 64
      %v6622 = vpop.permute.xlu0 %6621
      %6623 = vrot.lane.b32.xlu0 %v6377, 64
      %v6624 = vpop.permute.xlu0 %6623
      %6625 = vrot.lane.b32.xlu0 %v6378, 64
      %v6626 = vpop.permute.xlu0 %6625
      %6627 = vrot.lane.b32.xlu0 %v6379, 64
      %v6628 = vpop.permute.xlu0 %6627
      %6629 = vrot.lane.b32.xlu0 %v6380, 64
      %v6630 = vpop.permute.xlu0 %6629
      %6631 = vrot.lane.b32.xlu0 %v6381, 64
      %v6632 = vpop.permute.xlu0 %6631
      %6633 = vrot.lane.b32.xlu0 %v6382, 64
      %v6634 = vpop.permute.xlu0 %6633
      %6635 = vrot.lane.b32.xlu0 %v6383, 64
      %v6636 = vpop.permute.xlu0 %6635
      %6637 = vrot.lane.b32.xlu0 %v6384, 64
      %v6638 = vpop.permute.xlu0 %6637
      %6639 = vrot.lane.b32.xlu0 %v6385, 64
      %v6640 = vpop.permute.xlu0 %6639
      %6641 = vrot.lane.b32.xlu0 %v6386, 64
      %v6642 = vpop.permute.xlu0 %6641
      %6675 = vst.msk [vmem:[%s2543 + $0x1] sm:$0xff] %vm962, %v6580
      %6676 = vst.msk [vmem:[%s2543 + $0x9] sm:$0xff] %vm962, %v6582
      %6677 = vst.msk [vmem:[%s2543 + $0x19] sm:$0xff] %vm962, %v6584
      %6678 = vst.msk [vmem:[%s2543 + $0x21] sm:$0xff] %vm962, %v6586
      %6679 = vst.msk [vmem:[%s2543 + $0x31] sm:$0xff] %vm962, %v6588
      %6680 = vst.msk [vmem:[%s2543 + $0x39] sm:$0xff] %vm962, %v6590
      %6681 = vst.msk [vmem:[%s2543 + $0x49] sm:$0xff] %vm962, %v6592
      %6682 = vst.msk [vmem:[%s2543 + $0x51] sm:$0xff] %vm962, %v6594
      %6683 = vst.msk [vmem:[%s2543 + $0x61] sm:$0xff] %vm962, %v6596
      %6684 = vst.msk [vmem:[%s2543 + $0x69] sm:$0xff] %vm962, %v6598
      %6685 = vst.msk [vmem:[%s2543 + $0x79] sm:$0xff] %vm962, %v6600
      %6686 = vst.msk [vmem:[%s2543 + $0x81] sm:$0xff] %vm962, %v6602
      %6687 = vst.msk [vmem:[%s2543 + $0x91] sm:$0xff] %vm962, %v6604
      %6688 = vst.msk [vmem:[%s2543 + $0x99] sm:$0xff] %vm962, %v6606
      %6689 = vst.msk [vmem:[%s2543 + $0xa9] sm:$0xff] %vm962, %v6608
      %6690 = vst.msk [vmem:[%s2543 + $0xb1] sm:$0xff] %vm962, %v6610
      %6691 = vst.msk [vmem:[%s2543 + $0xc1] sm:$0xff] %vm962, %v6612
      %6692 = vst.msk [vmem:[%s2543 + $0xc9] sm:$0xff] %vm962, %v6614
      %6693 = vst.msk [vmem:[%s2543 + $0xd9] sm:$0xff] %vm962, %v6616
      %6694 = vst.msk [vmem:[%s2543 + $0xe1] sm:$0xff] %vm962, %v6618
      %6695 = vst.msk [vmem:[%s2543 + $0xf1] sm:$0xff] %vm962, %v6620
      %6696 = vst.msk [vmem:[%s2543 + $0xf9] sm:$0xff] %vm962, %v6622
      %6697 = vst.msk [vmem:[%s2543 + $0x109] sm:$0xff] %vm962, %v6624
      %6698 = vst.msk [vmem:[%s2543 + $0x111] sm:$0xff] %vm962, %v6626
      %6699 = vst.msk [vmem:[%s2543 + $0x121] sm:$0xff] %vm962, %v6628
      %6700 = vst.msk [vmem:[%s2543 + $0x129] sm:$0xff] %vm962, %v6630
      %6701 = vst.msk [vmem:[%s2543 + $0x139] sm:$0xff] %vm962, %v6632
      %6702 = vst.msk [vmem:[%s2543 + $0x141] sm:$0xff] %vm962, %v6634
      %6703 = vst.msk [vmem:[%s2543 + $0x151] sm:$0xff] %vm962, %v6636
      %6704 = vst.msk [vmem:[%s2543 + $0x159] sm:$0xff] %vm962, %v6638
      %6705 = vst.msk [vmem:[%s2543 + $0x169] sm:$0xff] %vm962, %v6640
      %6706 = vst.msk [vmem:[%s2543 + $0x171] sm:$0xff] %vm962, %v6642
      %v6707 = vld [vmem:[#allocation3] sm:$0xff]
      %v6708 = vld [vmem:[#allocation3 + $0x8] sm:$0xff]
      %v6709 = vld [vmem:[#allocation3 + $0x18] sm:$0xff]
      %v6710 = vld [vmem:[#allocation3 + $0x20] sm:$0xff]
      %v6711 = vld [vmem:[#allocation3 + $0x30] sm:$0xff]
      %v6712 = vld [vmem:[#allocation3 + $0x38] sm:$0xff]
      %v6713 = vld [vmem:[#allocation3 + $0x48] sm:$0xff]
      %v6714 = vld [vmem:[#allocation3 + $0x50] sm:$0xff]
      %v6715 = vld [vmem:[#allocation3 + $0x60] sm:$0xff]
      %v6716 = vld [vmem:[#allocation3 + $0x68] sm:$0xff]
      %v6717 = vld [vmem:[#allocation3 + $0x78] sm:$0xff]
      %v6718 = vld [vmem:[#allocation3 + $0x80] sm:$0xff]
      %v6719 = vld [vmem:[#allocation3 + $0x90] sm:$0xff]
      %v6720 = vld [vmem:[#allocation3 + $0x98] sm:$0xff]
      %v6721 = vld [vmem:[#allocation3 + $0xa8] sm:$0xff]
      %v6722 = vld [vmem:[#allocation3 + $0xb0] sm:$0xff]
      %v6723 = vld [vmem:[#allocation3 + $0xc0] sm:$0xff]
      %v6724 = vld [vmem:[#allocation3 + $0xc8] sm:$0xff]
      %v6725 = vld [vmem:[#allocation3 + $0xd8] sm:$0xff]
      %v6726 = vld [vmem:[#allocation3 + $0xe0] sm:$0xff]
      %v6727 = vld [vmem:[#allocation3 + $0xf0] sm:$0xff]
      %v6728 = vld [vmem:[#allocation3 + $0xf8] sm:$0xff]
      %v6729 = vld [vmem:[#allocation3 + $0x108] sm:$0xff]
      %v6730 = vld [vmem:[#allocation3 + $0x110] sm:$0xff]
      %v6731 = vld [vmem:[#allocation3 + $0x120] sm:$0xff]
      %v6732 = vld [vmem:[#allocation3 + $0x128] sm:$0xff]
      %v6733 = vld [vmem:[#allocation3 + $0x138] sm:$0xff]
      %v6734 = vld [vmem:[#allocation3 + $0x140] sm:$0xff]
      %v6735 = vld [vmem:[#allocation3 + $0x150] sm:$0xff]
      %v6736 = vld [vmem:[#allocation3 + $0x158] sm:$0xff]
      %v6737 = vld [vmem:[#allocation3 + $0x168] sm:$0xff]
      %v6738 = vld [vmem:[#allocation3 + $0x170] sm:$0xff]
      %v6739 = vld [vmem:[%s4] sm:$0xff]
      %v6740 = vld [vmem:[%s4 + $0x8] sm:$0xff]
      %v6741 = vld [vmem:[%s4 + $0x10] sm:$0xff]
      %v6742 = vld [vmem:[%s4 + $0x18] sm:$0xff]
      %v6743 = vld [vmem:[#allocation4] sm:$0xff]
      %v6744 = vld [vmem:[#allocation4 + $0x8] sm:$0xff]
      %v6745 = vld [vmem:[#allocation4 + $0x18] sm:$0xff]
      %v6746 = vld [vmem:[#allocation4 + $0x20] sm:$0xff]
      %v6747 = vld [vmem:[#allocation4 + $0x30] sm:$0xff]
      %v6748 = vld [vmem:[#allocation4 + $0x38] sm:$0xff]
      %v6749 = vld [vmem:[#allocation4 + $0x48] sm:$0xff]
      %v6750 = vld [vmem:[#allocation4 + $0x50] sm:$0xff]
      %v6751 = vld [vmem:[#allocation4 + $0x60] sm:$0xff]
      %v6752 = vld [vmem:[#allocation4 + $0x68] sm:$0xff]
      %v6753 = vld [vmem:[#allocation4 + $0x78] sm:$0xff]
      %v6754 = vld [vmem:[#allocation4 + $0x80] sm:$0xff]
      %v6755 = vld [vmem:[#allocation4 + $0x90] sm:$0xff]
      %v6756 = vld [vmem:[#allocation4 + $0x98] sm:$0xff]
      %v6757 = vld [vmem:[#allocation4 + $0xa8] sm:$0xff]
      %v6758 = vld [vmem:[#allocation4 + $0xb0] sm:$0xff]
      %v6759 = vld [vmem:[#allocation4 + $0xc0] sm:$0xff]
      %v6760 = vld [vmem:[#allocation4 + $0xc8] sm:$0xff]
      %v6761 = vld [vmem:[#allocation4 + $0xd8] sm:$0xff]
      %v6762 = vld [vmem:[#allocation4 + $0xe0] sm:$0xff]
      %v6763 = vld [vmem:[#allocation4 + $0xf0] sm:$0xff]
      %v6764 = vld [vmem:[#allocation4 + $0xf8] sm:$0xff]
      %v6765 = vld [vmem:[#allocation4 + $0x108] sm:$0xff]
      %v6766 = vld [vmem:[#allocation4 + $0x110] sm:$0xff]
      %v6767 = vld [vmem:[#allocation4 + $0x120] sm:$0xff]
      %v6768 = vld [vmem:[#allocation4 + $0x128] sm:$0xff]
      %v6769 = vld [vmem:[#allocation4 + $0x138] sm:$0xff]
      %v6770 = vld [vmem:[#allocation4 + $0x140] sm:$0xff]
      %v6771 = vld [vmem:[#allocation4 + $0x150] sm:$0xff]
      %v6772 = vld [vmem:[#allocation4 + $0x158] sm:$0xff]
      %v6773 = vld [vmem:[#allocation4 + $0x168] sm:$0xff]
      %v6774 = vld [vmem:[#allocation4 + $0x170] sm:$0xff]
      %v6775 = vld [vmem:[%s5] sm:$0xff]
      %v6776 = vld [vmem:[%s5 + $0x8] sm:$0xff]
      %v6777 = vld [vmem:[%s5 + $0x10] sm:$0xff]
      %v6778 = vld [vmem:[%s5 + $0x18] sm:$0xff]
      %v6780 = vsel %vm962, %v6743, 0
      %v6783 = vsel %vm962, %v6744, 0
      %v6786 = vsel %vm962, %v6745, 0
      %v6789 = vsel %vm962, %v6746, 0
      %v6792 = vsel %vm962, %v6747, 0
      %v6795 = vsel %vm962, %v6748, 0
      %v6798 = vsel %vm962, %v6749, 0
      %v6801 = vsel %vm962, %v6750, 0
      %v6804 = vsel %vm962, %v6751, 0
      %v6807 = vsel %vm962, %v6752, 0
      %v6810 = vsel %vm962, %v6753, 0
      %v6813 = vsel %vm962, %v6754, 0
      %v6816 = vsel %vm962, %v6755, 0
      %v6819 = vsel %vm962, %v6756, 0
      %v6822 = vsel %vm962, %v6757, 0
      %v6825 = vsel %vm962, %v6758, 0
      %v6828 = vsel %vm962, %v6759, 0
      %v6831 = vsel %vm962, %v6760, 0
      %v6834 = vsel %vm962, %v6761, 0
      %v6837 = vsel %vm962, %v6762, 0
      %v6840 = vsel %vm962, %v6763, 0
      %v6843 = vsel %vm962, %v6764, 0
      %v6846 = vsel %vm962, %v6765, 0
      %v6849 = vsel %vm962, %v6766, 0
      %v6852 = vsel %vm962, %v6767, 0
      %v6855 = vsel %vm962, %v6768, 0
      %v6858 = vsel %vm962, %v6769, 0
      %v6861 = vsel %vm962, %v6770, 0
      %v6864 = vsel %vm962, %v6771, 0
      %v6867 = vsel %vm962, %v6772, 0
      %v6870 = vsel %vm962, %v6773, 0
      %v6873 = vsel %vm962, %v6774, 0
      %6875 = vmatpush.msra.mxu0 0.0
      %6876 = vmatpush.msra.mxu0 0.0
      %6877 = vmatpush.msra.mxu0 0.0
      %6878 = vmatpush.msra.mxu0 0.0
      %6879 = vmatpush.msra.mxu0 0.0
      %6880 = vmatpush.msra.mxu0 0.0
      %6881 = vmatpush.msra.mxu0 0.0
      %6882 = vmatpush.msra.mxu0 0.0
      %6883 = vmatpush.msra.mxu0 0.0
      %6884 = vmatpush.msra.mxu0 0.0
      %6885 = vmatpush.msra.mxu0 0.0
      %6886 = vmatpush.msra.mxu0 0.0
      %6887 = vmatpush.msra.mxu0 %v6778
      %6888 = vmatpush.msra.mxu0 %v6777
      %6889 = vmatpush.msra.mxu0 %v6776
      %6890 = vmatpush.msra.mxu0 %v6775
      %6891 = vmatmul.f32.gmra.mxu0 %v6780
      %v6892 = vpop.f32.mrf.mxu0
      %v6893 = vadd.f32 0.0, %v6892
      %6894 = vmatmul.f32.gmra.mxu0 %v6783
      %v6895 = vpop.f32.mrf.mxu0
      %v6896 = vadd.f32 0.0, %v6895
      %6897 = vmatmul.f32.gmra.mxu0 %v6786
      %v6898 = vpop.f32.mrf.mxu0
      %v6899 = vadd.f32 0.0, %v6898
      %6900 = vmatmul.f32.gmra.mxu0 %v6789
      %v6901 = vpop.f32.mrf.mxu0
      %v6902 = vadd.f32 0.0, %v6901
      %6903 = vmatmul.f32.gmra.mxu0 %v6792
      %v6904 = vpop.f32.mrf.mxu0
      %v6905 = vadd.f32 0.0, %v6904
      %6906 = vmatmul.f32.gmra.mxu0 %v6795
      %v6907 = vpop.f32.mrf.mxu0
      %v6908 = vadd.f32 0.0, %v6907
      %6909 = vmatmul.f32.gmra.mxu0 %v6798
      %v6910 = vpop.f32.mrf.mxu0
      %v6911 = vadd.f32 0.0, %v6910
      %6912 = vmatmul.f32.gmra.mxu0 %v6801
      %v6913 = vpop.f32.mrf.mxu0
      %v6914 = vadd.f32 0.0, %v6913
      %6915 = vmatmul.f32.gmra.mxu0 %v6804
      %v6916 = vpop.f32.mrf.mxu0
      %v6917 = vadd.f32 0.0, %v6916
      %6918 = vmatmul.f32.gmra.mxu0 %v6807
      %v6919 = vpop.f32.mrf.mxu0
      %v6920 = vadd.f32 0.0, %v6919
      %6921 = vmatmul.f32.gmra.mxu0 %v6810
      %v6922 = vpop.f32.mrf.mxu0
      %v6923 = vadd.f32 0.0, %v6922
      %6924 = vmatmul.f32.gmra.mxu0 %v6813
      %v6925 = vpop.f32.mrf.mxu0
      %v6926 = vadd.f32 0.0, %v6925
      %6927 = vmatmul.f32.gmra.mxu0 %v6816
      %v6928 = vpop.f32.mrf.mxu0
      %v6929 = vadd.f32 0.0, %v6928
      %6930 = vmatmul.f32.gmra.mxu0 %v6819
      %v6931 = vpop.f32.mrf.mxu0
      %v6932 = vadd.f32 0.0, %v6931
      %6933 = vmatmul.f32.gmra.mxu0 %v6822
      %v6934 = vpop.f32.mrf.mxu0
      %v6935 = vadd.f32 0.0, %v6934
      %6936 = vmatmul.f32.gmra.mxu0 %v6825
      %v6937 = vpop.f32.mrf.mxu0
      %v6938 = vadd.f32 0.0, %v6937
      %6939 = vmatmul.f32.gmra.mxu0 %v6828
      %v6940 = vpop.f32.mrf.mxu0
      %v6941 = vadd.f32 0.0, %v6940
      %6942 = vmatmul.f32.gmra.mxu0 %v6831
      %v6943 = vpop.f32.mrf.mxu0
      %v6944 = vadd.f32 0.0, %v6943
      %6945 = vmatmul.f32.gmra.mxu0 %v6834
      %v6946 = vpop.f32.mrf.mxu0
      %v6947 = vadd.f32 0.0, %v6946
      %6948 = vmatmul.f32.gmra.mxu0 %v6837
      %v6949 = vpop.f32.mrf.mxu0
      %v6950 = vadd.f32 0.0, %v6949
      %6951 = vmatmul.f32.gmra.mxu0 %v6840
      %v6952 = vpop.f32.mrf.mxu0
      %v6953 = vadd.f32 0.0, %v6952
      %6954 = vmatmul.f32.gmra.mxu0 %v6843
      %v6955 = vpop.f32.mrf.mxu0
      %v6956 = vadd.f32 0.0, %v6955
      %6957 = vmatmul.f32.gmra.mxu0 %v6846
      %v6958 = vpop.f32.mrf.mxu0
      %v6959 = vadd.f32 0.0, %v6958
      %6960 = vmatmul.f32.gmra.mxu0 %v6849
      %v6961 = vpop.f32.mrf.mxu0
      %v6962 = vadd.f32 0.0, %v6961
      %6963 = vmatmul.f32.gmra.mxu0 %v6852
      %v6964 = vpop.f32.mrf.mxu0
      %v6965 = vadd.f32 0.0, %v6964
      %6966 = vmatmul.f32.gmra.mxu0 %v6855
      %v6967 = vpop.f32.mrf.mxu0
      %v6968 = vadd.f32 0.0, %v6967
      %6969 = vmatmul.f32.gmra.mxu0 %v6858
      %v6970 = vpop.f32.mrf.mxu0
      %v6971 = vadd.f32 0.0, %v6970
      %6972 = vmatmul.f32.gmra.mxu0 %v6861
      %v6973 = vpop.f32.mrf.mxu0
      %v6974 = vadd.f32 0.0, %v6973
      %6975 = vmatmul.f32.gmra.mxu0 %v6864
      %v6976 = vpop.f32.mrf.mxu0
      %v6977 = vadd.f32 0.0, %v6976
      %6978 = vmatmul.f32.gmra.mxu0 %v6867
      %v6979 = vpop.f32.mrf.mxu0
      %v6980 = vadd.f32 0.0, %v6979
      %6981 = vmatmul.f32.gmra.mxu0 %v6870
      %v6982 = vpop.f32.mrf.mxu0
      %v6983 = vadd.f32 0.0, %v6982
      %6984 = vmatmul.f32.gmra.mxu0 %v6873
      %v6985 = vpop.f32.mrf.mxu0
      %v6986 = vadd.f32 0.0, %v6985
      %6987 = vdwg.mxu0
      %v6989 = vsel %vm962, %v6707, 0
      %v6992 = vsel %vm962, %v6708, 0
      %v6995 = vsel %vm962, %v6709, 0
      %v6998 = vsel %vm962, %v6710, 0
      %v7001 = vsel %vm962, %v6711, 0
      %v7004 = vsel %vm962, %v6712, 0
      %v7007 = vsel %vm962, %v6713, 0
      %v7010 = vsel %vm962, %v6714, 0
      %v7013 = vsel %vm962, %v6715, 0
      %v7016 = vsel %vm962, %v6716, 0
      %v7019 = vsel %vm962, %v6717, 0
      %v7022 = vsel %vm962, %v6718, 0
      %v7025 = vsel %vm962, %v6719, 0
      %v7028 = vsel %vm962, %v6720, 0
      %v7031 = vsel %vm962, %v6721, 0
      %v7034 = vsel %vm962, %v6722, 0
      %v7037 = vsel %vm962, %v6723, 0
      %v7040 = vsel %vm962, %v6724, 0
      %v7043 = vsel %vm962, %v6725, 0
      %v7046 = vsel %vm962, %v6726, 0
      %v7049 = vsel %vm962, %v6727, 0
      %v7052 = vsel %vm962, %v6728, 0
      %v7055 = vsel %vm962, %v6729, 0
      %v7058 = vsel %vm962, %v6730, 0
      %v7061 = vsel %vm962, %v6731, 0
      %v7064 = vsel %vm962, %v6732, 0
      %v7067 = vsel %vm962, %v6733, 0
      %v7070 = vsel %vm962, %v6734, 0
      %v7073 = vsel %vm962, %v6735, 0
      %v7076 = vsel %vm962, %v6736, 0
      %v7079 = vsel %vm962, %v6737, 0
      %v7082 = vsel %vm962, %v6738, 0
      %7084 = vmatpush.msra.mxu0 0.0
      %7085 = vmatpush.msra.mxu0 0.0
      %7086 = vmatpush.msra.mxu0 0.0
      %7087 = vmatpush.msra.mxu0 0.0
      %7088 = vmatpush.msra.mxu0 0.0
      %7089 = vmatpush.msra.mxu0 0.0
      %7090 = vmatpush.msra.mxu0 0.0
      %7091 = vmatpush.msra.mxu0 0.0
      %7092 = vmatpush.msra.mxu0 0.0
      %7093 = vmatpush.msra.mxu0 0.0
      %7094 = vmatpush.msra.mxu0 0.0
      %7095 = vmatpush.msra.mxu0 0.0
      %7096 = vmatpush.msra.mxu0 %v6742
      %7097 = vmatpush.msra.mxu0 %v6741
      %7098 = vmatpush.msra.mxu0 %v6740
      %7099 = vmatpush.msra.mxu0 %v6739
      %7100 = vmatmul.f32.gmra.mxu0 %v6989
      %v7101 = vpop.f32.mrf.mxu0
      %v7102 = vadd.f32 %v6893, %v7101
      %7103 = vmatmul.f32.gmra.mxu0 %v6992
      %v7104 = vpop.f32.mrf.mxu0
      %v7105 = vadd.f32 %v6896, %v7104
      %7106 = vmatmul.f32.gmra.mxu0 %v6995
      %v7107 = vpop.f32.mrf.mxu0
      %v7108 = vadd.f32 %v6899, %v7107
      %7109 = vmatmul.f32.gmra.mxu0 %v6998
      %v7110 = vpop.f32.mrf.mxu0
      %v7111 = vadd.f32 %v6902, %v7110
      %7112 = vmatmul.f32.gmra.mxu0 %v7001
      %v7113 = vpop.f32.mrf.mxu0
      %v7114 = vadd.f32 %v6905, %v7113
      %7115 = vmatmul.f32.gmra.mxu0 %v7004
      %v7116 = vpop.f32.mrf.mxu0
      %v7117 = vadd.f32 %v6908, %v7116
      %7118 = vmatmul.f32.gmra.mxu0 %v7007
      %v7119 = vpop.f32.mrf.mxu0
      %v7120 = vadd.f32 %v6911, %v7119
      %7121 = vmatmul.f32.gmra.mxu0 %v7010
      %v7122 = vpop.f32.mrf.mxu0
      %v7123 = vadd.f32 %v6914, %v7122
      %7124 = vmatmul.f32.gmra.mxu0 %v7013
      %v7125 = vpop.f32.mrf.mxu0
      %v7126 = vadd.f32 %v6917, %v7125
      %7127 = vmatmul.f32.gmra.mxu0 %v7016
      %v7128 = vpop.f32.mrf.mxu0
      %v7129 = vadd.f32 %v6920, %v7128
      %7130 = vmatmul.f32.gmra.mxu0 %v7019
      %v7131 = vpop.f32.mrf.mxu0
      %v7132 = vadd.f32 %v6923, %v7131
      %7133 = vmatmul.f32.gmra.mxu0 %v7022
      %v7134 = vpop.f32.mrf.mxu0
      %v7135 = vadd.f32 %v6926, %v7134
      %7136 = vmatmul.f32.gmra.mxu0 %v7025
      %v7137 = vpop.f32.mrf.mxu0
      %v7138 = vadd.f32 %v6929, %v7137
      %7139 = vmatmul.f32.gmra.mxu0 %v7028
      %v7140 = vpop.f32.mrf.mxu0
      %v7141 = vadd.f32 %v6932, %v7140
      %7142 = vmatmul.f32.gmra.mxu0 %v7031
      %v7143 = vpop.f32.mrf.mxu0
      %v7144 = vadd.f32 %v6935, %v7143
      %7145 = vmatmul.f32.gmra.mxu0 %v7034
      %v7146 = vpop.f32.mrf.mxu0
      %v7147 = vadd.f32 %v6938, %v7146
      %7148 = vmatmul.f32.gmra.mxu0 %v7037
      %v7149 = vpop.f32.mrf.mxu0
      %v7150 = vadd.f32 %v6941, %v7149
      %7151 = vmatmul.f32.gmra.mxu0 %v7040
      %v7152 = vpop.f32.mrf.mxu0
      %v7153 = vadd.f32 %v6944, %v7152
      %7154 = vmatmul.f32.gmra.mxu0 %v7043
      %v7155 = vpop.f32.mrf.mxu0
      %v7156 = vadd.f32 %v6947, %v7155
      %7157 = vmatmul.f32.gmra.mxu0 %v7046
      %v7158 = vpop.f32.mrf.mxu0
      %v7159 = vadd.f32 %v6950, %v7158
      %7160 = vmatmul.f32.gmra.mxu0 %v7049
      %v7161 = vpop.f32.mrf.mxu0
      %v7162 = vadd.f32 %v6953, %v7161
      %7163 = vmatmul.f32.gmra.mxu0 %v7052
      %v7164 = vpop.f32.mrf.mxu0
      %v7165 = vadd.f32 %v6956, %v7164
      %7166 = vmatmul.f32.gmra.mxu0 %v7055
      %v7167 = vpop.f32.mrf.mxu0
      %v7168 = vadd.f32 %v6959, %v7167
      %7169 = vmatmul.f32.gmra.mxu0 %v7058
      %v7170 = vpop.f32.mrf.mxu0
      %v7171 = vadd.f32 %v6962, %v7170
      %7172 = vmatmul.f32.gmra.mxu0 %v7061
      %v7173 = vpop.f32.mrf.mxu0
      %v7174 = vadd.f32 %v6965, %v7173
      %7175 = vmatmul.f32.gmra.mxu0 %v7064
      %v7176 = vpop.f32.mrf.mxu0
      %v7177 = vadd.f32 %v6968, %v7176
      %7178 = vmatmul.f32.gmra.mxu0 %v7067
      %v7179 = vpop.f32.mrf.mxu0
      %v7180 = vadd.f32 %v6971, %v7179
      %7181 = vmatmul.f32.gmra.mxu0 %v7070
      %v7182 = vpop.f32.mrf.mxu0
      %v7183 = vadd.f32 %v6974, %v7182
      %7184 = vmatmul.f32.gmra.mxu0 %v7073
      %v7185 = vpop.f32.mrf.mxu0
      %v7186 = vadd.f32 %v6977, %v7185
      %7187 = vmatmul.f32.gmra.mxu0 %v7076
      %v7188 = vpop.f32.mrf.mxu0
      %v7189 = vadd.f32 %v6980, %v7188
      %7190 = vmatmul.f32.gmra.mxu0 %v7079
      %v7191 = vpop.f32.mrf.mxu0
      %v7192 = vadd.f32 %v6983, %v7191
      %7193 = vmatmul.f32.gmra.mxu0 %v7082
      %v7194 = vpop.f32.mrf.mxu0
      %v7195 = vadd.f32 %v6986, %v7194
      %7196 = vdwg.mxu0
      %v7197 = vld [vmem:[#allocation3 + $0x1] sm:$0xff]
      %v7198 = vld [vmem:[#allocation3 + $0x9] sm:$0xff]
      %v7199 = vld [vmem:[#allocation3 + $0x19] sm:$0xff]
      %v7200 = vld [vmem:[#allocation3 + $0x21] sm:$0xff]
      %v7201 = vld [vmem:[#allocation3 + $0x31] sm:$0xff]
      %v7202 = vld [vmem:[#allocation3 + $0x39] sm:$0xff]
      %v7203 = vld [vmem:[#allocation3 + $0x49] sm:$0xff]
      %v7204 = vld [vmem:[#allocation3 + $0x51] sm:$0xff]
      %v7205 = vld [vmem:[#allocation3 + $0x61] sm:$0xff]
      %v7206 = vld [vmem:[#allocation3 + $0x69] sm:$0xff]
      %v7207 = vld [vmem:[#allocation3 + $0x79] sm:$0xff]
      %v7208 = vld [vmem:[#allocation3 + $0x81] sm:$0xff]
      %v7209 = vld [vmem:[#allocation3 + $0x91] sm:$0xff]
      %v7210 = vld [vmem:[#allocation3 + $0x99] sm:$0xff]
      %v7211 = vld [vmem:[#allocation3 + $0xa9] sm:$0xff]
      %v7212 = vld [vmem:[#allocation3 + $0xb1] sm:$0xff]
      %v7213 = vld [vmem:[#allocation3 + $0xc1] sm:$0xff]
      %v7214 = vld [vmem:[#allocation3 + $0xc9] sm:$0xff]
      %v7215 = vld [vmem:[#allocation3 + $0xd9] sm:$0xff]
      %v7216 = vld [vmem:[#allocation3 + $0xe1] sm:$0xff]
      %v7217 = vld [vmem:[#allocation3 + $0xf1] sm:$0xff]
      %v7218 = vld [vmem:[#allocation3 + $0xf9] sm:$0xff]
      %v7219 = vld [vmem:[#allocation3 + $0x109] sm:$0xff]
      %v7220 = vld [vmem:[#allocation3 + $0x111] sm:$0xff]
      %v7221 = vld [vmem:[#allocation3 + $0x121] sm:$0xff]
      %v7222 = vld [vmem:[#allocation3 + $0x129] sm:$0xff]
      %v7223 = vld [vmem:[#allocation3 + $0x139] sm:$0xff]
      %v7224 = vld [vmem:[#allocation3 + $0x141] sm:$0xff]
      %v7225 = vld [vmem:[#allocation3 + $0x151] sm:$0xff]
      %v7226 = vld [vmem:[#allocation3 + $0x159] sm:$0xff]
      %v7227 = vld [vmem:[#allocation3 + $0x169] sm:$0xff]
      %v7228 = vld [vmem:[#allocation3 + $0x171] sm:$0xff]
      %s7229 = scalar_lea.vmem %s4, 32
      %v7230 = vld [vmem:[%s7229] sm:$0xff]
      %v7231 = vld [vmem:[%s7229 + $0x8] sm:$0xff]
      %v7232 = vld [vmem:[%s7229 + $0x10] sm:$0xff]
      %v7233 = vld [vmem:[%s7229 + $0x18] sm:$0xff]
      %v7235 = vsel %vm962, %v7197, 0
      %v7238 = vsel %vm962, %v7198, 0
      %v7241 = vsel %vm962, %v7199, 0
      %v7244 = vsel %vm962, %v7200, 0
      %v7247 = vsel %vm962, %v7201, 0
      %v7250 = vsel %vm962, %v7202, 0
      %v7253 = vsel %vm962, %v7203, 0
      %v7256 = vsel %vm962, %v7204, 0
      %v7259 = vsel %vm962, %v7205, 0
      %v7262 = vsel %vm962, %v7206, 0
      %v7265 = vsel %vm962, %v7207, 0
      %v7268 = vsel %vm962, %v7208, 0
      %v7271 = vsel %vm962, %v7209, 0
      %v7274 = vsel %vm962, %v7210, 0
      %v7277 = vsel %vm962, %v7211, 0
      %v7280 = vsel %vm962, %v7212, 0
      %v7283 = vsel %vm962, %v7213, 0
      %v7286 = vsel %vm962, %v7214, 0
      %v7289 = vsel %vm962, %v7215, 0
      %v7292 = vsel %vm962, %v7216, 0
      %v7295 = vsel %vm962, %v7217, 0
      %v7298 = vsel %vm962, %v7218, 0
      %v7301 = vsel %vm962, %v7219, 0
      %v7304 = vsel %vm962, %v7220, 0
      %v7307 = vsel %vm962, %v7221, 0
      %v7310 = vsel %vm962, %v7222, 0
      %v7313 = vsel %vm962, %v7223, 0
      %v7316 = vsel %vm962, %v7224, 0
      %v7319 = vsel %vm962, %v7225, 0
      %v7322 = vsel %vm962, %v7226, 0
      %v7325 = vsel %vm962, %v7227, 0
      %v7328 = vsel %vm962, %v7228, 0
      %7330 = vmatpush.msra.mxu0 0.0
      %7331 = vmatpush.msra.mxu0 0.0
      %7332 = vmatpush.msra.mxu0 0.0
      %7333 = vmatpush.msra.mxu0 0.0
      %7334 = vmatpush.msra.mxu0 0.0
      %7335 = vmatpush.msra.mxu0 0.0
      %7336 = vmatpush.msra.mxu0 0.0
      %7337 = vmatpush.msra.mxu0 0.0
      %7338 = vmatpush.msra.mxu0 0.0
      %7339 = vmatpush.msra.mxu0 0.0
      %7340 = vmatpush.msra.mxu0 0.0
      %7341 = vmatpush.msra.mxu0 0.0
      %7342 = vmatpush.msra.mxu0 %v7233
      %7343 = vmatpush.msra.mxu0 %v7232
      %7344 = vmatpush.msra.mxu0 %v7231
      %7345 = vmatpush.msra.mxu0 %v7230
      %7346 = vmatmul.f32.gmra.mxu0 %v7235
      %v7347 = vpop.f32.mrf.mxu0
      %v7348 = vadd.f32 0.0, %v7347
      %7349 = vmatmul.f32.gmra.mxu0 %v7238
      %v7350 = vpop.f32.mrf.mxu0
      %v7351 = vadd.f32 0.0, %v7350
      %7352 = vmatmul.f32.gmra.mxu0 %v7241
      %v7353 = vpop.f32.mrf.mxu0
      %v7354 = vadd.f32 0.0, %v7353
      %7355 = vmatmul.f32.gmra.mxu0 %v7244
      %v7356 = vpop.f32.mrf.mxu0
      %v7357 = vadd.f32 0.0, %v7356
      %7358 = vmatmul.f32.gmra.mxu0 %v7247
      %v7359 = vpop.f32.mrf.mxu0
      %v7360 = vadd.f32 0.0, %v7359
      %7361 = vmatmul.f32.gmra.mxu0 %v7250
      %v7362 = vpop.f32.mrf.mxu0
      %v7363 = vadd.f32 0.0, %v7362
      %7364 = vmatmul.f32.gmra.mxu0 %v7253
      %v7365 = vpop.f32.mrf.mxu0
      %v7366 = vadd.f32 0.0, %v7365
      %7367 = vmatmul.f32.gmra.mxu0 %v7256
      %v7368 = vpop.f32.mrf.mxu0
      %v7369 = vadd.f32 0.0, %v7368
      %7370 = vmatmul.f32.gmra.mxu0 %v7259
      %v7371 = vpop.f32.mrf.mxu0
      %v7372 = vadd.f32 0.0, %v7371
      %7373 = vmatmul.f32.gmra.mxu0 %v7262
      %v7374 = vpop.f32.mrf.mxu0
      %v7375 = vadd.f32 0.0, %v7374
      %7376 = vmatmul.f32.gmra.mxu0 %v7265
      %v7377 = vpop.f32.mrf.mxu0
      %v7378 = vadd.f32 0.0, %v7377
      %7379 = vmatmul.f32.gmra.mxu0 %v7268
      %v7380 = vpop.f32.mrf.mxu0
      %v7381 = vadd.f32 0.0, %v7380
      %7382 = vmatmul.f32.gmra.mxu0 %v7271
      %v7383 = vpop.f32.mrf.mxu0
      %v7384 = vadd.f32 0.0, %v7383
      %7385 = vmatmul.f32.gmra.mxu0 %v7274
      %v7386 = vpop.f32.mrf.mxu0
      %v7387 = vadd.f32 0.0, %v7386
      %7388 = vmatmul.f32.gmra.mxu0 %v7277
      %v7389 = vpop.f32.mrf.mxu0
      %v7390 = vadd.f32 0.0, %v7389
      %7391 = vmatmul.f32.gmra.mxu0 %v7280
      %v7392 = vpop.f32.mrf.mxu0
      %v7393 = vadd.f32 0.0, %v7392
      %7394 = vmatmul.f32.gmra.mxu0 %v7283
      %v7395 = vpop.f32.mrf.mxu0
      %v7396 = vadd.f32 0.0, %v7395
      %7397 = vmatmul.f32.gmra.mxu0 %v7286
      %v7398 = vpop.f32.mrf.mxu0
      %v7399 = vadd.f32 0.0, %v7398
      %7400 = vmatmul.f32.gmra.mxu0 %v7289
      %v7401 = vpop.f32.mrf.mxu0
      %v7402 = vadd.f32 0.0, %v7401
      %7403 = vmatmul.f32.gmra.mxu0 %v7292
      %v7404 = vpop.f32.mrf.mxu0
      %v7405 = vadd.f32 0.0, %v7404
      %7406 = vmatmul.f32.gmra.mxu0 %v7295
      %v7407 = vpop.f32.mrf.mxu0
      %v7408 = vadd.f32 0.0, %v7407
      %7409 = vmatmul.f32.gmra.mxu0 %v7298
      %v7410 = vpop.f32.mrf.mxu0
      %v7411 = vadd.f32 0.0, %v7410
      %7412 = vmatmul.f32.gmra.mxu0 %v7301
      %v7413 = vpop.f32.mrf.mxu0
      %v7414 = vadd.f32 0.0, %v7413
      %7415 = vmatmul.f32.gmra.mxu0 %v7304
      %v7416 = vpop.f32.mrf.mxu0
      %v7417 = vadd.f32 0.0, %v7416
      %7418 = vmatmul.f32.gmra.mxu0 %v7307
      %v7419 = vpop.f32.mrf.mxu0
      %v7420 = vadd.f32 0.0, %v7419
      %7421 = vmatmul.f32.gmra.mxu0 %v7310
      %v7422 = vpop.f32.mrf.mxu0
      %v7423 = vadd.f32 0.0, %v7422
      %7424 = vmatmul.f32.gmra.mxu0 %v7313
      %v7425 = vpop.f32.mrf.mxu0
      %v7426 = vadd.f32 0.0, %v7425
      %7427 = vmatmul.f32.gmra.mxu0 %v7316
      %v7428 = vpop.f32.mrf.mxu0
      %v7429 = vadd.f32 0.0, %v7428
      %7430 = vmatmul.f32.gmra.mxu0 %v7319
      %v7431 = vpop.f32.mrf.mxu0
      %v7432 = vadd.f32 0.0, %v7431
      %7433 = vmatmul.f32.gmra.mxu0 %v7322
      %v7434 = vpop.f32.mrf.mxu0
      %v7435 = vadd.f32 0.0, %v7434
      %7436 = vmatmul.f32.gmra.mxu0 %v7325
      %v7437 = vpop.f32.mrf.mxu0
      %v7438 = vadd.f32 0.0, %v7437
      %7439 = vmatmul.f32.gmra.mxu0 %v7328
      %v7440 = vpop.f32.mrf.mxu0
      %v7441 = vadd.f32 0.0, %v7440
      %7442 = vdwg.mxu0
      %v7443 = vadd.f32 %v7102, %v7348
      %v7444 = vadd.f32 %v7105, %v7351
      %v7445 = vadd.f32 %v7108, %v7354
      %v7446 = vadd.f32 %v7111, %v7357
      %v7447 = vadd.f32 %v7114, %v7360
      %v7448 = vadd.f32 %v7117, %v7363
      %v7449 = vadd.f32 %v7120, %v7366
      %v7450 = vadd.f32 %v7123, %v7369
      %v7451 = vadd.f32 %v7126, %v7372
      %v7452 = vadd.f32 %v7129, %v7375
      %v7453 = vadd.f32 %v7132, %v7378
      %v7454 = vadd.f32 %v7135, %v7381
      %v7455 = vadd.f32 %v7138, %v7384
      %v7456 = vadd.f32 %v7141, %v7387
      %v7457 = vadd.f32 %v7144, %v7390
      %v7458 = vadd.f32 %v7147, %v7393
      %v7459 = vadd.f32 %v7150, %v7396
      %v7460 = vadd.f32 %v7153, %v7399
      %v7461 = vadd.f32 %v7156, %v7402
      %v7462 = vadd.f32 %v7159, %v7405
      %v7463 = vadd.f32 %v7162, %v7408
      %v7464 = vadd.f32 %v7165, %v7411
      %v7465 = vadd.f32 %v7168, %v7414
      %v7466 = vadd.f32 %v7171, %v7417
      %v7467 = vadd.f32 %v7174, %v7420
      %v7468 = vadd.f32 %v7177, %v7423
      %v7469 = vadd.f32 %v7180, %v7426
      %v7470 = vadd.f32 %v7183, %v7429
      %v7471 = vadd.f32 %v7186, %v7432
      %v7472 = vadd.f32 %v7189, %v7435
      %v7473 = vadd.f32 %v7192, %v7438
      %v7474 = vadd.f32 %v7195, %v7441
      %v7475 = vld [vmem:[#allocation4 + $0x1] sm:$0xff]
      %v7476 = vld [vmem:[#allocation4 + $0x9] sm:$0xff]
      %v7477 = vld [vmem:[#allocation4 + $0x19] sm:$0xff]
      %v7478 = vld [vmem:[#allocation4 + $0x21] sm:$0xff]
      %v7479 = vld [vmem:[#allocation4 + $0x31] sm:$0xff]
      %v7480 = vld [vmem:[#allocation4 + $0x39] sm:$0xff]
      %v7481 = vld [vmem:[#allocation4 + $0x49] sm:$0xff]
      %v7482 = vld [vmem:[#allocation4 + $0x51] sm:$0xff]
      %v7483 = vld [vmem:[#allocation4 + $0x61] sm:$0xff]
      %v7484 = vld [vmem:[#allocation4 + $0x69] sm:$0xff]
      %v7485 = vld [vmem:[#allocation4 + $0x79] sm:$0xff]
      %v7486 = vld [vmem:[#allocation4 + $0x81] sm:$0xff]
      %v7487 = vld [vmem:[#allocation4 + $0x91] sm:$0xff]
      %v7488 = vld [vmem:[#allocation4 + $0x99] sm:$0xff]
      %v7489 = vld [vmem:[#allocation4 + $0xa9] sm:$0xff]
      %v7490 = vld [vmem:[#allocation4 + $0xb1] sm:$0xff]
      %v7491 = vld [vmem:[#allocation4 + $0xc1] sm:$0xff]
      %v7492 = vld [vmem:[#allocation4 + $0xc9] sm:$0xff]
      %v7493 = vld [vmem:[#allocation4 + $0xd9] sm:$0xff]
      %v7494 = vld [vmem:[#allocation4 + $0xe1] sm:$0xff]
      %v7495 = vld [vmem:[#allocation4 + $0xf1] sm:$0xff]
      %v7496 = vld [vmem:[#allocation4 + $0xf9] sm:$0xff]
      %v7497 = vld [vmem:[#allocation4 + $0x109] sm:$0xff]
      %v7498 = vld [vmem:[#allocation4 + $0x111] sm:$0xff]
      %v7499 = vld [vmem:[#allocation4 + $0x121] sm:$0xff]
      %v7500 = vld [vmem:[#allocation4 + $0x129] sm:$0xff]
      %v7501 = vld [vmem:[#allocation4 + $0x139] sm:$0xff]
      %v7502 = vld [vmem:[#allocation4 + $0x141] sm:$0xff]
      %v7503 = vld [vmem:[#allocation4 + $0x151] sm:$0xff]
      %v7504 = vld [vmem:[#allocation4 + $0x159] sm:$0xff]
      %v7505 = vld [vmem:[#allocation4 + $0x169] sm:$0xff]
      %v7506 = vld [vmem:[#allocation4 + $0x171] sm:$0xff]
      %s7507 = scalar_lea.vmem %s5, 32
      %v7508 = vld [vmem:[%s7507] sm:$0xff]
      %v7509 = vld [vmem:[%s7507 + $0x8] sm:$0xff]
      %v7510 = vld [vmem:[%s7507 + $0x10] sm:$0xff]
      %v7511 = vld [vmem:[%s7507 + $0x18] sm:$0xff]
      %v7513 = vsel %vm962, %v7475, 0
      %v7516 = vsel %vm962, %v7476, 0
      %v7519 = vsel %vm962, %v7477, 0
      %v7522 = vsel %vm962, %v7478, 0
      %v7525 = vsel %vm962, %v7479, 0
      %v7528 = vsel %vm962, %v7480, 0
      %v7531 = vsel %vm962, %v7481, 0
      %v7534 = vsel %vm962, %v7482, 0
      %v7537 = vsel %vm962, %v7483, 0
      %v7540 = vsel %vm962, %v7484, 0
      %v7543 = vsel %vm962, %v7485, 0
      %v7546 = vsel %vm962, %v7486, 0
      %v7549 = vsel %vm962, %v7487, 0
      %v7552 = vsel %vm962, %v7488, 0
      %v7555 = vsel %vm962, %v7489, 0
      %v7558 = vsel %vm962, %v7490, 0
      %v7561 = vsel %vm962, %v7491, 0
      %v7564 = vsel %vm962, %v7492, 0
      %v7567 = vsel %vm962, %v7493, 0
      %v7570 = vsel %vm962, %v7494, 0
      %v7573 = vsel %vm962, %v7495, 0
      %v7576 = vsel %vm962, %v7496, 0
      %v7579 = vsel %vm962, %v7497, 0
      %v7582 = vsel %vm962, %v7498, 0
      %v7585 = vsel %vm962, %v7499, 0
      %v7588 = vsel %vm962, %v7500, 0
      %v7591 = vsel %vm962, %v7501, 0
      %v7594 = vsel %vm962, %v7502, 0
      %v7597 = vsel %vm962, %v7503, 0
      %v7600 = vsel %vm962, %v7504, 0
      %v7603 = vsel %vm962, %v7505, 0
      %v7606 = vsel %vm962, %v7506, 0
      %7608 = vmatpush.msra.mxu0 0.0
      %7609 = vmatpush.msra.mxu0 0.0
      %7610 = vmatpush.msra.mxu0 0.0
      %7611 = vmatpush.msra.mxu0 0.0
      %7612 = vmatpush.msra.mxu0 0.0
      %7613 = vmatpush.msra.mxu0 0.0
      %7614 = vmatpush.msra.mxu0 0.0
      %7615 = vmatpush.msra.mxu0 0.0
      %7616 = vmatpush.msra.mxu0 0.0
      %7617 = vmatpush.msra.mxu0 0.0
      %7618 = vmatpush.msra.mxu0 0.0
      %7619 = vmatpush.msra.mxu0 0.0
      %7620 = vmatpush.msra.mxu0 %v7511
      %7621 = vmatpush.msra.mxu0 %v7510
      %7622 = vmatpush.msra.mxu0 %v7509
      %7623 = vmatpush.msra.mxu0 %v7508
      %7624 = vmatmul.f32.gmra.mxu0 %v7513
      %v7625 = vpop.f32.mrf.mxu0
      %v7626 = vadd.f32 0.0, %v7625
      %7627 = vmatmul.f32.gmra.mxu0 %v7516
      %v7628 = vpop.f32.mrf.mxu0
      %v7629 = vadd.f32 0.0, %v7628
      %7630 = vmatmul.f32.gmra.mxu0 %v7519
      %v7631 = vpop.f32.mrf.mxu0
      %v7632 = vadd.f32 0.0, %v7631
      %7633 = vmatmul.f32.gmra.mxu0 %v7522
      %v7634 = vpop.f32.mrf.mxu0
      %v7635 = vadd.f32 0.0, %v7634
      %7636 = vmatmul.f32.gmra.mxu0 %v7525
      %v7637 = vpop.f32.mrf.mxu0
      %v7638 = vadd.f32 0.0, %v7637
      %7639 = vmatmul.f32.gmra.mxu0 %v7528
      %v7640 = vpop.f32.mrf.mxu0
      %v7641 = vadd.f32 0.0, %v7640
      %7642 = vmatmul.f32.gmra.mxu0 %v7531
      %v7643 = vpop.f32.mrf.mxu0
      %v7644 = vadd.f32 0.0, %v7643
      %7645 = vmatmul.f32.gmra.mxu0 %v7534
      %v7646 = vpop.f32.mrf.mxu0
      %v7647 = vadd.f32 0.0, %v7646
      %7648 = vmatmul.f32.gmra.mxu0 %v7537
      %v7649 = vpop.f32.mrf.mxu0
      %v7650 = vadd.f32 0.0, %v7649
      %7651 = vmatmul.f32.gmra.mxu0 %v7540
      %v7652 = vpop.f32.mrf.mxu0
      %v7653 = vadd.f32 0.0, %v7652
      %7654 = vmatmul.f32.gmra.mxu0 %v7543
      %v7655 = vpop.f32.mrf.mxu0
      %v7656 = vadd.f32 0.0, %v7655
      %7657 = vmatmul.f32.gmra.mxu0 %v7546
      %v7658 = vpop.f32.mrf.mxu0
      %v7659 = vadd.f32 0.0, %v7658
      %7660 = vmatmul.f32.gmra.mxu0 %v7549
      %v7661 = vpop.f32.mrf.mxu0
      %v7662 = vadd.f32 0.0, %v7661
      %7663 = vmatmul.f32.gmra.mxu0 %v7552
      %v7664 = vpop.f32.mrf.mxu0
      %v7665 = vadd.f32 0.0, %v7664
      %7666 = vmatmul.f32.gmra.mxu0 %v7555
      %v7667 = vpop.f32.mrf.mxu0
      %v7668 = vadd.f32 0.0, %v7667
      %7669 = vmatmul.f32.gmra.mxu0 %v7558
      %v7670 = vpop.f32.mrf.mxu0
      %v7671 = vadd.f32 0.0, %v7670
      %7672 = vmatmul.f32.gmra.mxu0 %v7561
      %v7673 = vpop.f32.mrf.mxu0
      %v7674 = vadd.f32 0.0, %v7673
      %7675 = vmatmul.f32.gmra.mxu0 %v7564
      %v7676 = vpop.f32.mrf.mxu0
      %v7677 = vadd.f32 0.0, %v7676
      %7678 = vmatmul.f32.gmra.mxu0 %v7567
      %v7679 = vpop.f32.mrf.mxu0
      %v7680 = vadd.f32 0.0, %v7679
      %7681 = vmatmul.f32.gmra.mxu0 %v7570
      %v7682 = vpop.f32.mrf.mxu0
      %v7683 = vadd.f32 0.0, %v7682
      %7684 = vmatmul.f32.gmra.mxu0 %v7573
      %v7685 = vpop.f32.mrf.mxu0
      %v7686 = vadd.f32 0.0, %v7685
      %7687 = vmatmul.f32.gmra.mxu0 %v7576
      %v7688 = vpop.f32.mrf.mxu0
      %v7689 = vadd.f32 0.0, %v7688
      %7690 = vmatmul.f32.gmra.mxu0 %v7579
      %v7691 = vpop.f32.mrf.mxu0
      %v7692 = vadd.f32 0.0, %v7691
      %7693 = vmatmul.f32.gmra.mxu0 %v7582
      %v7694 = vpop.f32.mrf.mxu0
      %v7695 = vadd.f32 0.0, %v7694
      %7696 = vmatmul.f32.gmra.mxu0 %v7585
      %v7697 = vpop.f32.mrf.mxu0
      %v7698 = vadd.f32 0.0, %v7697
      %7699 = vmatmul.f32.gmra.mxu0 %v7588
      %v7700 = vpop.f32.mrf.mxu0
      %v7701 = vadd.f32 0.0, %v7700
      %7702 = vmatmul.f32.gmra.mxu0 %v7591
      %v7703 = vpop.f32.mrf.mxu0
      %v7704 = vadd.f32 0.0, %v7703
      %7705 = vmatmul.f32.gmra.mxu0 %v7594
      %v7706 = vpop.f32.mrf.mxu0
      %v7707 = vadd.f32 0.0, %v7706
      %7708 = vmatmul.f32.gmra.mxu0 %v7597
      %v7709 = vpop.f32.mrf.mxu0
      %v7710 = vadd.f32 0.0, %v7709
      %7711 = vmatmul.f32.gmra.mxu0 %v7600
      %v7712 = vpop.f32.mrf.mxu0
      %v7713 = vadd.f32 0.0, %v7712
      %7714 = vmatmul.f32.gmra.mxu0 %v7603
      %v7715 = vpop.f32.mrf.mxu0
      %v7716 = vadd.f32 0.0, %v7715
      %7717 = vmatmul.f32.gmra.mxu0 %v7606
      %v7718 = vpop.f32.mrf.mxu0
      %v7719 = vadd.f32 0.0, %v7718
      %7720 = vdwg.mxu0
      %v7721 = vadd.f32 %v7443, %v7626
      %v7722 = vadd.f32 %v7444, %v7629
      %v7723 = vadd.f32 %v7445, %v7632
      %v7724 = vadd.f32 %v7446, %v7635
      %v7725 = vadd.f32 %v7447, %v7638
      %v7726 = vadd.f32 %v7448, %v7641
      %v7727 = vadd.f32 %v7449, %v7644
      %v7728 = vadd.f32 %v7450, %v7647
      %v7729 = vadd.f32 %v7451, %v7650
      %v7730 = vadd.f32 %v7452, %v7653
      %v7731 = vadd.f32 %v7453, %v7656
      %v7732 = vadd.f32 %v7454, %v7659
      %v7733 = vadd.f32 %v7455, %v7662
      %v7734 = vadd.f32 %v7456, %v7665
      %v7735 = vadd.f32 %v7457, %v7668
      %v7736 = vadd.f32 %v7458, %v7671
      %v7737 = vadd.f32 %v7459, %v7674
      %v7738 = vadd.f32 %v7460, %v7677
      %v7739 = vadd.f32 %v7461, %v7680
      %v7740 = vadd.f32 %v7462, %v7683
      %v7741 = vadd.f32 %v7463, %v7686
      %v7742 = vadd.f32 %v7464, %v7689
      %v7743 = vadd.f32 %v7465, %v7692
      %v7744 = vadd.f32 %v7466, %v7695
      %v7745 = vadd.f32 %v7467, %v7698
      %v7746 = vadd.f32 %v7468, %v7701
      %v7747 = vadd.f32 %v7469, %v7704
      %v7748 = vadd.f32 %v7470, %v7707
      %v7749 = vadd.f32 %v7471, %v7710
      %v7750 = vadd.f32 %v7472, %v7713
      %v7751 = vadd.f32 %v7473, %v7716
      %v7752 = vadd.f32 %v7474, %v7719
      %v7753 = vld [vmem:[#allocation3 + $0x2] sm:$0xff]
      %v7754 = vld [vmem:[#allocation3 + $0xa] sm:$0xff]
      %v7755 = vld [vmem:[#allocation3 + $0x1a] sm:$0xff]
      %v7756 = vld [vmem:[#allocation3 + $0x22] sm:$0xff]
      %v7757 = vld [vmem:[#allocation3 + $0x32] sm:$0xff]
      %v7758 = vld [vmem:[#allocation3 + $0x3a] sm:$0xff]
      %v7759 = vld [vmem:[#allocation3 + $0x4a] sm:$0xff]
      %v7760 = vld [vmem:[#allocation3 + $0x52] sm:$0xff]
      %v7761 = vld [vmem:[#allocation3 + $0x62] sm:$0xff]
      %v7762 = vld [vmem:[#allocation3 + $0x6a] sm:$0xff]
      %v7763 = vld [vmem:[#allocation3 + $0x7a] sm:$0xff]
      %v7764 = vld [vmem:[#allocation3 + $0x82] sm:$0xff]
      %v7765 = vld [vmem:[#allocation3 + $0x92] sm:$0xff]
      %v7766 = vld [vmem:[#allocation3 + $0x9a] sm:$0xff]
      %v7767 = vld [vmem:[#allocation3 + $0xaa] sm:$0xff]
      %v7768 = vld [vmem:[#allocation3 + $0xb2] sm:$0xff]
      %v7769 = vld [vmem:[#allocation3 + $0xc2] sm:$0xff]
      %v7770 = vld [vmem:[#allocation3 + $0xca] sm:$0xff]
      %v7771 = vld [vmem:[#allocation3 + $0xda] sm:$0xff]
      %v7772 = vld [vmem:[#allocation3 + $0xe2] sm:$0xff]
      %v7773 = vld [vmem:[#allocation3 + $0xf2] sm:$0xff]
      %v7774 = vld [vmem:[#allocation3 + $0xfa] sm:$0xff]
      %v7775 = vld [vmem:[#allocation3 + $0x10a] sm:$0xff]
      %v7776 = vld [vmem:[#allocation3 + $0x112] sm:$0xff]
      %v7777 = vld [vmem:[#allocation3 + $0x122] sm:$0xff]
      %v7778 = vld [vmem:[#allocation3 + $0x12a] sm:$0xff]
      %v7779 = vld [vmem:[#allocation3 + $0x13a] sm:$0xff]
      %v7780 = vld [vmem:[#allocation3 + $0x142] sm:$0xff]
      %v7781 = vld [vmem:[#allocation3 + $0x152] sm:$0xff]
      %v7782 = vld [vmem:[#allocation3 + $0x15a] sm:$0xff]
      %v7783 = vld [vmem:[#allocation3 + $0x16a] sm:$0xff]
      %v7784 = vld [vmem:[#allocation3 + $0x172] sm:$0xff]
      %s7785 = scalar_lea.vmem %s4, 64
      %v7786 = vld [vmem:[%s7785] sm:$0xff]
      %v7787 = vld [vmem:[%s7785 + $0x8] sm:$0xff]
      %v7788 = vld [vmem:[%s7785 + $0x10] sm:$0xff]
      %v7789 = vld [vmem:[%s7785 + $0x18] sm:$0xff]
      %v7791 = vsel %vm962, %v7753, 0
      %v7794 = vsel %vm962, %v7754, 0
      %v7797 = vsel %vm962, %v7755, 0
      %v7800 = vsel %vm962, %v7756, 0
      %v7803 = vsel %vm962, %v7757, 0
      %v7806 = vsel %vm962, %v7758, 0
      %v7809 = vsel %vm962, %v7759, 0
      %v7812 = vsel %vm962, %v7760, 0
      %v7815 = vsel %vm962, %v7761, 0
      %v7818 = vsel %vm962, %v7762, 0
      %v7821 = vsel %vm962, %v7763, 0
      %v7824 = vsel %vm962, %v7764, 0
      %v7827 = vsel %vm962, %v7765, 0
      %v7830 = vsel %vm962, %v7766, 0
      %v7833 = vsel %vm962, %v7767, 0
      %v7836 = vsel %vm962, %v7768, 0
      %v7839 = vsel %vm962, %v7769, 0
      %v7842 = vsel %vm962, %v7770, 0
      %v7845 = vsel %vm962, %v7771, 0
      %v7848 = vsel %vm962, %v7772, 0
      %v7851 = vsel %vm962, %v7773, 0
      %v7854 = vsel %vm962, %v7774, 0
      %v7857 = vsel %vm962, %v7775, 0
      %v7860 = vsel %vm962, %v7776, 0
      %v7863 = vsel %vm962, %v7777, 0
      %v7866 = vsel %vm962, %v7778, 0
      %v7869 = vsel %vm962, %v7779, 0
      %v7872 = vsel %vm962, %v7780, 0
      %v7875 = vsel %vm962, %v7781, 0
      %v7878 = vsel %vm962, %v7782, 0
      %v7881 = vsel %vm962, %v7783, 0
      %v7884 = vsel %vm962, %v7784, 0
      %7886 = vmatpush.msra.mxu0 0.0
      %7887 = vmatpush.msra.mxu0 0.0
      %7888 = vmatpush.msra.mxu0 0.0
      %7889 = vmatpush.msra.mxu0 0.0
      %7890 = vmatpush.msra.mxu0 0.0
      %7891 = vmatpush.msra.mxu0 0.0
      %7892 = vmatpush.msra.mxu0 0.0
      %7893 = vmatpush.msra.mxu0 0.0
      %7894 = vmatpush.msra.mxu0 0.0
      %7895 = vmatpush.msra.mxu0 0.0
      %7896 = vmatpush.msra.mxu0 0.0
      %7897 = vmatpush.msra.mxu0 0.0
      %7898 = vmatpush.msra.mxu0 %v7789
      %7899 = vmatpush.msra.mxu0 %v7788
      %7900 = vmatpush.msra.mxu0 %v7787
      %7901 = vmatpush.msra.mxu0 %v7786
      %7902 = vmatmul.f32.gmra.mxu0 %v7791
      %v7903 = vpop.f32.mrf.mxu0
      %v7904 = vadd.f32 0.0, %v7903
      %7905 = vmatmul.f32.gmra.mxu0 %v7794
      %v7906 = vpop.f32.mrf.mxu0
      %v7907 = vadd.f32 0.0, %v7906
      %7908 = vmatmul.f32.gmra.mxu0 %v7797
      %v7909 = vpop.f32.mrf.mxu0
      %v7910 = vadd.f32 0.0, %v7909
      %7911 = vmatmul.f32.gmra.mxu0 %v7800
      %v7912 = vpop.f32.mrf.mxu0
      %v7913 = vadd.f32 0.0, %v7912
      %7914 = vmatmul.f32.gmra.mxu0 %v7803
      %v7915 = vpop.f32.mrf.mxu0
      %v7916 = vadd.f32 0.0, %v7915
      %7917 = vmatmul.f32.gmra.mxu0 %v7806
      %v7918 = vpop.f32.mrf.mxu0
      %v7919 = vadd.f32 0.0, %v7918
      %7920 = vmatmul.f32.gmra.mxu0 %v7809
      %v7921 = vpop.f32.mrf.mxu0
      %v7922 = vadd.f32 0.0, %v7921
      %7923 = vmatmul.f32.gmra.mxu0 %v7812
      %v7924 = vpop.f32.mrf.mxu0
      %v7925 = vadd.f32 0.0, %v7924
      %7926 = vmatmul.f32.gmra.mxu0 %v7815
      %v7927 = vpop.f32.mrf.mxu0
      %v7928 = vadd.f32 0.0, %v7927
      %7929 = vmatmul.f32.gmra.mxu0 %v7818
      %v7930 = vpop.f32.mrf.mxu0
      %v7931 = vadd.f32 0.0, %v7930
      %7932 = vmatmul.f32.gmra.mxu0 %v7821
      %v7933 = vpop.f32.mrf.mxu0
      %v7934 = vadd.f32 0.0, %v7933
      %7935 = vmatmul.f32.gmra.mxu0 %v7824
      %v7936 = vpop.f32.mrf.mxu0
      %v7937 = vadd.f32 0.0, %v7936
      %7938 = vmatmul.f32.gmra.mxu0 %v7827
      %v7939 = vpop.f32.mrf.mxu0
      %v7940 = vadd.f32 0.0, %v7939
      %7941 = vmatmul.f32.gmra.mxu0 %v7830
      %v7942 = vpop.f32.mrf.mxu0
      %v7943 = vadd.f32 0.0, %v7942
      %7944 = vmatmul.f32.gmra.mxu0 %v7833
      %v7945 = vpop.f32.mrf.mxu0
      %v7946 = vadd.f32 0.0, %v7945
      %7947 = vmatmul.f32.gmra.mxu0 %v7836
      %v7948 = vpop.f32.mrf.mxu0
      %v7949 = vadd.f32 0.0, %v7948
      %7950 = vmatmul.f32.gmra.mxu0 %v7839
      %v7951 = vpop.f32.mrf.mxu0
      %v7952 = vadd.f32 0.0, %v7951
      %7953 = vmatmul.f32.gmra.mxu0 %v7842
      %v7954 = vpop.f32.mrf.mxu0
      %v7955 = vadd.f32 0.0, %v7954
      %7956 = vmatmul.f32.gmra.mxu0 %v7845
      %v7957 = vpop.f32.mrf.mxu0
      %v7958 = vadd.f32 0.0, %v7957
      %7959 = vmatmul.f32.gmra.mxu0 %v7848
      %v7960 = vpop.f32.mrf.mxu0
      %v7961 = vadd.f32 0.0, %v7960
      %7962 = vmatmul.f32.gmra.mxu0 %v7851
      %v7963 = vpop.f32.mrf.mxu0
      %v7964 = vadd.f32 0.0, %v7963
      %7965 = vmatmul.f32.gmra.mxu0 %v7854
      %v7966 = vpop.f32.mrf.mxu0
      %v7967 = vadd.f32 0.0, %v7966
      %7968 = vmatmul.f32.gmra.mxu0 %v7857
      %v7969 = vpop.f32.mrf.mxu0
      %v7970 = vadd.f32 0.0, %v7969
      %7971 = vmatmul.f32.gmra.mxu0 %v7860
      %v7972 = vpop.f32.mrf.mxu0
      %v7973 = vadd.f32 0.0, %v7972
      %7974 = vmatmul.f32.gmra.mxu0 %v7863
      %v7975 = vpop.f32.mrf.mxu0
      %v7976 = vadd.f32 0.0, %v7975
      %7977 = vmatmul.f32.gmra.mxu0 %v7866
      %v7978 = vpop.f32.mrf.mxu0
      %v7979 = vadd.f32 0.0, %v7978
      %7980 = vmatmul.f32.gmra.mxu0 %v7869
      %v7981 = vpop.f32.mrf.mxu0
      %v7982 = vadd.f32 0.0, %v7981
      %7983 = vmatmul.f32.gmra.mxu0 %v7872
      %v7984 = vpop.f32.mrf.mxu0
      %v7985 = vadd.f32 0.0, %v7984
      %7986 = vmatmul.f32.gmra.mxu0 %v7875
      %v7987 = vpop.f32.mrf.mxu0
      %v7988 = vadd.f32 0.0, %v7987
      %7989 = vmatmul.f32.gmra.mxu0 %v7878
      %v7990 = vpop.f32.mrf.mxu0
      %v7991 = vadd.f32 0.0, %v7990
      %7992 = vmatmul.f32.gmra.mxu0 %v7881
      %v7993 = vpop.f32.mrf.mxu0
      %v7994 = vadd.f32 0.0, %v7993
      %7995 = vmatmul.f32.gmra.mxu0 %v7884
      %v7996 = vpop.f32.mrf.mxu0
      %v7997 = vadd.f32 0.0, %v7996
      %7998 = vdwg.mxu0
      %v7999 = vadd.f32 %v7721, %v7904
      %v8000 = vadd.f32 %v7722, %v7907
      %v8001 = vadd.f32 %v7723, %v7910
      %v8002 = vadd.f32 %v7724, %v7913
      %v8003 = vadd.f32 %v7725, %v7916
      %v8004 = vadd.f32 %v7726, %v7919
      %v8005 = vadd.f32 %v7727, %v7922
      %v8006 = vadd.f32 %v7728, %v7925
      %v8007 = vadd.f32 %v7729, %v7928
      %v8008 = vadd.f32 %v7730, %v7931
      %v8009 = vadd.f32 %v7731, %v7934
      %v8010 = vadd.f32 %v7732, %v7937
      %v8011 = vadd.f32 %v7733, %v7940
      %v8012 = vadd.f32 %v7734, %v7943
      %v8013 = vadd.f32 %v7735, %v7946
      %v8014 = vadd.f32 %v7736, %v7949
      %v8015 = vadd.f32 %v7737, %v7952
      %v8016 = vadd.f32 %v7738, %v7955
      %v8017 = vadd.f32 %v7739, %v7958
      %v8018 = vadd.f32 %v7740, %v7961
      %v8019 = vadd.f32 %v7741, %v7964
      %v8020 = vadd.f32 %v7742, %v7967
      %v8021 = vadd.f32 %v7743, %v7970
      %v8022 = vadd.f32 %v7744, %v7973
      %v8023 = vadd.f32 %v7745, %v7976
      %v8024 = vadd.f32 %v7746, %v7979
      %v8025 = vadd.f32 %v7747, %v7982
      %v8026 = vadd.f32 %v7748, %v7985
      %v8027 = vadd.f32 %v7749, %v7988
      %v8028 = vadd.f32 %v7750, %v7991
      %v8029 = vadd.f32 %v7751, %v7994
      %v8030 = vadd.f32 %v7752, %v7997
      %v8031 = vld [vmem:[#allocation4 + $0x2] sm:$0xff]
      %v8032 = vld [vmem:[#allocation4 + $0xa] sm:$0xff]
      %v8033 = vld [vmem:[#allocation4 + $0x1a] sm:$0xff]
      %v8034 = vld [vmem:[#allocation4 + $0x22] sm:$0xff]
      %v8035 = vld [vmem:[#allocation4 + $0x32] sm:$0xff]
      %v8036 = vld [vmem:[#allocation4 + $0x3a] sm:$0xff]
      %v8037 = vld [vmem:[#allocation4 + $0x4a] sm:$0xff]
      %v8038 = vld [vmem:[#allocation4 + $0x52] sm:$0xff]
      %v8039 = vld [vmem:[#allocation4 + $0x62] sm:$0xff]
      %v8040 = vld [vmem:[#allocation4 + $0x6a] sm:$0xff]
      %v8041 = vld [vmem:[#allocation4 + $0x7a] sm:$0xff]
      %v8042 = vld [vmem:[#allocation4 + $0x82] sm:$0xff]
      %v8043 = vld [vmem:[#allocation4 + $0x92] sm:$0xff]
      %v8044 = vld [vmem:[#allocation4 + $0x9a] sm:$0xff]
      %v8045 = vld [vmem:[#allocation4 + $0xaa] sm:$0xff]
      %v8046 = vld [vmem:[#allocation4 + $0xb2] sm:$0xff]
      %v8047 = vld [vmem:[#allocation4 + $0xc2] sm:$0xff]
      %v8048 = vld [vmem:[#allocation4 + $0xca] sm:$0xff]
      %v8049 = vld [vmem:[#allocation4 + $0xda] sm:$0xff]
      %v8050 = vld [vmem:[#allocation4 + $0xe2] sm:$0xff]
      %v8051 = vld [vmem:[#allocation4 + $0xf2] sm:$0xff]
      %v8052 = vld [vmem:[#allocation4 + $0xfa] sm:$0xff]
      %v8053 = vld [vmem:[#allocation4 + $0x10a] sm:$0xff]
      %v8054 = vld [vmem:[#allocation4 + $0x112] sm:$0xff]
      %v8055 = vld [vmem:[#allocation4 + $0x122] sm:$0xff]
      %v8056 = vld [vmem:[#allocation4 + $0x12a] sm:$0xff]
      %v8057 = vld [vmem:[#allocation4 + $0x13a] sm:$0xff]
      %v8058 = vld [vmem:[#allocation4 + $0x142] sm:$0xff]
      %v8059 = vld [vmem:[#allocation4 + $0x152] sm:$0xff]
      %v8060 = vld [vmem:[#allocation4 + $0x15a] sm:$0xff]
      %v8061 = vld [vmem:[#allocation4 + $0x16a] sm:$0xff]
      %v8062 = vld [vmem:[#allocation4 + $0x172] sm:$0xff]
      %s8063 = scalar_lea.vmem %s5, 64
      %v8064 = vld [vmem:[%s8063] sm:$0xff]
      %v8065 = vld [vmem:[%s8063 + $0x8] sm:$0xff]
      %v8066 = vld [vmem:[%s8063 + $0x10] sm:$0xff]
      %v8067 = vld [vmem:[%s8063 + $0x18] sm:$0xff]
      %v8069 = vsel %vm962, %v8031, 0
      %v8072 = vsel %vm962, %v8032, 0
      %v8075 = vsel %vm962, %v8033, 0
      %v8078 = vsel %vm962, %v8034, 0
      %v8081 = vsel %vm962, %v8035, 0
      %v8084 = vsel %vm962, %v8036, 0
      %v8087 = vsel %vm962, %v8037, 0
      %v8090 = vsel %vm962, %v8038, 0
      %v8093 = vsel %vm962, %v8039, 0
      %v8096 = vsel %vm962, %v8040, 0
      %v8099 = vsel %vm962, %v8041, 0
      %v8102 = vsel %vm962, %v8042, 0
      %v8105 = vsel %vm962, %v8043, 0
      %v8108 = vsel %vm962, %v8044, 0
      %v8111 = vsel %vm962, %v8045, 0
      %v8114 = vsel %vm962, %v8046, 0
      %v8117 = vsel %vm962, %v8047, 0
      %v8120 = vsel %vm962, %v8048, 0
      %v8123 = vsel %vm962, %v8049, 0
      %v8126 = vsel %vm962, %v8050, 0
      %v8129 = vsel %vm962, %v8051, 0
      %v8132 = vsel %vm962, %v8052, 0
      %v8135 = vsel %vm962, %v8053, 0
      %v8138 = vsel %vm962, %v8054, 0
      %v8141 = vsel %vm962, %v8055, 0
      %v8144 = vsel %vm962, %v8056, 0
      %v8147 = vsel %vm962, %v8057, 0
      %v8150 = vsel %vm962, %v8058, 0
      %v8153 = vsel %vm962, %v8059, 0
      %v8156 = vsel %vm962, %v8060, 0
      %v8159 = vsel %vm962, %v8061, 0
      %v8162 = vsel %vm962, %v8062, 0
      %8164 = vmatpush.msra.mxu0 0.0
      %8165 = vmatpush.msra.mxu0 0.0
      %8166 = vmatpush.msra.mxu0 0.0
      %8167 = vmatpush.msra.mxu0 0.0
      %8168 = vmatpush.msra.mxu0 0.0
      %8169 = vmatpush.msra.mxu0 0.0
      %8170 = vmatpush.msra.mxu0 0.0
      %8171 = vmatpush.msra.mxu0 0.0
      %8172 = vmatpush.msra.mxu0 0.0
      %8173 = vmatpush.msra.mxu0 0.0
      %8174 = vmatpush.msra.mxu0 0.0
      %8175 = vmatpush.msra.mxu0 0.0
      %8176 = vmatpush.msra.mxu0 %v8067
      %8177 = vmatpush.msra.mxu0 %v8066
      %8178 = vmatpush.msra.mxu0 %v8065
      %8179 = vmatpush.msra.mxu0 %v8064
      %8180 = vmatmul.f32.gmra.mxu0 %v8069
      %v8181 = vpop.f32.mrf.mxu0
      %v8182 = vadd.f32 0.0, %v8181
      %8183 = vmatmul.f32.gmra.mxu0 %v8072
      %v8184 = vpop.f32.mrf.mxu0
      %v8185 = vadd.f32 0.0, %v8184
      %8186 = vmatmul.f32.gmra.mxu0 %v8075
      %v8187 = vpop.f32.mrf.mxu0
      %v8188 = vadd.f32 0.0, %v8187
      %8189 = vmatmul.f32.gmra.mxu0 %v8078
      %v8190 = vpop.f32.mrf.mxu0
      %v8191 = vadd.f32 0.0, %v8190
      %8192 = vmatmul.f32.gmra.mxu0 %v8081
      %v8193 = vpop.f32.mrf.mxu0
      %v8194 = vadd.f32 0.0, %v8193
      %8195 = vmatmul.f32.gmra.mxu0 %v8084
      %v8196 = vpop.f32.mrf.mxu0
      %v8197 = vadd.f32 0.0, %v8196
      %8198 = vmatmul.f32.gmra.mxu0 %v8087
      %v8199 = vpop.f32.mrf.mxu0
      %v8200 = vadd.f32 0.0, %v8199
      %8201 = vmatmul.f32.gmra.mxu0 %v8090
      %v8202 = vpop.f32.mrf.mxu0
      %v8203 = vadd.f32 0.0, %v8202
      %8204 = vmatmul.f32.gmra.mxu0 %v8093
      %v8205 = vpop.f32.mrf.mxu0
      %v8206 = vadd.f32 0.0, %v8205
      %8207 = vmatmul.f32.gmra.mxu0 %v8096
      %v8208 = vpop.f32.mrf.mxu0
      %v8209 = vadd.f32 0.0, %v8208
      %8210 = vmatmul.f32.gmra.mxu0 %v8099
      %v8211 = vpop.f32.mrf.mxu0
      %v8212 = vadd.f32 0.0, %v8211
      %8213 = vmatmul.f32.gmra.mxu0 %v8102
      %v8214 = vpop.f32.mrf.mxu0
      %v8215 = vadd.f32 0.0, %v8214
      %8216 = vmatmul.f32.gmra.mxu0 %v8105
      %v8217 = vpop.f32.mrf.mxu0
      %v8218 = vadd.f32 0.0, %v8217
      %8219 = vmatmul.f32.gmra.mxu0 %v8108
      %v8220 = vpop.f32.mrf.mxu0
      %v8221 = vadd.f32 0.0, %v8220
      %8222 = vmatmul.f32.gmra.mxu0 %v8111
      %v8223 = vpop.f32.mrf.mxu0
      %v8224 = vadd.f32 0.0, %v8223
      %8225 = vmatmul.f32.gmra.mxu0 %v8114
      %v8226 = vpop.f32.mrf.mxu0
      %v8227 = vadd.f32 0.0, %v8226
      %8228 = vmatmul.f32.gmra.mxu0 %v8117
      %v8229 = vpop.f32.mrf.mxu0
      %v8230 = vadd.f32 0.0, %v8229
      %8231 = vmatmul.f32.gmra.mxu0 %v8120
      %v8232 = vpop.f32.mrf.mxu0
      %v8233 = vadd.f32 0.0, %v8232
      %8234 = vmatmul.f32.gmra.mxu0 %v8123
      %v8235 = vpop.f32.mrf.mxu0
      %v8236 = vadd.f32 0.0, %v8235
      %8237 = vmatmul.f32.gmra.mxu0 %v8126
      %v8238 = vpop.f32.mrf.mxu0
      %v8239 = vadd.f32 0.0, %v8238
      %8240 = vmatmul.f32.gmra.mxu0 %v8129
      %v8241 = vpop.f32.mrf.mxu0
      %v8242 = vadd.f32 0.0, %v8241
      %8243 = vmatmul.f32.gmra.mxu0 %v8132
      %v8244 = vpop.f32.mrf.mxu0
      %v8245 = vadd.f32 0.0, %v8244
      %8246 = vmatmul.f32.gmra.mxu0 %v8135
      %v8247 = vpop.f32.mrf.mxu0
      %v8248 = vadd.f32 0.0, %v8247
      %8249 = vmatmul.f32.gmra.mxu0 %v8138
      %v8250 = vpop.f32.mrf.mxu0
      %v8251 = vadd.f32 0.0, %v8250
      %8252 = vmatmul.f32.gmra.mxu0 %v8141
      %v8253 = vpop.f32.mrf.mxu0
      %v8254 = vadd.f32 0.0, %v8253
      %8255 = vmatmul.f32.gmra.mxu0 %v8144
      %v8256 = vpop.f32.mrf.mxu0
      %v8257 = vadd.f32 0.0, %v8256
      %8258 = vmatmul.f32.gmra.mxu0 %v8147
      %v8259 = vpop.f32.mrf.mxu0
      %v8260 = vadd.f32 0.0, %v8259
      %8261 = vmatmul.f32.gmra.mxu0 %v8150
      %v8262 = vpop.f32.mrf.mxu0
      %v8263 = vadd.f32 0.0, %v8262
      %8264 = vmatmul.f32.gmra.mxu0 %v8153
      %v8265 = vpop.f32.mrf.mxu0
      %v8266 = vadd.f32 0.0, %v8265
      %8267 = vmatmul.f32.gmra.mxu0 %v8156
      %v8268 = vpop.f32.mrf.mxu0
      %v8269 = vadd.f32 0.0, %v8268
      %8270 = vmatmul.f32.gmra.mxu0 %v8159
      %v8271 = vpop.f32.mrf.mxu0
      %v8272 = vadd.f32 0.0, %v8271
      %8273 = vmatmul.f32.gmra.mxu0 %v8162
      %v8274 = vpop.f32.mrf.mxu0
      %v8275 = vadd.f32 0.0, %v8274
      %8276 = vdwg.mxu0
      %v8277 = vadd.f32 %v7999, %v8182
      %v8278 = vadd.f32 %v8000, %v8185
      %v8279 = vadd.f32 %v8001, %v8188
      %v8280 = vadd.f32 %v8002, %v8191
      %v8281 = vadd.f32 %v8003, %v8194
      %v8282 = vadd.f32 %v8004, %v8197
      %v8283 = vadd.f32 %v8005, %v8200
      %v8284 = vadd.f32 %v8006, %v8203
      %v8285 = vadd.f32 %v8007, %v8206
      %v8286 = vadd.f32 %v8008, %v8209
      %v8287 = vadd.f32 %v8009, %v8212
      %v8288 = vadd.f32 %v8010, %v8215
      %v8289 = vadd.f32 %v8011, %v8218
      %v8290 = vadd.f32 %v8012, %v8221
      %v8291 = vadd.f32 %v8013, %v8224
      %v8292 = vadd.f32 %v8014, %v8227
      %v8293 = vadd.f32 %v8015, %v8230
      %v8294 = vadd.f32 %v8016, %v8233
      %v8295 = vadd.f32 %v8017, %v8236
      %v8296 = vadd.f32 %v8018, %v8239
      %v8297 = vadd.f32 %v8019, %v8242
      %v8298 = vadd.f32 %v8020, %v8245
      %v8299 = vadd.f32 %v8021, %v8248
      %v8300 = vadd.f32 %v8022, %v8251
      %v8301 = vadd.f32 %v8023, %v8254
      %v8302 = vadd.f32 %v8024, %v8257
      %v8303 = vadd.f32 %v8025, %v8260
      %v8304 = vadd.f32 %v8026, %v8263
      %v8305 = vadd.f32 %v8027, %v8266
      %v8306 = vadd.f32 %v8028, %v8269
      %v8307 = vadd.f32 %v8029, %v8272
      %v8308 = vadd.f32 %v8030, %v8275
      %v8309 = vld [vmem:[%s2543] sm:$0xff]
      %v8310 = vld [vmem:[%s2543 + $0x8] sm:$0xff]
      %v8311 = vld [vmem:[%s2543 + $0x18] sm:$0xff]
      %v8312 = vld [vmem:[%s2543 + $0x20] sm:$0xff]
      %v8313 = vld [vmem:[%s2543 + $0x30] sm:$0xff]
      %v8314 = vld [vmem:[%s2543 + $0x38] sm:$0xff]
      %v8315 = vld [vmem:[%s2543 + $0x48] sm:$0xff]
      %v8316 = vld [vmem:[%s2543 + $0x50] sm:$0xff]
      %v8317 = vld [vmem:[%s2543 + $0x60] sm:$0xff]
      %v8318 = vld [vmem:[%s2543 + $0x68] sm:$0xff]
      %v8319 = vld [vmem:[%s2543 + $0x78] sm:$0xff]
      %v8320 = vld [vmem:[%s2543 + $0x80] sm:$0xff]
      %v8321 = vld [vmem:[%s2543 + $0x90] sm:$0xff]
      %v8322 = vld [vmem:[%s2543 + $0x98] sm:$0xff]
      %v8323 = vld [vmem:[%s2543 + $0xa8] sm:$0xff]
      %v8324 = vld [vmem:[%s2543 + $0xb0] sm:$0xff]
      %v8325 = vld [vmem:[%s2543 + $0xc0] sm:$0xff]
      %v8326 = vld [vmem:[%s2543 + $0xc8] sm:$0xff]
      %v8327 = vld [vmem:[%s2543 + $0xd8] sm:$0xff]
      %v8328 = vld [vmem:[%s2543 + $0xe0] sm:$0xff]
      %v8329 = vld [vmem:[%s2543 + $0xf0] sm:$0xff]
      %v8330 = vld [vmem:[%s2543 + $0xf8] sm:$0xff]
      %v8331 = vld [vmem:[%s2543 + $0x108] sm:$0xff]
      %v8332 = vld [vmem:[%s2543 + $0x110] sm:$0xff]
      %v8333 = vld [vmem:[%s2543 + $0x120] sm:$0xff]
      %v8334 = vld [vmem:[%s2543 + $0x128] sm:$0xff]
      %v8335 = vld [vmem:[%s2543 + $0x138] sm:$0xff]
      %v8336 = vld [vmem:[%s2543 + $0x140] sm:$0xff]
      %v8337 = vld [vmem:[%s2543 + $0x150] sm:$0xff]
      %v8338 = vld [vmem:[%s2543 + $0x158] sm:$0xff]
      %v8339 = vld [vmem:[%s2543 + $0x168] sm:$0xff]
      %v8340 = vld [vmem:[%s2543 + $0x170] sm:$0xff]
      %s8341 = scalar_lea.vmem %s4, 96
      %v8342 = vld [vmem:[%s8341] sm:$0xff]
      %v8343 = vld [vmem:[%s8341 + $0x8] sm:$0xff]
      %v8344 = vld [vmem:[%s8341 + $0x10] sm:$0xff]
      %v8345 = vld [vmem:[%s8341 + $0x18] sm:$0xff]
      %v8347 = vsel %vm962, %v8309, 0
      %v8350 = vsel %vm962, %v8310, 0
      %v8353 = vsel %vm962, %v8311, 0
      %v8356 = vsel %vm962, %v8312, 0
      %v8359 = vsel %vm962, %v8313, 0
      %v8362 = vsel %vm962, %v8314, 0
      %v8365 = vsel %vm962, %v8315, 0
      %v8368 = vsel %vm962, %v8316, 0
      %v8371 = vsel %vm962, %v8317, 0
      %v8374 = vsel %vm962, %v8318, 0
      %v8377 = vsel %vm962, %v8319, 0
      %v8380 = vsel %vm962, %v8320, 0
      %v8383 = vsel %vm962, %v8321, 0
      %v8386 = vsel %vm962, %v8322, 0
      %v8389 = vsel %vm962, %v8323, 0
      %v8392 = vsel %vm962, %v8324, 0
      %v8395 = vsel %vm962, %v8325, 0
      %v8398 = vsel %vm962, %v8326, 0
      %v8401 = vsel %vm962, %v8327, 0
      %v8404 = vsel %vm962, %v8328, 0
      %v8407 = vsel %vm962, %v8329, 0
      %v8410 = vsel %vm962, %v8330, 0
      %v8413 = vsel %vm962, %v8331, 0
      %v8416 = vsel %vm962, %v8332, 0
      %v8419 = vsel %vm962, %v8333, 0
      %v8422 = vsel %vm962, %v8334, 0
      %v8425 = vsel %vm962, %v8335, 0
      %v8428 = vsel %vm962, %v8336, 0
      %v8431 = vsel %vm962, %v8337, 0
      %v8434 = vsel %vm962, %v8338, 0
      %v8437 = vsel %vm962, %v8339, 0
      %v8440 = vsel %vm962, %v8340, 0
      %8442 = vmatpush.msra.mxu0 0.0
      %8443 = vmatpush.msra.mxu0 0.0
      %8444 = vmatpush.msra.mxu0 0.0
      %8445 = vmatpush.msra.mxu0 0.0
      %8446 = vmatpush.msra.mxu0 0.0
      %8447 = vmatpush.msra.mxu0 0.0
      %8448 = vmatpush.msra.mxu0 0.0
      %8449 = vmatpush.msra.mxu0 0.0
      %8450 = vmatpush.msra.mxu0 0.0
      %8451 = vmatpush.msra.mxu0 0.0
      %8452 = vmatpush.msra.mxu0 0.0
      %8453 = vmatpush.msra.mxu0 0.0
      %8454 = vmatpush.msra.mxu0 %v8345
      %8455 = vmatpush.msra.mxu0 %v8344
      %8456 = vmatpush.msra.mxu0 %v8343
      %8457 = vmatpush.msra.mxu0 %v8342
      %8458 = vmatmul.f32.gmra.mxu0 %v8347
      %v8459 = vpop.f32.mrf.mxu0
      %v8460 = vadd.f32 0.0, %v8459
      %8461 = vmatmul.f32.gmra.mxu0 %v8350
      %v8462 = vpop.f32.mrf.mxu0
      %v8463 = vadd.f32 0.0, %v8462
      %8464 = vmatmul.f32.gmra.mxu0 %v8353
      %v8465 = vpop.f32.mrf.mxu0
      %v8466 = vadd.f32 0.0, %v8465
      %8467 = vmatmul.f32.gmra.mxu0 %v8356
      %v8468 = vpop.f32.mrf.mxu0
      %v8469 = vadd.f32 0.0, %v8468
      %8470 = vmatmul.f32.gmra.mxu0 %v8359
      %v8471 = vpop.f32.mrf.mxu0
      %v8472 = vadd.f32 0.0, %v8471
      %8473 = vmatmul.f32.gmra.mxu0 %v8362
      %v8474 = vpop.f32.mrf.mxu0
      %v8475 = vadd.f32 0.0, %v8474
      %8476 = vmatmul.f32.gmra.mxu0 %v8365
      %v8477 = vpop.f32.mrf.mxu0
      %v8478 = vadd.f32 0.0, %v8477
      %8479 = vmatmul.f32.gmra.mxu0 %v8368
      %v8480 = vpop.f32.mrf.mxu0
      %v8481 = vadd.f32 0.0, %v8480
      %8482 = vmatmul.f32.gmra.mxu0 %v8371
      %v8483 = vpop.f32.mrf.mxu0
      %v8484 = vadd.f32 0.0, %v8483
      %8485 = vmatmul.f32.gmra.mxu0 %v8374
      %v8486 = vpop.f32.mrf.mxu0
      %v8487 = vadd.f32 0.0, %v8486
      %8488 = vmatmul.f32.gmra.mxu0 %v8377
      %v8489 = vpop.f32.mrf.mxu0
      %v8490 = vadd.f32 0.0, %v8489
      %8491 = vmatmul.f32.gmra.mxu0 %v8380
      %v8492 = vpop.f32.mrf.mxu0
      %v8493 = vadd.f32 0.0, %v8492
      %8494 = vmatmul.f32.gmra.mxu0 %v8383
      %v8495 = vpop.f32.mrf.mxu0
      %v8496 = vadd.f32 0.0, %v8495
      %8497 = vmatmul.f32.gmra.mxu0 %v8386
      %v8498 = vpop.f32.mrf.mxu0
      %v8499 = vadd.f32 0.0, %v8498
      %8500 = vmatmul.f32.gmra.mxu0 %v8389
      %v8501 = vpop.f32.mrf.mxu0
      %v8502 = vadd.f32 0.0, %v8501
      %8503 = vmatmul.f32.gmra.mxu0 %v8392
      %v8504 = vpop.f32.mrf.mxu0
      %v8505 = vadd.f32 0.0, %v8504
      %8506 = vmatmul.f32.gmra.mxu0 %v8395
      %v8507 = vpop.f32.mrf.mxu0
      %v8508 = vadd.f32 0.0, %v8507
      %8509 = vmatmul.f32.gmra.mxu0 %v8398
      %v8510 = vpop.f32.mrf.mxu0
      %v8511 = vadd.f32 0.0, %v8510
      %8512 = vmatmul.f32.gmra.mxu0 %v8401
      %v8513 = vpop.f32.mrf.mxu0
      %v8514 = vadd.f32 0.0, %v8513
      %8515 = vmatmul.f32.gmra.mxu0 %v8404
      %v8516 = vpop.f32.mrf.mxu0
      %v8517 = vadd.f32 0.0, %v8516
      %8518 = vmatmul.f32.gmra.mxu0 %v8407
      %v8519 = vpop.f32.mrf.mxu0
      %v8520 = vadd.f32 0.0, %v8519
      %8521 = vmatmul.f32.gmra.mxu0 %v8410
      %v8522 = vpop.f32.mrf.mxu0
      %v8523 = vadd.f32 0.0, %v8522
      %8524 = vmatmul.f32.gmra.mxu0 %v8413
      %v8525 = vpop.f32.mrf.mxu0
      %v8526 = vadd.f32 0.0, %v8525
      %8527 = vmatmul.f32.gmra.mxu0 %v8416
      %v8528 = vpop.f32.mrf.mxu0
      %v8529 = vadd.f32 0.0, %v8528
      %8530 = vmatmul.f32.gmra.mxu0 %v8419
      %v8531 = vpop.f32.mrf.mxu0
      %v8532 = vadd.f32 0.0, %v8531
      %8533 = vmatmul.f32.gmra.mxu0 %v8422
      %v8534 = vpop.f32.mrf.mxu0
      %v8535 = vadd.f32 0.0, %v8534
      %8536 = vmatmul.f32.gmra.mxu0 %v8425
      %v8537 = vpop.f32.mrf.mxu0
      %v8538 = vadd.f32 0.0, %v8537
      %8539 = vmatmul.f32.gmra.mxu0 %v8428
      %v8540 = vpop.f32.mrf.mxu0
      %v8541 = vadd.f32 0.0, %v8540
      %8542 = vmatmul.f32.gmra.mxu0 %v8431
      %v8543 = vpop.f32.mrf.mxu0
      %v8544 = vadd.f32 0.0, %v8543
      %8545 = vmatmul.f32.gmra.mxu0 %v8434
      %v8546 = vpop.f32.mrf.mxu0
      %v8547 = vadd.f32 0.0, %v8546
      %8548 = vmatmul.f32.gmra.mxu0 %v8437
      %v8549 = vpop.f32.mrf.mxu0
      %v8550 = vadd.f32 0.0, %v8549
      %8551 = vmatmul.f32.gmra.mxu0 %v8440
      %v8552 = vpop.f32.mrf.mxu0
      %v8553 = vadd.f32 0.0, %v8552
      %8554 = vdwg.mxu0
      %v8555 = vadd.f32 %v8277, %v8460
      %v8556 = vadd.f32 %v8278, %v8463
      %v8557 = vadd.f32 %v8279, %v8466
      %v8558 = vadd.f32 %v8280, %v8469
      %v8559 = vadd.f32 %v8281, %v8472
      %v8560 = vadd.f32 %v8282, %v8475
      %v8561 = vadd.f32 %v8283, %v8478
      %v8562 = vadd.f32 %v8284, %v8481
      %v8563 = vadd.f32 %v8285, %v8484
      %v8564 = vadd.f32 %v8286, %v8487
      %v8565 = vadd.f32 %v8287, %v8490
      %v8566 = vadd.f32 %v8288, %v8493
      %v8567 = vadd.f32 %v8289, %v8496
      %v8568 = vadd.f32 %v8290, %v8499
      %v8569 = vadd.f32 %v8291, %v8502
      %v8570 = vadd.f32 %v8292, %v8505
      %v8571 = vadd.f32 %v8293, %v8508
      %v8572 = vadd.f32 %v8294, %v8511
      %v8573 = vadd.f32 %v8295, %v8514
      %v8574 = vadd.f32 %v8296, %v8517
      %v8575 = vadd.f32 %v8297, %v8520
      %v8576 = vadd.f32 %v8298, %v8523
      %v8577 = vadd.f32 %v8299, %v8526
      %v8578 = vadd.f32 %v8300, %v8529
      %v8579 = vadd.f32 %v8301, %v8532
      %v8580 = vadd.f32 %v8302, %v8535
      %v8581 = vadd.f32 %v8303, %v8538
      %v8582 = vadd.f32 %v8304, %v8541
      %v8583 = vadd.f32 %v8305, %v8544
      %v8584 = vadd.f32 %v8306, %v8547
      %v8585 = vadd.f32 %v8307, %v8550
      %v8586 = vadd.f32 %v8308, %v8553
      %s8587 = scalar_lea.vmem [#allocation4], 24
      %v8588 = vld [vmem:[%s8587] sm:$0xff]
      %v8589 = vld [vmem:[%s8587 + $0x8] sm:$0xff]
      %v8590 = vld [vmem:[%s8587 + $0x18] sm:$0xff]
      %v8591 = vld [vmem:[%s8587 + $0x20] sm:$0xff]
      %v8592 = vld [vmem:[%s8587 + $0x30] sm:$0xff]
      %v8593 = vld [vmem:[%s8587 + $0x38] sm:$0xff]
      %v8594 = vld [vmem:[%s8587 + $0x48] sm:$0xff]
      %v8595 = vld [vmem:[%s8587 + $0x50] sm:$0xff]
      %v8596 = vld [vmem:[%s8587 + $0x60] sm:$0xff]
      %v8597 = vld [vmem:[%s8587 + $0x68] sm:$0xff]
      %v8598 = vld [vmem:[%s8587 + $0x78] sm:$0xff]
      %v8599 = vld [vmem:[%s8587 + $0x80] sm:$0xff]
      %v8600 = vld [vmem:[%s8587 + $0x90] sm:$0xff]
      %v8601 = vld [vmem:[%s8587 + $0x98] sm:$0xff]
      %v8602 = vld [vmem:[%s8587 + $0xa8] sm:$0xff]
      %v8603 = vld [vmem:[%s8587 + $0xb0] sm:$0xff]
      %v8604 = vld [vmem:[%s8587 + $0xc0] sm:$0xff]
      %v8605 = vld [vmem:[%s8587 + $0xc8] sm:$0xff]
      %v8606 = vld [vmem:[%s8587 + $0xd8] sm:$0xff]
      %v8607 = vld [vmem:[%s8587 + $0xe0] sm:$0xff]
      %v8608 = vld [vmem:[%s8587 + $0xf0] sm:$0xff]
      %v8609 = vld [vmem:[%s8587 + $0xf8] sm:$0xff]
      %v8610 = vld [vmem:[%s8587 + $0x108] sm:$0xff]
      %v8611 = vld [vmem:[%s8587 + $0x110] sm:$0xff]
      %v8612 = vld [vmem:[%s8587 + $0x120] sm:$0xff]
      %v8613 = vld [vmem:[%s8587 + $0x128] sm:$0xff]
      %v8614 = vld [vmem:[%s8587 + $0x138] sm:$0xff]
      %v8615 = vld [vmem:[%s8587 + $0x140] sm:$0xff]
      %v8616 = vld [vmem:[%s8587 + $0x150] sm:$0xff]
      %v8617 = vld [vmem:[%s8587 + $0x158] sm:$0xff]
      %v8618 = vld [vmem:[%s8587 + $0x168] sm:$0xff]
      %v8619 = vld [vmem:[%s8587 + $0x170] sm:$0xff]
      %s8620 = scalar_lea.vmem %s5, 96
      %v8621 = vld [vmem:[%s8620] sm:$0xff]
      %v8622 = vld [vmem:[%s8620 + $0x8] sm:$0xff]
      %v8623 = vld [vmem:[%s8620 + $0x10] sm:$0xff]
      %v8624 = vld [vmem:[%s8620 + $0x18] sm:$0xff]
      %v8626 = vsel %vm962, %v8588, 0
      %v8629 = vsel %vm962, %v8589, 0
      %v8632 = vsel %vm962, %v8590, 0
      %v8635 = vsel %vm962, %v8591, 0
      %v8638 = vsel %vm962, %v8592, 0
      %v8641 = vsel %vm962, %v8593, 0
      %v8644 = vsel %vm962, %v8594, 0
      %v8647 = vsel %vm962, %v8595, 0
      %v8650 = vsel %vm962, %v8596, 0
      %v8653 = vsel %vm962, %v8597, 0
      %v8656 = vsel %vm962, %v8598, 0
      %v8659 = vsel %vm962, %v8599, 0
      %v8662 = vsel %vm962, %v8600, 0
      %v8665 = vsel %vm962, %v8601, 0
      %v8668 = vsel %vm962, %v8602, 0
      %v8671 = vsel %vm962, %v8603, 0
      %v8674 = vsel %vm962, %v8604, 0
      %v8677 = vsel %vm962, %v8605, 0
      %v8680 = vsel %vm962, %v8606, 0
      %v8683 = vsel %vm962, %v8607, 0
      %v8686 = vsel %vm962, %v8608, 0
      %v8689 = vsel %vm962, %v8609, 0
      %v8692 = vsel %vm962, %v8610, 0
      %v8695 = vsel %vm962, %v8611, 0
      %v8698 = vsel %vm962, %v8612, 0
      %v8701 = vsel %vm962, %v8613, 0
      %v8704 = vsel %vm962, %v8614, 0
      %v8707 = vsel %vm962, %v8615, 0
      %v8710 = vsel %vm962, %v8616, 0
      %v8713 = vsel %vm962, %v8617, 0
      %v8716 = vsel %vm962, %v8618, 0
      %v8719 = vsel %vm962, %v8619, 0
      %8721 = vmatpush.msra.mxu0 0.0
      %8722 = vmatpush.msra.mxu0 0.0
      %8723 = vmatpush.msra.mxu0 0.0
      %8724 = vmatpush.msra.mxu0 0.0
      %8725 = vmatpush.msra.mxu0 0.0
      %8726 = vmatpush.msra.mxu0 0.0
      %8727 = vmatpush.msra.mxu0 0.0
      %8728 = vmatpush.msra.mxu0 0.0
      %8729 = vmatpush.msra.mxu0 0.0
      %8730 = vmatpush.msra.mxu0 0.0
      %8731 = vmatpush.msra.mxu0 0.0
      %8732 = vmatpush.msra.mxu0 0.0
      %8733 = vmatpush.msra.mxu0 %v8624
      %8734 = vmatpush.msra.mxu0 %v8623
      %8735 = vmatpush.msra.mxu0 %v8622
      %8736 = vmatpush.msra.mxu0 %v8621
      %8737 = vmatmul.f32.gmra.mxu0 %v8626
      %v8738 = vpop.f32.mrf.mxu0
      %v8739 = vadd.f32 0.0, %v8738
      %8740 = vmatmul.f32.gmra.mxu0 %v8629
      %v8741 = vpop.f32.mrf.mxu0
      %v8742 = vadd.f32 0.0, %v8741
      %8743 = vmatmul.f32.gmra.mxu0 %v8632
      %v8744 = vpop.f32.mrf.mxu0
      %v8745 = vadd.f32 0.0, %v8744
      %8746 = vmatmul.f32.gmra.mxu0 %v8635
      %v8747 = vpop.f32.mrf.mxu0
      %v8748 = vadd.f32 0.0, %v8747
      %8749 = vmatmul.f32.gmra.mxu0 %v8638
      %v8750 = vpop.f32.mrf.mxu0
      %v8751 = vadd.f32 0.0, %v8750
      %8752 = vmatmul.f32.gmra.mxu0 %v8641
      %v8753 = vpop.f32.mrf.mxu0
      %v8754 = vadd.f32 0.0, %v8753
      %8755 = vmatmul.f32.gmra.mxu0 %v8644
      %v8756 = vpop.f32.mrf.mxu0
      %v8757 = vadd.f32 0.0, %v8756
      %8758 = vmatmul.f32.gmra.mxu0 %v8647
      %v8759 = vpop.f32.mrf.mxu0
      %v8760 = vadd.f32 0.0, %v8759
      %8761 = vmatmul.f32.gmra.mxu0 %v8650
      %v8762 = vpop.f32.mrf.mxu0
      %v8763 = vadd.f32 0.0, %v8762
      %8764 = vmatmul.f32.gmra.mxu0 %v8653
      %v8765 = vpop.f32.mrf.mxu0
      %v8766 = vadd.f32 0.0, %v8765
      %8767 = vmatmul.f32.gmra.mxu0 %v8656
      %v8768 = vpop.f32.mrf.mxu0
      %v8769 = vadd.f32 0.0, %v8768
      %8770 = vmatmul.f32.gmra.mxu0 %v8659
      %v8771 = vpop.f32.mrf.mxu0
      %v8772 = vadd.f32 0.0, %v8771
      %8773 = vmatmul.f32.gmra.mxu0 %v8662
      %v8774 = vpop.f32.mrf.mxu0
      %v8775 = vadd.f32 0.0, %v8774
      %8776 = vmatmul.f32.gmra.mxu0 %v8665
      %v8777 = vpop.f32.mrf.mxu0
      %v8778 = vadd.f32 0.0, %v8777
      %8779 = vmatmul.f32.gmra.mxu0 %v8668
      %v8780 = vpop.f32.mrf.mxu0
      %v8781 = vadd.f32 0.0, %v8780
      %8782 = vmatmul.f32.gmra.mxu0 %v8671
      %v8783 = vpop.f32.mrf.mxu0
      %v8784 = vadd.f32 0.0, %v8783
      %8785 = vmatmul.f32.gmra.mxu0 %v8674
      %v8786 = vpop.f32.mrf.mxu0
      %v8787 = vadd.f32 0.0, %v8786
      %8788 = vmatmul.f32.gmra.mxu0 %v8677
      %v8789 = vpop.f32.mrf.mxu0
      %v8790 = vadd.f32 0.0, %v8789
      %8791 = vmatmul.f32.gmra.mxu0 %v8680
      %v8792 = vpop.f32.mrf.mxu0
      %v8793 = vadd.f32 0.0, %v8792
      %8794 = vmatmul.f32.gmra.mxu0 %v8683
      %v8795 = vpop.f32.mrf.mxu0
      %v8796 = vadd.f32 0.0, %v8795
      %8797 = vmatmul.f32.gmra.mxu0 %v8686
      %v8798 = vpop.f32.mrf.mxu0
      %v8799 = vadd.f32 0.0, %v8798
      %8800 = vmatmul.f32.gmra.mxu0 %v8689
      %v8801 = vpop.f32.mrf.mxu0
      %v8802 = vadd.f32 0.0, %v8801
      %8803 = vmatmul.f32.gmra.mxu0 %v8692
      %v8804 = vpop.f32.mrf.mxu0
      %v8805 = vadd.f32 0.0, %v8804
      %8806 = vmatmul.f32.gmra.mxu0 %v8695
      %v8807 = vpop.f32.mrf.mxu0
      %v8808 = vadd.f32 0.0, %v8807
      %8809 = vmatmul.f32.gmra.mxu0 %v8698
      %v8810 = vpop.f32.mrf.mxu0
      %v8811 = vadd.f32 0.0, %v8810
      %8812 = vmatmul.f32.gmra.mxu0 %v8701
      %v8813 = vpop.f32.mrf.mxu0
      %v8814 = vadd.f32 0.0, %v8813
      %8815 = vmatmul.f32.gmra.mxu0 %v8704
      %v8816 = vpop.f32.mrf.mxu0
      %v8817 = vadd.f32 0.0, %v8816
      %8818 = vmatmul.f32.gmra.mxu0 %v8707
      %v8819 = vpop.f32.mrf.mxu0
      %v8820 = vadd.f32 0.0, %v8819
      %8821 = vmatmul.f32.gmra.mxu0 %v8710
      %v8822 = vpop.f32.mrf.mxu0
      %v8823 = vadd.f32 0.0, %v8822
      %8824 = vmatmul.f32.gmra.mxu0 %v8713
      %v8825 = vpop.f32.mrf.mxu0
      %v8826 = vadd.f32 0.0, %v8825
      %8827 = vmatmul.f32.gmra.mxu0 %v8716
      %v8828 = vpop.f32.mrf.mxu0
      %v8829 = vadd.f32 0.0, %v8828
      %8830 = vmatmul.f32.gmra.mxu0 %v8719
      %v8831 = vpop.f32.mrf.mxu0
      %v8832 = vadd.f32 0.0, %v8831
      %8833 = vdwg.mxu0
      %v8834 = vadd.f32 %v8555, %v8739
      %v8835 = vadd.f32 %v8556, %v8742
      %v8836 = vadd.f32 %v8557, %v8745
      %v8837 = vadd.f32 %v8558, %v8748
      %v8838 = vadd.f32 %v8559, %v8751
      %v8839 = vadd.f32 %v8560, %v8754
      %v8840 = vadd.f32 %v8561, %v8757
      %v8841 = vadd.f32 %v8562, %v8760
      %v8842 = vadd.f32 %v8563, %v8763
      %v8843 = vadd.f32 %v8564, %v8766
      %v8844 = vadd.f32 %v8565, %v8769
      %v8845 = vadd.f32 %v8566, %v8772
      %v8846 = vadd.f32 %v8567, %v8775
      %v8847 = vadd.f32 %v8568, %v8778
      %v8848 = vadd.f32 %v8569, %v8781
      %v8849 = vadd.f32 %v8570, %v8784
      %v8850 = vadd.f32 %v8571, %v8787
      %v8851 = vadd.f32 %v8572, %v8790
      %v8852 = vadd.f32 %v8573, %v8793
      %v8853 = vadd.f32 %v8574, %v8796
      %v8854 = vadd.f32 %v8575, %v8799
      %v8855 = vadd.f32 %v8576, %v8802
      %v8856 = vadd.f32 %v8577, %v8805
      %v8857 = vadd.f32 %v8578, %v8808
      %v8858 = vadd.f32 %v8579, %v8811
      %v8859 = vadd.f32 %v8580, %v8814
      %v8860 = vadd.f32 %v8581, %v8817
      %v8861 = vadd.f32 %v8582, %v8820
      %v8862 = vadd.f32 %v8583, %v8823
      %v8863 = vadd.f32 %v8584, %v8826
      %v8864 = vadd.f32 %v8585, %v8829
      %v8865 = vadd.f32 %v8586, %v8832
      %v8866 = vld [vmem:[%s2543 + $0x1] sm:$0xff]
      %v8867 = vld [vmem:[%s2543 + $0x9] sm:$0xff]
      %v8868 = vld [vmem:[%s2543 + $0x19] sm:$0xff]
      %v8869 = vld [vmem:[%s2543 + $0x21] sm:$0xff]
      %v8870 = vld [vmem:[%s2543 + $0x31] sm:$0xff]
      %v8871 = vld [vmem:[%s2543 + $0x39] sm:$0xff]
      %v8872 = vld [vmem:[%s2543 + $0x49] sm:$0xff]
      %v8873 = vld [vmem:[%s2543 + $0x51] sm:$0xff]
      %v8874 = vld [vmem:[%s2543 + $0x61] sm:$0xff]
      %v8875 = vld [vmem:[%s2543 + $0x69] sm:$0xff]
      %v8876 = vld [vmem:[%s2543 + $0x79] sm:$0xff]
      %v8877 = vld [vmem:[%s2543 + $0x81] sm:$0xff]
      %v8878 = vld [vmem:[%s2543 + $0x91] sm:$0xff]
      %v8879 = vld [vmem:[%s2543 + $0x99] sm:$0xff]
      %v8880 = vld [vmem:[%s2543 + $0xa9] sm:$0xff]
      %v8881 = vld [vmem:[%s2543 + $0xb1] sm:$0xff]
      %v8882 = vld [vmem:[%s2543 + $0xc1] sm:$0xff]
      %v8883 = vld [vmem:[%s2543 + $0xc9] sm:$0xff]
      %v8884 = vld [vmem:[%s2543 + $0xd9] sm:$0xff]
      %v8885 = vld [vmem:[%s2543 + $0xe1] sm:$0xff]
      %v8886 = vld [vmem:[%s2543 + $0xf1] sm:$0xff]
      %v8887 = vld [vmem:[%s2543 + $0xf9] sm:$0xff]
      %v8888 = vld [vmem:[%s2543 + $0x109] sm:$0xff]
      %v8889 = vld [vmem:[%s2543 + $0x111] sm:$0xff]
      %v8890 = vld [vmem:[%s2543 + $0x121] sm:$0xff]
      %v8891 = vld [vmem:[%s2543 + $0x129] sm:$0xff]
      %v8892 = vld [vmem:[%s2543 + $0x139] sm:$0xff]
      %v8893 = vld [vmem:[%s2543 + $0x141] sm:$0xff]
      %v8894 = vld [vmem:[%s2543 + $0x151] sm:$0xff]
      %v8895 = vld [vmem:[%s2543 + $0x159] sm:$0xff]
      %v8896 = vld [vmem:[%s2543 + $0x169] sm:$0xff]
      %v8897 = vld [vmem:[%s2543 + $0x171] sm:$0xff]
      %s8898 = scalar_lea.vmem %s4, 128
      %v8899 = vld [vmem:[%s8898] sm:$0xff]
      %v8900 = vld [vmem:[%s8898 + $0x8] sm:$0xff]
      %v8901 = vld [vmem:[%s8898 + $0x10] sm:$0xff]
      %v8902 = vld [vmem:[%s8898 + $0x18] sm:$0xff]
      %v8904 = vsel %vm962, %v8866, 0
      %v8907 = vsel %vm962, %v8867, 0
      %v8910 = vsel %vm962, %v8868, 0
      %v8913 = vsel %vm962, %v8869, 0
      %v8916 = vsel %vm962, %v8870, 0
      %v8919 = vsel %vm962, %v8871, 0
      %v8922 = vsel %vm962, %v8872, 0
      %v8925 = vsel %vm962, %v8873, 0
      %v8928 = vsel %vm962, %v8874, 0
      %v8931 = vsel %vm962, %v8875, 0
      %v8934 = vsel %vm962, %v8876, 0
      %v8937 = vsel %vm962, %v8877, 0
      %v8940 = vsel %vm962, %v8878, 0
      %v8943 = vsel %vm962, %v8879, 0
      %v8946 = vsel %vm962, %v8880, 0
      %v8949 = vsel %vm962, %v8881, 0
      %v8952 = vsel %vm962, %v8882, 0
      %v8955 = vsel %vm962, %v8883, 0
      %v8958 = vsel %vm962, %v8884, 0
      %v8961 = vsel %vm962, %v8885, 0
      %v8964 = vsel %vm962, %v8886, 0
      %v8967 = vsel %vm962, %v8887, 0
      %v8970 = vsel %vm962, %v8888, 0
      %v8973 = vsel %vm962, %v8889, 0
      %v8976 = vsel %vm962, %v8890, 0
      %v8979 = vsel %vm962, %v8891, 0
      %v8982 = vsel %vm962, %v8892, 0
      %v8985 = vsel %vm962, %v8893, 0
      %v8988 = vsel %vm962, %v8894, 0
      %v8991 = vsel %vm962, %v8895, 0
      %v8994 = vsel %vm962, %v8896, 0
      %v8997 = vsel %vm962, %v8897, 0
      %8999 = vmatpush.msra.mxu0 0.0
      %9000 = vmatpush.msra.mxu0 0.0
      %9001 = vmatpush.msra.mxu0 0.0
      %9002 = vmatpush.msra.mxu0 0.0
      %9003 = vmatpush.msra.mxu0 0.0
      %9004 = vmatpush.msra.mxu0 0.0
      %9005 = vmatpush.msra.mxu0 0.0
      %9006 = vmatpush.msra.mxu0 0.0
      %9007 = vmatpush.msra.mxu0 0.0
      %9008 = vmatpush.msra.mxu0 0.0
      %9009 = vmatpush.msra.mxu0 0.0
      %9010 = vmatpush.msra.mxu0 0.0
      %9011 = vmatpush.msra.mxu0 %v8902
      %9012 = vmatpush.msra.mxu0 %v8901
      %9013 = vmatpush.msra.mxu0 %v8900
      %9014 = vmatpush.msra.mxu0 %v8899
      %9015 = vmatmul.f32.gmra.mxu0 %v8904
      %v9016 = vpop.f32.mrf.mxu0
      %v9017 = vadd.f32 0.0, %v9016
      %9018 = vmatmul.f32.gmra.mxu0 %v8907
      %v9019 = vpop.f32.mrf.mxu0
      %v9020 = vadd.f32 0.0, %v9019
      %9021 = vmatmul.f32.gmra.mxu0 %v8910
      %v9022 = vpop.f32.mrf.mxu0
      %v9023 = vadd.f32 0.0, %v9022
      %9024 = vmatmul.f32.gmra.mxu0 %v8913
      %v9025 = vpop.f32.mrf.mxu0
      %v9026 = vadd.f32 0.0, %v9025
      %9027 = vmatmul.f32.gmra.mxu0 %v8916
      %v9028 = vpop.f32.mrf.mxu0
      %v9029 = vadd.f32 0.0, %v9028
      %9030 = vmatmul.f32.gmra.mxu0 %v8919
      %v9031 = vpop.f32.mrf.mxu0
      %v9032 = vadd.f32 0.0, %v9031
      %9033 = vmatmul.f32.gmra.mxu0 %v8922
      %v9034 = vpop.f32.mrf.mxu0
      %v9035 = vadd.f32 0.0, %v9034
      %9036 = vmatmul.f32.gmra.mxu0 %v8925
      %v9037 = vpop.f32.mrf.mxu0
      %v9038 = vadd.f32 0.0, %v9037
      %9039 = vmatmul.f32.gmra.mxu0 %v8928
      %v9040 = vpop.f32.mrf.mxu0
      %v9041 = vadd.f32 0.0, %v9040
      %9042 = vmatmul.f32.gmra.mxu0 %v8931
      %v9043 = vpop.f32.mrf.mxu0
      %v9044 = vadd.f32 0.0, %v9043
      %9045 = vmatmul.f32.gmra.mxu0 %v8934
      %v9046 = vpop.f32.mrf.mxu0
      %v9047 = vadd.f32 0.0, %v9046
      %9048 = vmatmul.f32.gmra.mxu0 %v8937
      %v9049 = vpop.f32.mrf.mxu0
      %v9050 = vadd.f32 0.0, %v9049
      %9051 = vmatmul.f32.gmra.mxu0 %v8940
      %v9052 = vpop.f32.mrf.mxu0
      %v9053 = vadd.f32 0.0, %v9052
      %9054 = vmatmul.f32.gmra.mxu0 %v8943
      %v9055 = vpop.f32.mrf.mxu0
      %v9056 = vadd.f32 0.0, %v9055
      %9057 = vmatmul.f32.gmra.mxu0 %v8946
      %v9058 = vpop.f32.mrf.mxu0
      %v9059 = vadd.f32 0.0, %v9058
      %9060 = vmatmul.f32.gmra.mxu0 %v8949
      %v9061 = vpop.f32.mrf.mxu0
      %v9062 = vadd.f32 0.0, %v9061
      %9063 = vmatmul.f32.gmra.mxu0 %v8952
      %v9064 = vpop.f32.mrf.mxu0
      %v9065 = vadd.f32 0.0, %v9064
      %9066 = vmatmul.f32.gmra.mxu0 %v8955
      %v9067 = vpop.f32.mrf.mxu0
      %v9068 = vadd.f32 0.0, %v9067
      %9069 = vmatmul.f32.gmra.mxu0 %v8958
      %v9070 = vpop.f32.mrf.mxu0
      %v9071 = vadd.f32 0.0, %v9070
      %9072 = vmatmul.f32.gmra.mxu0 %v8961
      %v9073 = vpop.f32.mrf.mxu0
      %v9074 = vadd.f32 0.0, %v9073
      %9075 = vmatmul.f32.gmra.mxu0 %v8964
      %v9076 = vpop.f32.mrf.mxu0
      %v9077 = vadd.f32 0.0, %v9076
      %9078 = vmatmul.f32.gmra.mxu0 %v8967
      %v9079 = vpop.f32.mrf.mxu0
      %v9080 = vadd.f32 0.0, %v9079
      %9081 = vmatmul.f32.gmra.mxu0 %v8970
      %v9082 = vpop.f32.mrf.mxu0
      %v9083 = vadd.f32 0.0, %v9082
      %9084 = vmatmul.f32.gmra.mxu0 %v8973
      %v9085 = vpop.f32.mrf.mxu0
      %v9086 = vadd.f32 0.0, %v9085
      %9087 = vmatmul.f32.gmra.mxu0 %v8976
      %v9088 = vpop.f32.mrf.mxu0
      %v9089 = vadd.f32 0.0, %v9088
      %9090 = vmatmul.f32.gmra.mxu0 %v8979
      %v9091 = vpop.f32.mrf.mxu0
      %v9092 = vadd.f32 0.0, %v9091
      %9093 = vmatmul.f32.gmra.mxu0 %v8982
      %v9094 = vpop.f32.mrf.mxu0
      %v9095 = vadd.f32 0.0, %v9094
      %9096 = vmatmul.f32.gmra.mxu0 %v8985
      %v9097 = vpop.f32.mrf.mxu0
      %v9098 = vadd.f32 0.0, %v9097
      %9099 = vmatmul.f32.gmra.mxu0 %v8988
      %v9100 = vpop.f32.mrf.mxu0
      %v9101 = vadd.f32 0.0, %v9100
      %9102 = vmatmul.f32.gmra.mxu0 %v8991
      %v9103 = vpop.f32.mrf.mxu0
      %v9104 = vadd.f32 0.0, %v9103
      %9105 = vmatmul.f32.gmra.mxu0 %v8994
      %v9106 = vpop.f32.mrf.mxu0
      %v9107 = vadd.f32 0.0, %v9106
      %9108 = vmatmul.f32.gmra.mxu0 %v8997
      %v9109 = vpop.f32.mrf.mxu0
      %v9110 = vadd.f32 0.0, %v9109
      %9111 = vdwg.mxu0
      %v9112 = vadd.f32 %v8834, %v9017
      %v9113 = vadd.f32 %v8835, %v9020
      %v9114 = vadd.f32 %v8836, %v9023
      %v9115 = vadd.f32 %v8837, %v9026
      %v9116 = vadd.f32 %v8838, %v9029
      %v9117 = vadd.f32 %v8839, %v9032
      %v9118 = vadd.f32 %v8840, %v9035
      %v9119 = vadd.f32 %v8841, %v9038
      %v9120 = vadd.f32 %v8842, %v9041
      %v9121 = vadd.f32 %v8843, %v9044
      %v9122 = vadd.f32 %v8844, %v9047
      %v9123 = vadd.f32 %v8845, %v9050
      %v9124 = vadd.f32 %v8846, %v9053
      %v9125 = vadd.f32 %v8847, %v9056
      %v9126 = vadd.f32 %v8848, %v9059
      %v9127 = vadd.f32 %v8849, %v9062
      %v9128 = vadd.f32 %v8850, %v9065
      %v9129 = vadd.f32 %v8851, %v9068
      %v9130 = vadd.f32 %v8852, %v9071
      %v9131 = vadd.f32 %v8853, %v9074
      %v9132 = vadd.f32 %v8854, %v9077
      %v9133 = vadd.f32 %v8855, %v9080
      %v9134 = vadd.f32 %v8856, %v9083
      %v9135 = vadd.f32 %v8857, %v9086
      %v9136 = vadd.f32 %v8858, %v9089
      %v9137 = vadd.f32 %v8859, %v9092
      %v9138 = vadd.f32 %v8860, %v9095
      %v9139 = vadd.f32 %v8861, %v9098
      %v9140 = vadd.f32 %v8862, %v9101
      %v9141 = vadd.f32 %v8863, %v9104
      %v9142 = vadd.f32 %v8864, %v9107
      %v9143 = vadd.f32 %v8865, %v9110
      %v9144 = vld [vmem:[%s8587 + $0x1] sm:$0xff]
      %v9145 = vld [vmem:[%s8587 + $0x9] sm:$0xff]
      %v9146 = vld [vmem:[%s8587 + $0x19] sm:$0xff]
      %v9147 = vld [vmem:[%s8587 + $0x21] sm:$0xff]
      %v9148 = vld [vmem:[%s8587 + $0x31] sm:$0xff]
      %v9149 = vld [vmem:[%s8587 + $0x39] sm:$0xff]
      %v9150 = vld [vmem:[%s8587 + $0x49] sm:$0xff]
      %v9151 = vld [vmem:[%s8587 + $0x51] sm:$0xff]
      %v9152 = vld [vmem:[%s8587 + $0x61] sm:$0xff]
      %v9153 = vld [vmem:[%s8587 + $0x69] sm:$0xff]
      %v9154 = vld [vmem:[%s8587 + $0x79] sm:$0xff]
      %v9155 = vld [vmem:[%s8587 + $0x81] sm:$0xff]
      %v9156 = vld [vmem:[%s8587 + $0x91] sm:$0xff]
      %v9157 = vld [vmem:[%s8587 + $0x99] sm:$0xff]
      %v9158 = vld [vmem:[%s8587 + $0xa9] sm:$0xff]
      %v9159 = vld [vmem:[%s8587 + $0xb1] sm:$0xff]
      %v9160 = vld [vmem:[%s8587 + $0xc1] sm:$0xff]
      %v9161 = vld [vmem:[%s8587 + $0xc9] sm:$0xff]
      %v9162 = vld [vmem:[%s8587 + $0xd9] sm:$0xff]
      %v9163 = vld [vmem:[%s8587 + $0xe1] sm:$0xff]
      %v9164 = vld [vmem:[%s8587 + $0xf1] sm:$0xff]
      %v9165 = vld [vmem:[%s8587 + $0xf9] sm:$0xff]
      %v9166 = vld [vmem:[%s8587 + $0x109] sm:$0xff]
      %v9167 = vld [vmem:[%s8587 + $0x111] sm:$0xff]
      %v9168 = vld [vmem:[%s8587 + $0x121] sm:$0xff]
      %v9169 = vld [vmem:[%s8587 + $0x129] sm:$0xff]
      %v9170 = vld [vmem:[%s8587 + $0x139] sm:$0xff]
      %v9171 = vld [vmem:[%s8587 + $0x141] sm:$0xff]
      %v9172 = vld [vmem:[%s8587 + $0x151] sm:$0xff]
      %v9173 = vld [vmem:[%s8587 + $0x159] sm:$0xff]
      %v9174 = vld [vmem:[%s8587 + $0x169] sm:$0xff]
      %v9175 = vld [vmem:[%s8587 + $0x171] sm:$0xff]
      %s9176 = scalar_lea.vmem %s5, 128
      %v9177 = vld [vmem:[%s9176] sm:$0xff]
      %v9178 = vld [vmem:[%s9176 + $0x8] sm:$0xff]
      %v9179 = vld [vmem:[%s9176 + $0x10] sm:$0xff]
      %v9180 = vld [vmem:[%s9176 + $0x18] sm:$0xff]
      %v9182 = vsel %vm962, %v9144, 0
      %v9185 = vsel %vm962, %v9145, 0
      %v9188 = vsel %vm962, %v9146, 0
      %v9191 = vsel %vm962, %v9147, 0
      %v9194 = vsel %vm962, %v9148, 0
      %v9197 = vsel %vm962, %v9149, 0
      %v9200 = vsel %vm962, %v9150, 0
      %v9203 = vsel %vm962, %v9151, 0
      %v9206 = vsel %vm962, %v9152, 0
      %v9209 = vsel %vm962, %v9153, 0
      %v9212 = vsel %vm962, %v9154, 0
      %v9215 = vsel %vm962, %v9155, 0
      %v9218 = vsel %vm962, %v9156, 0
      %v9221 = vsel %vm962, %v9157, 0
      %v9224 = vsel %vm962, %v9158, 0
      %v9227 = vsel %vm962, %v9159, 0
      %v9230 = vsel %vm962, %v9160, 0
      %v9233 = vsel %vm962, %v9161, 0
      %v9236 = vsel %vm962, %v9162, 0
      %v9239 = vsel %vm962, %v9163, 0
      %v9242 = vsel %vm962, %v9164, 0
      %v9245 = vsel %vm962, %v9165, 0
      %v9248 = vsel %vm962, %v9166, 0
      %v9251 = vsel %vm962, %v9167, 0
      %v9254 = vsel %vm962, %v9168, 0
      %v9257 = vsel %vm962, %v9169, 0
      %v9260 = vsel %vm962, %v9170, 0
      %v9263 = vsel %vm962, %v9171, 0
      %v9266 = vsel %vm962, %v9172, 0
      %v9269 = vsel %vm962, %v9173, 0
      %v9272 = vsel %vm962, %v9174, 0
      %v9275 = vsel %vm962, %v9175, 0
      %9277 = vmatpush.msra.mxu0 0.0
      %9278 = vmatpush.msra.mxu0 0.0
      %9279 = vmatpush.msra.mxu0 0.0
      %9280 = vmatpush.msra.mxu0 0.0
      %9281 = vmatpush.msra.mxu0 0.0
      %9282 = vmatpush.msra.mxu0 0.0
      %9283 = vmatpush.msra.mxu0 0.0
      %9284 = vmatpush.msra.mxu0 0.0
      %9285 = vmatpush.msra.mxu0 0.0
      %9286 = vmatpush.msra.mxu0 0.0
      %9287 = vmatpush.msra.mxu0 0.0
      %9288 = vmatpush.msra.mxu0 0.0
      %9289 = vmatpush.msra.mxu0 %v9180
      %9290 = vmatpush.msra.mxu0 %v9179
      %9291 = vmatpush.msra.mxu0 %v9178
      %9292 = vmatpush.msra.mxu0 %v9177
      %9293 = vmatmul.f32.gmra.mxu0 %v9182
      %v9294 = vpop.f32.mrf.mxu0
      %v9295 = vadd.f32 0.0, %v9294
      %9296 = vmatmul.f32.gmra.mxu0 %v9185
      %v9297 = vpop.f32.mrf.mxu0
      %v9298 = vadd.f32 0.0, %v9297
      %9299 = vmatmul.f32.gmra.mxu0 %v9188
      %v9300 = vpop.f32.mrf.mxu0
      %v9301 = vadd.f32 0.0, %v9300
      %9302 = vmatmul.f32.gmra.mxu0 %v9191
      %v9303 = vpop.f32.mrf.mxu0
      %v9304 = vadd.f32 0.0, %v9303
      %9305 = vmatmul.f32.gmra.mxu0 %v9194
      %v9306 = vpop.f32.mrf.mxu0
      %v9307 = vadd.f32 0.0, %v9306
      %9308 = vmatmul.f32.gmra.mxu0 %v9197
      %v9309 = vpop.f32.mrf.mxu0
      %v9310 = vadd.f32 0.0, %v9309
      %9311 = vmatmul.f32.gmra.mxu0 %v9200
      %v9312 = vpop.f32.mrf.mxu0
      %v9313 = vadd.f32 0.0, %v9312
      %9314 = vmatmul.f32.gmra.mxu0 %v9203
      %v9315 = vpop.f32.mrf.mxu0
      %v9316 = vadd.f32 0.0, %v9315
      %9317 = vmatmul.f32.gmra.mxu0 %v9206
      %v9318 = vpop.f32.mrf.mxu0
      %v9319 = vadd.f32 0.0, %v9318
      %9320 = vmatmul.f32.gmra.mxu0 %v9209
      %v9321 = vpop.f32.mrf.mxu0
      %v9322 = vadd.f32 0.0, %v9321
      %9323 = vmatmul.f32.gmra.mxu0 %v9212
      %v9324 = vpop.f32.mrf.mxu0
      %v9325 = vadd.f32 0.0, %v9324
      %9326 = vmatmul.f32.gmra.mxu0 %v9215
      %v9327 = vpop.f32.mrf.mxu0
      %v9328 = vadd.f32 0.0, %v9327
      %9329 = vmatmul.f32.gmra.mxu0 %v9218
      %v9330 = vpop.f32.mrf.mxu0
      %v9331 = vadd.f32 0.0, %v9330
      %9332 = vmatmul.f32.gmra.mxu0 %v9221
      %v9333 = vpop.f32.mrf.mxu0
      %v9334 = vadd.f32 0.0, %v9333
      %9335 = vmatmul.f32.gmra.mxu0 %v9224
      %v9336 = vpop.f32.mrf.mxu0
      %v9337 = vadd.f32 0.0, %v9336
      %9338 = vmatmul.f32.gmra.mxu0 %v9227
      %v9339 = vpop.f32.mrf.mxu0
      %v9340 = vadd.f32 0.0, %v9339
      %9341 = vmatmul.f32.gmra.mxu0 %v9230
      %v9342 = vpop.f32.mrf.mxu0
      %v9343 = vadd.f32 0.0, %v9342
      %9344 = vmatmul.f32.gmra.mxu0 %v9233
      %v9345 = vpop.f32.mrf.mxu0
      %v9346 = vadd.f32 0.0, %v9345
      %9347 = vmatmul.f32.gmra.mxu0 %v9236
      %v9348 = vpop.f32.mrf.mxu0
      %v9349 = vadd.f32 0.0, %v9348
      %9350 = vmatmul.f32.gmra.mxu0 %v9239
      %v9351 = vpop.f32.mrf.mxu0
      %v9352 = vadd.f32 0.0, %v9351
      %9353 = vmatmul.f32.gmra.mxu0 %v9242
      %v9354 = vpop.f32.mrf.mxu0
      %v9355 = vadd.f32 0.0, %v9354
      %9356 = vmatmul.f32.gmra.mxu0 %v9245
      %v9357 = vpop.f32.mrf.mxu0
      %v9358 = vadd.f32 0.0, %v9357
      %9359 = vmatmul.f32.gmra.mxu0 %v9248
      %v9360 = vpop.f32.mrf.mxu0
      %v9361 = vadd.f32 0.0, %v9360
      %9362 = vmatmul.f32.gmra.mxu0 %v9251
      %v9363 = vpop.f32.mrf.mxu0
      %v9364 = vadd.f32 0.0, %v9363
      %9365 = vmatmul.f32.gmra.mxu0 %v9254
      %v9366 = vpop.f32.mrf.mxu0
      %v9367 = vadd.f32 0.0, %v9366
      %9368 = vmatmul.f32.gmra.mxu0 %v9257
      %v9369 = vpop.f32.mrf.mxu0
      %v9370 = vadd.f32 0.0, %v9369
      %9371 = vmatmul.f32.gmra.mxu0 %v9260
      %v9372 = vpop.f32.mrf.mxu0
      %v9373 = vadd.f32 0.0, %v9372
      %9374 = vmatmul.f32.gmra.mxu0 %v9263
      %v9375 = vpop.f32.mrf.mxu0
      %v9376 = vadd.f32 0.0, %v9375
      %9377 = vmatmul.f32.gmra.mxu0 %v9266
      %v9378 = vpop.f32.mrf.mxu0
      %v9379 = vadd.f32 0.0, %v9378
      %9380 = vmatmul.f32.gmra.mxu0 %v9269
      %v9381 = vpop.f32.mrf.mxu0
      %v9382 = vadd.f32 0.0, %v9381
      %9383 = vmatmul.f32.gmra.mxu0 %v9272
      %v9384 = vpop.f32.mrf.mxu0
      %v9385 = vadd.f32 0.0, %v9384
      %9386 = vmatmul.f32.gmra.mxu0 %v9275
      %v9387 = vpop.f32.mrf.mxu0
      %v9388 = vadd.f32 0.0, %v9387
      %9389 = vdwg.mxu0
      %v9390 = vadd.f32 %v9112, %v9295
      %v9391 = vadd.f32 %v9113, %v9298
      %v9392 = vadd.f32 %v9114, %v9301
      %v9393 = vadd.f32 %v9115, %v9304
      %v9394 = vadd.f32 %v9116, %v9307
      %v9395 = vadd.f32 %v9117, %v9310
      %v9396 = vadd.f32 %v9118, %v9313
      %v9397 = vadd.f32 %v9119, %v9316
      %v9398 = vadd.f32 %v9120, %v9319
      %v9399 = vadd.f32 %v9121, %v9322
      %v9400 = vadd.f32 %v9122, %v9325
      %v9401 = vadd.f32 %v9123, %v9328
      %v9402 = vadd.f32 %v9124, %v9331
      %v9403 = vadd.f32 %v9125, %v9334
      %v9404 = vadd.f32 %v9126, %v9337
      %v9405 = vadd.f32 %v9127, %v9340
      %v9406 = vadd.f32 %v9128, %v9343
      %v9407 = vadd.f32 %v9129, %v9346
      %v9408 = vadd.f32 %v9130, %v9349
      %v9409 = vadd.f32 %v9131, %v9352
      %v9410 = vadd.f32 %v9132, %v9355
      %v9411 = vadd.f32 %v9133, %v9358
      %v9412 = vadd.f32 %v9134, %v9361
      %v9413 = vadd.f32 %v9135, %v9364
      %v9414 = vadd.f32 %v9136, %v9367
      %v9415 = vadd.f32 %v9137, %v9370
      %v9416 = vadd.f32 %v9138, %v9373
      %v9417 = vadd.f32 %v9139, %v9376
      %v9418 = vadd.f32 %v9140, %v9379
      %v9419 = vadd.f32 %v9141, %v9382
      %v9420 = vadd.f32 %v9142, %v9385
      %v9421 = vadd.f32 %v9143, %v9388
      %v9422 = vld [vmem:[%s2543 + $0x2] sm:$0xff]
      %v9423 = vld [vmem:[%s2543 + $0xa] sm:$0xff]
      %v9424 = vld [vmem:[%s2543 + $0x1a] sm:$0xff]
      %v9425 = vld [vmem:[%s2543 + $0x22] sm:$0xff]
      %v9426 = vld [vmem:[%s2543 + $0x32] sm:$0xff]
      %v9427 = vld [vmem:[%s2543 + $0x3a] sm:$0xff]
      %v9428 = vld [vmem:[%s2543 + $0x4a] sm:$0xff]
      %v9429 = vld [vmem:[%s2543 + $0x52] sm:$0xff]
      %v9430 = vld [vmem:[%s2543 + $0x62] sm:$0xff]
      %v9431 = vld [vmem:[%s2543 + $0x6a] sm:$0xff]
      %v9432 = vld [vmem:[%s2543 + $0x7a] sm:$0xff]
      %v9433 = vld [vmem:[%s2543 + $0x82] sm:$0xff]
      %v9434 = vld [vmem:[%s2543 + $0x92] sm:$0xff]
      %v9435 = vld [vmem:[%s2543 + $0x9a] sm:$0xff]
      %v9436 = vld [vmem:[%s2543 + $0xaa] sm:$0xff]
      %v9437 = vld [vmem:[%s2543 + $0xb2] sm:$0xff]
      %v9438 = vld [vmem:[%s2543 + $0xc2] sm:$0xff]
      %v9439 = vld [vmem:[%s2543 + $0xca] sm:$0xff]
      %v9440 = vld [vmem:[%s2543 + $0xda] sm:$0xff]
      %v9441 = vld [vmem:[%s2543 + $0xe2] sm:$0xff]
      %v9442 = vld [vmem:[%s2543 + $0xf2] sm:$0xff]
      %v9443 = vld [vmem:[%s2543 + $0xfa] sm:$0xff]
      %v9444 = vld [vmem:[%s2543 + $0x10a] sm:$0xff]
      %v9445 = vld [vmem:[%s2543 + $0x112] sm:$0xff]
      %v9446 = vld [vmem:[%s2543 + $0x122] sm:$0xff]
      %v9447 = vld [vmem:[%s2543 + $0x12a] sm:$0xff]
      %v9448 = vld [vmem:[%s2543 + $0x13a] sm:$0xff]
      %v9449 = vld [vmem:[%s2543 + $0x142] sm:$0xff]
      %v9450 = vld [vmem:[%s2543 + $0x152] sm:$0xff]
      %v9451 = vld [vmem:[%s2543 + $0x15a] sm:$0xff]
      %v9452 = vld [vmem:[%s2543 + $0x16a] sm:$0xff]
      %v9453 = vld [vmem:[%s2543 + $0x172] sm:$0xff]
      %s9454 = scalar_lea.vmem %s4, 160
      %v9455 = vld [vmem:[%s9454] sm:$0xff]
      %v9456 = vld [vmem:[%s9454 + $0x8] sm:$0xff]
      %v9457 = vld [vmem:[%s9454 + $0x10] sm:$0xff]
      %v9458 = vld [vmem:[%s9454 + $0x18] sm:$0xff]
      %v9460 = vsel %vm962, %v9422, 0
      %v9463 = vsel %vm962, %v9423, 0
      %v9466 = vsel %vm962, %v9424, 0
      %v9469 = vsel %vm962, %v9425, 0
      %v9472 = vsel %vm962, %v9426, 0
      %v9475 = vsel %vm962, %v9427, 0
      %v9478 = vsel %vm962, %v9428, 0
      %v9481 = vsel %vm962, %v9429, 0
      %v9484 = vsel %vm962, %v9430, 0
      %v9487 = vsel %vm962, %v9431, 0
      %v9490 = vsel %vm962, %v9432, 0
      %v9493 = vsel %vm962, %v9433, 0
      %v9496 = vsel %vm962, %v9434, 0
      %v9499 = vsel %vm962, %v9435, 0
      %v9502 = vsel %vm962, %v9436, 0
      %v9505 = vsel %vm962, %v9437, 0
      %v9508 = vsel %vm962, %v9438, 0
      %v9511 = vsel %vm962, %v9439, 0
      %v9514 = vsel %vm962, %v9440, 0
      %v9517 = vsel %vm962, %v9441, 0
      %v9520 = vsel %vm962, %v9442, 0
      %v9523 = vsel %vm962, %v9443, 0
      %v9526 = vsel %vm962, %v9444, 0
      %v9529 = vsel %vm962, %v9445, 0
      %v9532 = vsel %vm962, %v9446, 0
      %v9535 = vsel %vm962, %v9447, 0
      %v9538 = vsel %vm962, %v9448, 0
      %v9541 = vsel %vm962, %v9449, 0
      %v9544 = vsel %vm962, %v9450, 0
      %v9547 = vsel %vm962, %v9451, 0
      %v9550 = vsel %vm962, %v9452, 0
      %v9553 = vsel %vm962, %v9453, 0
      %9555 = vmatpush.msra.mxu0 0.0
      %9556 = vmatpush.msra.mxu0 0.0
      %9557 = vmatpush.msra.mxu0 0.0
      %9558 = vmatpush.msra.mxu0 0.0
      %9559 = vmatpush.msra.mxu0 0.0
      %9560 = vmatpush.msra.mxu0 0.0
      %9561 = vmatpush.msra.mxu0 0.0
      %9562 = vmatpush.msra.mxu0 0.0
      %9563 = vmatpush.msra.mxu0 0.0
      %9564 = vmatpush.msra.mxu0 0.0
      %9565 = vmatpush.msra.mxu0 0.0
      %9566 = vmatpush.msra.mxu0 0.0
      %9567 = vmatpush.msra.mxu0 %v9458
      %9568 = vmatpush.msra.mxu0 %v9457
      %9569 = vmatpush.msra.mxu0 %v9456
      %9570 = vmatpush.msra.mxu0 %v9455
      %9571 = vmatmul.f32.gmra.mxu0 %v9460
      %v9572 = vpop.f32.mrf.mxu0
      %v9573 = vadd.f32 0.0, %v9572
      %9574 = vmatmul.f32.gmra.mxu0 %v9463
      %v9575 = vpop.f32.mrf.mxu0
      %v9576 = vadd.f32 0.0, %v9575
      %9577 = vmatmul.f32.gmra.mxu0 %v9466
      %v9578 = vpop.f32.mrf.mxu0
      %v9579 = vadd.f32 0.0, %v9578
      %9580 = vmatmul.f32.gmra.mxu0 %v9469
      %v9581 = vpop.f32.mrf.mxu0
      %v9582 = vadd.f32 0.0, %v9581
      %9583 = vmatmul.f32.gmra.mxu0 %v9472
      %v9584 = vpop.f32.mrf.mxu0
      %v9585 = vadd.f32 0.0, %v9584
      %9586 = vmatmul.f32.gmra.mxu0 %v9475
      %v9587 = vpop.f32.mrf.mxu0
      %v9588 = vadd.f32 0.0, %v9587
      %9589 = vmatmul.f32.gmra.mxu0 %v9478
      %v9590 = vpop.f32.mrf.mxu0
      %v9591 = vadd.f32 0.0, %v9590
      %9592 = vmatmul.f32.gmra.mxu0 %v9481
      %v9593 = vpop.f32.mrf.mxu0
      %v9594 = vadd.f32 0.0, %v9593
      %9595 = vmatmul.f32.gmra.mxu0 %v9484
      %v9596 = vpop.f32.mrf.mxu0
      %v9597 = vadd.f32 0.0, %v9596
      %9598 = vmatmul.f32.gmra.mxu0 %v9487
      %v9599 = vpop.f32.mrf.mxu0
      %v9600 = vadd.f32 0.0, %v9599
      %9601 = vmatmul.f32.gmra.mxu0 %v9490
      %v9602 = vpop.f32.mrf.mxu0
      %v9603 = vadd.f32 0.0, %v9602
      %9604 = vmatmul.f32.gmra.mxu0 %v9493
      %v9605 = vpop.f32.mrf.mxu0
      %v9606 = vadd.f32 0.0, %v9605
      %9607 = vmatmul.f32.gmra.mxu0 %v9496
      %v9608 = vpop.f32.mrf.mxu0
      %v9609 = vadd.f32 0.0, %v9608
      %9610 = vmatmul.f32.gmra.mxu0 %v9499
      %v9611 = vpop.f32.mrf.mxu0
      %v9612 = vadd.f32 0.0, %v9611
      %9613 = vmatmul.f32.gmra.mxu0 %v9502
      %v9614 = vpop.f32.mrf.mxu0
      %v9615 = vadd.f32 0.0, %v9614
      %9616 = vmatmul.f32.gmra.mxu0 %v9505
      %v9617 = vpop.f32.mrf.mxu0
      %v9618 = vadd.f32 0.0, %v9617
      %9619 = vmatmul.f32.gmra.mxu0 %v9508
      %v9620 = vpop.f32.mrf.mxu0
      %v9621 = vadd.f32 0.0, %v9620
      %9622 = vmatmul.f32.gmra.mxu0 %v9511
      %v9623 = vpop.f32.mrf.mxu0
      %v9624 = vadd.f32 0.0, %v9623
      %9625 = vmatmul.f32.gmra.mxu0 %v9514
      %v9626 = vpop.f32.mrf.mxu0
      %v9627 = vadd.f32 0.0, %v9626
      %9628 = vmatmul.f32.gmra.mxu0 %v9517
      %v9629 = vpop.f32.mrf.mxu0
      %v9630 = vadd.f32 0.0, %v9629
      %9631 = vmatmul.f32.gmra.mxu0 %v9520
      %v9632 = vpop.f32.mrf.mxu0
      %v9633 = vadd.f32 0.0, %v9632
      %9634 = vmatmul.f32.gmra.mxu0 %v9523
      %v9635 = vpop.f32.mrf.mxu0
      %v9636 = vadd.f32 0.0, %v9635
      %9637 = vmatmul.f32.gmra.mxu0 %v9526
      %v9638 = vpop.f32.mrf.mxu0
      %v9639 = vadd.f32 0.0, %v9638
      %9640 = vmatmul.f32.gmra.mxu0 %v9529
      %v9641 = vpop.f32.mrf.mxu0
      %v9642 = vadd.f32 0.0, %v9641
      %9643 = vmatmul.f32.gmra.mxu0 %v9532
      %v9644 = vpop.f32.mrf.mxu0
      %v9645 = vadd.f32 0.0, %v9644
      %9646 = vmatmul.f32.gmra.mxu0 %v9535
      %v9647 = vpop.f32.mrf.mxu0
      %v9648 = vadd.f32 0.0, %v9647
      %9649 = vmatmul.f32.gmra.mxu0 %v9538
      %v9650 = vpop.f32.mrf.mxu0
      %v9651 = vadd.f32 0.0, %v9650
      %9652 = vmatmul.f32.gmra.mxu0 %v9541
      %v9653 = vpop.f32.mrf.mxu0
      %v9654 = vadd.f32 0.0, %v9653
      %9655 = vmatmul.f32.gmra.mxu0 %v9544
      %v9656 = vpop.f32.mrf.mxu0
      %v9657 = vadd.f32 0.0, %v9656
      %9658 = vmatmul.f32.gmra.mxu0 %v9547
      %v9659 = vpop.f32.mrf.mxu0
      %v9660 = vadd.f32 0.0, %v9659
      %9661 = vmatmul.f32.gmra.mxu0 %v9550
      %v9662 = vpop.f32.mrf.mxu0
      %v9663 = vadd.f32 0.0, %v9662
      %9664 = vmatmul.f32.gmra.mxu0 %v9553
      %v9665 = vpop.f32.mrf.mxu0
      %v9666 = vadd.f32 0.0, %v9665
      %9667 = vdwg.mxu0
      %v9668 = vadd.f32 %v9390, %v9573
      %v9669 = vadd.f32 %v9391, %v9576
      %v9670 = vadd.f32 %v9392, %v9579
      %v9671 = vadd.f32 %v9393, %v9582
      %v9672 = vadd.f32 %v9394, %v9585
      %v9673 = vadd.f32 %v9395, %v9588
      %v9674 = vadd.f32 %v9396, %v9591
      %v9675 = vadd.f32 %v9397, %v9594
      %v9676 = vadd.f32 %v9398, %v9597
      %v9677 = vadd.f32 %v9399, %v9600
      %v9678 = vadd.f32 %v9400, %v9603
      %v9679 = vadd.f32 %v9401, %v9606
      %v9680 = vadd.f32 %v9402, %v9609
      %v9681 = vadd.f32 %v9403, %v9612
      %v9682 = vadd.f32 %v9404, %v9615
      %v9683 = vadd.f32 %v9405, %v9618
      %v9684 = vadd.f32 %v9406, %v9621
      %v9685 = vadd.f32 %v9407, %v9624
      %v9686 = vadd.f32 %v9408, %v9627
      %v9687 = vadd.f32 %v9409, %v9630
      %v9688 = vadd.f32 %v9410, %v9633
      %v9689 = vadd.f32 %v9411, %v9636
      %v9690 = vadd.f32 %v9412, %v9639
      %v9691 = vadd.f32 %v9413, %v9642
      %v9692 = vadd.f32 %v9414, %v9645
      %v9693 = vadd.f32 %v9415, %v9648
      %v9694 = vadd.f32 %v9416, %v9651
      %v9695 = vadd.f32 %v9417, %v9654
      %v9696 = vadd.f32 %v9418, %v9657
      %v9697 = vadd.f32 %v9419, %v9660
      %v9698 = vadd.f32 %v9420, %v9663
      %v9699 = vadd.f32 %v9421, %v9666
      %v9700 = vld [vmem:[%s8587 + $0x2] sm:$0xff]
      %v9701 = vld [vmem:[%s8587 + $0xa] sm:$0xff]
      %v9702 = vld [vmem:[%s8587 + $0x1a] sm:$0xff]
      %v9703 = vld [vmem:[%s8587 + $0x22] sm:$0xff]
      %v9704 = vld [vmem:[%s8587 + $0x32] sm:$0xff]
      %v9705 = vld [vmem:[%s8587 + $0x3a] sm:$0xff]
      %v9706 = vld [vmem:[%s8587 + $0x4a] sm:$0xff]
      %v9707 = vld [vmem:[%s8587 + $0x52] sm:$0xff]
      %v9708 = vld [vmem:[%s8587 + $0x62] sm:$0xff]
      %v9709 = vld [vmem:[%s8587 + $0x6a] sm:$0xff]
      %v9710 = vld [vmem:[%s8587 + $0x7a] sm:$0xff]
      %v9711 = vld [vmem:[%s8587 + $0x82] sm:$0xff]
      %v9712 = vld [vmem:[%s8587 + $0x92] sm:$0xff]
      %v9713 = vld [vmem:[%s8587 + $0x9a] sm:$0xff]
      %v9714 = vld [vmem:[%s8587 + $0xaa] sm:$0xff]
      %v9715 = vld [vmem:[%s8587 + $0xb2] sm:$0xff]
      %v9716 = vld [vmem:[%s8587 + $0xc2] sm:$0xff]
      %v9717 = vld [vmem:[%s8587 + $0xca] sm:$0xff]
      %v9718 = vld [vmem:[%s8587 + $0xda] sm:$0xff]
      %v9719 = vld [vmem:[%s8587 + $0xe2] sm:$0xff]
      %v9720 = vld [vmem:[%s8587 + $0xf2] sm:$0xff]
      %v9721 = vld [vmem:[%s8587 + $0xfa] sm:$0xff]
      %v9722 = vld [vmem:[%s8587 + $0x10a] sm:$0xff]
      %v9723 = vld [vmem:[%s8587 + $0x112] sm:$0xff]
      %v9724 = vld [vmem:[%s8587 + $0x122] sm:$0xff]
      %v9725 = vld [vmem:[%s8587 + $0x12a] sm:$0xff]
      %v9726 = vld [vmem:[%s8587 + $0x13a] sm:$0xff]
      %v9727 = vld [vmem:[%s8587 + $0x142] sm:$0xff]
      %v9728 = vld [vmem:[%s8587 + $0x152] sm:$0xff]
      %v9729 = vld [vmem:[%s8587 + $0x15a] sm:$0xff]
      %v9730 = vld [vmem:[%s8587 + $0x16a] sm:$0xff]
      %v9731 = vld [vmem:[%s8587 + $0x172] sm:$0xff]
      %s9732 = scalar_lea.vmem %s5, 160
      %v9733 = vld [vmem:[%s9732] sm:$0xff]
      %v9734 = vld [vmem:[%s9732 + $0x8] sm:$0xff]
      %v9735 = vld [vmem:[%s9732 + $0x10] sm:$0xff]
      %v9736 = vld [vmem:[%s9732 + $0x18] sm:$0xff]
      %v9738 = vsel %vm962, %v9700, 0
      %v9741 = vsel %vm962, %v9701, 0
      %v9744 = vsel %vm962, %v9702, 0
      %v9747 = vsel %vm962, %v9703, 0
      %v9750 = vsel %vm962, %v9704, 0
      %v9753 = vsel %vm962, %v9705, 0
      %v9756 = vsel %vm962, %v9706, 0
      %v9759 = vsel %vm962, %v9707, 0
      %v9762 = vsel %vm962, %v9708, 0
      %v9765 = vsel %vm962, %v9709, 0
      %v9768 = vsel %vm962, %v9710, 0
      %v9771 = vsel %vm962, %v9711, 0
      %v9774 = vsel %vm962, %v9712, 0
      %v9777 = vsel %vm962, %v9713, 0
      %v9780 = vsel %vm962, %v9714, 0
      %v9783 = vsel %vm962, %v9715, 0
      %v9786 = vsel %vm962, %v9716, 0
      %v9789 = vsel %vm962, %v9717, 0
      %v9792 = vsel %vm962, %v9718, 0
      %v9795 = vsel %vm962, %v9719, 0
      %v9798 = vsel %vm962, %v9720, 0
      %v9801 = vsel %vm962, %v9721, 0
      %v9804 = vsel %vm962, %v9722, 0
      %v9807 = vsel %vm962, %v9723, 0
      %v9810 = vsel %vm962, %v9724, 0
      %v9813 = vsel %vm962, %v9725, 0
      %v9816 = vsel %vm962, %v9726, 0
      %v9819 = vsel %vm962, %v9727, 0
      %v9822 = vsel %vm962, %v9728, 0
      %v9825 = vsel %vm962, %v9729, 0
      %v9828 = vsel %vm962, %v9730, 0
      %v9831 = vsel %vm962, %v9731, 0
      %9833 = vmatpush.msra.mxu0 0.0
      %9834 = vmatpush.msra.mxu0 0.0
      %9835 = vmatpush.msra.mxu0 0.0
      %9836 = vmatpush.msra.mxu0 0.0
      %9837 = vmatpush.msra.mxu0 0.0
      %9838 = vmatpush.msra.mxu0 0.0
      %9839 = vmatpush.msra.mxu0 0.0
      %9840 = vmatpush.msra.mxu0 0.0
      %9841 = vmatpush.msra.mxu0 0.0
      %9842 = vmatpush.msra.mxu0 0.0
      %9843 = vmatpush.msra.mxu0 0.0
      %9844 = vmatpush.msra.mxu0 0.0
      %9845 = vmatpush.msra.mxu0 %v9736
      %9846 = vmatpush.msra.mxu0 %v9735
      %9847 = vmatpush.msra.mxu0 %v9734
      %9848 = vmatpush.msra.mxu0 %v9733
      %9849 = vmatmul.f32.gmra.mxu0 %v9738
      %v9850 = vpop.f32.mrf.mxu0
      %v9851 = vadd.f32 0.0, %v9850
      %9852 = vmatmul.f32.gmra.mxu0 %v9741
      %v9853 = vpop.f32.mrf.mxu0
      %v9854 = vadd.f32 0.0, %v9853
      %9855 = vmatmul.f32.gmra.mxu0 %v9744
      %v9856 = vpop.f32.mrf.mxu0
      %v9857 = vadd.f32 0.0, %v9856
      %9858 = vmatmul.f32.gmra.mxu0 %v9747
      %v9859 = vpop.f32.mrf.mxu0
      %v9860 = vadd.f32 0.0, %v9859
      %9861 = vmatmul.f32.gmra.mxu0 %v9750
      %v9862 = vpop.f32.mrf.mxu0
      %v9863 = vadd.f32 0.0, %v9862
      %9864 = vmatmul.f32.gmra.mxu0 %v9753
      %v9865 = vpop.f32.mrf.mxu0
      %v9866 = vadd.f32 0.0, %v9865
      %9867 = vmatmul.f32.gmra.mxu0 %v9756
      %v9868 = vpop.f32.mrf.mxu0
      %v9869 = vadd.f32 0.0, %v9868
      %9870 = vmatmul.f32.gmra.mxu0 %v9759
      %v9871 = vpop.f32.mrf.mxu0
      %v9872 = vadd.f32 0.0, %v9871
      %9873 = vmatmul.f32.gmra.mxu0 %v9762
      %v9874 = vpop.f32.mrf.mxu0
      %v9875 = vadd.f32 0.0, %v9874
      %9876 = vmatmul.f32.gmra.mxu0 %v9765
      %v9877 = vpop.f32.mrf.mxu0
      %v9878 = vadd.f32 0.0, %v9877
      %9879 = vmatmul.f32.gmra.mxu0 %v9768
      %v9880 = vpop.f32.mrf.mxu0
      %v9881 = vadd.f32 0.0, %v9880
      %9882 = vmatmul.f32.gmra.mxu0 %v9771
      %v9883 = vpop.f32.mrf.mxu0
      %v9884 = vadd.f32 0.0, %v9883
      %9885 = vmatmul.f32.gmra.mxu0 %v9774
      %v9886 = vpop.f32.mrf.mxu0
      %v9887 = vadd.f32 0.0, %v9886
      %9888 = vmatmul.f32.gmra.mxu0 %v9777
      %v9889 = vpop.f32.mrf.mxu0
      %v9890 = vadd.f32 0.0, %v9889
      %9891 = vmatmul.f32.gmra.mxu0 %v9780
      %v9892 = vpop.f32.mrf.mxu0
      %v9893 = vadd.f32 0.0, %v9892
      %9894 = vmatmul.f32.gmra.mxu0 %v9783
      %v9895 = vpop.f32.mrf.mxu0
      %v9896 = vadd.f32 0.0, %v9895
      %9897 = vmatmul.f32.gmra.mxu0 %v9786
      %v9898 = vpop.f32.mrf.mxu0
      %v9899 = vadd.f32 0.0, %v9898
      %9900 = vmatmul.f32.gmra.mxu0 %v9789
      %v9901 = vpop.f32.mrf.mxu0
      %v9902 = vadd.f32 0.0, %v9901
      %9903 = vmatmul.f32.gmra.mxu0 %v9792
      %v9904 = vpop.f32.mrf.mxu0
      %v9905 = vadd.f32 0.0, %v9904
      %9906 = vmatmul.f32.gmra.mxu0 %v9795
      %v9907 = vpop.f32.mrf.mxu0
      %v9908 = vadd.f32 0.0, %v9907
      %9909 = vmatmul.f32.gmra.mxu0 %v9798
      %v9910 = vpop.f32.mrf.mxu0
      %v9911 = vadd.f32 0.0, %v9910
      %9912 = vmatmul.f32.gmra.mxu0 %v9801
      %v9913 = vpop.f32.mrf.mxu0
      %v9914 = vadd.f32 0.0, %v9913
      %9915 = vmatmul.f32.gmra.mxu0 %v9804
      %v9916 = vpop.f32.mrf.mxu0
      %v9917 = vadd.f32 0.0, %v9916
      %9918 = vmatmul.f32.gmra.mxu0 %v9807
      %v9919 = vpop.f32.mrf.mxu0
      %v9920 = vadd.f32 0.0, %v9919
      %9921 = vmatmul.f32.gmra.mxu0 %v9810
      %v9922 = vpop.f32.mrf.mxu0
      %v9923 = vadd.f32 0.0, %v9922
      %9924 = vmatmul.f32.gmra.mxu0 %v9813
      %v9925 = vpop.f32.mrf.mxu0
      %v9926 = vadd.f32 0.0, %v9925
      %9927 = vmatmul.f32.gmra.mxu0 %v9816
      %v9928 = vpop.f32.mrf.mxu0
      %v9929 = vadd.f32 0.0, %v9928
      %9930 = vmatmul.f32.gmra.mxu0 %v9819
      %v9931 = vpop.f32.mrf.mxu0
      %v9932 = vadd.f32 0.0, %v9931
      %9933 = vmatmul.f32.gmra.mxu0 %v9822
      %v9934 = vpop.f32.mrf.mxu0
      %v9935 = vadd.f32 0.0, %v9934
      %9936 = vmatmul.f32.gmra.mxu0 %v9825
      %v9937 = vpop.f32.mrf.mxu0
      %v9938 = vadd.f32 0.0, %v9937
      %9939 = vmatmul.f32.gmra.mxu0 %v9828
      %v9940 = vpop.f32.mrf.mxu0
      %v9941 = vadd.f32 0.0, %v9940
      %9942 = vmatmul.f32.gmra.mxu0 %v9831
      %v9943 = vpop.f32.mrf.mxu0
      %v9944 = vadd.f32 0.0, %v9943
      %9945 = vdwg.mxu0
      %v9946 = vadd.f32 %v9668, %v9851
      %v9947 = vadd.f32 %v9669, %v9854
      %v9948 = vadd.f32 %v9670, %v9857
      %v9949 = vadd.f32 %v9671, %v9860
      %v9950 = vadd.f32 %v9672, %v9863
      %v9951 = vadd.f32 %v9673, %v9866
      %v9952 = vadd.f32 %v9674, %v9869
      %v9953 = vadd.f32 %v9675, %v9872
      %v9954 = vadd.f32 %v9676, %v9875
      %v9955 = vadd.f32 %v9677, %v9878
      %v9956 = vadd.f32 %v9678, %v9881
      %v9957 = vadd.f32 %v9679, %v9884
      %v9958 = vadd.f32 %v9680, %v9887
      %v9959 = vadd.f32 %v9681, %v9890
      %v9960 = vadd.f32 %v9682, %v9893
      %v9961 = vadd.f32 %v9683, %v9896
      %v9962 = vadd.f32 %v9684, %v9899
      %v9963 = vadd.f32 %v9685, %v9902
      %v9964 = vadd.f32 %v9686, %v9905
      %v9965 = vadd.f32 %v9687, %v9908
      %v9966 = vadd.f32 %v9688, %v9911
      %v9967 = vadd.f32 %v9689, %v9914
      %v9968 = vadd.f32 %v9690, %v9917
      %v9969 = vadd.f32 %v9691, %v9920
      %v9970 = vadd.f32 %v9692, %v9923
      %v9971 = vadd.f32 %v9693, %v9926
      %v9972 = vadd.f32 %v9694, %v9929
      %v9973 = vadd.f32 %v9695, %v9932
      %v9974 = vadd.f32 %v9696, %v9935
      %v9975 = vadd.f32 %v9697, %v9938
      %v9976 = vadd.f32 %v9698, %v9941
      %v9977 = vadd.f32 %v9699, %v9944
      %v9978 = vld [vmem:[%s4162] sm:$0xff]
      %v9979 = vld [vmem:[%s4162 + $0x8] sm:$0xff]
      %v9980 = vld [vmem:[%s4162 + $0x18] sm:$0xff]
      %v9981 = vld [vmem:[%s4162 + $0x20] sm:$0xff]
      %v9982 = vld [vmem:[%s4162 + $0x30] sm:$0xff]
      %v9983 = vld [vmem:[%s4162 + $0x38] sm:$0xff]
      %v9984 = vld [vmem:[%s4162 + $0x48] sm:$0xff]
      %v9985 = vld [vmem:[%s4162 + $0x50] sm:$0xff]
      %v9986 = vld [vmem:[%s4162 + $0x60] sm:$0xff]
      %v9987 = vld [vmem:[%s4162 + $0x68] sm:$0xff]
      %v9988 = vld [vmem:[%s4162 + $0x78] sm:$0xff]
      %v9989 = vld [vmem:[%s4162 + $0x80] sm:$0xff]
      %v9990 = vld [vmem:[%s4162 + $0x90] sm:$0xff]
      %v9991 = vld [vmem:[%s4162 + $0x98] sm:$0xff]
      %v9992 = vld [vmem:[%s4162 + $0xa8] sm:$0xff]
      %v9993 = vld [vmem:[%s4162 + $0xb0] sm:$0xff]
      %v9994 = vld [vmem:[%s4162 + $0xc0] sm:$0xff]
      %v9995 = vld [vmem:[%s4162 + $0xc8] sm:$0xff]
      %v9996 = vld [vmem:[%s4162 + $0xd8] sm:$0xff]
      %v9997 = vld [vmem:[%s4162 + $0xe0] sm:$0xff]
      %v9998 = vld [vmem:[%s4162 + $0xf0] sm:$0xff]
      %v9999 = vld [vmem:[%s4162 + $0xf8] sm:$0xff]
      %v10000 = vld [vmem:[%s4162 + $0x108] sm:$0xff]
      %v10001 = vld [vmem:[%s4162 + $0x110] sm:$0xff]
      %v10002 = vld [vmem:[%s4162 + $0x120] sm:$0xff]
      %v10003 = vld [vmem:[%s4162 + $0x128] sm:$0xff]
      %v10004 = vld [vmem:[%s4162 + $0x138] sm:$0xff]
      %v10005 = vld [vmem:[%s4162 + $0x140] sm:$0xff]
      %v10006 = vld [vmem:[%s4162 + $0x150] sm:$0xff]
      %v10007 = vld [vmem:[%s4162 + $0x158] sm:$0xff]
      %v10008 = vld [vmem:[%s4162 + $0x168] sm:$0xff]
      %v10009 = vld [vmem:[%s4162 + $0x170] sm:$0xff]
      %s10010 = scalar_lea.vmem %s4, 192
      %v10011 = vld [vmem:[%s10010] sm:$0xff]
      %v10012 = vld [vmem:[%s10010 + $0x8] sm:$0xff]
      %v10013 = vld [vmem:[%s10010 + $0x10] sm:$0xff]
      %v10014 = vld [vmem:[%s10010 + $0x18] sm:$0xff]
      %v10016 = vsel %vm962, %v9978, 0
      %v10019 = vsel %vm962, %v9979, 0
      %v10022 = vsel %vm962, %v9980, 0
      %v10025 = vsel %vm962, %v9981, 0
      %v10028 = vsel %vm962, %v9982, 0
      %v10031 = vsel %vm962, %v9983, 0
      %v10034 = vsel %vm962, %v9984, 0
      %v10037 = vsel %vm962, %v9985, 0
      %v10040 = vsel %vm962, %v9986, 0
      %v10043 = vsel %vm962, %v9987, 0
      %v10046 = vsel %vm962, %v9988, 0
      %v10049 = vsel %vm962, %v9989, 0
      %v10052 = vsel %vm962, %v9990, 0
      %v10055 = vsel %vm962, %v9991, 0
      %v10058 = vsel %vm962, %v9992, 0
      %v10061 = vsel %vm962, %v9993, 0
      %v10064 = vsel %vm962, %v9994, 0
      %v10067 = vsel %vm962, %v9995, 0
      %v10070 = vsel %vm962, %v9996, 0
      %v10073 = vsel %vm962, %v9997, 0
      %v10076 = vsel %vm962, %v9998, 0
      %v10079 = vsel %vm962, %v9999, 0
      %v10082 = vsel %vm962, %v10000, 0
      %v10085 = vsel %vm962, %v10001, 0
      %v10088 = vsel %vm962, %v10002, 0
      %v10091 = vsel %vm962, %v10003, 0
      %v10094 = vsel %vm962, %v10004, 0
      %v10097 = vsel %vm962, %v10005, 0
      %v10100 = vsel %vm962, %v10006, 0
      %v10103 = vsel %vm962, %v10007, 0
      %v10106 = vsel %vm962, %v10008, 0
      %v10109 = vsel %vm962, %v10009, 0
      %10111 = vmatpush.msra.mxu0 0.0
      %10112 = vmatpush.msra.mxu0 0.0
      %10113 = vmatpush.msra.mxu0 0.0
      %10114 = vmatpush.msra.mxu0 0.0
      %10115 = vmatpush.msra.mxu0 0.0
      %10116 = vmatpush.msra.mxu0 0.0
      %10117 = vmatpush.msra.mxu0 0.0
      %10118 = vmatpush.msra.mxu0 0.0
      %10119 = vmatpush.msra.mxu0 0.0
      %10120 = vmatpush.msra.mxu0 0.0
      %10121 = vmatpush.msra.mxu0 0.0
      %10122 = vmatpush.msra.mxu0 0.0
      %10123 = vmatpush.msra.mxu0 %v10014
      %10124 = vmatpush.msra.mxu0 %v10013
      %10125 = vmatpush.msra.mxu0 %v10012
      %10126 = vmatpush.msra.mxu0 %v10011
      %10127 = vmatmul.f32.gmra.mxu0 %v10016
      %v10128 = vpop.f32.mrf.mxu0
      %v10129 = vadd.f32 0.0, %v10128
      %10130 = vmatmul.f32.gmra.mxu0 %v10019
      %v10131 = vpop.f32.mrf.mxu0
      %v10132 = vadd.f32 0.0, %v10131
      %10133 = vmatmul.f32.gmra.mxu0 %v10022
      %v10134 = vpop.f32.mrf.mxu0
      %v10135 = vadd.f32 0.0, %v10134
      %10136 = vmatmul.f32.gmra.mxu0 %v10025
      %v10137 = vpop.f32.mrf.mxu0
      %v10138 = vadd.f32 0.0, %v10137
      %10139 = vmatmul.f32.gmra.mxu0 %v10028
      %v10140 = vpop.f32.mrf.mxu0
      %v10141 = vadd.f32 0.0, %v10140
      %10142 = vmatmul.f32.gmra.mxu0 %v10031
      %v10143 = vpop.f32.mrf.mxu0
      %v10144 = vadd.f32 0.0, %v10143
      %10145 = vmatmul.f32.gmra.mxu0 %v10034
      %v10146 = vpop.f32.mrf.mxu0
      %v10147 = vadd.f32 0.0, %v10146
      %10148 = vmatmul.f32.gmra.mxu0 %v10037
      %v10149 = vpop.f32.mrf.mxu0
      %v10150 = vadd.f32 0.0, %v10149
      %10151 = vmatmul.f32.gmra.mxu0 %v10040
      %v10152 = vpop.f32.mrf.mxu0
      %v10153 = vadd.f32 0.0, %v10152
      %10154 = vmatmul.f32.gmra.mxu0 %v10043
      %v10155 = vpop.f32.mrf.mxu0
      %v10156 = vadd.f32 0.0, %v10155
      %10157 = vmatmul.f32.gmra.mxu0 %v10046
      %v10158 = vpop.f32.mrf.mxu0
      %v10159 = vadd.f32 0.0, %v10158
      %10160 = vmatmul.f32.gmra.mxu0 %v10049
      %v10161 = vpop.f32.mrf.mxu0
      %v10162 = vadd.f32 0.0, %v10161
      %10163 = vmatmul.f32.gmra.mxu0 %v10052
      %v10164 = vpop.f32.mrf.mxu0
      %v10165 = vadd.f32 0.0, %v10164
      %10166 = vmatmul.f32.gmra.mxu0 %v10055
      %v10167 = vpop.f32.mrf.mxu0
      %v10168 = vadd.f32 0.0, %v10167
      %10169 = vmatmul.f32.gmra.mxu0 %v10058
      %v10170 = vpop.f32.mrf.mxu0
      %v10171 = vadd.f32 0.0, %v10170
      %10172 = vmatmul.f32.gmra.mxu0 %v10061
      %v10173 = vpop.f32.mrf.mxu0
      %v10174 = vadd.f32 0.0, %v10173
      %10175 = vmatmul.f32.gmra.mxu0 %v10064
      %v10176 = vpop.f32.mrf.mxu0
      %v10177 = vadd.f32 0.0, %v10176
      %10178 = vmatmul.f32.gmra.mxu0 %v10067
      %v10179 = vpop.f32.mrf.mxu0
      %v10180 = vadd.f32 0.0, %v10179
      %10181 = vmatmul.f32.gmra.mxu0 %v10070
      %v10182 = vpop.f32.mrf.mxu0
      %v10183 = vadd.f32 0.0, %v10182
      %10184 = vmatmul.f32.gmra.mxu0 %v10073
      %v10185 = vpop.f32.mrf.mxu0
      %v10186 = vadd.f32 0.0, %v10185
      %10187 = vmatmul.f32.gmra.mxu0 %v10076
      %v10188 = vpop.f32.mrf.mxu0
      %v10189 = vadd.f32 0.0, %v10188
      %10190 = vmatmul.f32.gmra.mxu0 %v10079
      %v10191 = vpop.f32.mrf.mxu0
      %v10192 = vadd.f32 0.0, %v10191
      %10193 = vmatmul.f32.gmra.mxu0 %v10082
      %v10194 = vpop.f32.mrf.mxu0
      %v10195 = vadd.f32 0.0, %v10194
      %10196 = vmatmul.f32.gmra.mxu0 %v10085
      %v10197 = vpop.f32.mrf.mxu0
      %v10198 = vadd.f32 0.0, %v10197
      %10199 = vmatmul.f32.gmra.mxu0 %v10088
      %v10200 = vpop.f32.mrf.mxu0
      %v10201 = vadd.f32 0.0, %v10200
      %10202 = vmatmul.f32.gmra.mxu0 %v10091
      %v10203 = vpop.f32.mrf.mxu0
      %v10204 = vadd.f32 0.0, %v10203
      %10205 = vmatmul.f32.gmra.mxu0 %v10094
      %v10206 = vpop.f32.mrf.mxu0
      %v10207 = vadd.f32 0.0, %v10206
      %10208 = vmatmul.f32.gmra.mxu0 %v10097
      %v10209 = vpop.f32.mrf.mxu0
      %v10210 = vadd.f32 0.0, %v10209
      %10211 = vmatmul.f32.gmra.mxu0 %v10100
      %v10212 = vpop.f32.mrf.mxu0
      %v10213 = vadd.f32 0.0, %v10212
      %10214 = vmatmul.f32.gmra.mxu0 %v10103
      %v10215 = vpop.f32.mrf.mxu0
      %v10216 = vadd.f32 0.0, %v10215
      %10217 = vmatmul.f32.gmra.mxu0 %v10106
      %v10218 = vpop.f32.mrf.mxu0
      %v10219 = vadd.f32 0.0, %v10218
      %10220 = vmatmul.f32.gmra.mxu0 %v10109
      %v10221 = vpop.f32.mrf.mxu0
      %v10222 = vadd.f32 0.0, %v10221
      %10223 = vdwg.mxu0
      %v10224 = vadd.f32 %v9946, %v10129
      %v10225 = vadd.f32 %v9947, %v10132
      %v10226 = vadd.f32 %v9948, %v10135
      %v10227 = vadd.f32 %v9949, %v10138
      %v10228 = vadd.f32 %v9950, %v10141
      %v10229 = vadd.f32 %v9951, %v10144
      %v10230 = vadd.f32 %v9952, %v10147
      %v10231 = vadd.f32 %v9953, %v10150
      %v10232 = vadd.f32 %v9954, %v10153
      %v10233 = vadd.f32 %v9955, %v10156
      %v10234 = vadd.f32 %v9956, %v10159
      %v10235 = vadd.f32 %v9957, %v10162
      %v10236 = vadd.f32 %v9958, %v10165
      %v10237 = vadd.f32 %v9959, %v10168
      %v10238 = vadd.f32 %v9960, %v10171
      %v10239 = vadd.f32 %v9961, %v10174
      %v10240 = vadd.f32 %v9962, %v10177
      %v10241 = vadd.f32 %v9963, %v10180
      %v10242 = vadd.f32 %v9964, %v10183
      %v10243 = vadd.f32 %v9965, %v10186
      %v10244 = vadd.f32 %v9966, %v10189
      %v10245 = vadd.f32 %v9967, %v10192
      %v10246 = vadd.f32 %v9968, %v10195
      %v10247 = vadd.f32 %v9969, %v10198
      %v10248 = vadd.f32 %v9970, %v10201
      %v10249 = vadd.f32 %v9971, %v10204
      %v10250 = vadd.f32 %v9972, %v10207
      %v10251 = vadd.f32 %v9973, %v10210
      %v10252 = vadd.f32 %v9974, %v10213
      %v10253 = vadd.f32 %v9975, %v10216
      %v10254 = vadd.f32 %v9976, %v10219
      %v10255 = vadd.f32 %v9977, %v10222
      %s10256 = scalar_lea.vmem [#allocation4], 48
      %v10257 = vld [vmem:[%s10256] sm:$0xff]
      %v10258 = vld [vmem:[%s10256 + $0x8] sm:$0xff]
      %v10259 = vld [vmem:[%s10256 + $0x18] sm:$0xff]
      %v10260 = vld [vmem:[%s10256 + $0x20] sm:$0xff]
      %v10261 = vld [vmem:[%s10256 + $0x30] sm:$0xff]
      %v10262 = vld [vmem:[%s10256 + $0x38] sm:$0xff]
      %v10263 = vld [vmem:[%s10256 + $0x48] sm:$0xff]
      %v10264 = vld [vmem:[%s10256 + $0x50] sm:$0xff]
      %v10265 = vld [vmem:[%s10256 + $0x60] sm:$0xff]
      %v10266 = vld [vmem:[%s10256 + $0x68] sm:$0xff]
      %v10267 = vld [vmem:[%s10256 + $0x78] sm:$0xff]
      %v10268 = vld [vmem:[%s10256 + $0x80] sm:$0xff]
      %v10269 = vld [vmem:[%s10256 + $0x90] sm:$0xff]
      %v10270 = vld [vmem:[%s10256 + $0x98] sm:$0xff]
      %v10271 = vld [vmem:[%s10256 + $0xa8] sm:$0xff]
      %v10272 = vld [vmem:[%s10256 + $0xb0] sm:$0xff]
      %v10273 = vld [vmem:[%s10256 + $0xc0] sm:$0xff]
      %v10274 = vld [vmem:[%s10256 + $0xc8] sm:$0xff]
      %v10275 = vld [vmem:[%s10256 + $0xd8] sm:$0xff]
      %v10276 = vld [vmem:[%s10256 + $0xe0] sm:$0xff]
      %v10277 = vld [vmem:[%s10256 + $0xf0] sm:$0xff]
      %v10278 = vld [vmem:[%s10256 + $0xf8] sm:$0xff]
      %v10279 = vld [vmem:[%s10256 + $0x108] sm:$0xff]
      %v10280 = vld [vmem:[%s10256 + $0x110] sm:$0xff]
      %v10281 = vld [vmem:[%s10256 + $0x120] sm:$0xff]
      %v10282 = vld [vmem:[%s10256 + $0x128] sm:$0xff]
      %v10283 = vld [vmem:[%s10256 + $0x138] sm:$0xff]
      %v10284 = vld [vmem:[%s10256 + $0x140] sm:$0xff]
      %v10285 = vld [vmem:[%s10256 + $0x150] sm:$0xff]
      %v10286 = vld [vmem:[%s10256 + $0x158] sm:$0xff]
      %v10287 = vld [vmem:[%s10256 + $0x168] sm:$0xff]
      %v10288 = vld [vmem:[%s10256 + $0x170] sm:$0xff]
      %s10289 = scalar_lea.vmem %s5, 192
      %v10290 = vld [vmem:[%s10289] sm:$0xff]
      %v10291 = vld [vmem:[%s10289 + $0x8] sm:$0xff]
      %v10292 = vld [vmem:[%s10289 + $0x10] sm:$0xff]
      %v10293 = vld [vmem:[%s10289 + $0x18] sm:$0xff]
      %v10295 = vsel %vm962, %v10257, 0
      %v10298 = vsel %vm962, %v10258, 0
      %v10301 = vsel %vm962, %v10259, 0
      %v10304 = vsel %vm962, %v10260, 0
      %v10307 = vsel %vm962, %v10261, 0
      %v10310 = vsel %vm962, %v10262, 0
      %v10313 = vsel %vm962, %v10263, 0
      %v10316 = vsel %vm962, %v10264, 0
      %v10319 = vsel %vm962, %v10265, 0
      %v10322 = vsel %vm962, %v10266, 0
      %v10325 = vsel %vm962, %v10267, 0
      %v10328 = vsel %vm962, %v10268, 0
      %v10331 = vsel %vm962, %v10269, 0
      %v10334 = vsel %vm962, %v10270, 0
      %v10337 = vsel %vm962, %v10271, 0
      %v10340 = vsel %vm962, %v10272, 0
      %v10343 = vsel %vm962, %v10273, 0
      %v10346 = vsel %vm962, %v10274, 0
      %v10349 = vsel %vm962, %v10275, 0
      %v10352 = vsel %vm962, %v10276, 0
      %v10355 = vsel %vm962, %v10277, 0
      %v10358 = vsel %vm962, %v10278, 0
      %v10361 = vsel %vm962, %v10279, 0
      %v10364 = vsel %vm962, %v10280, 0
      %v10367 = vsel %vm962, %v10281, 0
      %v10370 = vsel %vm962, %v10282, 0
      %v10373 = vsel %vm962, %v10283, 0
      %v10376 = vsel %vm962, %v10284, 0
      %v10379 = vsel %vm962, %v10285, 0
      %v10382 = vsel %vm962, %v10286, 0
      %v10385 = vsel %vm962, %v10287, 0
      %v10388 = vsel %vm962, %v10288, 0
      %10390 = vmatpush.msra.mxu0 0.0
      %10391 = vmatpush.msra.mxu0 0.0
      %10392 = vmatpush.msra.mxu0 0.0
      %10393 = vmatpush.msra.mxu0 0.0
      %10394 = vmatpush.msra.mxu0 0.0
      %10395 = vmatpush.msra.mxu0 0.0
      %10396 = vmatpush.msra.mxu0 0.0
      %10397 = vmatpush.msra.mxu0 0.0
      %10398 = vmatpush.msra.mxu0 0.0
      %10399 = vmatpush.msra.mxu0 0.0
      %10400 = vmatpush.msra.mxu0 0.0
      %10401 = vmatpush.msra.mxu0 0.0
      %10402 = vmatpush.msra.mxu0 %v10293
      %10403 = vmatpush.msra.mxu0 %v10292
      %10404 = vmatpush.msra.mxu0 %v10291
      %10405 = vmatpush.msra.mxu0 %v10290
      %10406 = vmatmul.f32.gmra.mxu0 %v10295
      %v10407 = vpop.f32.mrf.mxu0
      %v10408 = vadd.f32 0.0, %v10407
      %10409 = vmatmul.f32.gmra.mxu0 %v10298
      %v10410 = vpop.f32.mrf.mxu0
      %v10411 = vadd.f32 0.0, %v10410
      %10412 = vmatmul.f32.gmra.mxu0 %v10301
      %v10413 = vpop.f32.mrf.mxu0
      %v10414 = vadd.f32 0.0, %v10413
      %10415 = vmatmul.f32.gmra.mxu0 %v10304
      %v10416 = vpop.f32.mrf.mxu0
      %v10417 = vadd.f32 0.0, %v10416
      %10418 = vmatmul.f32.gmra.mxu0 %v10307
      %v10419 = vpop.f32.mrf.mxu0
      %v10420 = vadd.f32 0.0, %v10419
      %10421 = vmatmul.f32.gmra.mxu0 %v10310
      %v10422 = vpop.f32.mrf.mxu0
      %v10423 = vadd.f32 0.0, %v10422
      %10424 = vmatmul.f32.gmra.mxu0 %v10313
      %v10425 = vpop.f32.mrf.mxu0
      %v10426 = vadd.f32 0.0, %v10425
      %10427 = vmatmul.f32.gmra.mxu0 %v10316
      %v10428 = vpop.f32.mrf.mxu0
      %v10429 = vadd.f32 0.0, %v10428
      %10430 = vmatmul.f32.gmra.mxu0 %v10319
      %v10431 = vpop.f32.mrf.mxu0
      %v10432 = vadd.f32 0.0, %v10431
      %10433 = vmatmul.f32.gmra.mxu0 %v10322
      %v10434 = vpop.f32.mrf.mxu0
      %v10435 = vadd.f32 0.0, %v10434
      %10436 = vmatmul.f32.gmra.mxu0 %v10325
      %v10437 = vpop.f32.mrf.mxu0
      %v10438 = vadd.f32 0.0, %v10437
      %10439 = vmatmul.f32.gmra.mxu0 %v10328
      %v10440 = vpop.f32.mrf.mxu0
      %v10441 = vadd.f32 0.0, %v10440
      %10442 = vmatmul.f32.gmra.mxu0 %v10331
      %v10443 = vpop.f32.mrf.mxu0
      %v10444 = vadd.f32 0.0, %v10443
      %10445 = vmatmul.f32.gmra.mxu0 %v10334
      %v10446 = vpop.f32.mrf.mxu0
      %v10447 = vadd.f32 0.0, %v10446
      %10448 = vmatmul.f32.gmra.mxu0 %v10337
      %v10449 = vpop.f32.mrf.mxu0
      %v10450 = vadd.f32 0.0, %v10449
      %10451 = vmatmul.f32.gmra.mxu0 %v10340
      %v10452 = vpop.f32.mrf.mxu0
      %v10453 = vadd.f32 0.0, %v10452
      %10454 = vmatmul.f32.gmra.mxu0 %v10343
      %v10455 = vpop.f32.mrf.mxu0
      %v10456 = vadd.f32 0.0, %v10455
      %10457 = vmatmul.f32.gmra.mxu0 %v10346
      %v10458 = vpop.f32.mrf.mxu0
      %v10459 = vadd.f32 0.0, %v10458
      %10460 = vmatmul.f32.gmra.mxu0 %v10349
      %v10461 = vpop.f32.mrf.mxu0
      %v10462 = vadd.f32 0.0, %v10461
      %10463 = vmatmul.f32.gmra.mxu0 %v10352
      %v10464 = vpop.f32.mrf.mxu0
      %v10465 = vadd.f32 0.0, %v10464
      %10466 = vmatmul.f32.gmra.mxu0 %v10355
      %v10467 = vpop.f32.mrf.mxu0
      %v10468 = vadd.f32 0.0, %v10467
      %10469 = vmatmul.f32.gmra.mxu0 %v10358
      %v10470 = vpop.f32.mrf.mxu0
      %v10471 = vadd.f32 0.0, %v10470
      %10472 = vmatmul.f32.gmra.mxu0 %v10361
      %v10473 = vpop.f32.mrf.mxu0
      %v10474 = vadd.f32 0.0, %v10473
      %10475 = vmatmul.f32.gmra.mxu0 %v10364
      %v10476 = vpop.f32.mrf.mxu0
      %v10477 = vadd.f32 0.0, %v10476
      %10478 = vmatmul.f32.gmra.mxu0 %v10367
      %v10479 = vpop.f32.mrf.mxu0
      %v10480 = vadd.f32 0.0, %v10479
      %10481 = vmatmul.f32.gmra.mxu0 %v10370
      %v10482 = vpop.f32.mrf.mxu0
      %v10483 = vadd.f32 0.0, %v10482
      %10484 = vmatmul.f32.gmra.mxu0 %v10373
      %v10485 = vpop.f32.mrf.mxu0
      %v10486 = vadd.f32 0.0, %v10485
      %10487 = vmatmul.f32.gmra.mxu0 %v10376
      %v10488 = vpop.f32.mrf.mxu0
      %v10489 = vadd.f32 0.0, %v10488
      %10490 = vmatmul.f32.gmra.mxu0 %v10379
      %v10491 = vpop.f32.mrf.mxu0
      %v10492 = vadd.f32 0.0, %v10491
      %10493 = vmatmul.f32.gmra.mxu0 %v10382
      %v10494 = vpop.f32.mrf.mxu0
      %v10495 = vadd.f32 0.0, %v10494
      %10496 = vmatmul.f32.gmra.mxu0 %v10385
      %v10497 = vpop.f32.mrf.mxu0
      %v10498 = vadd.f32 0.0, %v10497
      %10499 = vmatmul.f32.gmra.mxu0 %v10388
      %v10500 = vpop.f32.mrf.mxu0
      %v10501 = vadd.f32 0.0, %v10500
      %10502 = vdwg.mxu0
      %v10503 = vadd.f32 %v10224, %v10408
      %v10504 = vadd.f32 %v10225, %v10411
      %v10505 = vadd.f32 %v10226, %v10414
      %v10506 = vadd.f32 %v10227, %v10417
      %v10507 = vadd.f32 %v10228, %v10420
      %v10508 = vadd.f32 %v10229, %v10423
      %v10509 = vadd.f32 %v10230, %v10426
      %v10510 = vadd.f32 %v10231, %v10429
      %v10511 = vadd.f32 %v10232, %v10432
      %v10512 = vadd.f32 %v10233, %v10435
      %v10513 = vadd.f32 %v10234, %v10438
      %v10514 = vadd.f32 %v10235, %v10441
      %v10515 = vadd.f32 %v10236, %v10444
      %v10516 = vadd.f32 %v10237, %v10447
      %v10517 = vadd.f32 %v10238, %v10450
      %v10518 = vadd.f32 %v10239, %v10453
      %v10519 = vadd.f32 %v10240, %v10456
      %v10520 = vadd.f32 %v10241, %v10459
      %v10521 = vadd.f32 %v10242, %v10462
      %v10522 = vadd.f32 %v10243, %v10465
      %v10523 = vadd.f32 %v10244, %v10468
      %v10524 = vadd.f32 %v10245, %v10471
      %v10525 = vadd.f32 %v10246, %v10474
      %v10526 = vadd.f32 %v10247, %v10477
      %v10527 = vadd.f32 %v10248, %v10480
      %v10528 = vadd.f32 %v10249, %v10483
      %v10529 = vadd.f32 %v10250, %v10486
      %v10530 = vadd.f32 %v10251, %v10489
      %v10531 = vadd.f32 %v10252, %v10492
      %v10532 = vadd.f32 %v10253, %v10495
      %v10533 = vadd.f32 %v10254, %v10498
      %v10534 = vadd.f32 %v10255, %v10501
      %v10535 = vld [vmem:[%s4162 + $0x1] sm:$0xff]
      %v10536 = vld [vmem:[%s4162 + $0x9] sm:$0xff]
      %v10537 = vld [vmem:[%s4162 + $0x19] sm:$0xff]
      %v10538 = vld [vmem:[%s4162 + $0x21] sm:$0xff]
      %v10539 = vld [vmem:[%s4162 + $0x31] sm:$0xff]
      %v10540 = vld [vmem:[%s4162 + $0x39] sm:$0xff]
      %v10541 = vld [vmem:[%s4162 + $0x49] sm:$0xff]
      %v10542 = vld [vmem:[%s4162 + $0x51] sm:$0xff]
      %v10543 = vld [vmem:[%s4162 + $0x61] sm:$0xff]
      %v10544 = vld [vmem:[%s4162 + $0x69] sm:$0xff]
      %v10545 = vld [vmem:[%s4162 + $0x79] sm:$0xff]
      %v10546 = vld [vmem:[%s4162 + $0x81] sm:$0xff]
      %v10547 = vld [vmem:[%s4162 + $0x91] sm:$0xff]
      %v10548 = vld [vmem:[%s4162 + $0x99] sm:$0xff]
      %v10549 = vld [vmem:[%s4162 + $0xa9] sm:$0xff]
      %v10550 = vld [vmem:[%s4162 + $0xb1] sm:$0xff]
      %v10551 = vld [vmem:[%s4162 + $0xc1] sm:$0xff]
      %v10552 = vld [vmem:[%s4162 + $0xc9] sm:$0xff]
      %v10553 = vld [vmem:[%s4162 + $0xd9] sm:$0xff]
      %v10554 = vld [vmem:[%s4162 + $0xe1] sm:$0xff]
      %v10555 = vld [vmem:[%s4162 + $0xf1] sm:$0xff]
      %v10556 = vld [vmem:[%s4162 + $0xf9] sm:$0xff]
      %v10557 = vld [vmem:[%s4162 + $0x109] sm:$0xff]
      %v10558 = vld [vmem:[%s4162 + $0x111] sm:$0xff]
      %v10559 = vld [vmem:[%s4162 + $0x121] sm:$0xff]
      %v10560 = vld [vmem:[%s4162 + $0x129] sm:$0xff]
      %v10561 = vld [vmem:[%s4162 + $0x139] sm:$0xff]
      %v10562 = vld [vmem:[%s4162 + $0x141] sm:$0xff]
      %v10563 = vld [vmem:[%s4162 + $0x151] sm:$0xff]
      %v10564 = vld [vmem:[%s4162 + $0x159] sm:$0xff]
      %v10565 = vld [vmem:[%s4162 + $0x169] sm:$0xff]
      %v10566 = vld [vmem:[%s4162 + $0x171] sm:$0xff]
      %s10567 = scalar_lea.vmem %s4, 224
      %v10568 = vld [vmem:[%s10567] sm:$0xff]
      %v10569 = vld [vmem:[%s10567 + $0x8] sm:$0xff]
      %v10570 = vld [vmem:[%s10567 + $0x10] sm:$0xff]
      %v10571 = vld [vmem:[%s10567 + $0x18] sm:$0xff]
      %v10573 = vsel %vm962, %v10535, 0
      %v10576 = vsel %vm962, %v10536, 0
      %v10579 = vsel %vm962, %v10537, 0
      %v10582 = vsel %vm962, %v10538, 0
      %v10585 = vsel %vm962, %v10539, 0
      %v10588 = vsel %vm962, %v10540, 0
      %v10591 = vsel %vm962, %v10541, 0
      %v10594 = vsel %vm962, %v10542, 0
      %v10597 = vsel %vm962, %v10543, 0
      %v10600 = vsel %vm962, %v10544, 0
      %v10603 = vsel %vm962, %v10545, 0
      %v10606 = vsel %vm962, %v10546, 0
      %v10609 = vsel %vm962, %v10547, 0
      %v10612 = vsel %vm962, %v10548, 0
      %v10615 = vsel %vm962, %v10549, 0
      %v10618 = vsel %vm962, %v10550, 0
      %v10621 = vsel %vm962, %v10551, 0
      %v10624 = vsel %vm962, %v10552, 0
      %v10627 = vsel %vm962, %v10553, 0
      %v10630 = vsel %vm962, %v10554, 0
      %v10633 = vsel %vm962, %v10555, 0
      %v10636 = vsel %vm962, %v10556, 0
      %v10639 = vsel %vm962, %v10557, 0
      %v10642 = vsel %vm962, %v10558, 0
      %v10645 = vsel %vm962, %v10559, 0
      %v10648 = vsel %vm962, %v10560, 0
      %v10651 = vsel %vm962, %v10561, 0
      %v10654 = vsel %vm962, %v10562, 0
      %v10657 = vsel %vm962, %v10563, 0
      %v10660 = vsel %vm962, %v10564, 0
      %v10663 = vsel %vm962, %v10565, 0
      %v10666 = vsel %vm962, %v10566, 0
      %10668 = vmatpush.msra.mxu0 0.0
      %10669 = vmatpush.msra.mxu0 0.0
      %10670 = vmatpush.msra.mxu0 0.0
      %10671 = vmatpush.msra.mxu0 0.0
      %10672 = vmatpush.msra.mxu0 0.0
      %10673 = vmatpush.msra.mxu0 0.0
      %10674 = vmatpush.msra.mxu0 0.0
      %10675 = vmatpush.msra.mxu0 0.0
      %10676 = vmatpush.msra.mxu0 0.0
      %10677 = vmatpush.msra.mxu0 0.0
      %10678 = vmatpush.msra.mxu0 0.0
      %10679 = vmatpush.msra.mxu0 0.0
      %10680 = vmatpush.msra.mxu0 %v10571
      %10681 = vmatpush.msra.mxu0 %v10570
      %10682 = vmatpush.msra.mxu0 %v10569
      %10683 = vmatpush.msra.mxu0 %v10568
      %10684 = vmatmul.f32.gmra.mxu0 %v10573
      %v10685 = vpop.f32.mrf.mxu0
      %v10686 = vadd.f32 0.0, %v10685
      %10687 = vmatmul.f32.gmra.mxu0 %v10576
      %v10688 = vpop.f32.mrf.mxu0
      %v10689 = vadd.f32 0.0, %v10688
      %10690 = vmatmul.f32.gmra.mxu0 %v10579
      %v10691 = vpop.f32.mrf.mxu0
      %v10692 = vadd.f32 0.0, %v10691
      %10693 = vmatmul.f32.gmra.mxu0 %v10582
      %v10694 = vpop.f32.mrf.mxu0
      %v10695 = vadd.f32 0.0, %v10694
      %10696 = vmatmul.f32.gmra.mxu0 %v10585
      %v10697 = vpop.f32.mrf.mxu0
      %v10698 = vadd.f32 0.0, %v10697
      %10699 = vmatmul.f32.gmra.mxu0 %v10588
      %v10700 = vpop.f32.mrf.mxu0
      %v10701 = vadd.f32 0.0, %v10700
      %10702 = vmatmul.f32.gmra.mxu0 %v10591
      %v10703 = vpop.f32.mrf.mxu0
      %v10704 = vadd.f32 0.0, %v10703
      %10705 = vmatmul.f32.gmra.mxu0 %v10594
      %v10706 = vpop.f32.mrf.mxu0
      %v10707 = vadd.f32 0.0, %v10706
      %10708 = vmatmul.f32.gmra.mxu0 %v10597
      %v10709 = vpop.f32.mrf.mxu0
      %v10710 = vadd.f32 0.0, %v10709
      %10711 = vmatmul.f32.gmra.mxu0 %v10600
      %v10712 = vpop.f32.mrf.mxu0
      %v10713 = vadd.f32 0.0, %v10712
      %10714 = vmatmul.f32.gmra.mxu0 %v10603
      %v10715 = vpop.f32.mrf.mxu0
      %v10716 = vadd.f32 0.0, %v10715
      %10717 = vmatmul.f32.gmra.mxu0 %v10606
      %v10718 = vpop.f32.mrf.mxu0
      %v10719 = vadd.f32 0.0, %v10718
      %10720 = vmatmul.f32.gmra.mxu0 %v10609
      %v10721 = vpop.f32.mrf.mxu0
      %v10722 = vadd.f32 0.0, %v10721
      %10723 = vmatmul.f32.gmra.mxu0 %v10612
      %v10724 = vpop.f32.mrf.mxu0
      %v10725 = vadd.f32 0.0, %v10724
      %10726 = vmatmul.f32.gmra.mxu0 %v10615
      %v10727 = vpop.f32.mrf.mxu0
      %v10728 = vadd.f32 0.0, %v10727
      %10729 = vmatmul.f32.gmra.mxu0 %v10618
      %v10730 = vpop.f32.mrf.mxu0
      %v10731 = vadd.f32 0.0, %v10730
      %10732 = vmatmul.f32.gmra.mxu0 %v10621
      %v10733 = vpop.f32.mrf.mxu0
      %v10734 = vadd.f32 0.0, %v10733
      %10735 = vmatmul.f32.gmra.mxu0 %v10624
      %v10736 = vpop.f32.mrf.mxu0
      %v10737 = vadd.f32 0.0, %v10736
      %10738 = vmatmul.f32.gmra.mxu0 %v10627
      %v10739 = vpop.f32.mrf.mxu0
      %v10740 = vadd.f32 0.0, %v10739
      %10741 = vmatmul.f32.gmra.mxu0 %v10630
      %v10742 = vpop.f32.mrf.mxu0
      %v10743 = vadd.f32 0.0, %v10742
      %10744 = vmatmul.f32.gmra.mxu0 %v10633
      %v10745 = vpop.f32.mrf.mxu0
      %v10746 = vadd.f32 0.0, %v10745
      %10747 = vmatmul.f32.gmra.mxu0 %v10636
      %v10748 = vpop.f32.mrf.mxu0
      %v10749 = vadd.f32 0.0, %v10748
      %10750 = vmatmul.f32.gmra.mxu0 %v10639
      %v10751 = vpop.f32.mrf.mxu0
      %v10752 = vadd.f32 0.0, %v10751
      %10753 = vmatmul.f32.gmra.mxu0 %v10642
      %v10754 = vpop.f32.mrf.mxu0
      %v10755 = vadd.f32 0.0, %v10754
      %10756 = vmatmul.f32.gmra.mxu0 %v10645
      %v10757 = vpop.f32.mrf.mxu0
      %v10758 = vadd.f32 0.0, %v10757
      %10759 = vmatmul.f32.gmra.mxu0 %v10648
      %v10760 = vpop.f32.mrf.mxu0
      %v10761 = vadd.f32 0.0, %v10760
      %10762 = vmatmul.f32.gmra.mxu0 %v10651
      %v10763 = vpop.f32.mrf.mxu0
      %v10764 = vadd.f32 0.0, %v10763
      %10765 = vmatmul.f32.gmra.mxu0 %v10654
      %v10766 = vpop.f32.mrf.mxu0
      %v10767 = vadd.f32 0.0, %v10766
      %10768 = vmatmul.f32.gmra.mxu0 %v10657
      %v10769 = vpop.f32.mrf.mxu0
      %v10770 = vadd.f32 0.0, %v10769
      %10771 = vmatmul.f32.gmra.mxu0 %v10660
      %v10772 = vpop.f32.mrf.mxu0
      %v10773 = vadd.f32 0.0, %v10772
      %10774 = vmatmul.f32.gmra.mxu0 %v10663
      %v10775 = vpop.f32.mrf.mxu0
      %v10776 = vadd.f32 0.0, %v10775
      %10777 = vmatmul.f32.gmra.mxu0 %v10666
      %v10778 = vpop.f32.mrf.mxu0
      %v10779 = vadd.f32 0.0, %v10778
      %10780 = vdwg.mxu0
      %v10781 = vadd.f32 %v10503, %v10686
      %v10782 = vadd.f32 %v10504, %v10689
      %v10783 = vadd.f32 %v10505, %v10692
      %v10784 = vadd.f32 %v10506, %v10695
      %v10785 = vadd.f32 %v10507, %v10698
      %v10786 = vadd.f32 %v10508, %v10701
      %v10787 = vadd.f32 %v10509, %v10704
      %v10788 = vadd.f32 %v10510, %v10707
      %v10789 = vadd.f32 %v10511, %v10710
      %v10790 = vadd.f32 %v10512, %v10713
      %v10791 = vadd.f32 %v10513, %v10716
      %v10792 = vadd.f32 %v10514, %v10719
      %v10793 = vadd.f32 %v10515, %v10722
      %v10794 = vadd.f32 %v10516, %v10725
      %v10795 = vadd.f32 %v10517, %v10728
      %v10796 = vadd.f32 %v10518, %v10731
      %v10797 = vadd.f32 %v10519, %v10734
      %v10798 = vadd.f32 %v10520, %v10737
      %v10799 = vadd.f32 %v10521, %v10740
      %v10800 = vadd.f32 %v10522, %v10743
      %v10801 = vadd.f32 %v10523, %v10746
      %v10802 = vadd.f32 %v10524, %v10749
      %v10803 = vadd.f32 %v10525, %v10752
      %v10804 = vadd.f32 %v10526, %v10755
      %v10805 = vadd.f32 %v10527, %v10758
      %v10806 = vadd.f32 %v10528, %v10761
      %v10807 = vadd.f32 %v10529, %v10764
      %v10808 = vadd.f32 %v10530, %v10767
      %v10809 = vadd.f32 %v10531, %v10770
      %v10810 = vadd.f32 %v10532, %v10773
      %v10811 = vadd.f32 %v10533, %v10776
      %v10812 = vadd.f32 %v10534, %v10779
      %v10813 = vld [vmem:[%s10256 + $0x1] sm:$0xff]
      %v10814 = vld [vmem:[%s10256 + $0x9] sm:$0xff]
      %v10815 = vld [vmem:[%s10256 + $0x19] sm:$0xff]
      %v10816 = vld [vmem:[%s10256 + $0x21] sm:$0xff]
      %v10817 = vld [vmem:[%s10256 + $0x31] sm:$0xff]
      %v10818 = vld [vmem:[%s10256 + $0x39] sm:$0xff]
      %v10819 = vld [vmem:[%s10256 + $0x49] sm:$0xff]
      %v10820 = vld [vmem:[%s10256 + $0x51] sm:$0xff]
      %v10821 = vld [vmem:[%s10256 + $0x61] sm:$0xff]
      %v10822 = vld [vmem:[%s10256 + $0x69] sm:$0xff]
      %v10823 = vld [vmem:[%s10256 + $0x79] sm:$0xff]
      %v10824 = vld [vmem:[%s10256 + $0x81] sm:$0xff]
      %v10825 = vld [vmem:[%s10256 + $0x91] sm:$0xff]
      %v10826 = vld [vmem:[%s10256 + $0x99] sm:$0xff]
      %v10827 = vld [vmem:[%s10256 + $0xa9] sm:$0xff]
      %v10828 = vld [vmem:[%s10256 + $0xb1] sm:$0xff]
      %v10829 = vld [vmem:[%s10256 + $0xc1] sm:$0xff]
      %v10830 = vld [vmem:[%s10256 + $0xc9] sm:$0xff]
      %v10831 = vld [vmem:[%s10256 + $0xd9] sm:$0xff]
      %v10832 = vld [vmem:[%s10256 + $0xe1] sm:$0xff]
      %v10833 = vld [vmem:[%s10256 + $0xf1] sm:$0xff]
      %v10834 = vld [vmem:[%s10256 + $0xf9] sm:$0xff]
      %v10835 = vld [vmem:[%s10256 + $0x109] sm:$0xff]
      %v10836 = vld [vmem:[%s10256 + $0x111] sm:$0xff]
      %v10837 = vld [vmem:[%s10256 + $0x121] sm:$0xff]
      %v10838 = vld [vmem:[%s10256 + $0x129] sm:$0xff]
      %v10839 = vld [vmem:[%s10256 + $0x139] sm:$0xff]
      %v10840 = vld [vmem:[%s10256 + $0x141] sm:$0xff]
      %v10841 = vld [vmem:[%s10256 + $0x151] sm:$0xff]
      %v10842 = vld [vmem:[%s10256 + $0x159] sm:$0xff]
      %v10843 = vld [vmem:[%s10256 + $0x169] sm:$0xff]
      %v10844 = vld [vmem:[%s10256 + $0x171] sm:$0xff]
      %s10845 = scalar_lea.vmem %s5, 224
      %v10846 = vld [vmem:[%s10845] sm:$0xff]
      %v10847 = vld [vmem:[%s10845 + $0x8] sm:$0xff]
      %v10848 = vld [vmem:[%s10845 + $0x10] sm:$0xff]
      %v10849 = vld [vmem:[%s10845 + $0x18] sm:$0xff]
      %v10851 = vsel %vm962, %v10813, 0
      %v10854 = vsel %vm962, %v10814, 0
      %v10857 = vsel %vm962, %v10815, 0
      %v10860 = vsel %vm962, %v10816, 0
      %v10863 = vsel %vm962, %v10817, 0
      %v10866 = vsel %vm962, %v10818, 0
      %v10869 = vsel %vm962, %v10819, 0
      %v10872 = vsel %vm962, %v10820, 0
      %v10875 = vsel %vm962, %v10821, 0
      %v10878 = vsel %vm962, %v10822, 0
      %v10881 = vsel %vm962, %v10823, 0
      %v10884 = vsel %vm962, %v10824, 0
      %v10887 = vsel %vm962, %v10825, 0
      %v10890 = vsel %vm962, %v10826, 0
      %v10893 = vsel %vm962, %v10827, 0
      %v10896 = vsel %vm962, %v10828, 0
      %v10899 = vsel %vm962, %v10829, 0
      %v10902 = vsel %vm962, %v10830, 0
      %v10905 = vsel %vm962, %v10831, 0
      %v10908 = vsel %vm962, %v10832, 0
      %v10911 = vsel %vm962, %v10833, 0
      %v10914 = vsel %vm962, %v10834, 0
      %v10917 = vsel %vm962, %v10835, 0
      %v10920 = vsel %vm962, %v10836, 0
      %v10923 = vsel %vm962, %v10837, 0
      %v10926 = vsel %vm962, %v10838, 0
      %v10929 = vsel %vm962, %v10839, 0
      %v10932 = vsel %vm962, %v10840, 0
      %v10935 = vsel %vm962, %v10841, 0
      %v10938 = vsel %vm962, %v10842, 0
      %v10941 = vsel %vm962, %v10843, 0
      %v10944 = vsel %vm962, %v10844, 0
      %10946 = vmatpush.msra.mxu0 0.0
      %10947 = vmatpush.msra.mxu0 0.0
      %10948 = vmatpush.msra.mxu0 0.0
      %10949 = vmatpush.msra.mxu0 0.0
      %10950 = vmatpush.msra.mxu0 0.0
      %10951 = vmatpush.msra.mxu0 0.0
      %10952 = vmatpush.msra.mxu0 0.0
      %10953 = vmatpush.msra.mxu0 0.0
      %10954 = vmatpush.msra.mxu0 0.0
      %10955 = vmatpush.msra.mxu0 0.0
      %10956 = vmatpush.msra.mxu0 0.0
      %10957 = vmatpush.msra.mxu0 0.0
      %10958 = vmatpush.msra.mxu0 %v10849
      %10959 = vmatpush.msra.mxu0 %v10848
      %10960 = vmatpush.msra.mxu0 %v10847
      %10961 = vmatpush.msra.mxu0 %v10846
      %10962 = vmatmul.f32.gmra.mxu0 %v10851
      %v10963 = vpop.f32.mrf.mxu0
      %v10964 = vadd.f32 0.0, %v10963
      %10965 = vmatmul.f32.gmra.mxu0 %v10854
      %v10966 = vpop.f32.mrf.mxu0
      %v10967 = vadd.f32 0.0, %v10966
      %10968 = vmatmul.f32.gmra.mxu0 %v10857
      %v10969 = vpop.f32.mrf.mxu0
      %v10970 = vadd.f32 0.0, %v10969
      %10971 = vmatmul.f32.gmra.mxu0 %v10860
      %v10972 = vpop.f32.mrf.mxu0
      %v10973 = vadd.f32 0.0, %v10972
      %10974 = vmatmul.f32.gmra.mxu0 %v10863
      %v10975 = vpop.f32.mrf.mxu0
      %v10976 = vadd.f32 0.0, %v10975
      %10977 = vmatmul.f32.gmra.mxu0 %v10866
      %v10978 = vpop.f32.mrf.mxu0
      %v10979 = vadd.f32 0.0, %v10978
      %10980 = vmatmul.f32.gmra.mxu0 %v10869
      %v10981 = vpop.f32.mrf.mxu0
      %v10982 = vadd.f32 0.0, %v10981
      %10983 = vmatmul.f32.gmra.mxu0 %v10872
      %v10984 = vpop.f32.mrf.mxu0
      %v10985 = vadd.f32 0.0, %v10984
      %10986 = vmatmul.f32.gmra.mxu0 %v10875
      %v10987 = vpop.f32.mrf.mxu0
      %v10988 = vadd.f32 0.0, %v10987
      %10989 = vmatmul.f32.gmra.mxu0 %v10878
      %v10990 = vpop.f32.mrf.mxu0
      %v10991 = vadd.f32 0.0, %v10990
      %10992 = vmatmul.f32.gmra.mxu0 %v10881
      %v10993 = vpop.f32.mrf.mxu0
      %v10994 = vadd.f32 0.0, %v10993
      %10995 = vmatmul.f32.gmra.mxu0 %v10884
      %v10996 = vpop.f32.mrf.mxu0
      %v10997 = vadd.f32 0.0, %v10996
      %10998 = vmatmul.f32.gmra.mxu0 %v10887
      %v10999 = vpop.f32.mrf.mxu0
      %v11000 = vadd.f32 0.0, %v10999
      %11001 = vmatmul.f32.gmra.mxu0 %v10890
      %v11002 = vpop.f32.mrf.mxu0
      %v11003 = vadd.f32 0.0, %v11002
      %11004 = vmatmul.f32.gmra.mxu0 %v10893
      %v11005 = vpop.f32.mrf.mxu0
      %v11006 = vadd.f32 0.0, %v11005
      %11007 = vmatmul.f32.gmra.mxu0 %v10896
      %v11008 = vpop.f32.mrf.mxu0
      %v11009 = vadd.f32 0.0, %v11008
      %11010 = vmatmul.f32.gmra.mxu0 %v10899
      %v11011 = vpop.f32.mrf.mxu0
      %v11012 = vadd.f32 0.0, %v11011
      %11013 = vmatmul.f32.gmra.mxu0 %v10902
      %v11014 = vpop.f32.mrf.mxu0
      %v11015 = vadd.f32 0.0, %v11014
      %11016 = vmatmul.f32.gmra.mxu0 %v10905
      %v11017 = vpop.f32.mrf.mxu0
      %v11018 = vadd.f32 0.0, %v11017
      %11019 = vmatmul.f32.gmra.mxu0 %v10908
      %v11020 = vpop.f32.mrf.mxu0
      %v11021 = vadd.f32 0.0, %v11020
      %11022 = vmatmul.f32.gmra.mxu0 %v10911
      %v11023 = vpop.f32.mrf.mxu0
      %v11024 = vadd.f32 0.0, %v11023
      %11025 = vmatmul.f32.gmra.mxu0 %v10914
      %v11026 = vpop.f32.mrf.mxu0
      %v11027 = vadd.f32 0.0, %v11026
      %11028 = vmatmul.f32.gmra.mxu0 %v10917
      %v11029 = vpop.f32.mrf.mxu0
      %v11030 = vadd.f32 0.0, %v11029
      %11031 = vmatmul.f32.gmra.mxu0 %v10920
      %v11032 = vpop.f32.mrf.mxu0
      %v11033 = vadd.f32 0.0, %v11032
      %11034 = vmatmul.f32.gmra.mxu0 %v10923
      %v11035 = vpop.f32.mrf.mxu0
      %v11036 = vadd.f32 0.0, %v11035
      %11037 = vmatmul.f32.gmra.mxu0 %v10926
      %v11038 = vpop.f32.mrf.mxu0
      %v11039 = vadd.f32 0.0, %v11038
      %11040 = vmatmul.f32.gmra.mxu0 %v10929
      %v11041 = vpop.f32.mrf.mxu0
      %v11042 = vadd.f32 0.0, %v11041
      %11043 = vmatmul.f32.gmra.mxu0 %v10932
      %v11044 = vpop.f32.mrf.mxu0
      %v11045 = vadd.f32 0.0, %v11044
      %11046 = vmatmul.f32.gmra.mxu0 %v10935
      %v11047 = vpop.f32.mrf.mxu0
      %v11048 = vadd.f32 0.0, %v11047
      %11049 = vmatmul.f32.gmra.mxu0 %v10938
      %v11050 = vpop.f32.mrf.mxu0
      %v11051 = vadd.f32 0.0, %v11050
      %11052 = vmatmul.f32.gmra.mxu0 %v10941
      %v11053 = vpop.f32.mrf.mxu0
      %v11054 = vadd.f32 0.0, %v11053
      %11055 = vmatmul.f32.gmra.mxu0 %v10944
      %v11056 = vpop.f32.mrf.mxu0
      %v11057 = vadd.f32 0.0, %v11056
      %11058 = vdwg.mxu0
      %v11059 = vadd.f32 %v10781, %v10964
      %v11060 = vadd.f32 %v10782, %v10967
      %v11061 = vadd.f32 %v10783, %v10970
      %v11062 = vadd.f32 %v10784, %v10973
      %v11063 = vadd.f32 %v10785, %v10976
      %v11064 = vadd.f32 %v10786, %v10979
      %v11065 = vadd.f32 %v10787, %v10982
      %v11066 = vadd.f32 %v10788, %v10985
      %v11067 = vadd.f32 %v10789, %v10988
      %v11068 = vadd.f32 %v10790, %v10991
      %v11069 = vadd.f32 %v10791, %v10994
      %v11070 = vadd.f32 %v10792, %v10997
      %v11071 = vadd.f32 %v10793, %v11000
      %v11072 = vadd.f32 %v10794, %v11003
      %v11073 = vadd.f32 %v10795, %v11006
      %v11074 = vadd.f32 %v10796, %v11009
      %v11075 = vadd.f32 %v10797, %v11012
      %v11076 = vadd.f32 %v10798, %v11015
      %v11077 = vadd.f32 %v10799, %v11018
      %v11078 = vadd.f32 %v10800, %v11021
      %v11079 = vadd.f32 %v10801, %v11024
      %v11080 = vadd.f32 %v10802, %v11027
      %v11081 = vadd.f32 %v10803, %v11030
      %v11082 = vadd.f32 %v10804, %v11033
      %v11083 = vadd.f32 %v10805, %v11036
      %v11084 = vadd.f32 %v10806, %v11039
      %v11085 = vadd.f32 %v10807, %v11042
      %v11086 = vadd.f32 %v10808, %v11045
      %v11087 = vadd.f32 %v10809, %v11048
      %v11088 = vadd.f32 %v10810, %v11051
      %v11089 = vadd.f32 %v10811, %v11054
      %v11090 = vadd.f32 %v10812, %v11057
      %v11091 = vld [vmem:[%s4162 + $0x2] sm:$0xff]
      %v11092 = vld [vmem:[%s4162 + $0xa] sm:$0xff]
      %v11093 = vld [vmem:[%s4162 + $0x1a] sm:$0xff]
      %v11094 = vld [vmem:[%s4162 + $0x22] sm:$0xff]
      %v11095 = vld [vmem:[%s4162 + $0x32] sm:$0xff]
      %v11096 = vld [vmem:[%s4162 + $0x3a] sm:$0xff]
      %v11097 = vld [vmem:[%s4162 + $0x4a] sm:$0xff]
      %v11098 = vld [vmem:[%s4162 + $0x52] sm:$0xff]
      %v11099 = vld [vmem:[%s4162 + $0x62] sm:$0xff]
      %v11100 = vld [vmem:[%s4162 + $0x6a] sm:$0xff]
      %v11101 = vld [vmem:[%s4162 + $0x7a] sm:$0xff]
      %v11102 = vld [vmem:[%s4162 + $0x82] sm:$0xff]
      %v11103 = vld [vmem:[%s4162 + $0x92] sm:$0xff]
      %v11104 = vld [vmem:[%s4162 + $0x9a] sm:$0xff]
      %v11105 = vld [vmem:[%s4162 + $0xaa] sm:$0xff]
      %v11106 = vld [vmem:[%s4162 + $0xb2] sm:$0xff]
      %v11107 = vld [vmem:[%s4162 + $0xc2] sm:$0xff]
      %v11108 = vld [vmem:[%s4162 + $0xca] sm:$0xff]
      %v11109 = vld [vmem:[%s4162 + $0xda] sm:$0xff]
      %v11110 = vld [vmem:[%s4162 + $0xe2] sm:$0xff]
      %v11111 = vld [vmem:[%s4162 + $0xf2] sm:$0xff]
      %v11112 = vld [vmem:[%s4162 + $0xfa] sm:$0xff]
      %v11113 = vld [vmem:[%s4162 + $0x10a] sm:$0xff]
      %v11114 = vld [vmem:[%s4162 + $0x112] sm:$0xff]
      %v11115 = vld [vmem:[%s4162 + $0x122] sm:$0xff]
      %v11116 = vld [vmem:[%s4162 + $0x12a] sm:$0xff]
      %v11117 = vld [vmem:[%s4162 + $0x13a] sm:$0xff]
      %v11118 = vld [vmem:[%s4162 + $0x142] sm:$0xff]
      %v11119 = vld [vmem:[%s4162 + $0x152] sm:$0xff]
      %v11120 = vld [vmem:[%s4162 + $0x15a] sm:$0xff]
      %v11121 = vld [vmem:[%s4162 + $0x16a] sm:$0xff]
      %v11122 = vld [vmem:[%s4162 + $0x172] sm:$0xff]
      %s11123 = scalar_lea.vmem %s4, 256
      %v11124 = vld [vmem:[%s11123] sm:$0xff]
      %v11125 = vld [vmem:[%s11123 + $0x8] sm:$0xff]
      %v11126 = vld [vmem:[%s11123 + $0x10] sm:$0xff]
      %v11127 = vld [vmem:[%s11123 + $0x18] sm:$0xff]
      %v11129 = vsel %vm962, %v11091, 0
      %v11132 = vsel %vm962, %v11092, 0
      %v11135 = vsel %vm962, %v11093, 0
      %v11138 = vsel %vm962, %v11094, 0
      %v11141 = vsel %vm962, %v11095, 0
      %v11144 = vsel %vm962, %v11096, 0
      %v11147 = vsel %vm962, %v11097, 0
      %v11150 = vsel %vm962, %v11098, 0
      %v11153 = vsel %vm962, %v11099, 0
      %v11156 = vsel %vm962, %v11100, 0
      %v11159 = vsel %vm962, %v11101, 0
      %v11162 = vsel %vm962, %v11102, 0
      %v11165 = vsel %vm962, %v11103, 0
      %v11168 = vsel %vm962, %v11104, 0
      %v11171 = vsel %vm962, %v11105, 0
      %v11174 = vsel %vm962, %v11106, 0
      %v11177 = vsel %vm962, %v11107, 0
      %v11180 = vsel %vm962, %v11108, 0
      %v11183 = vsel %vm962, %v11109, 0
      %v11186 = vsel %vm962, %v11110, 0
      %v11189 = vsel %vm962, %v11111, 0
      %v11192 = vsel %vm962, %v11112, 0
      %v11195 = vsel %vm962, %v11113, 0
      %v11198 = vsel %vm962, %v11114, 0
      %v11201 = vsel %vm962, %v11115, 0
      %v11204 = vsel %vm962, %v11116, 0
      %v11207 = vsel %vm962, %v11117, 0
      %v11210 = vsel %vm962, %v11118, 0
      %v11213 = vsel %vm962, %v11119, 0
      %v11216 = vsel %vm962, %v11120, 0
      %v11219 = vsel %vm962, %v11121, 0
      %v11222 = vsel %vm962, %v11122, 0
      %11224 = vmatpush.msra.mxu0 0.0
      %11225 = vmatpush.msra.mxu0 0.0
      %11226 = vmatpush.msra.mxu0 0.0
      %11227 = vmatpush.msra.mxu0 0.0
      %11228 = vmatpush.msra.mxu0 0.0
      %11229 = vmatpush.msra.mxu0 0.0
      %11230 = vmatpush.msra.mxu0 0.0
      %11231 = vmatpush.msra.mxu0 0.0
      %11232 = vmatpush.msra.mxu0 0.0
      %11233 = vmatpush.msra.mxu0 0.0
      %11234 = vmatpush.msra.mxu0 0.0
      %11235 = vmatpush.msra.mxu0 0.0
      %11236 = vmatpush.msra.mxu0 %v11127
      %11237 = vmatpush.msra.mxu0 %v11126
      %11238 = vmatpush.msra.mxu0 %v11125
      %11239 = vmatpush.msra.mxu0 %v11124
      %11240 = vmatmul.f32.gmra.mxu0 %v11129
      %v11241 = vpop.f32.mrf.mxu0
      %v11242 = vadd.f32 0.0, %v11241
      %11243 = vmatmul.f32.gmra.mxu0 %v11132
      %v11244 = vpop.f32.mrf.mxu0
      %v11245 = vadd.f32 0.0, %v11244
      %11246 = vmatmul.f32.gmra.mxu0 %v11135
      %v11247 = vpop.f32.mrf.mxu0
      %v11248 = vadd.f32 0.0, %v11247
      %11249 = vmatmul.f32.gmra.mxu0 %v11138
      %v11250 = vpop.f32.mrf.mxu0
      %v11251 = vadd.f32 0.0, %v11250
      %11252 = vmatmul.f32.gmra.mxu0 %v11141
      %v11253 = vpop.f32.mrf.mxu0
      %v11254 = vadd.f32 0.0, %v11253
      %11255 = vmatmul.f32.gmra.mxu0 %v11144
      %v11256 = vpop.f32.mrf.mxu0
      %v11257 = vadd.f32 0.0, %v11256
      %11258 = vmatmul.f32.gmra.mxu0 %v11147
      %v11259 = vpop.f32.mrf.mxu0
      %v11260 = vadd.f32 0.0, %v11259
      %11261 = vmatmul.f32.gmra.mxu0 %v11150
      %v11262 = vpop.f32.mrf.mxu0
      %v11263 = vadd.f32 0.0, %v11262
      %11264 = vmatmul.f32.gmra.mxu0 %v11153
      %v11265 = vpop.f32.mrf.mxu0
      %v11266 = vadd.f32 0.0, %v11265
      %11267 = vmatmul.f32.gmra.mxu0 %v11156
      %v11268 = vpop.f32.mrf.mxu0
      %v11269 = vadd.f32 0.0, %v11268
      %11270 = vmatmul.f32.gmra.mxu0 %v11159
      %v11271 = vpop.f32.mrf.mxu0
      %v11272 = vadd.f32 0.0, %v11271
      %11273 = vmatmul.f32.gmra.mxu0 %v11162
      %v11274 = vpop.f32.mrf.mxu0
      %v11275 = vadd.f32 0.0, %v11274
      %11276 = vmatmul.f32.gmra.mxu0 %v11165
      %v11277 = vpop.f32.mrf.mxu0
      %v11278 = vadd.f32 0.0, %v11277
      %11279 = vmatmul.f32.gmra.mxu0 %v11168
      %v11280 = vpop.f32.mrf.mxu0
      %v11281 = vadd.f32 0.0, %v11280
      %11282 = vmatmul.f32.gmra.mxu0 %v11171
      %v11283 = vpop.f32.mrf.mxu0
      %v11284 = vadd.f32 0.0, %v11283
      %11285 = vmatmul.f32.gmra.mxu0 %v11174
      %v11286 = vpop.f32.mrf.mxu0
      %v11287 = vadd.f32 0.0, %v11286
      %11288 = vmatmul.f32.gmra.mxu0 %v11177
      %v11289 = vpop.f32.mrf.mxu0
      %v11290 = vadd.f32 0.0, %v11289
      %11291 = vmatmul.f32.gmra.mxu0 %v11180
      %v11292 = vpop.f32.mrf.mxu0
      %v11293 = vadd.f32 0.0, %v11292
      %11294 = vmatmul.f32.gmra.mxu0 %v11183
      %v11295 = vpop.f32.mrf.mxu0
      %v11296 = vadd.f32 0.0, %v11295
      %11297 = vmatmul.f32.gmra.mxu0 %v11186
      %v11298 = vpop.f32.mrf.mxu0
      %v11299 = vadd.f32 0.0, %v11298
      %11300 = vmatmul.f32.gmra.mxu0 %v11189
      %v11301 = vpop.f32.mrf.mxu0
      %v11302 = vadd.f32 0.0, %v11301
      %11303 = vmatmul.f32.gmra.mxu0 %v11192
      %v11304 = vpop.f32.mrf.mxu0
      %v11305 = vadd.f32 0.0, %v11304
      %11306 = vmatmul.f32.gmra.mxu0 %v11195
      %v11307 = vpop.f32.mrf.mxu0
      %v11308 = vadd.f32 0.0, %v11307
      %11309 = vmatmul.f32.gmra.mxu0 %v11198
      %v11310 = vpop.f32.mrf.mxu0
      %v11311 = vadd.f32 0.0, %v11310
      %11312 = vmatmul.f32.gmra.mxu0 %v11201
      %v11313 = vpop.f32.mrf.mxu0
      %v11314 = vadd.f32 0.0, %v11313
      %11315 = vmatmul.f32.gmra.mxu0 %v11204
      %v11316 = vpop.f32.mrf.mxu0
      %v11317 = vadd.f32 0.0, %v11316
      %11318 = vmatmul.f32.gmra.mxu0 %v11207
      %v11319 = vpop.f32.mrf.mxu0
      %v11320 = vadd.f32 0.0, %v11319
      %11321 = vmatmul.f32.gmra.mxu0 %v11210
      %v11322 = vpop.f32.mrf.mxu0
      %v11323 = vadd.f32 0.0, %v11322
      %11324 = vmatmul.f32.gmra.mxu0 %v11213
      %v11325 = vpop.f32.mrf.mxu0
      %v11326 = vadd.f32 0.0, %v11325
      %11327 = vmatmul.f32.gmra.mxu0 %v11216
      %v11328 = vpop.f32.mrf.mxu0
      %v11329 = vadd.f32 0.0, %v11328
      %11330 = vmatmul.f32.gmra.mxu0 %v11219
      %v11331 = vpop.f32.mrf.mxu0
      %v11332 = vadd.f32 0.0, %v11331
      %11333 = vmatmul.f32.gmra.mxu0 %v11222
      %v11334 = vpop.f32.mrf.mxu0
      %v11335 = vadd.f32 0.0, %v11334
      %11336 = vdwg.mxu0
      %v11337 = vadd.f32 %v11059, %v11242
      %v11338 = vadd.f32 %v11060, %v11245
      %v11339 = vadd.f32 %v11061, %v11248
      %v11340 = vadd.f32 %v11062, %v11251
      %v11341 = vadd.f32 %v11063, %v11254
      %v11342 = vadd.f32 %v11064, %v11257
      %v11343 = vadd.f32 %v11065, %v11260
      %v11344 = vadd.f32 %v11066, %v11263
      %v11345 = vadd.f32 %v11067, %v11266
      %v11346 = vadd.f32 %v11068, %v11269
      %v11347 = vadd.f32 %v11069, %v11272
      %v11348 = vadd.f32 %v11070, %v11275
      %v11349 = vadd.f32 %v11071, %v11278
      %v11350 = vadd.f32 %v11072, %v11281
      %v11351 = vadd.f32 %v11073, %v11284
      %v11352 = vadd.f32 %v11074, %v11287
      %v11353 = vadd.f32 %v11075, %v11290
      %v11354 = vadd.f32 %v11076, %v11293
      %v11355 = vadd.f32 %v11077, %v11296
      %v11356 = vadd.f32 %v11078, %v11299
      %v11357 = vadd.f32 %v11079, %v11302
      %v11358 = vadd.f32 %v11080, %v11305
      %v11359 = vadd.f32 %v11081, %v11308
      %v11360 = vadd.f32 %v11082, %v11311
      %v11361 = vadd.f32 %v11083, %v11314
      %v11362 = vadd.f32 %v11084, %v11317
      %v11363 = vadd.f32 %v11085, %v11320
      %v11364 = vadd.f32 %v11086, %v11323
      %v11365 = vadd.f32 %v11087, %v11326
      %v11366 = vadd.f32 %v11088, %v11329
      %v11367 = vadd.f32 %v11089, %v11332
      %v11368 = vadd.f32 %v11090, %v11335
      %v11369 = vld [vmem:[%s10256 + $0x2] sm:$0xff]
      %v11370 = vld [vmem:[%s10256 + $0xa] sm:$0xff]
      %v11371 = vld [vmem:[%s10256 + $0x1a] sm:$0xff]
      %v11372 = vld [vmem:[%s10256 + $0x22] sm:$0xff]
      %v11373 = vld [vmem:[%s10256 + $0x32] sm:$0xff]
      %v11374 = vld [vmem:[%s10256 + $0x3a] sm:$0xff]
      %v11375 = vld [vmem:[%s10256 + $0x4a] sm:$0xff]
      %v11376 = vld [vmem:[%s10256 + $0x52] sm:$0xff]
      %v11377 = vld [vmem:[%s10256 + $0x62] sm:$0xff]
      %v11378 = vld [vmem:[%s10256 + $0x6a] sm:$0xff]
      %v11379 = vld [vmem:[%s10256 + $0x7a] sm:$0xff]
      %v11380 = vld [vmem:[%s10256 + $0x82] sm:$0xff]
      %v11381 = vld [vmem:[%s10256 + $0x92] sm:$0xff]
      %v11382 = vld [vmem:[%s10256 + $0x9a] sm:$0xff]
      %v11383 = vld [vmem:[%s10256 + $0xaa] sm:$0xff]
      %v11384 = vld [vmem:[%s10256 + $0xb2] sm:$0xff]
      %v11385 = vld [vmem:[%s10256 + $0xc2] sm:$0xff]
      %v11386 = vld [vmem:[%s10256 + $0xca] sm:$0xff]
      %v11387 = vld [vmem:[%s10256 + $0xda] sm:$0xff]
      %v11388 = vld [vmem:[%s10256 + $0xe2] sm:$0xff]
      %v11389 = vld [vmem:[%s10256 + $0xf2] sm:$0xff]
      %v11390 = vld [vmem:[%s10256 + $0xfa] sm:$0xff]
      %v11391 = vld [vmem:[%s10256 + $0x10a] sm:$0xff]
      %v11392 = vld [vmem:[%s10256 + $0x112] sm:$0xff]
      %v11393 = vld [vmem:[%s10256 + $0x122] sm:$0xff]
      %v11394 = vld [vmem:[%s10256 + $0x12a] sm:$0xff]
      %v11395 = vld [vmem:[%s10256 + $0x13a] sm:$0xff]
      %v11396 = vld [vmem:[%s10256 + $0x142] sm:$0xff]
      %v11397 = vld [vmem:[%s10256 + $0x152] sm:$0xff]
      %v11398 = vld [vmem:[%s10256 + $0x15a] sm:$0xff]
      %v11399 = vld [vmem:[%s10256 + $0x16a] sm:$0xff]
      %v11400 = vld [vmem:[%s10256 + $0x172] sm:$0xff]
      %s11401 = scalar_lea.vmem %s5, 256
      %v11402 = vld [vmem:[%s11401] sm:$0xff]
      %v11403 = vld [vmem:[%s11401 + $0x8] sm:$0xff]
      %v11404 = vld [vmem:[%s11401 + $0x10] sm:$0xff]
      %v11405 = vld [vmem:[%s11401 + $0x18] sm:$0xff]
      %v11407 = vsel %vm962, %v11369, 0
      %v11410 = vsel %vm962, %v11370, 0
      %v11413 = vsel %vm962, %v11371, 0
      %v11416 = vsel %vm962, %v11372, 0
      %v11419 = vsel %vm962, %v11373, 0
      %v11422 = vsel %vm962, %v11374, 0
      %v11425 = vsel %vm962, %v11375, 0
      %v11428 = vsel %vm962, %v11376, 0
      %v11431 = vsel %vm962, %v11377, 0
      %v11434 = vsel %vm962, %v11378, 0
      %v11437 = vsel %vm962, %v11379, 0
      %v11440 = vsel %vm962, %v11380, 0
      %v11443 = vsel %vm962, %v11381, 0
      %v11446 = vsel %vm962, %v11382, 0
      %v11449 = vsel %vm962, %v11383, 0
      %v11452 = vsel %vm962, %v11384, 0
      %v11455 = vsel %vm962, %v11385, 0
      %v11458 = vsel %vm962, %v11386, 0
      %v11461 = vsel %vm962, %v11387, 0
      %v11464 = vsel %vm962, %v11388, 0
      %v11467 = vsel %vm962, %v11389, 0
      %v11470 = vsel %vm962, %v11390, 0
      %v11473 = vsel %vm962, %v11391, 0
      %v11476 = vsel %vm962, %v11392, 0
      %v11479 = vsel %vm962, %v11393, 0
      %v11482 = vsel %vm962, %v11394, 0
      %v11485 = vsel %vm962, %v11395, 0
      %v11488 = vsel %vm962, %v11396, 0
      %v11491 = vsel %vm962, %v11397, 0
      %v11494 = vsel %vm962, %v11398, 0
      %v11497 = vsel %vm962, %v11399, 0
      %v11500 = vsel %vm962, %v11400, 0
      %11502 = vmatpush.msra.mxu0 0.0
      %11503 = vmatpush.msra.mxu0 0.0
      %11504 = vmatpush.msra.mxu0 0.0
      %11505 = vmatpush.msra.mxu0 0.0
      %11506 = vmatpush.msra.mxu0 0.0
      %11507 = vmatpush.msra.mxu0 0.0
      %11508 = vmatpush.msra.mxu0 0.0
      %11509 = vmatpush.msra.mxu0 0.0
      %11510 = vmatpush.msra.mxu0 0.0
      %11511 = vmatpush.msra.mxu0 0.0
      %11512 = vmatpush.msra.mxu0 0.0
      %11513 = vmatpush.msra.mxu0 0.0
      %11514 = vmatpush.msra.mxu0 %v11405
      %11515 = vmatpush.msra.mxu0 %v11404
      %11516 = vmatpush.msra.mxu0 %v11403
      %11517 = vmatpush.msra.mxu0 %v11402
      %11518 = vmatmul.f32.gmra.mxu0 %v11407
      %v11519 = vpop.f32.mrf.mxu0
      %v11520 = vadd.f32 0.0, %v11519
      %11521 = vmatmul.f32.gmra.mxu0 %v11410
      %v11522 = vpop.f32.mrf.mxu0
      %v11523 = vadd.f32 0.0, %v11522
      %11524 = vmatmul.f32.gmra.mxu0 %v11413
      %v11525 = vpop.f32.mrf.mxu0
      %v11526 = vadd.f32 0.0, %v11525
      %11527 = vmatmul.f32.gmra.mxu0 %v11416
      %v11528 = vpop.f32.mrf.mxu0
      %v11529 = vadd.f32 0.0, %v11528
      %11530 = vmatmul.f32.gmra.mxu0 %v11419
      %v11531 = vpop.f32.mrf.mxu0
      %v11532 = vadd.f32 0.0, %v11531
      %11533 = vmatmul.f32.gmra.mxu0 %v11422
      %v11534 = vpop.f32.mrf.mxu0
      %v11535 = vadd.f32 0.0, %v11534
      %11536 = vmatmul.f32.gmra.mxu0 %v11425
      %v11537 = vpop.f32.mrf.mxu0
      %v11538 = vadd.f32 0.0, %v11537
      %11539 = vmatmul.f32.gmra.mxu0 %v11428
      %v11540 = vpop.f32.mrf.mxu0
      %v11541 = vadd.f32 0.0, %v11540
      %11542 = vmatmul.f32.gmra.mxu0 %v11431
      %v11543 = vpop.f32.mrf.mxu0
      %v11544 = vadd.f32 0.0, %v11543
      %11545 = vmatmul.f32.gmra.mxu0 %v11434
      %v11546 = vpop.f32.mrf.mxu0
      %v11547 = vadd.f32 0.0, %v11546
      %11548 = vmatmul.f32.gmra.mxu0 %v11437
      %v11549 = vpop.f32.mrf.mxu0
      %v11550 = vadd.f32 0.0, %v11549
      %11551 = vmatmul.f32.gmra.mxu0 %v11440
      %v11552 = vpop.f32.mrf.mxu0
      %v11553 = vadd.f32 0.0, %v11552
      %11554 = vmatmul.f32.gmra.mxu0 %v11443
      %v11555 = vpop.f32.mrf.mxu0
      %v11556 = vadd.f32 0.0, %v11555
      %11557 = vmatmul.f32.gmra.mxu0 %v11446
      %v11558 = vpop.f32.mrf.mxu0
      %v11559 = vadd.f32 0.0, %v11558
      %11560 = vmatmul.f32.gmra.mxu0 %v11449
      %v11561 = vpop.f32.mrf.mxu0
      %v11562 = vadd.f32 0.0, %v11561
      %11563 = vmatmul.f32.gmra.mxu0 %v11452
      %v11564 = vpop.f32.mrf.mxu0
      %v11565 = vadd.f32 0.0, %v11564
      %11566 = vmatmul.f32.gmra.mxu0 %v11455
      %v11567 = vpop.f32.mrf.mxu0
      %v11568 = vadd.f32 0.0, %v11567
      %11569 = vmatmul.f32.gmra.mxu0 %v11458
      %v11570 = vpop.f32.mrf.mxu0
      %v11571 = vadd.f32 0.0, %v11570
      %11572 = vmatmul.f32.gmra.mxu0 %v11461
      %v11573 = vpop.f32.mrf.mxu0
      %v11574 = vadd.f32 0.0, %v11573
      %11575 = vmatmul.f32.gmra.mxu0 %v11464
      %v11576 = vpop.f32.mrf.mxu0
      %v11577 = vadd.f32 0.0, %v11576
      %11578 = vmatmul.f32.gmra.mxu0 %v11467
      %v11579 = vpop.f32.mrf.mxu0
      %v11580 = vadd.f32 0.0, %v11579
      %11581 = vmatmul.f32.gmra.mxu0 %v11470
      %v11582 = vpop.f32.mrf.mxu0
      %v11583 = vadd.f32 0.0, %v11582
      %11584 = vmatmul.f32.gmra.mxu0 %v11473
      %v11585 = vpop.f32.mrf.mxu0
      %v11586 = vadd.f32 0.0, %v11585
      %11587 = vmatmul.f32.gmra.mxu0 %v11476
      %v11588 = vpop.f32.mrf.mxu0
      %v11589 = vadd.f32 0.0, %v11588
      %11590 = vmatmul.f32.gmra.mxu0 %v11479
      %v11591 = vpop.f32.mrf.mxu0
      %v11592 = vadd.f32 0.0, %v11591
      %11593 = vmatmul.f32.gmra.mxu0 %v11482
      %v11594 = vpop.f32.mrf.mxu0
      %v11595 = vadd.f32 0.0, %v11594
      %11596 = vmatmul.f32.gmra.mxu0 %v11485
      %v11597 = vpop.f32.mrf.mxu0
      %v11598 = vadd.f32 0.0, %v11597
      %11599 = vmatmul.f32.gmra.mxu0 %v11488
      %v11600 = vpop.f32.mrf.mxu0
      %v11601 = vadd.f32 0.0, %v11600
      %11602 = vmatmul.f32.gmra.mxu0 %v11491
      %v11603 = vpop.f32.mrf.mxu0
      %v11604 = vadd.f32 0.0, %v11603
      %11605 = vmatmul.f32.gmra.mxu0 %v11494
      %v11606 = vpop.f32.mrf.mxu0
      %v11607 = vadd.f32 0.0, %v11606
      %11608 = vmatmul.f32.gmra.mxu0 %v11497
      %v11609 = vpop.f32.mrf.mxu0
      %v11610 = vadd.f32 0.0, %v11609
      %11611 = vmatmul.f32.gmra.mxu0 %v11500
      %v11612 = vpop.f32.mrf.mxu0
      %v11613 = vadd.f32 0.0, %v11612
      %11614 = vdwg.mxu0
      %v11615 = vadd.f32 %v11337, %v11520
      %v11616 = vadd.f32 %v11338, %v11523
      %v11617 = vadd.f32 %v11339, %v11526
      %v11618 = vadd.f32 %v11340, %v11529
      %v11619 = vadd.f32 %v11341, %v11532
      %v11620 = vadd.f32 %v11342, %v11535
      %v11621 = vadd.f32 %v11343, %v11538
      %v11622 = vadd.f32 %v11344, %v11541
      %v11623 = vadd.f32 %v11345, %v11544
      %v11624 = vadd.f32 %v11346, %v11547
      %v11625 = vadd.f32 %v11347, %v11550
      %v11626 = vadd.f32 %v11348, %v11553
      %v11627 = vadd.f32 %v11349, %v11556
      %v11628 = vadd.f32 %v11350, %v11559
      %v11629 = vadd.f32 %v11351, %v11562
      %v11630 = vadd.f32 %v11352, %v11565
      %v11631 = vadd.f32 %v11353, %v11568
      %v11632 = vadd.f32 %v11354, %v11571
      %v11633 = vadd.f32 %v11355, %v11574
      %v11634 = vadd.f32 %v11356, %v11577
      %v11635 = vadd.f32 %v11357, %v11580
      %v11636 = vadd.f32 %v11358, %v11583
      %v11637 = vadd.f32 %v11359, %v11586
      %v11638 = vadd.f32 %v11360, %v11589
      %v11639 = vadd.f32 %v11361, %v11592
      %v11640 = vadd.f32 %v11362, %v11595
      %v11641 = vadd.f32 %v11363, %v11598
      %v11642 = vadd.f32 %v11364, %v11601
      %v11643 = vadd.f32 %v11365, %v11604
      %v11644 = vadd.f32 %v11366, %v11607
      %v11645 = vadd.f32 %v11367, %v11610
      %v11646 = vadd.f32 %v11368, %v11613
      %v11647 = vld [vmem:[%s6] sm:$0x1]
      %v11649 = vperm.slane %v11647, 0
      %v11651 = vadd.f32 %v11615, %v11649
      %v11652 = vadd.f32 %v11616, %v11649
      %v11653 = vadd.f32 %v11617, %v11649
      %v11654 = vadd.f32 %v11618, %v11649
      %v11655 = vadd.f32 %v11619, %v11649
      %v11656 = vadd.f32 %v11620, %v11649
      %v11657 = vadd.f32 %v11621, %v11649
      %v11658 = vadd.f32 %v11622, %v11649
      %v11659 = vadd.f32 %v11623, %v11649
      %v11660 = vadd.f32 %v11624, %v11649
      %v11661 = vadd.f32 %v11625, %v11649
      %v11662 = vadd.f32 %v11626, %v11649
      %v11663 = vadd.f32 %v11627, %v11649
      %v11664 = vadd.f32 %v11628, %v11649
      %v11665 = vadd.f32 %v11629, %v11649
      %v11666 = vadd.f32 %v11630, %v11649
      %v11667 = vadd.f32 %v11631, %v11649
      %v11668 = vadd.f32 %v11632, %v11649
      %v11669 = vadd.f32 %v11633, %v11649
      %v11670 = vadd.f32 %v11634, %v11649
      %v11671 = vadd.f32 %v11635, %v11649
      %v11672 = vadd.f32 %v11636, %v11649
      %v11673 = vadd.f32 %v11637, %v11649
      %v11674 = vadd.f32 %v11638, %v11649
      %v11675 = vadd.f32 %v11639, %v11649
      %v11676 = vadd.f32 %v11640, %v11649
      %v11677 = vadd.f32 %v11641, %v11649
      %v11678 = vadd.f32 %v11642, %v11649
      %v11679 = vadd.f32 %v11643, %v11649
      %v11680 = vadd.f32 %v11644, %v11649
      %v11681 = vadd.f32 %v11645, %v11649
      %v11682 = vadd.f32 %v11646, %v11649
      %v11683 = vld [vmem:[#allocation6] sm:$0xff]
      %v11684 = vld [vmem:[#allocation6 + $0x8] sm:$0xff]
      %v11685 = vld [vmem:[#allocation6 + $0x10] sm:$0xff]
      %v11686 = vld [vmem:[#allocation6 + $0x18] sm:$0xff]
      %v11687 = vld [vmem:[#allocation6 + $0x20] sm:$0xff]
      %v11688 = vld [vmem:[#allocation6 + $0x28] sm:$0xff]
      %v11689 = vld [vmem:[#allocation6 + $0x30] sm:$0xff]
      %v11690 = vld [vmem:[#allocation6 + $0x38] sm:$0xff]
      %v11691 = vld [vmem:[#allocation6 + $0x40] sm:$0xff]
      %v11692 = vld [vmem:[#allocation6 + $0x48] sm:$0xff]
      %v11693 = vld [vmem:[#allocation6 + $0x50] sm:$0xff]
      %v11694 = vld [vmem:[#allocation6 + $0x58] sm:$0xff]
      %v11695 = vld [vmem:[#allocation6 + $0x60] sm:$0xff]
      %v11696 = vld [vmem:[#allocation6 + $0x68] sm:$0xff]
      %v11697 = vld [vmem:[#allocation6 + $0x70] sm:$0xff]
      %v11698 = vld [vmem:[#allocation6 + $0x78] sm:$0xff]
      %v11699 = vld [vmem:[#allocation6 + $0x80] sm:$0xff]
      %v11700 = vld [vmem:[#allocation6 + $0x88] sm:$0xff]
      %v11701 = vld [vmem:[#allocation6 + $0x90] sm:$0xff]
      %v11702 = vld [vmem:[#allocation6 + $0x98] sm:$0xff]
      %v11703 = vld [vmem:[#allocation6 + $0xa0] sm:$0xff]
      %v11704 = vld [vmem:[#allocation6 + $0xa8] sm:$0xff]
      %v11705 = vld [vmem:[#allocation6 + $0xb0] sm:$0xff]
      %v11706 = vld [vmem:[#allocation6 + $0xb8] sm:$0xff]
      %v11707 = vld [vmem:[#allocation6 + $0xc0] sm:$0xff]
      %v11708 = vld [vmem:[#allocation6 + $0xc8] sm:$0xff]
      %v11709 = vld [vmem:[#allocation6 + $0xd0] sm:$0xff]
      %v11710 = vld [vmem:[#allocation6 + $0xd8] sm:$0xff]
      %v11711 = vld [vmem:[#allocation6 + $0xe0] sm:$0xff]
      %v11712 = vld [vmem:[#allocation6 + $0xe8] sm:$0xff]
      %v11713 = vld [vmem:[#allocation6 + $0xf0] sm:$0xff]
      %v11714 = vld [vmem:[#allocation6 + $0xf8] sm:$0xff]
      %v11715 = vmul.f32 %v11651, %v664
      %v11716 = vmul.f32 %v11652, %v664
      %v11717 = vmul.f32 %v11653, %v664
      %v11718 = vmul.f32 %v11654, %v664
      %v11719 = vmul.f32 %v11655, %v664
      %v11720 = vmul.f32 %v11656, %v664
      %v11721 = vmul.f32 %v11657, %v664
      %v11722 = vmul.f32 %v11658, %v664
      %v11723 = vmul.f32 %v11659, %v664
      %v11724 = vmul.f32 %v11660, %v664
      %v11725 = vmul.f32 %v11661, %v664
      %v11726 = vmul.f32 %v11662, %v664
      %v11727 = vmul.f32 %v11663, %v664
      %v11728 = vmul.f32 %v11664, %v664
      %v11729 = vmul.f32 %v11665, %v664
      %v11730 = vmul.f32 %v11666, %v664
      %v11731 = vmul.f32 %v11667, %v664
      %v11732 = vmul.f32 %v11668, %v664
      %v11733 = vmul.f32 %v11669, %v664
      %v11734 = vmul.f32 %v11670, %v664
      %v11735 = vmul.f32 %v11671, %v664
      %v11736 = vmul.f32 %v11672, %v664
      %v11737 = vmul.f32 %v11673, %v664
      %v11738 = vmul.f32 %v11674, %v664
      %v11739 = vmul.f32 %v11675, %v664
      %v11740 = vmul.f32 %v11676, %v664
      %v11741 = vmul.f32 %v11677, %v664
      %v11742 = vmul.f32 %v11678, %v664
      %v11743 = vmul.f32 %v11679, %v664
      %v11744 = vmul.f32 %v11680, %v664
      %v11745 = vmul.f32 %v11681, %v664
      %v11746 = vmul.f32 %v11682, %v664
      %v11747 = vtanh.pop %v11715
      %v11748 = vtanh.pop %v11716
      %v11749 = vtanh.pop %v11717
      %v11750 = vtanh.pop %v11718
      %v11751 = vtanh.pop %v11719
      %v11752 = vtanh.pop %v11720
      %v11753 = vtanh.pop %v11721
      %v11754 = vtanh.pop %v11722
      %v11755 = vtanh.pop %v11723
      %v11756 = vtanh.pop %v11724
      %v11757 = vtanh.pop %v11725
      %v11758 = vtanh.pop %v11726
      %v11759 = vtanh.pop %v11727
      %v11760 = vtanh.pop %v11728
      %v11761 = vtanh.pop %v11729
      %v11762 = vtanh.pop %v11730
      %v11763 = vtanh.pop %v11731
      %v11764 = vtanh.pop %v11732
      %v11765 = vtanh.pop %v11733
      %v11766 = vtanh.pop %v11734
      %v11767 = vtanh.pop %v11735
      %v11768 = vtanh.pop %v11736
      %v11769 = vtanh.pop %v11737
      %v11770 = vtanh.pop %v11738
      %v11771 = vtanh.pop %v11739
      %v11772 = vtanh.pop %v11740
      %v11773 = vtanh.pop %v11741
      %v11774 = vtanh.pop %v11742
      %v11775 = vtanh.pop %v11743
      %v11776 = vtanh.pop %v11744
      %v11777 = vtanh.pop %v11745
      %v11778 = vtanh.pop %v11746
      %v11779 = vmul.f32 %v11747, %v664
      %v11780 = vmul.f32 %v11748, %v664
      %v11781 = vmul.f32 %v11749, %v664
      %v11782 = vmul.f32 %v11750, %v664
      %v11783 = vmul.f32 %v11751, %v664
      %v11784 = vmul.f32 %v11752, %v664
      %v11785 = vmul.f32 %v11753, %v664
      %v11786 = vmul.f32 %v11754, %v664
      %v11787 = vmul.f32 %v11755, %v664
      %v11788 = vmul.f32 %v11756, %v664
      %v11789 = vmul.f32 %v11757, %v664
      %v11790 = vmul.f32 %v11758, %v664
      %v11791 = vmul.f32 %v11759, %v664
      %v11792 = vmul.f32 %v11760, %v664
      %v11793 = vmul.f32 %v11761, %v664
      %v11794 = vmul.f32 %v11762, %v664
      %v11795 = vmul.f32 %v11763, %v664
      %v11796 = vmul.f32 %v11764, %v664
      %v11797 = vmul.f32 %v11765, %v664
      %v11798 = vmul.f32 %v11766, %v664
      %v11799 = vmul.f32 %v11767, %v664
      %v11800 = vmul.f32 %v11768, %v664
      %v11801 = vmul.f32 %v11769, %v664
      %v11802 = vmul.f32 %v11770, %v664
      %v11803 = vmul.f32 %v11771, %v664
      %v11804 = vmul.f32 %v11772, %v664
      %v11805 = vmul.f32 %v11773, %v664
      %v11806 = vmul.f32 %v11774, %v664
      %v11807 = vmul.f32 %v11775, %v664
      %v11808 = vmul.f32 %v11776, %v664
      %v11809 = vmul.f32 %v11777, %v664
      %v11810 = vmul.f32 %v11778, %v664
      %v11811 = vadd.f32 %v11779, %v665
      %v11812 = vadd.f32 %v11780, %v665
      %v11813 = vadd.f32 %v11781, %v665
      %v11814 = vadd.f32 %v11782, %v665
      %v11815 = vadd.f32 %v11783, %v665
      %v11816 = vadd.f32 %v11784, %v665
      %v11817 = vadd.f32 %v11785, %v665
      %v11818 = vadd.f32 %v11786, %v665
      %v11819 = vadd.f32 %v11787, %v665
      %v11820 = vadd.f32 %v11788, %v665
      %v11821 = vadd.f32 %v11789, %v665
      %v11822 = vadd.f32 %v11790, %v665
      %v11823 = vadd.f32 %v11791, %v665
      %v11824 = vadd.f32 %v11792, %v665
      %v11825 = vadd.f32 %v11793, %v665
      %v11826 = vadd.f32 %v11794, %v665
      %v11827 = vadd.f32 %v11795, %v665
      %v11828 = vadd.f32 %v11796, %v665
      %v11829 = vadd.f32 %v11797, %v665
      %v11830 = vadd.f32 %v11798, %v665
      %v11831 = vadd.f32 %v11799, %v665
      %v11832 = vadd.f32 %v11800, %v665
      %v11833 = vadd.f32 %v11801, %v665
      %v11834 = vadd.f32 %v11802, %v665
      %v11835 = vadd.f32 %v11803, %v665
      %v11836 = vadd.f32 %v11804, %v665
      %v11837 = vadd.f32 %v11805, %v665
      %v11838 = vadd.f32 %v11806, %v665
      %v11839 = vadd.f32 %v11807, %v665
      %v11840 = vadd.f32 %v11808, %v665
      %v11841 = vadd.f32 %v11809, %v665
      %v11842 = vadd.f32 %v11810, %v665
      %11875 = vrot.lane.b32.xlu0 %v11683, 32
      %v11876 = vpop.permute.xlu0 %11875
      %11877 = vrot.lane.b32.xlu0 %v11684, 32
      %v11878 = vpop.permute.xlu0 %11877
      %11879 = vrot.lane.b32.xlu0 %v11685, 32
      %v11880 = vpop.permute.xlu0 %11879
      %11881 = vrot.lane.b32.xlu0 %v11686, 32
      %v11882 = vpop.permute.xlu0 %11881
      %11883 = vrot.lane.b32.xlu0 %v11687, 32
      %v11884 = vpop.permute.xlu0 %11883
      %11885 = vrot.lane.b32.xlu0 %v11688, 32
      %v11886 = vpop.permute.xlu0 %11885
      %11887 = vrot.lane.b32.xlu0 %v11689, 32
      %v11888 = vpop.permute.xlu0 %11887
      %11889 = vrot.lane.b32.xlu0 %v11690, 32
      %v11890 = vpop.permute.xlu0 %11889
      %11891 = vrot.lane.b32.xlu0 %v11691, 32
      %v11892 = vpop.permute.xlu0 %11891
      %11893 = vrot.lane.b32.xlu0 %v11692, 32
      %v11894 = vpop.permute.xlu0 %11893
      %11895 = vrot.lane.b32.xlu0 %v11693, 32
      %v11896 = vpop.permute.xlu0 %11895
      %11897 = vrot.lane.b32.xlu0 %v11694, 32
      %v11898 = vpop.permute.xlu0 %11897
      %11899 = vrot.lane.b32.xlu0 %v11695, 32
      %v11900 = vpop.permute.xlu0 %11899
      %11901 = vrot.lane.b32.xlu0 %v11696, 32
      %v11902 = vpop.permute.xlu0 %11901
      %11903 = vrot.lane.b32.xlu0 %v11697, 32
      %v11904 = vpop.permute.xlu0 %11903
      %11905 = vrot.lane.b32.xlu0 %v11698, 32
      %v11906 = vpop.permute.xlu0 %11905
      %11907 = vrot.lane.b32.xlu0 %v11699, 32
      %v11908 = vpop.permute.xlu0 %11907
      %11909 = vrot.lane.b32.xlu0 %v11700, 32
      %v11910 = vpop.permute.xlu0 %11909
      %11911 = vrot.lane.b32.xlu0 %v11701, 32
      %v11912 = vpop.permute.xlu0 %11911
      %11913 = vrot.lane.b32.xlu0 %v11702, 32
      %v11914 = vpop.permute.xlu0 %11913
      %11915 = vrot.lane.b32.xlu0 %v11703, 32
      %v11916 = vpop.permute.xlu0 %11915
      %11917 = vrot.lane.b32.xlu0 %v11704, 32
      %v11918 = vpop.permute.xlu0 %11917
      %11919 = vrot.lane.b32.xlu0 %v11705, 32
      %v11920 = vpop.permute.xlu0 %11919
      %11921 = vrot.lane.b32.xlu0 %v11706, 32
      %v11922 = vpop.permute.xlu0 %11921
      %11923 = vrot.lane.b32.xlu0 %v11707, 32
      %v11924 = vpop.permute.xlu0 %11923
      %11925 = vrot.lane.b32.xlu0 %v11708, 32
      %v11926 = vpop.permute.xlu0 %11925
      %11927 = vrot.lane.b32.xlu0 %v11709, 32
      %v11928 = vpop.permute.xlu0 %11927
      %11929 = vrot.lane.b32.xlu0 %v11710, 32
      %v11930 = vpop.permute.xlu0 %11929
      %11931 = vrot.lane.b32.xlu0 %v11711, 32
      %v11932 = vpop.permute.xlu0 %11931
      %11933 = vrot.lane.b32.xlu0 %v11712, 32
      %v11934 = vpop.permute.xlu0 %11933
      %11935 = vrot.lane.b32.xlu0 %v11713, 32
      %v11936 = vpop.permute.xlu0 %11935
      %11937 = vrot.lane.b32.xlu0 %v11714, 32
      %v11938 = vpop.permute.xlu0 %11937
      %v11971 = vmul.f32 %v11811, %v11876
      %v11972 = vmul.f32 %v11812, %v11878
      %v11973 = vmul.f32 %v11813, %v11880
      %v11974 = vmul.f32 %v11814, %v11882
      %v11975 = vmul.f32 %v11815, %v11884
      %v11976 = vmul.f32 %v11816, %v11886
      %v11977 = vmul.f32 %v11817, %v11888
      %v11978 = vmul.f32 %v11818, %v11890
      %v11979 = vmul.f32 %v11819, %v11892
      %v11980 = vmul.f32 %v11820, %v11894
      %v11981 = vmul.f32 %v11821, %v11896
      %v11982 = vmul.f32 %v11822, %v11898
      %v11983 = vmul.f32 %v11823, %v11900
      %v11984 = vmul.f32 %v11824, %v11902
      %v11985 = vmul.f32 %v11825, %v11904
      %v11986 = vmul.f32 %v11826, %v11906
      %v11987 = vmul.f32 %v11827, %v11908
      %v11988 = vmul.f32 %v11828, %v11910
      %v11989 = vmul.f32 %v11829, %v11912
      %v11990 = vmul.f32 %v11830, %v11914
      %v11991 = vmul.f32 %v11831, %v11916
      %v11992 = vmul.f32 %v11832, %v11918
      %v11993 = vmul.f32 %v11833, %v11920
      %v11994 = vmul.f32 %v11834, %v11922
      %v11995 = vmul.f32 %v11835, %v11924
      %v11996 = vmul.f32 %v11836, %v11926
      %v11997 = vmul.f32 %v11837, %v11928
      %v11998 = vmul.f32 %v11838, %v11930
      %v11999 = vmul.f32 %v11839, %v11932
      %v12000 = vmul.f32 %v11840, %v11934
      %v12001 = vmul.f32 %v11841, %v11936
      %v12002 = vmul.f32 %v11842, %v11938
      %12035 = vrot.lane.b32.xlu0 %v11811, 32
      %v12036 = vpop.permute.xlu0 %12035
      %12037 = vrot.lane.b32.xlu0 %v11812, 32
      %v12038 = vpop.permute.xlu0 %12037
      %12039 = vrot.lane.b32.xlu0 %v11813, 32
      %v12040 = vpop.permute.xlu0 %12039
      %12041 = vrot.lane.b32.xlu0 %v11814, 32
      %v12042 = vpop.permute.xlu0 %12041
      %12043 = vrot.lane.b32.xlu0 %v11815, 32
      %v12044 = vpop.permute.xlu0 %12043
      %12045 = vrot.lane.b32.xlu0 %v11816, 32
      %v12046 = vpop.permute.xlu0 %12045
      %12047 = vrot.lane.b32.xlu0 %v11817, 32
      %v12048 = vpop.permute.xlu0 %12047
      %12049 = vrot.lane.b32.xlu0 %v11818, 32
      %v12050 = vpop.permute.xlu0 %12049
      %12051 = vrot.lane.b32.xlu0 %v11819, 32
      %v12052 = vpop.permute.xlu0 %12051
      %12053 = vrot.lane.b32.xlu0 %v11820, 32
      %v12054 = vpop.permute.xlu0 %12053
      %12055 = vrot.lane.b32.xlu0 %v11821, 32
      %v12056 = vpop.permute.xlu0 %12055
      %12057 = vrot.lane.b32.xlu0 %v11822, 32
      %v12058 = vpop.permute.xlu0 %12057
      %12059 = vrot.lane.b32.xlu0 %v11823, 32
      %v12060 = vpop.permute.xlu0 %12059
      %12061 = vrot.lane.b32.xlu0 %v11824, 32
      %v12062 = vpop.permute.xlu0 %12061
      %12063 = vrot.lane.b32.xlu0 %v11825, 32
      %v12064 = vpop.permute.xlu0 %12063
      %12065 = vrot.lane.b32.xlu0 %v11826, 32
      %v12066 = vpop.permute.xlu0 %12065
      %12067 = vrot.lane.b32.xlu0 %v11827, 32
      %v12068 = vpop.permute.xlu0 %12067
      %12069 = vrot.lane.b32.xlu0 %v11828, 32
      %v12070 = vpop.permute.xlu0 %12069
      %12071 = vrot.lane.b32.xlu0 %v11829, 32
      %v12072 = vpop.permute.xlu0 %12071
      %12073 = vrot.lane.b32.xlu0 %v11830, 32
      %v12074 = vpop.permute.xlu0 %12073
      %12075 = vrot.lane.b32.xlu0 %v11831, 32
      %v12076 = vpop.permute.xlu0 %12075
      %12077 = vrot.lane.b32.xlu0 %v11832, 32
      %v12078 = vpop.permute.xlu0 %12077
      %12079 = vrot.lane.b32.xlu0 %v11833, 32
      %v12080 = vpop.permute.xlu0 %12079
      %12081 = vrot.lane.b32.xlu0 %v11834, 32
      %v12082 = vpop.permute.xlu0 %12081
      %12083 = vrot.lane.b32.xlu0 %v11835, 32
      %v12084 = vpop.permute.xlu0 %12083
      %12085 = vrot.lane.b32.xlu0 %v11836, 32
      %v12086 = vpop.permute.xlu0 %12085
      %12087 = vrot.lane.b32.xlu0 %v11837, 32
      %v12088 = vpop.permute.xlu0 %12087
      %12089 = vrot.lane.b32.xlu0 %v11838, 32
      %v12090 = vpop.permute.xlu0 %12089
      %12091 = vrot.lane.b32.xlu0 %v11839, 32
      %v12092 = vpop.permute.xlu0 %12091
      %12093 = vrot.lane.b32.xlu0 %v11840, 32
      %v12094 = vpop.permute.xlu0 %12093
      %12095 = vrot.lane.b32.xlu0 %v11841, 32
      %v12096 = vpop.permute.xlu0 %12095
      %12097 = vrot.lane.b32.xlu0 %v11842, 32
      %v12098 = vpop.permute.xlu0 %12097
      %v12131 = vmul.f32 %v11811, %v12036
      %v12132 = vmul.f32 %v11812, %v12038
      %v12133 = vmul.f32 %v11813, %v12040
      %v12134 = vmul.f32 %v11814, %v12042
      %v12135 = vmul.f32 %v11815, %v12044
      %v12136 = vmul.f32 %v11816, %v12046
      %v12137 = vmul.f32 %v11817, %v12048
      %v12138 = vmul.f32 %v11818, %v12050
      %v12139 = vmul.f32 %v11819, %v12052
      %v12140 = vmul.f32 %v11820, %v12054
      %v12141 = vmul.f32 %v11821, %v12056
      %v12142 = vmul.f32 %v11822, %v12058
      %v12143 = vmul.f32 %v11823, %v12060
      %v12144 = vmul.f32 %v11824, %v12062
      %v12145 = vmul.f32 %v11825, %v12064
      %v12146 = vmul.f32 %v11826, %v12066
      %v12147 = vmul.f32 %v11827, %v12068
      %v12148 = vmul.f32 %v11828, %v12070
      %v12149 = vmul.f32 %v11829, %v12072
      %v12150 = vmul.f32 %v11830, %v12074
      %v12151 = vmul.f32 %v11831, %v12076
      %v12152 = vmul.f32 %v11832, %v12078
      %v12153 = vmul.f32 %v11833, %v12080
      %v12154 = vmul.f32 %v11834, %v12082
      %v12155 = vmul.f32 %v11835, %v12084
      %v12156 = vmul.f32 %v11836, %v12086
      %v12157 = vmul.f32 %v11837, %v12088
      %v12158 = vmul.f32 %v11838, %v12090
      %v12159 = vmul.f32 %v11839, %v12092
      %v12160 = vmul.f32 %v11840, %v12094
      %v12161 = vmul.f32 %v11841, %v12096
      %v12162 = vmul.f32 %v11842, %v12098
      %12195 = vrot.lane.b32.xlu0 %v12131, 32
      %v12196 = vpop.permute.xlu0 %12195
      %12197 = vrot.lane.b32.xlu0 %v12132, 32
      %v12198 = vpop.permute.xlu0 %12197
      %12199 = vrot.lane.b32.xlu0 %v12133, 32
      %v12200 = vpop.permute.xlu0 %12199
      %12201 = vrot.lane.b32.xlu0 %v12134, 32
      %v12202 = vpop.permute.xlu0 %12201
      %12203 = vrot.lane.b32.xlu0 %v12135, 32
      %v12204 = vpop.permute.xlu0 %12203
      %12205 = vrot.lane.b32.xlu0 %v12136, 32
      %v12206 = vpop.permute.xlu0 %12205
      %12207 = vrot.lane.b32.xlu0 %v12137, 32
      %v12208 = vpop.permute.xlu0 %12207
      %12209 = vrot.lane.b32.xlu0 %v12138, 32
      %v12210 = vpop.permute.xlu0 %12209
      %12211 = vrot.lane.b32.xlu0 %v12139, 32
      %v12212 = vpop.permute.xlu0 %12211
      %12213 = vrot.lane.b32.xlu0 %v12140, 32
      %v12214 = vpop.permute.xlu0 %12213
      %12215 = vrot.lane.b32.xlu0 %v12141, 32
      %v12216 = vpop.permute.xlu0 %12215
      %12217 = vrot.lane.b32.xlu0 %v12142, 32
      %v12218 = vpop.permute.xlu0 %12217
      %12219 = vrot.lane.b32.xlu0 %v12143, 32
      %v12220 = vpop.permute.xlu0 %12219
      %12221 = vrot.lane.b32.xlu0 %v12144, 32
      %v12222 = vpop.permute.xlu0 %12221
      %12223 = vrot.lane.b32.xlu0 %v12145, 32
      %v12224 = vpop.permute.xlu0 %12223
      %12225 = vrot.lane.b32.xlu0 %v12146, 32
      %v12226 = vpop.permute.xlu0 %12225
      %12227 = vrot.lane.b32.xlu0 %v12147, 32
      %v12228 = vpop.permute.xlu0 %12227
      %12229 = vrot.lane.b32.xlu0 %v12148, 32
      %v12230 = vpop.permute.xlu0 %12229
      %12231 = vrot.lane.b32.xlu0 %v12149, 32
      %v12232 = vpop.permute.xlu0 %12231
      %12233 = vrot.lane.b32.xlu0 %v12150, 32
      %v12234 = vpop.permute.xlu0 %12233
      %12235 = vrot.lane.b32.xlu0 %v12151, 32
      %v12236 = vpop.permute.xlu0 %12235
      %12237 = vrot.lane.b32.xlu0 %v12152, 32
      %v12238 = vpop.permute.xlu0 %12237
      %12239 = vrot.lane.b32.xlu0 %v12153, 32
      %v12240 = vpop.permute.xlu0 %12239
      %12241 = vrot.lane.b32.xlu0 %v12154, 32
      %v12242 = vpop.permute.xlu0 %12241
      %12243 = vrot.lane.b32.xlu0 %v12155, 32
      %v12244 = vpop.permute.xlu0 %12243
      %12245 = vrot.lane.b32.xlu0 %v12156, 32
      %v12246 = vpop.permute.xlu0 %12245
      %12247 = vrot.lane.b32.xlu0 %v12157, 32
      %v12248 = vpop.permute.xlu0 %12247
      %12249 = vrot.lane.b32.xlu0 %v12158, 32
      %v12250 = vpop.permute.xlu0 %12249
      %12251 = vrot.lane.b32.xlu0 %v12159, 32
      %v12252 = vpop.permute.xlu0 %12251
      %12253 = vrot.lane.b32.xlu0 %v12160, 32
      %v12254 = vpop.permute.xlu0 %12253
      %12255 = vrot.lane.b32.xlu0 %v12161, 32
      %v12256 = vpop.permute.xlu0 %12255
      %12257 = vrot.lane.b32.xlu0 %v12162, 32
      %v12258 = vpop.permute.xlu0 %12257
      %v12291 = vadd.f32 %v11971, %v12196
      %v12292 = vadd.f32 %v11972, %v12198
      %v12293 = vadd.f32 %v11973, %v12200
      %v12294 = vadd.f32 %v11974, %v12202
      %v12295 = vadd.f32 %v11975, %v12204
      %v12296 = vadd.f32 %v11976, %v12206
      %v12297 = vadd.f32 %v11977, %v12208
      %v12298 = vadd.f32 %v11978, %v12210
      %v12299 = vadd.f32 %v11979, %v12212
      %v12300 = vadd.f32 %v11980, %v12214
      %v12301 = vadd.f32 %v11981, %v12216
      %v12302 = vadd.f32 %v11982, %v12218
      %v12303 = vadd.f32 %v11983, %v12220
      %v12304 = vadd.f32 %v11984, %v12222
      %v12305 = vadd.f32 %v11985, %v12224
      %v12306 = vadd.f32 %v11986, %v12226
      %v12307 = vadd.f32 %v11987, %v12228
      %v12308 = vadd.f32 %v11988, %v12230
      %v12309 = vadd.f32 %v11989, %v12232
      %v12310 = vadd.f32 %v11990, %v12234
      %v12311 = vadd.f32 %v11991, %v12236
      %v12312 = vadd.f32 %v11992, %v12238
      %v12313 = vadd.f32 %v11993, %v12240
      %v12314 = vadd.f32 %v11994, %v12242
      %v12315 = vadd.f32 %v11995, %v12244
      %v12316 = vadd.f32 %v11996, %v12246
      %v12317 = vadd.f32 %v11997, %v12248
      %v12318 = vadd.f32 %v11998, %v12250
      %v12319 = vadd.f32 %v11999, %v12252
      %v12320 = vadd.f32 %v12000, %v12254
      %v12321 = vadd.f32 %v12001, %v12256
      %v12322 = vadd.f32 %v12002, %v12258
      %v12323 = vtanh.pop %v12291
      %v12324 = vtanh.pop %v12292
      %v12325 = vtanh.pop %v12293
      %v12326 = vtanh.pop %v12294
      %v12327 = vtanh.pop %v12295
      %v12328 = vtanh.pop %v12296
      %v12329 = vtanh.pop %v12297
      %v12330 = vtanh.pop %v12298
      %v12331 = vtanh.pop %v12299
      %v12332 = vtanh.pop %v12300
      %v12333 = vtanh.pop %v12301
      %v12334 = vtanh.pop %v12302
      %v12335 = vtanh.pop %v12303
      %v12336 = vtanh.pop %v12304
      %v12337 = vtanh.pop %v12305
      %v12338 = vtanh.pop %v12306
      %v12339 = vtanh.pop %v12307
      %v12340 = vtanh.pop %v12308
      %v12341 = vtanh.pop %v12309
      %v12342 = vtanh.pop %v12310
      %v12343 = vtanh.pop %v12311
      %v12344 = vtanh.pop %v12312
      %v12345 = vtanh.pop %v12313
      %v12346 = vtanh.pop %v12314
      %v12347 = vtanh.pop %v12315
      %v12348 = vtanh.pop %v12316
      %v12349 = vtanh.pop %v12317
      %v12350 = vtanh.pop %v12318
      %v12351 = vtanh.pop %v12319
      %v12352 = vtanh.pop %v12320
      %v12353 = vtanh.pop %v12321
      %v12354 = vtanh.pop %v12322
      %12387 = vrot.lane.b32.xlu0 %v12323, 32
      %v12388 = vpop.permute.xlu0 %12387
      %12389 = vrot.lane.b32.xlu0 %v12324, 32
      %v12390 = vpop.permute.xlu0 %12389
      %12391 = vrot.lane.b32.xlu0 %v12325, 32
      %v12392 = vpop.permute.xlu0 %12391
      %12393 = vrot.lane.b32.xlu0 %v12326, 32
      %v12394 = vpop.permute.xlu0 %12393
      %12395 = vrot.lane.b32.xlu0 %v12327, 32
      %v12396 = vpop.permute.xlu0 %12395
      %12397 = vrot.lane.b32.xlu0 %v12328, 32
      %v12398 = vpop.permute.xlu0 %12397
      %12399 = vrot.lane.b32.xlu0 %v12329, 32
      %v12400 = vpop.permute.xlu0 %12399
      %12401 = vrot.lane.b32.xlu0 %v12330, 32
      %v12402 = vpop.permute.xlu0 %12401
      %12403 = vrot.lane.b32.xlu0 %v12331, 32
      %v12404 = vpop.permute.xlu0 %12403
      %12405 = vrot.lane.b32.xlu0 %v12332, 32
      %v12406 = vpop.permute.xlu0 %12405
      %12407 = vrot.lane.b32.xlu0 %v12333, 32
      %v12408 = vpop.permute.xlu0 %12407
      %12409 = vrot.lane.b32.xlu0 %v12334, 32
      %v12410 = vpop.permute.xlu0 %12409
      %12411 = vrot.lane.b32.xlu0 %v12335, 32
      %v12412 = vpop.permute.xlu0 %12411
      %12413 = vrot.lane.b32.xlu0 %v12336, 32
      %v12414 = vpop.permute.xlu0 %12413
      %12415 = vrot.lane.b32.xlu0 %v12337, 32
      %v12416 = vpop.permute.xlu0 %12415
      %12417 = vrot.lane.b32.xlu0 %v12338, 32
      %v12418 = vpop.permute.xlu0 %12417
      %12419 = vrot.lane.b32.xlu0 %v12339, 32
      %v12420 = vpop.permute.xlu0 %12419
      %12421 = vrot.lane.b32.xlu0 %v12340, 32
      %v12422 = vpop.permute.xlu0 %12421
      %12423 = vrot.lane.b32.xlu0 %v12341, 32
      %v12424 = vpop.permute.xlu0 %12423
      %12425 = vrot.lane.b32.xlu0 %v12342, 32
      %v12426 = vpop.permute.xlu0 %12425
      %12427 = vrot.lane.b32.xlu0 %v12343, 32
      %v12428 = vpop.permute.xlu0 %12427
      %12429 = vrot.lane.b32.xlu0 %v12344, 32
      %v12430 = vpop.permute.xlu0 %12429
      %12431 = vrot.lane.b32.xlu0 %v12345, 32
      %v12432 = vpop.permute.xlu0 %12431
      %12433 = vrot.lane.b32.xlu0 %v12346, 32
      %v12434 = vpop.permute.xlu0 %12433
      %12435 = vrot.lane.b32.xlu0 %v12347, 32
      %v12436 = vpop.permute.xlu0 %12435
      %12437 = vrot.lane.b32.xlu0 %v12348, 32
      %v12438 = vpop.permute.xlu0 %12437
      %12439 = vrot.lane.b32.xlu0 %v12349, 32
      %v12440 = vpop.permute.xlu0 %12439
      %12441 = vrot.lane.b32.xlu0 %v12350, 32
      %v12442 = vpop.permute.xlu0 %12441
      %12443 = vrot.lane.b32.xlu0 %v12351, 32
      %v12444 = vpop.permute.xlu0 %12443
      %12445 = vrot.lane.b32.xlu0 %v12352, 32
      %v12446 = vpop.permute.xlu0 %12445
      %12447 = vrot.lane.b32.xlu0 %v12353, 32
      %v12448 = vpop.permute.xlu0 %12447
      %12449 = vrot.lane.b32.xlu0 %v12354, 32
      %v12450 = vpop.permute.xlu0 %12449
      %v12483 = vmul.f32 %v11811, %v12388
      %v12484 = vmul.f32 %v11812, %v12390
      %v12485 = vmul.f32 %v11813, %v12392
      %v12486 = vmul.f32 %v11814, %v12394
      %v12487 = vmul.f32 %v11815, %v12396
      %v12488 = vmul.f32 %v11816, %v12398
      %v12489 = vmul.f32 %v11817, %v12400
      %v12490 = vmul.f32 %v11818, %v12402
      %v12491 = vmul.f32 %v11819, %v12404
      %v12492 = vmul.f32 %v11820, %v12406
      %v12493 = vmul.f32 %v11821, %v12408
      %v12494 = vmul.f32 %v11822, %v12410
      %v12495 = vmul.f32 %v11823, %v12412
      %v12496 = vmul.f32 %v11824, %v12414
      %v12497 = vmul.f32 %v11825, %v12416
      %v12498 = vmul.f32 %v11826, %v12418
      %v12499 = vmul.f32 %v11827, %v12420
      %v12500 = vmul.f32 %v11828, %v12422
      %v12501 = vmul.f32 %v11829, %v12424
      %v12502 = vmul.f32 %v11830, %v12426
      %v12503 = vmul.f32 %v11831, %v12428
      %v12504 = vmul.f32 %v11832, %v12430
      %v12505 = vmul.f32 %v11833, %v12432
      %v12506 = vmul.f32 %v11834, %v12434
      %v12507 = vmul.f32 %v11835, %v12436
      %v12508 = vmul.f32 %v11836, %v12438
      %v12509 = vmul.f32 %v11837, %v12440
      %v12510 = vmul.f32 %v11838, %v12442
      %v12511 = vmul.f32 %v11839, %v12444
      %v12512 = vmul.f32 %v11840, %v12446
      %v12513 = vmul.f32 %v11841, %v12448
      %v12514 = vmul.f32 %v11842, %v12450
      %12547 = vrot.lane.b32.xlu0 %v12291, 96
      %v12548 = vpop.permute.xlu0 %12547
      %12549 = vrot.lane.b32.xlu0 %v12292, 96
      %v12550 = vpop.permute.xlu0 %12549
      %12551 = vrot.lane.b32.xlu0 %v12293, 96
      %v12552 = vpop.permute.xlu0 %12551
      %12553 = vrot.lane.b32.xlu0 %v12294, 96
      %v12554 = vpop.permute.xlu0 %12553
      %12555 = vrot.lane.b32.xlu0 %v12295, 96
      %v12556 = vpop.permute.xlu0 %12555
      %12557 = vrot.lane.b32.xlu0 %v12296, 96
      %v12558 = vpop.permute.xlu0 %12557
      %12559 = vrot.lane.b32.xlu0 %v12297, 96
      %v12560 = vpop.permute.xlu0 %12559
      %12561 = vrot.lane.b32.xlu0 %v12298, 96
      %v12562 = vpop.permute.xlu0 %12561
      %12563 = vrot.lane.b32.xlu0 %v12299, 96
      %v12564 = vpop.permute.xlu0 %12563
      %12565 = vrot.lane.b32.xlu0 %v12300, 96
      %v12566 = vpop.permute.xlu0 %12565
      %12567 = vrot.lane.b32.xlu0 %v12301, 96
      %v12568 = vpop.permute.xlu0 %12567
      %12569 = vrot.lane.b32.xlu0 %v12302, 96
      %v12570 = vpop.permute.xlu0 %12569
      %12571 = vrot.lane.b32.xlu0 %v12303, 96
      %v12572 = vpop.permute.xlu0 %12571
      %12573 = vrot.lane.b32.xlu0 %v12304, 96
      %v12574 = vpop.permute.xlu0 %12573
      %12575 = vrot.lane.b32.xlu0 %v12305, 96
      %v12576 = vpop.permute.xlu0 %12575
      %12577 = vrot.lane.b32.xlu0 %v12306, 96
      %v12578 = vpop.permute.xlu0 %12577
      %12579 = vrot.lane.b32.xlu0 %v12307, 96
      %v12580 = vpop.permute.xlu0 %12579
      %12581 = vrot.lane.b32.xlu0 %v12308, 96
      %v12582 = vpop.permute.xlu0 %12581
      %12583 = vrot.lane.b32.xlu0 %v12309, 96
      %v12584 = vpop.permute.xlu0 %12583
      %12585 = vrot.lane.b32.xlu0 %v12310, 96
      %v12586 = vpop.permute.xlu0 %12585
      %12587 = vrot.lane.b32.xlu0 %v12311, 96
      %v12588 = vpop.permute.xlu0 %12587
      %12589 = vrot.lane.b32.xlu0 %v12312, 96
      %v12590 = vpop.permute.xlu0 %12589
      %12591 = vrot.lane.b32.xlu0 %v12313, 96
      %v12592 = vpop.permute.xlu0 %12591
      %12593 = vrot.lane.b32.xlu0 %v12314, 96
      %v12594 = vpop.permute.xlu0 %12593
      %12595 = vrot.lane.b32.xlu0 %v12315, 96
      %v12596 = vpop.permute.xlu0 %12595
      %12597 = vrot.lane.b32.xlu0 %v12316, 96
      %v12598 = vpop.permute.xlu0 %12597
      %12599 = vrot.lane.b32.xlu0 %v12317, 96
      %v12600 = vpop.permute.xlu0 %12599
      %12601 = vrot.lane.b32.xlu0 %v12318, 96
      %v12602 = vpop.permute.xlu0 %12601
      %12603 = vrot.lane.b32.xlu0 %v12319, 96
      %v12604 = vpop.permute.xlu0 %12603
      %12605 = vrot.lane.b32.xlu0 %v12320, 96
      %v12606 = vpop.permute.xlu0 %12605
      %12607 = vrot.lane.b32.xlu0 %v12321, 96
      %v12608 = vpop.permute.xlu0 %12607
      %12609 = vrot.lane.b32.xlu0 %v12322, 96
      %v12610 = vpop.permute.xlu0 %12609
      %12643 = vst.msk [vmem:[#allocation6] sm:$0xff] %vm962, %v12548
      %12644 = vst.msk [vmem:[#allocation6 + $0x8] sm:$0xff] %vm962, %v12550
      %12645 = vst.msk [vmem:[#allocation6 + $0x10] sm:$0xff] %vm962, %v12552
      %12646 = vst.msk [vmem:[#allocation6 + $0x18] sm:$0xff] %vm962, %v12554
      %12647 = vst.msk [vmem:[#allocation6 + $0x20] sm:$0xff] %vm962, %v12556
      %12648 = vst.msk [vmem:[#allocation6 + $0x28] sm:$0xff] %vm962, %v12558
      %12649 = vst.msk [vmem:[#allocation6 + $0x30] sm:$0xff] %vm962, %v12560
      %12650 = vst.msk [vmem:[#allocation6 + $0x38] sm:$0xff] %vm962, %v12562
      %12651 = vst.msk [vmem:[#allocation6 + $0x40] sm:$0xff] %vm962, %v12564
      %12652 = vst.msk [vmem:[#allocation6 + $0x48] sm:$0xff] %vm962, %v12566
      %12653 = vst.msk [vmem:[#allocation6 + $0x50] sm:$0xff] %vm962, %v12568
      %12654 = vst.msk [vmem:[#allocation6 + $0x58] sm:$0xff] %vm962, %v12570
      %12655 = vst.msk [vmem:[#allocation6 + $0x60] sm:$0xff] %vm962, %v12572
      %12656 = vst.msk [vmem:[#allocation6 + $0x68] sm:$0xff] %vm962, %v12574
      %12657 = vst.msk [vmem:[#allocation6 + $0x70] sm:$0xff] %vm962, %v12576
      %12658 = vst.msk [vmem:[#allocation6 + $0x78] sm:$0xff] %vm962, %v12578
      %12659 = vst.msk [vmem:[#allocation6 + $0x80] sm:$0xff] %vm962, %v12580
      %12660 = vst.msk [vmem:[#allocation6 + $0x88] sm:$0xff] %vm962, %v12582
      %12661 = vst.msk [vmem:[#allocation6 + $0x90] sm:$0xff] %vm962, %v12584
      %12662 = vst.msk [vmem:[#allocation6 + $0x98] sm:$0xff] %vm962, %v12586
      %12663 = vst.msk [vmem:[#allocation6 + $0xa0] sm:$0xff] %vm962, %v12588
      %12664 = vst.msk [vmem:[#allocation6 + $0xa8] sm:$0xff] %vm962, %v12590
      %12665 = vst.msk [vmem:[#allocation6 + $0xb0] sm:$0xff] %vm962, %v12592
      %12666 = vst.msk [vmem:[#allocation6 + $0xb8] sm:$0xff] %vm962, %v12594
      %12667 = vst.msk [vmem:[#allocation6 + $0xc0] sm:$0xff] %vm962, %v12596
      %12668 = vst.msk [vmem:[#allocation6 + $0xc8] sm:$0xff] %vm962, %v12598
      %12669 = vst.msk [vmem:[#allocation6 + $0xd0] sm:$0xff] %vm962, %v12600
      %12670 = vst.msk [vmem:[#allocation6 + $0xd8] sm:$0xff] %vm962, %v12602
      %12671 = vst.msk [vmem:[#allocation6 + $0xe0] sm:$0xff] %vm962, %v12604
      %12672 = vst.msk [vmem:[#allocation6 + $0xe8] sm:$0xff] %vm962, %v12606
      %12673 = vst.msk [vmem:[#allocation6 + $0xf0] sm:$0xff] %vm962, %v12608
      %12674 = vst.msk [vmem:[#allocation6 + $0xf8] sm:$0xff] %vm962, %v12610
      %12707 = vrot.lane.b32.xlu0 %v12483, 64
      %v12708 = vpop.permute.xlu0 %12707
      %12709 = vrot.lane.b32.xlu0 %v12484, 64
      %v12710 = vpop.permute.xlu0 %12709
      %12711 = vrot.lane.b32.xlu0 %v12485, 64
      %v12712 = vpop.permute.xlu0 %12711
      %12713 = vrot.lane.b32.xlu0 %v12486, 64
      %v12714 = vpop.permute.xlu0 %12713
      %12715 = vrot.lane.b32.xlu0 %v12487, 64
      %v12716 = vpop.permute.xlu0 %12715
      %12717 = vrot.lane.b32.xlu0 %v12488, 64
      %v12718 = vpop.permute.xlu0 %12717
      %12719 = vrot.lane.b32.xlu0 %v12489, 64
      %v12720 = vpop.permute.xlu0 %12719
      %12721 = vrot.lane.b32.xlu0 %v12490, 64
      %v12722 = vpop.permute.xlu0 %12721
      %12723 = vrot.lane.b32.xlu0 %v12491, 64
      %v12724 = vpop.permute.xlu0 %12723
      %12725 = vrot.lane.b32.xlu0 %v12492, 64
      %v12726 = vpop.permute.xlu0 %12725
      %12727 = vrot.lane.b32.xlu0 %v12493, 64
      %v12728 = vpop.permute.xlu0 %12727
      %12729 = vrot.lane.b32.xlu0 %v12494, 64
      %v12730 = vpop.permute.xlu0 %12729
      %12731 = vrot.lane.b32.xlu0 %v12495, 64
      %v12732 = vpop.permute.xlu0 %12731
      %12733 = vrot.lane.b32.xlu0 %v12496, 64
      %v12734 = vpop.permute.xlu0 %12733
      %12735 = vrot.lane.b32.xlu0 %v12497, 64
      %v12736 = vpop.permute.xlu0 %12735
      %12737 = vrot.lane.b32.xlu0 %v12498, 64
      %v12738 = vpop.permute.xlu0 %12737
      %12739 = vrot.lane.b32.xlu0 %v12499, 64
      %v12740 = vpop.permute.xlu0 %12739
      %12741 = vrot.lane.b32.xlu0 %v12500, 64
      %v12742 = vpop.permute.xlu0 %12741
      %12743 = vrot.lane.b32.xlu0 %v12501, 64
      %v12744 = vpop.permute.xlu0 %12743
      %12745 = vrot.lane.b32.xlu0 %v12502, 64
      %v12746 = vpop.permute.xlu0 %12745
      %12747 = vrot.lane.b32.xlu0 %v12503, 64
      %v12748 = vpop.permute.xlu0 %12747
      %12749 = vrot.lane.b32.xlu0 %v12504, 64
      %v12750 = vpop.permute.xlu0 %12749
      %12751 = vrot.lane.b32.xlu0 %v12505, 64
      %v12752 = vpop.permute.xlu0 %12751
      %12753 = vrot.lane.b32.xlu0 %v12506, 64
      %v12754 = vpop.permute.xlu0 %12753
      %12755 = vrot.lane.b32.xlu0 %v12507, 64
      %v12756 = vpop.permute.xlu0 %12755
      %12757 = vrot.lane.b32.xlu0 %v12508, 64
      %v12758 = vpop.permute.xlu0 %12757
      %12759 = vrot.lane.b32.xlu0 %v12509, 64
      %v12760 = vpop.permute.xlu0 %12759
      %12761 = vrot.lane.b32.xlu0 %v12510, 64
      %v12762 = vpop.permute.xlu0 %12761
      %12763 = vrot.lane.b32.xlu0 %v12511, 64
      %v12764 = vpop.permute.xlu0 %12763
      %12765 = vrot.lane.b32.xlu0 %v12512, 64
      %v12766 = vpop.permute.xlu0 %12765
      %12767 = vrot.lane.b32.xlu0 %v12513, 64
      %v12768 = vpop.permute.xlu0 %12767
      %12769 = vrot.lane.b32.xlu0 %v12514, 64
      %v12770 = vpop.permute.xlu0 %12769
      %12803 = vst.msk [vmem:[%s8587 + $0x1] sm:$0xff] %vm962, %v12708
      %12804 = vst.msk [vmem:[%s8587 + $0x9] sm:$0xff] %vm962, %v12710
      %12805 = vst.msk [vmem:[%s8587 + $0x19] sm:$0xff] %vm962, %v12712
      %12806 = vst.msk [vmem:[%s8587 + $0x21] sm:$0xff] %vm962, %v12714
      %12807 = vst.msk [vmem:[%s8587 + $0x31] sm:$0xff] %vm962, %v12716
      %12808 = vst.msk [vmem:[%s8587 + $0x39] sm:$0xff] %vm962, %v12718
      %12809 = vst.msk [vmem:[%s8587 + $0x49] sm:$0xff] %vm962, %v12720
      %12810 = vst.msk [vmem:[%s8587 + $0x51] sm:$0xff] %vm962, %v12722
      %12811 = vst.msk [vmem:[%s8587 + $0x61] sm:$0xff] %vm962, %v12724
      %12812 = vst.msk [vmem:[%s8587 + $0x69] sm:$0xff] %vm962, %v12726
      %12813 = vst.msk [vmem:[%s8587 + $0x79] sm:$0xff] %vm962, %v12728
      %12814 = vst.msk [vmem:[%s8587 + $0x81] sm:$0xff] %vm962, %v12730
      %12815 = vst.msk [vmem:[%s8587 + $0x91] sm:$0xff] %vm962, %v12732
      %12816 = vst.msk [vmem:[%s8587 + $0x99] sm:$0xff] %vm962, %v12734
      %12817 = vst.msk [vmem:[%s8587 + $0xa9] sm:$0xff] %vm962, %v12736
      %12818 = vst.msk [vmem:[%s8587 + $0xb1] sm:$0xff] %vm962, %v12738
      %12819 = vst.msk [vmem:[%s8587 + $0xc1] sm:$0xff] %vm962, %v12740
      %12820 = vst.msk [vmem:[%s8587 + $0xc9] sm:$0xff] %vm962, %v12742
      %12821 = vst.msk [vmem:[%s8587 + $0xd9] sm:$0xff] %vm962, %v12744
      %12822 = vst.msk [vmem:[%s8587 + $0xe1] sm:$0xff] %vm962, %v12746
      %12823 = vst.msk [vmem:[%s8587 + $0xf1] sm:$0xff] %vm962, %v12748
      %12824 = vst.msk [vmem:[%s8587 + $0xf9] sm:$0xff] %vm962, %v12750
      %12825 = vst.msk [vmem:[%s8587 + $0x109] sm:$0xff] %vm962, %v12752
      %12826 = vst.msk [vmem:[%s8587 + $0x111] sm:$0xff] %vm962, %v12754
      %12827 = vst.msk [vmem:[%s8587 + $0x121] sm:$0xff] %vm962, %v12756
      %12828 = vst.msk [vmem:[%s8587 + $0x129] sm:$0xff] %vm962, %v12758
      %12829 = vst.msk [vmem:[%s8587 + $0x139] sm:$0xff] %vm962, %v12760
      %12830 = vst.msk [vmem:[%s8587 + $0x141] sm:$0xff] %vm962, %v12762
      %12831 = vst.msk [vmem:[%s8587 + $0x151] sm:$0xff] %vm962, %v12764
      %12832 = vst.msk [vmem:[%s8587 + $0x159] sm:$0xff] %vm962, %v12766
      %12833 = vst.msk [vmem:[%s8587 + $0x169] sm:$0xff] %vm962, %v12768
      %12834 = vst.msk [vmem:[%s8587 + $0x171] sm:$0xff] %vm962, %v12770
      %p12835 = scmp.eq.s32.totalorder %s27, 3
      // Predicated region
      $region61: #{vehicle_grid_predictor.1} parent=55 // pred_check
        %p12836 = pneg %p12835
      $region62: #{vehicle_grid_predictor.1} parent=55 // pred_check_branch
        %12838 = sbr.rel (%p12836) target = $region64
      $region63: #{vehicle_grid_predictor.1} parent=55 // pred_region
        %v12839 = vld [vmem:[%s7] sm:$0x1]
        %v12841 = vperm.slane %v12839, 0
        %12842 = vrot.lane.b32.xlu0 %v12841, 64
        %v12843 = vpop.permute.xlu0 %12842
        %v12845 = vmul.f32 %v12483, %v12843
        %v12846 = vmul.f32 %v12484, %v12843
        %v12847 = vmul.f32 %v12485, %v12843
        %v12848 = vmul.f32 %v12486, %v12843
        %v12849 = vmul.f32 %v12487, %v12843
        %v12850 = vmul.f32 %v12488, %v12843
        %v12851 = vmul.f32 %v12489, %v12843
        %v12852 = vmul.f32 %v12490, %v12843
        %v12853 = vmul.f32 %v12491, %v12843
        %v12854 = vmul.f32 %v12492, %v12843
        %v12855 = vmul.f32 %v12493, %v12843
        %v12856 = vmul.f32 %v12494, %v12843
        %v12857 = vmul.f32 %v12495, %v12843
        %v12858 = vmul.f32 %v12496, %v12843
        %v12859 = vmul.f32 %v12497, %v12843
        %v12860 = vmul.f32 %v12498, %v12843
        %v12861 = vmul.f32 %v12499, %v12843
        %v12862 = vmul.f32 %v12500, %v12843
        %v12863 = vmul.f32 %v12501, %v12843
        %v12864 = vmul.f32 %v12502, %v12843
        %v12865 = vmul.f32 %v12503, %v12843
        %v12866 = vmul.f32 %v12504, %v12843
        %v12867 = vmul.f32 %v12505, %v12843
        %v12868 = vmul.f32 %v12506, %v12843
        %v12869 = vmul.f32 %v12507, %v12843
        %v12870 = vmul.f32 %v12508, %v12843
        %v12871 = vmul.f32 %v12509, %v12843
        %v12872 = vmul.f32 %v12510, %v12843
        %v12873 = vmul.f32 %v12511, %v12843
        %v12874 = vmul.f32 %v12512, %v12843
        %v12875 = vmul.f32 %v12513, %v12843
        %v12876 = vmul.f32 %v12514, %v12843
        %12909 = vrot.lane.b32.xlu0 %v12845, 64
        %v12910 = vpop.permute.xlu0 %12909
        %12911 = vrot.lane.b32.xlu0 %v12846, 64
        %v12912 = vpop.permute.xlu0 %12911
        %12913 = vrot.lane.b32.xlu0 %v12847, 64
        %v12914 = vpop.permute.xlu0 %12913
        %12915 = vrot.lane.b32.xlu0 %v12848, 64
        %v12916 = vpop.permute.xlu0 %12915
        %12917 = vrot.lane.b32.xlu0 %v12849, 64
        %v12918 = vpop.permute.xlu0 %12917
        %12919 = vrot.lane.b32.xlu0 %v12850, 64
        %v12920 = vpop.permute.xlu0 %12919
        %12921 = vrot.lane.b32.xlu0 %v12851, 64
        %v12922 = vpop.permute.xlu0 %12921
        %12923 = vrot.lane.b32.xlu0 %v12852, 64
        %v12924 = vpop.permute.xlu0 %12923
        %12925 = vrot.lane.b32.xlu0 %v12853, 64
        %v12926 = vpop.permute.xlu0 %12925
        %12927 = vrot.lane.b32.xlu0 %v12854, 64
        %v12928 = vpop.permute.xlu0 %12927
        %12929 = vrot.lane.b32.xlu0 %v12855, 64
        %v12930 = vpop.permute.xlu0 %12929
        %12931 = vrot.lane.b32.xlu0 %v12856, 64
        %v12932 = vpop.permute.xlu0 %12931
        %12933 = vrot.lane.b32.xlu0 %v12857, 64
        %v12934 = vpop.permute.xlu0 %12933
        %12935 = vrot.lane.b32.xlu0 %v12858, 64
        %v12936 = vpop.permute.xlu0 %12935
        %12937 = vrot.lane.b32.xlu0 %v12859, 64
        %v12938 = vpop.permute.xlu0 %12937
        %12939 = vrot.lane.b32.xlu0 %v12860, 64
        %v12940 = vpop.permute.xlu0 %12939
        %12941 = vrot.lane.b32.xlu0 %v12861, 64
        %v12942 = vpop.permute.xlu0 %12941
        %12943 = vrot.lane.b32.xlu0 %v12862, 64
        %v12944 = vpop.permute.xlu0 %12943
        %12945 = vrot.lane.b32.xlu0 %v12863, 64
        %v12946 = vpop.permute.xlu0 %12945
        %12947 = vrot.lane.b32.xlu0 %v12864, 64
        %v12948 = vpop.permute.xlu0 %12947
        %12949 = vrot.lane.b32.xlu0 %v12865, 64
        %v12950 = vpop.permute.xlu0 %12949
        %12951 = vrot.lane.b32.xlu0 %v12866, 64
        %v12952 = vpop.permute.xlu0 %12951
        %12953 = vrot.lane.b32.xlu0 %v12867, 64
        %v12954 = vpop.permute.xlu0 %12953
        %12955 = vrot.lane.b32.xlu0 %v12868, 64
        %v12956 = vpop.permute.xlu0 %12955
        %12957 = vrot.lane.b32.xlu0 %v12869, 64
        %v12958 = vpop.permute.xlu0 %12957
        %12959 = vrot.lane.b32.xlu0 %v12870, 64
        %v12960 = vpop.permute.xlu0 %12959
        %12961 = vrot.lane.b32.xlu0 %v12871, 64
        %v12962 = vpop.permute.xlu0 %12961
        %12963 = vrot.lane.b32.xlu0 %v12872, 64
        %v12964 = vpop.permute.xlu0 %12963
        %12965 = vrot.lane.b32.xlu0 %v12873, 64
        %v12966 = vpop.permute.xlu0 %12965
        %12967 = vrot.lane.b32.xlu0 %v12874, 64
        %v12968 = vpop.permute.xlu0 %12967
        %12969 = vrot.lane.b32.xlu0 %v12875, 64
        %v12970 = vpop.permute.xlu0 %12969
        %12971 = vrot.lane.b32.xlu0 %v12876, 64
        %v12972 = vpop.permute.xlu0 %12971
        %v13005 = vsel %vm962, %v12910, 0.0
        %13006 = vadd.xlane.f32.xlu0 %v13005
        %v13007 = vpop.xlane.xlu0 %13006
        %v13008 = vsel %vm962, %v12912, 0.0
        %13009 = vadd.xlane.f32.xlu0 %v13008
        %v13010 = vpop.xlane.xlu0 %13009
        %v13011 = vsel %vm962, %v12914, 0.0
        %13012 = vadd.xlane.f32.xlu0 %v13011
        %v13013 = vpop.xlane.xlu0 %13012
        %v13014 = vsel %vm962, %v12916, 0.0
        %13015 = vadd.xlane.f32.xlu0 %v13014
        %v13016 = vpop.xlane.xlu0 %13015
        %v13017 = vsel %vm962, %v12918, 0.0
        %13018 = vadd.xlane.f32.xlu0 %v13017
        %v13019 = vpop.xlane.xlu0 %13018
        %v13020 = vsel %vm962, %v12920, 0.0
        %13021 = vadd.xlane.f32.xlu0 %v13020
        %v13022 = vpop.xlane.xlu0 %13021
        %v13023 = vsel %vm962, %v12922, 0.0
        %13024 = vadd.xlane.f32.xlu0 %v13023
        %v13025 = vpop.xlane.xlu0 %13024
        %v13026 = vsel %vm962, %v12924, 0.0
        %13027 = vadd.xlane.f32.xlu0 %v13026
        %v13028 = vpop.xlane.xlu0 %13027
        %v13029 = vsel %vm962, %v12926, 0.0
        %13030 = vadd.xlane.f32.xlu0 %v13029
        %v13031 = vpop.xlane.xlu0 %13030
        %v13032 = vsel %vm962, %v12928, 0.0
        %13033 = vadd.xlane.f32.xlu0 %v13032
        %v13034 = vpop.xlane.xlu0 %13033
        %v13035 = vsel %vm962, %v12930, 0.0
        %13036 = vadd.xlane.f32.xlu0 %v13035
        %v13037 = vpop.xlane.xlu0 %13036
        %v13038 = vsel %vm962, %v12932, 0.0
        %13039 = vadd.xlane.f32.xlu0 %v13038
        %v13040 = vpop.xlane.xlu0 %13039
        %v13041 = vsel %vm962, %v12934, 0.0
        %13042 = vadd.xlane.f32.xlu0 %v13041
        %v13043 = vpop.xlane.xlu0 %13042
        %v13044 = vsel %vm962, %v12936, 0.0
        %13045 = vadd.xlane.f32.xlu0 %v13044
        %v13046 = vpop.xlane.xlu0 %13045
        %v13047 = vsel %vm962, %v12938, 0.0
        %13048 = vadd.xlane.f32.xlu0 %v13047
        %v13049 = vpop.xlane.xlu0 %13048
        %v13050 = vsel %vm962, %v12940, 0.0
        %13051 = vadd.xlane.f32.xlu0 %v13050
        %v13052 = vpop.xlane.xlu0 %13051
        %v13053 = vsel %vm962, %v12942, 0.0
        %13054 = vadd.xlane.f32.xlu0 %v13053
        %v13055 = vpop.xlane.xlu0 %13054
        %v13056 = vsel %vm962, %v12944, 0.0
        %13057 = vadd.xlane.f32.xlu0 %v13056
        %v13058 = vpop.xlane.xlu0 %13057
        %v13059 = vsel %vm962, %v12946, 0.0
        %13060 = vadd.xlane.f32.xlu0 %v13059
        %v13061 = vpop.xlane.xlu0 %13060
        %v13062 = vsel %vm962, %v12948, 0.0
        %13063 = vadd.xlane.f32.xlu0 %v13062
        %v13064 = vpop.xlane.xlu0 %13063
        %v13065 = vsel %vm962, %v12950, 0.0
        %13066 = vadd.xlane.f32.xlu0 %v13065
        %v13067 = vpop.xlane.xlu0 %13066
        %v13068 = vsel %vm962, %v12952, 0.0
        %13069 = vadd.xlane.f32.xlu0 %v13068
        %v13070 = vpop.xlane.xlu0 %13069
        %v13071 = vsel %vm962, %v12954, 0.0
        %13072 = vadd.xlane.f32.xlu0 %v13071
        %v13073 = vpop.xlane.xlu0 %13072
        %v13074 = vsel %vm962, %v12956, 0.0
        %13075 = vadd.xlane.f32.xlu0 %v13074
        %v13076 = vpop.xlane.xlu0 %13075
        %v13077 = vsel %vm962, %v12958, 0.0
        %13078 = vadd.xlane.f32.xlu0 %v13077
        %v13079 = vpop.xlane.xlu0 %13078
        %v13080 = vsel %vm962, %v12960, 0.0
        %13081 = vadd.xlane.f32.xlu0 %v13080
        %v13082 = vpop.xlane.xlu0 %13081
        %v13083 = vsel %vm962, %v12962, 0.0
        %13084 = vadd.xlane.f32.xlu0 %v13083
        %v13085 = vpop.xlane.xlu0 %13084
        %v13086 = vsel %vm962, %v12964, 0.0
        %13087 = vadd.xlane.f32.xlu0 %v13086
        %v13088 = vpop.xlane.xlu0 %13087
        %v13089 = vsel %vm962, %v12966, 0.0
        %13090 = vadd.xlane.f32.xlu0 %v13089
        %v13091 = vpop.xlane.xlu0 %13090
        %v13092 = vsel %vm962, %v12968, 0.0
        %13093 = vadd.xlane.f32.xlu0 %v13092
        %v13094 = vpop.xlane.xlu0 %13093
        %v13095 = vsel %vm962, %v12970, 0.0
        %13096 = vadd.xlane.f32.xlu0 %v13095
        %v13097 = vpop.xlane.xlu0 %13096
        %v13098 = vsel %vm962, %v12972, 0.0
        %13099 = vadd.xlane.f32.xlu0 %v13098
        %v13100 = vpop.xlane.xlu0 %13099
        %v13101 = vld [vmem:[#allocation7] sm:$0x1]
        %v13103 = vperm.slane %v13101, 0
        %v13105 = vadd.f32 %v13007, %v13103
        %v13106 = vadd.f32 %v13010, %v13103
        %v13107 = vadd.f32 %v13013, %v13103
        %v13108 = vadd.f32 %v13016, %v13103
        %v13109 = vadd.f32 %v13019, %v13103
        %v13110 = vadd.f32 %v13022, %v13103
        %v13111 = vadd.f32 %v13025, %v13103
        %v13112 = vadd.f32 %v13028, %v13103
        %v13113 = vadd.f32 %v13031, %v13103
        %v13114 = vadd.f32 %v13034, %v13103
        %v13115 = vadd.f32 %v13037, %v13103
        %v13116 = vadd.f32 %v13040, %v13103
        %v13117 = vadd.f32 %v13043, %v13103
        %v13118 = vadd.f32 %v13046, %v13103
        %v13119 = vadd.f32 %v13049, %v13103
        %v13120 = vadd.f32 %v13052, %v13103
        %v13121 = vadd.f32 %v13055, %v13103
        %v13122 = vadd.f32 %v13058, %v13103
        %v13123 = vadd.f32 %v13061, %v13103
        %v13124 = vadd.f32 %v13064, %v13103
        %v13125 = vadd.f32 %v13067, %v13103
        %v13126 = vadd.f32 %v13070, %v13103
        %v13127 = vadd.f32 %v13073, %v13103
        %v13128 = vadd.f32 %v13076, %v13103
        %v13129 = vadd.f32 %v13079, %v13103
        %v13130 = vadd.f32 %v13082, %v13103
        %v13131 = vadd.f32 %v13085, %v13103
        %v13132 = vadd.f32 %v13088, %v13103
        %v13133 = vadd.f32 %v13091, %v13103
        %v13134 = vadd.f32 %v13094, %v13103
        %v13135 = vadd.f32 %v13097, %v13103
        %v13136 = vadd.f32 %v13100, %v13103
        %v13137 = vmax.f32 %v13105, 0.0
        %v13138 = vmax.f32 %v13106, 0.0
        %v13139 = vmax.f32 %v13107, 0.0
        %v13140 = vmax.f32 %v13108, 0.0
        %v13141 = vmax.f32 %v13109, 0.0
        %v13142 = vmax.f32 %v13110, 0.0
        %v13143 = vmax.f32 %v13111, 0.0
        %v13144 = vmax.f32 %v13112, 0.0
        %v13145 = vmax.f32 %v13113, 0.0
        %v13146 = vmax.f32 %v13114, 0.0
        %v13147 = vmax.f32 %v13115, 0.0
        %v13148 = vmax.f32 %v13116, 0.0
        %v13149 = vmax.f32 %v13117, 0.0
        %v13150 = vmax.f32 %v13118, 0.0
        %v13151 = vmax.f32 %v13119, 0.0
        %v13152 = vmax.f32 %v13120, 0.0
        %v13153 = vmax.f32 %v13121, 0.0
        %v13154 = vmax.f32 %v13122, 0.0
        %v13155 = vmax.f32 %v13123, 0.0
        %v13156 = vmax.f32 %v13124, 0.0
        %v13157 = vmax.f32 %v13125, 0.0
        %v13158 = vmax.f32 %v13126, 0.0
        %v13159 = vmax.f32 %v13127, 0.0
        %v13160 = vmax.f32 %v13128, 0.0
        %v13161 = vmax.f32 %v13129, 0.0
        %v13162 = vmax.f32 %v13130, 0.0
        %v13163 = vmax.f32 %v13131, 0.0
        %v13164 = vmax.f32 %v13132, 0.0
        %v13165 = vmax.f32 %v13133, 0.0
        %v13166 = vmax.f32 %v13134, 0.0
        %v13167 = vmax.f32 %v13135, 0.0
        %v13168 = vmax.f32 %v13136, 0.0
        %13169 = vst.msk [vmem:[%s360] sm:$0xff] %vm628, %v13137
        %13170 = vst.msk [vmem:[%s360 + $0x8] sm:$0xff] %vm628, %v13138
        %13171 = vst.msk [vmem:[%s360 + $0x10] sm:$0xff] %vm628, %v13139
        %13172 = vst.msk [vmem:[%s360 + $0x18] sm:$0xff] %vm628, %v13140
        %13173 = vst.msk [vmem:[%s360 + $0x20] sm:$0xff] %vm628, %v13141
        %13174 = vst.msk [vmem:[%s360 + $0x28] sm:$0xff] %vm628, %v13142
        %13175 = vst.msk [vmem:[%s360 + $0x30] sm:$0xff] %vm628, %v13143
        %13176 = vst.msk [vmem:[%s360 + $0x38] sm:$0xff] %vm628, %v13144
        %13177 = vst.msk [vmem:[%s360 + $0x40] sm:$0xff] %vm628, %v13145
        %13178 = vst.msk [vmem:[%s360 + $0x48] sm:$0xff] %vm628, %v13146
        %13179 = vst.msk [vmem:[%s360 + $0x50] sm:$0xff] %vm628, %v13147
        %13180 = vst.msk [vmem:[%s360 + $0x58] sm:$0xff] %vm628, %v13148
        %13181 = vst.msk [vmem:[%s360 + $0x60] sm:$0xff] %vm628, %v13149
        %13182 = vst.msk [vmem:[%s360 + $0x68] sm:$0xff] %vm628, %v13150
        %13183 = vst.msk [vmem:[%s360 + $0x70] sm:$0xff] %vm628, %v13151
        %13184 = vst.msk [vmem:[%s360 + $0x78] sm:$0xff] %vm628, %v13152
        %13185 = vst.msk [vmem:[%s360 + $0x80] sm:$0xff] %vm628, %v13153
        %13186 = vst.msk [vmem:[%s360 + $0x88] sm:$0xff] %vm628, %v13154
        %13187 = vst.msk [vmem:[%s360 + $0x90] sm:$0xff] %vm628, %v13155
        %13188 = vst.msk [vmem:[%s360 + $0x98] sm:$0xff] %vm628, %v13156
        %13189 = vst.msk [vmem:[%s360 + $0xa0] sm:$0xff] %vm628, %v13157
        %13190 = vst.msk [vmem:[%s360 + $0xa8] sm:$0xff] %vm628, %v13158
        %13191 = vst.msk [vmem:[%s360 + $0xb0] sm:$0xff] %vm628, %v13159
        %13192 = vst.msk [vmem:[%s360 + $0xb8] sm:$0xff] %vm628, %v13160
        %13193 = vst.msk [vmem:[%s360 + $0xc0] sm:$0xff] %vm628, %v13161
        %13194 = vst.msk [vmem:[%s360 + $0xc8] sm:$0xff] %vm628, %v13162
        %13195 = vst.msk [vmem:[%s360 + $0xd0] sm:$0xff] %vm628, %v13163
        %13196 = vst.msk [vmem:[%s360 + $0xd8] sm:$0xff] %vm628, %v13164
        %13197 = vst.msk [vmem:[%s360 + $0xe0] sm:$0xff] %vm628, %v13165
        %13198 = vst.msk [vmem:[%s360 + $0xe8] sm:$0xff] %vm628, %v13166
        %13199 = vst.msk [vmem:[%s360 + $0xf0] sm:$0xff] %vm628, %v13167
        %13200 = vst.msk [vmem:[%s360 + $0xf8] sm:$0xff] %vm628, %v13168
      $region64: #{vehicle_grid_predictor.1} parent=55 // pred_fallthru
        _
      %p13201 = scmp.lt.s32.totalorder %s26, 1
      %s13202 = scalar_select %p13201, %s26, 1
      %s13203 = smul.addr %s13202, 32
      %s13204 = smul.addr %s13203, 8
      %s13205 = scalar_lea.vmem %s9, %s13204
      // Predicated region
      $region65: #{vehicle_grid_predictor.1} parent=55 // pred_check
        %p13206 = pneg %p248
      $region66: #{vehicle_grid_predictor.1} parent=55 // pred_check_branch
        %13208 = sbr.rel (%p13206) target = $region68
      $region67: #{vehicle_grid_predictor.1} parent=55 // pred_region
        _
      $region68: #{vehicle_grid_predictor.1} parent=55 // pred_fallthru
        _
    $region56: #{vehicle_grid_predictor.1} parent=5 // pred_fallthru
      _
    %p13209 = scmp.le.s32.totalorder 2, %s17
    // Predicated region
    $region69: #{vehicle_grid_predictor.1} parent=5 // pred_check
      %p13210 = pneg %p13209
    $region70: #{vehicle_grid_predictor.1} parent=5 // pred_check_branch
      %13212 = sbr.rel (%p13210) target = $region72
    $region71: #{vehicle_grid_predictor.1} parent=5 // pred_region
      %s13213 = ssub.s32 %s17, 2
      // Predicated region
      $region73: #{vehicle_grid_predictor.1} parent=71 // pred_check
        %p13214 = pneg %p254
      $region74: #{vehicle_grid_predictor.1} parent=71 // pred_check_branch
        %13216 = sbr.rel (%p13214) target = $region76
      $region75: #{vehicle_grid_predictor.1} parent=71 // pred_region
        %p13217 = scmp.lt.s32.totalorder %s28, 1
        %s13218 = scalar_select %p13217, %s28, 1
        %s13219 = smul.addr %s13218, 32
        %s13220 = smul.addr %s13219, 8
        %s13221 = scalar_lea.vmem %s9, %s13220
      $region76: #{vehicle_grid_predictor.1} parent=71 // pred_fallthru
        _
    $region72: #{vehicle_grid_predictor.1} parent=5 // pred_fallthru
      _
  $region6: #{vehicle_grid_predictor.1} parent=0 // loop_footer
    %s21 = sadd.s32 1, %s17
  $region7: #{vehicle_grid_predictor.1} parent=0 // loop_footer_branch
    %16 = sbr.rel target = $region3
  $region8: #{vehicle_grid_predictor.1} parent=0 // loop_exit
    _

</llo_original>
